<compile_context>
chip_gen: v6e
topology: v6e:2x2x1
jax: 0.10.0
libtpu: 0.0.40
codegen_flags: <defaults>
</compile_context>

<pallas_src>
import functools
import math

import jax
import jax.numpy as jnp
from jax.experimental import pallas as pl
from jax.experimental.pallas import tpu as pltpu


# ----------------------------- small helpers -----------------------------

def _make_divisible(v, divisor, min_value=None):
    if min_value is None:
        min_value = divisor
    new_v = max(min_value, int(v + divisor / 2) // divisor * divisor)
    if new_v < 0.9 * v:
        new_v += divisor
    return new_v


def _relu(x):
    return jnp.maximum(x, 0.0)


def _hsigmoid(x):
    # ReLU6(x + 3) / 6
    return jnp.clip(x + 3.0, 0.0, 6.0) * (1.0 / 6.0)


def _hswish(x):
    return x * _hsigmoid(x)


def _batch_spec(shape_no_batch):
    """Activation spec: one batch element per grid step, batch dim squeezed."""
    nd = len(shape_no_batch)
    return pl.BlockSpec((None,) + tuple(shape_no_batch),
                        lambda b: (b,) + (0,) * nd)


def _full_spec(shape):
    """Weight/bias spec: whole array in VMEM, invariant across the batch grid."""
    nd = len(shape)
    return pl.BlockSpec(tuple(shape), lambda b: (0,) * nd)


# ----------------------------- in-kernel helpers -----------------------------

def _write_padded(pad_ref, y, H, W, p):
    """Scatter the (H*W, C) activation into the zero-padded (Hp*Wp, C) scratch."""
    Wp = W + 2 * p
    pad_ref[...] = jnp.zeros_like(pad_ref)
    for h in range(H):
        base = (h + p) * Wp + p
        pad_ref[base:base + W, :] = y[h * W:(h + 1) * W, :]


def _tap(pad_ref, oy, dy, dx, stride, Wp, Wo):
    """Read one conv tap for output row oy: a (Wo, C) slab (strided when stride>1)."""
    start = (stride * oy + dy) * Wp + dx
    if stride == 1:
        return pad_ref[pl.ds(start, Wo), :]
    return pad_ref[pl.ds(start, Wo, stride=stride), :]


# ----------------------------- Pallas kernels -----------------------------

def _stem_kernel(x_ref, w_ref, b_ref, o_ref, pad_ref, col_ref,
                 *, H, W, k, stride, pad):
    """Fused conv3x3(stride 2) + folded BN + h_swish for one batch element."""
    Wp = W + 2 * pad
    Ho = (H + 2 * pad - k) // stride + 1
    Wo = (W + 2 * pad - k) // stride + 1

    x = x_ref[...]                                       # (H*W, Cin) f32
    _write_padded(pad_ref, x, H, W, pad)

    # Build im2col in VMEM scratch (k*k, Ho*Wo, Cin) - never touches HBM.
    for t in range(k * k):
        dy, dx = divmod(t, k)
        for oy in range(Ho):
            col_ref[t, oy * Wo:(oy + 1) * Wo, :] = _tap(pad_ref, oy, dy, dx,
                                                        stride, Wp, Wo)

    # Per-tap MXU accumulation (bf16 operands, f32 accumulation).
    acc = jnp.dot(col_ref[0].astype(jnp.bfloat16), w_ref[0],
                  preferred_element_type=jnp.float32)
    for t in range(1, k * k):
        acc = acc + jnp.dot(col_ref[t].astype(jnp.bfloat16), w_ref[t],
                            preferred_element_type=jnp.float32)
    o_ref[...] = _hswish(acc + b_ref[...])


def _block_kernel(*refs, H, W, k, stride, expand, use_se, use_hs, identity):
    """One fused InvertedResidual block for one batch element.

    Ref order: x, [pw_w, pw_b], dw_w, dw_b, [se_w1, se_b1, se_w2, se_b2],
               proj_w, proj_b, out, pad_scratch, dw_scratch
    """
    it = iter(refs)
    x_ref = next(it)
    if expand:
        pw_w, pw_b = next(it), next(it)
    dw_w, dw_b = next(it), next(it)
    if use_se:
        se_w1, se_b1, se_w2, se_b2 = next(it), next(it), next(it), next(it)
    pj_w, pj_b = next(it), next(it)
    o_ref = next(it)
    pad_ref = next(it)
    dw_ref = next(it)

    act = _hswish if use_hs else _relu
    pad = (k - 1) // 2
    Wp = W + 2 * pad
    Ho = (H + 2 * pad - k) // stride + 1
    Wo = (W + 2 * pad - k) // stride + 1

    x = x_ref[...]                                       # (H*W, Cin) f32

    # --- 1x1 expansion + folded BN + act (MXU, bf16 operands) ---
    if expand:
        y = jnp.dot(x.astype(jnp.bfloat16), pw_w[...],
                    preferred_element_type=jnp.float32)
        y = act(y + pw_b[...])
    else:
        y = x

    # --- depthwise kxk conv + folded BN: VMEM-padded buffer, in-kernel taps ---
    _write_padded(pad_ref, y, H, W, pad)
    wd = dw_w[...]                                       # (k*k, Cexp) f32, BN folded
    bd = dw_b[...]                                       # (1, Cexp)
    for oy in range(Ho):
        acc = None
        for t in range(k * k):
            dy, dx = divmod(t, k)
            term = _tap(pad_ref, oy, dy, dx, stride, Wp, Wo) * wd[t:t + 1, :]
            acc = term if acc is None else acc + term
        row = acc + bd
        # ordering per the PyTorch module:
        #   expand branch:      dw -> BN -> SE -> act -> project
        #   non-expand branch:  dw -> BN -> act -> SE -> project
        #   (no SE: act directly after dw+BN in both)
        if (not expand) or (not use_se):
            row = act(row)
        dw_ref[oy * Wo:(oy + 1) * Wo, :] = row

    z = dw_ref[...]                                      # (Ho*Wo, Cexp) f32

    # --- squeeze-and-excitation, fully in-kernel ---
    if use_se:
        m = jnp.mean(z, axis=0, keepdims=True)           # adaptive avg-pool (1, Cexp)
        h1 = _relu(jnp.dot(m, se_w1[...], preferred_element_type=jnp.float32)
                   + se_b1[...])
        g = _hsigmoid(jnp.dot(h1, se_w2[...], preferred_element_type=jnp.float32)
                      + se_b2[...])
        z = z * g
        if expand:
            z = act(z)

    # --- 1x1 projection + folded BN (+ residual) ---
    out = jnp.dot(z.astype(jnp.bfloat16), pj_w[...],
                  preferred_element_type=jnp.float32) + pj_b[...]
    if identity:
        out = out + x
    o_ref[...] = out


def _pool_bn_kernel(x_ref, s_ref, b_ref, o_ref):
    y = jnp.mean(x_ref[...], axis=1)                     # adaptive avg-pool -> (N, C)
    o_ref[...] = y * s_ref[...] + b_ref[...]


# ----------------------------- kernel wrappers -----------------------------

def stem_conv(x3, w, b, H, W, k=3, stride=2, pad=1):
    N, HW, Cin = x3.shape
    Cout = w.shape[2]
    Ho = (H + 2 * pad - k) // stride + 1
    Wo = (W + 2 * pad - k) // stride + 1
    Hp, Wp = H + 2 * pad, W + 2 * pad
    out = pl.pallas_call(
        functools.partial(_stem_kernel, H=H, W=W, k=k, stride=stride, pad=pad),
        grid=(N,),
        in_specs=[_batch_spec((HW, Cin)), _full_spec(w.shape), _full_spec(b.shape)],
        out_specs=_batch_spec((Ho * Wo, Cout)),
        out_shape=jax.ShapeDtypeStruct((N, Ho * Wo, Cout), jnp.float32),
        scratch_shapes=[pltpu.VMEM((Hp * Wp, Cin), jnp.float32),
                        pltpu.VMEM((k * k, Ho * Wo, Cin), jnp.float32)],
        compiler_params=pltpu.CompilerParams(dimension_semantics=("parallel",)),
    )(x3, w, b)
    return out, Ho, Wo


def inverted_residual(p, x3, H, W):
    cfg = p["cfg"]
    k, stride = cfg["k"], cfg["stride"]
    expand, use_se = cfg["expand"], cfg["use_se"]
    use_hs, identity = cfg["use_hs"], cfg["identity"]
    N, HW, Cin = x3.shape
    Cexp = p["dw_w"].shape[1]
    Cout = p["proj_w"].shape[1]
    pad = (k - 1) // 2
    Ho = (H + 2 * pad - k) // stride + 1
    Wo = (W + 2 * pad - k) // stride + 1
    Hp, Wp = H + 2 * pad, W + 2 * pad

    inputs = [x3]
    in_specs = [_batch_spec((HW, Cin))]

    def add(arr):
        inputs.append(arr)
        in_specs.append(_full_spec(arr.shape))

    if expand:
        add(p["pw_w"]); add(p["pw_b"])
    add(p["dw_w"]); add(p["dw_b"])
    if use_se:
        add(p["se_w1"]); add(p["se_b1"]); add(p["se_w2"]); add(p["se_b2"])
    add(p["proj_w"]); add(p["proj_b"])

    out = pl.pallas_call(
        functools.partial(_block_kernel, H=H, W=W, k=k, stride=stride,
                          expand=expand, use_se=use_se, use_hs=use_hs,
                          identity=identity),
        grid=(N,),
        in_specs=in_specs,
        out_specs=_batch_spec((Ho * Wo, Cout)),
        out_shape=jax.ShapeDtypeStruct((N, Ho * Wo, Cout), jnp.float32),
        scratch_shapes=[pltpu.VMEM((Hp * Wp, Cexp), jnp.float32),   # padded activation
                        pltpu.VMEM((Ho * Wo, Cexp), jnp.float32)],  # depthwise output
        compiler_params=pltpu.CompilerParams(dimension_semantics=("parallel",)),
    )(*inputs)
    return out, Ho, Wo


def pool_bn(x3, scale2d, bias2d):
    N, HW, C = x3.shape
    return pl.pallas_call(
        _pool_bn_kernel,
        out_shape=jax.ShapeDtypeStruct((N, C), jnp.float32),
        in_specs=[pl.BlockSpec(memory_space=pltpu.MemorySpace.VMEM)] * 3,
        out_specs=pl.BlockSpec(memory_space=pltpu.MemorySpace.VMEM),
    )(x3, scale2d, bias2d)


# ----------------------------- parameter init -----------------------------

def build_params(cfgs, width_mult, key):
    keys = [key]

    def nk():
        keys[0], sub = jax.random.split(keys[0])
        return sub

    eps = 1e-5

    def bn_fold(c):
        # inference BN with fresh running stats (mean=0, var=1) and gamma=1, beta=0
        scale = jnp.full((c,), 1.0 / math.sqrt(1.0 + eps), dtype=jnp.float32)
        bias = jnp.zeros((1, c), dtype=jnp.float32)
        return scale, bias

    def conv_w(shape, fan_n):
        # module's _initialize_weights: normal(0, sqrt(2 / (k*k*out_channels)))
        return math.sqrt(2.0 / fan_n) * jax.random.normal(nk(), shape, jnp.float32)

    def lin_w(shape):
        # nn.Linear init in _initialize_weights: normal(0, 0.01), bias = 0
        return 0.01 * jax.random.normal(nk(), shape, jnp.float32)

    params = {}
    n_map3d = int(16 * width_mult)
    input_channel = _make_divisible(16 * width_mult, 8)

    # stem: conv_3x3_bn(n_map3d, input_channel, stride=2) + h_swish
    sc, b = bn_fold(input_channel)
    w = conv_w((9, n_map3d, input_channel), 9 * input_channel)
    params["stem"] = {"w": (w * sc[None, None, :]).astype(jnp.bfloat16), "b": b}

    blocks = []
    for k, t, c, use_se, use_hs, s in cfgs:
        output_channel = _make_divisible(c * width_mult, 8)
        exp_size = _make_divisible(input_channel * t, 8)
        expand = input_channel != exp_size
        blk = {"cfg": dict(k=k, stride=s, use_se=bool(use_se), use_hs=bool(use_hs),
                           expand=expand,
                           identity=(s == 1 and input_channel == output_channel))}
        if expand:
            sc, b = bn_fold(exp_size)
            w = conv_w((input_channel, exp_size), exp_size)            # 1x1 expand
            blk["pw_w"] = (w * sc[None, :]).astype(jnp.bfloat16)
            blk["pw_b"] = b
        sc, b = bn_fold(exp_size)
        w = conv_w((k * k, exp_size), k * k * exp_size)                # depthwise kxk
        blk["dw_w"] = w * sc[None, :]                                  # f32 (VPU path)
        blk["dw_b"] = b
        if use_se:
            cr = _make_divisible(exp_size // 4, 8)
            blk["se_w1"] = lin_w((exp_size, cr))
            blk["se_b1"] = jnp.zeros((1, cr), jnp.float32)
            blk["se_w2"] = lin_w((cr, exp_size))
            blk["se_b2"] = jnp.zeros((1, exp_size), jnp.float32)
        sc, b = bn_fold(output_channel)
        w = conv_w((exp_size, output_channel), output_channel)         # 1x1 project
        blk["proj_w"] = (w * sc[None, :]).astype(jnp.bfloat16)
        blk["proj_b"] = b
        blocks.append(blk)
        input_channel = output_channel

    params["blocks"] = blocks
    f_scale, f_bias = bn_fold(input_channel)
    params["bn"] = {"scale": f_scale.reshape(1, -1), "bias": f_bias}
    return params, input_channel


# ----------------------------- forward pass -----------------------------

def mobilenetv3_forward(params, x_nchw):
    # PyTorch input is NCHW; convert once to channels-last (N, H*W, C).
    N, C, H, W = x_nchw.shape
    x = jnp.transpose(x_nchw, (0, 2, 3, 1)).astype(jnp.float32).reshape(N, H * W, C)

    x, H, W = stem_conv(x, params["stem"]["w"], params["stem"]["b"], H, W)

    for blk in params["blocks"]:
        x, H, W = inverted_residual(blk, x, H, W)

    # adaptive avg pool to 1x1 + BatchNorm2d + flatten
    return pool_bn(x, params["bn"]["scale"], params["bn"]["bias"])   # (N, outplanes)


# ----------------------------- main -----------------------------

if __name__ == "__main__":
    # Small MobileNetV3-style config: (k, t, c, use_se, use_hs, s)
    CFGS = [
        [3, 1, 16, 1, 0, 2],    # non-expand block, ReLU, SE, stride 2
        [3, 4.5, 24, 0, 0, 2],  # expand block, ReLU, no SE, stride 2
        [5, 4, 24, 1, 1, 1],    # expand block, h-swish, SE, stride 1 (identity residual)
    ]

    key = jax.random.PRNGKey(0)
    kparams, kx = jax.random.split(key)
    params, outplanes = build_params(CFGS, width_mult=1.0, key=kparams)

    # input: NCHW, batch=2, 16 channels (n_map3d), 16x16 spatial
    x = jax.random.normal(kx, (2, 16, 16, 16), dtype=jnp.float32)

    fwd = jax.jit(lambda inp: mobilenetv3_forward(params, inp))
    out = jax.block_until_ready(fwd(x))
    assert out.shape == (2, outplanes), out.shape
    assert bool(jnp.all(jnp.isfinite(out)))
    print("KERNEL_OK")
</pallas_src>

<mosaic_0001>
module attributes {stable_mosaic.version = 11 : i64} {
  func.func @_stem_kernel(%arg0: i32, %arg1: memref<1x256x16xf32, #tpu.memory_space<vmem>>, %arg2: memref<9x16x16xbf16, #tpu.memory_space<vmem>>, %arg3: memref<1x16xf32, #tpu.memory_space<vmem>>, %arg4: memref<1x64x16xf32, #tpu.memory_space<vmem>>, %arg5: memref<324x16xf32, #tpu.memory_space<vmem>>, %arg6: memref<9x64x16xf32, #tpu.memory_space<vmem>>) attributes {dimension_semantics = [#tpu.dimension_semantics<parallel>], iteration_bounds = array<i64: 2>, scalar_prefetch = 0 : i64, scratch_operands = 2 : i64, tpu.core_type = #tpu.core_type<tc>, window_params = [{transform_indices = @transform_0, window_bounds = array<i64: 1, 256, 16>}, {pipeline_mode = #tpu.pipeline_mode<synchronous>, transform_indices = @transform_1, window_bounds = array<i64: 9, 16, 16>}, {pipeline_mode = #tpu.pipeline_mode<synchronous>, transform_indices = @transform_2, window_bounds = array<i64: 1, 16>}, {transform_indices = @transform_3, window_bounds = array<i64: 1, 64, 16>}]} {
    %c0 = arith.constant 0 : index
    %c0_0 = arith.constant 0 : index
    %c0_1 = arith.constant 0 : index
    %0 = vector.load %arg1[%c0, %c0_0, %c0_1] : memref<1x256x16xf32, #tpu.memory_space<vmem>>, vector<1x256x16xf32>
    %1 = vector.shape_cast %0 : vector<1x256x16xf32> to vector<256x16xf32>
    %cst = arith.constant 0.000000e+00 : f32
    %2 = vector.broadcast %cst : f32 to vector<324x16xf32>
    %c0_2 = arith.constant 0 : index
    %c0_3 = arith.constant 0 : index
    %3 = vector.load %arg5[%c0_2, %c0_3] : memref<324x16xf32, #tpu.memory_space<vmem>>, vector<324x16xf32>
    tpu.vector_store %arg5[%c0_2, %c0_3], %2 {strides = array<i32>} : memref<324x16xf32, #tpu.memory_space<vmem>>, vector<324x16xf32>,
    %4 = vector.extract_strided_slice %1 {offsets = [0, 0], sizes = [16, 16], strides = [1, 1]} : vector<256x16xf32> to vector<16x16xf32>
    %c19 = arith.constant 19 : index
    %c0_4 = arith.constant 0 : index
    %5 = vector.load %arg5[%c19, %c0_4] : memref<324x16xf32, #tpu.memory_space<vmem>>, vector<16x16xf32>
    tpu.vector_store %arg5[%c19, %c0_4], %4 {strides = array<i32>} : memref<324x16xf32, #tpu.memory_space<vmem>>, vector<16x16xf32>,
    %6 = vector.extract_strided_slice %1 {offsets = [16, 0], sizes = [16, 16], strides = [1, 1]} : vector<256x16xf32> to vector<16x16xf32>
    %c37 = arith.constant 37 : index
    %c0_5 = arith.constant 0 : index
    %7 = vector.load %arg5[%c37, %c0_5] : memref<324x16xf32, #tpu.memory_space<vmem>>, vector<16x16xf32>
    tpu.vector_store %arg5[%c37, %c0_5], %6 {strides = array<i32>} : memref<324x16xf32, #tpu.memory_space<vmem>>, vector<16x16xf32>,
    %8 = vector.extract_strided_slice %1 {offsets = [32, 0], sizes = [16, 16], strides = [1, 1]} : vector<256x16xf32> to vector<16x16xf32>
    %c55 = arith.constant 55 : index
    %c0_6 = arith.constant 0 : index
    %9 = vector.load %arg5[%c55, %c0_6] : memref<324x16xf32, #tpu.memory_space<vmem>>, vector<16x16xf32>
    tpu.vector_store %arg5[%c55, %c0_6], %8 {strides = array<i32>} : memref<324x16xf32, #tpu.memory_space<vmem>>, vector<16x16xf32>,
    %10 = vector.extract_strided_slice %1 {offsets = [48, 0], sizes = [16, 16], strides = [1, 1]} : vector<256x16xf32> to vector<16x16xf32>
    %c73 = arith.constant 73 : index
    %c0_7 = arith.constant 0 : index
    %11 = vector.load %arg5[%c73, %c0_7] : memref<324x16xf32, #tpu.memory_space<vmem>>, vector<16x16xf32>
    tpu.vector_store %arg5[%c73, %c0_7], %10 {strides = array<i32>} : memref<324x16xf32, #tpu.memory_space<vmem>>, vector<16x16xf32>,
    %12 = vector.extract_strided_slice %1 {offsets = [64, 0], sizes = [16, 16], strides = [1, 1]} : vector<256x16xf32> to vector<16x16xf32>
    %c91 = arith.constant 91 : index
    %c0_8 = arith.constant 0 : index
    %13 = vector.load %arg5[%c91, %c0_8] : memref<324x16xf32, #tpu.memory_space<vmem>>, vector<16x16xf32>
    tpu.vector_store %arg5[%c91, %c0_8], %12 {strides = array<i32>} : memref<324x16xf32, #tpu.memory_space<vmem>>, vector<16x16xf32>,
    %14 = vector.extract_strided_slice %1 {offsets = [80, 0], sizes = [16, 16], strides = [1, 1]} : vector<256x16xf32> to vector<16x16xf32>
    %c109 = arith.constant 109 : index
    %c0_9 = arith.constant 0 : index
    %15 = vector.load %arg5[%c109, %c0_9] : memref<324x16xf32, #tpu.memory_space<vmem>>, vector<16x16xf32>
    tpu.vector_store %arg5[%c109, %c0_9], %14 {strides = array<i32>} : memref<324x16xf32, #tpu.memory_space<vmem>>, vector<16x16xf32>,
    %16 = vector.extract_strided_slice %1 {offsets = [96, 0], sizes = [16, 16], strides = [1, 1]} : vector<256x16xf32> to vector<16x16xf32>
    %c127 = arith.constant 127 : index
    %c0_10 = arith.constant 0 : index
    %17 = vector.load %arg5[%c127, %c0_10] : memref<324x16xf32, #tpu.memory_space<vmem>>, vector<16x16xf32>
    tpu.vector_store %arg5[%c127, %c0_10], %16 {strides = array<i32>} : memref<324x16xf32, #tpu.memory_space<vmem>>, vector<16x16xf32>,
    %18 = vector.extract_strided_slice %1 {offsets = [112, 0], sizes = [16, 16], strides = [1, 1]} : vector<256x16xf32> to vector<16x16xf32>
    %c145 = arith.constant 145 : index
    %c0_11 = arith.constant 0 : index
    %19 = vector.load %arg5[%c145, %c0_11] : memref<324x16xf32, #tpu.memory_space<vmem>>, vector<16x16xf32>
    tpu.vector_store %arg5[%c145, %c0_11], %18 {strides = array<i32>} : memref<324x16xf32, #tpu.memory_space<vmem>>, vector<16x16xf32>,
    %20 = vector.extract_strided_slice %1 {offsets = [128, 0], sizes = [16, 16], strides = [1, 1]} : vector<256x16xf32> to vector<16x16xf32>
    %c163 = arith.constant 163 : index
    %c0_12 = arith.constant 0 : index
    %21 = vector.load %arg5[%c163, %c0_12] : memref<324x16xf32, #tpu.memory_space<vmem>>, vector<16x16xf32>
    tpu.vector_store %arg5[%c163, %c0_12], %20 {strides = array<i32>} : memref<324x16xf32, #tpu.memory_space<vmem>>, vector<16x16xf32>,
    %22 = vector.extract_strided_slice %1 {offsets = [144, 0], sizes = [16, 16], strides = [1, 1]} : vector<256x16xf32> to vector<16x16xf32>
    %c181 = arith.constant 181 : index
    %c0_13 = arith.constant 0 : index
    %23 = vector.load %arg5[%c181, %c0_13] : memref<324x16xf32, #tpu.memory_space<vmem>>, vector<16x16xf32>
    tpu.vector_store %arg5[%c181, %c0_13], %22 {strides = array<i32>} : memref<324x16xf32, #tpu.memory_space<vmem>>, vector<16x16xf32>,
    %24 = vector.extract_strided_slice %1 {offsets = [160, 0], sizes = [16, 16], strides = [1, 1]} : vector<256x16xf32> to vector<16x16xf32>
    %c199 = arith.constant 199 : index
    %c0_14 = arith.constant 0 : index
    %25 = vector.load %arg5[%c199, %c0_14] : memref<324x16xf32, #tpu.memory_space<vmem>>, vector<16x16xf32>
    tpu.vector_store %arg5[%c199, %c0_14], %24 {strides = array<i32>} : memref<324x16xf32, #tpu.memory_space<vmem>>, vector<16x16xf32>,
    %26 = vector.extract_strided_slice %1 {offsets = [176, 0], sizes = [16, 16], strides = [1, 1]} : vector<256x16xf32> to vector<16x16xf32>
    %c217 = arith.constant 217 : index
    %c0_15 = arith.constant 0 : index
    %27 = vector.load %arg5[%c217, %c0_15] : memref<324x16xf32, #tpu.memory_space<vmem>>, vector<16x16xf32>
    tpu.vector_store %arg5[%c217, %c0_15], %26 {strides = array<i32>} : memref<324x16xf32, #tpu.memory_space<vmem>>, vector<16x16xf32>,
    %28 = vector.extract_strided_slice %1 {offsets = [192, 0], sizes = [16, 16], strides = [1, 1]} : vector<256x16xf32> to vector<16x16xf32>
    %c235 = arith.constant 235 : index
    %c0_16 = arith.constant 0 : index
    %29 = vector.load %arg5[%c235, %c0_16] : memref<324x16xf32, #tpu.memory_space<vmem>>, vector<16x16xf32>
    tpu.vector_store %arg5[%c235, %c0_16], %28 {strides = array<i32>} : memref<324x16xf32, #tpu.memory_space<vmem>>, vector<16x16xf32>,
    %30 = vector.extract_strided_slice %1 {offsets = [208, 0], sizes = [16, 16], strides = [1, 1]} : vector<256x16xf32> to vector<16x16xf32>
    %c253 = arith.constant 253 : index
    %c0_17 = arith.constant 0 : index
    %31 = vector.load %arg5[%c253, %c0_17] : memref<324x16xf32, #tpu.memory_space<vmem>>, vector<16x16xf32>
    tpu.vector_store %arg5[%c253, %c0_17], %30 {strides = array<i32>} : memref<324x16xf32, #tpu.memory_space<vmem>>, vector<16x16xf32>,
    %32 = vector.extract_strided_slice %1 {offsets = [224, 0], sizes = [16, 16], strides = [1, 1]} : vector<256x16xf32> to vector<16x16xf32>
    %c271 = arith.constant 271 : index
    %c0_18 = arith.constant 0 : index
    %33 = vector.load %arg5[%c271, %c0_18] : memref<324x16xf32, #tpu.memory_space<vmem>>, vector<16x16xf32>
    tpu.vector_store %arg5[%c271, %c0_18], %32 {strides = array<i32>} : memref<324x16xf32, #tpu.memory_space<vmem>>, vector<16x16xf32>,
    %34 = vector.extract_strided_slice %1 {offsets = [240, 0], sizes = [16, 16], strides = [1, 1]} : vector<256x16xf32> to vector<16x16xf32>
    %c289 = arith.constant 289 : index
    %c0_19 = arith.constant 0 : index
    %35 = vector.load %arg5[%c289, %c0_19] : memref<324x16xf32, #tpu.memory_space<vmem>>, vector<16x16xf32>
    tpu.vector_store %arg5[%c289, %c0_19], %34 {strides = array<i32>} : memref<324x16xf32, #tpu.memory_space<vmem>>, vector<16x16xf32>,
    %c0_20 = arith.constant 0 : index
    %c0_21 = arith.constant 0 : index
    %36 = tpu.strided_load %arg5[%c0_20, %c0_21] {strides = array<i32: 2, 1>} : memref<324x16xf32, #tpu.memory_space<vmem>>, vector<8x16xf32>
    %c0_22 = arith.constant 0 : index
    %c0_23 = arith.constant 0 : index
    %c0_24 = arith.constant 0 : index
    %37 = vector.load %arg6[%c0_22, %c0_23, %c0_24] : memref<9x64x16xf32, #tpu.memory_space<vmem>>, vector<1x8x16xf32>
    %38 = vector.shape_cast %37 : vector<1x8x16xf32> to vector<8x16xf32>
    %39 = vector.shape_cast %36 : vector<8x16xf32> to vector<1x8x16xf32>
    tpu.vector_store %arg6[%c0_22, %c0_23, %c0_24], %39 {strides = array<i32>} : memref<9x64x16xf32, #tpu.memory_space<vmem>>, vector<1x8x16xf32>,
    %c36 = arith.constant 36 : index
    %c0_25 = arith.constant 0 : index
    %40 = tpu.strided_load %arg5[%c36, %c0_25] {strides = array<i32: 2, 1>} : memref<324x16xf32, #tpu.memory_space<vmem>>, vector<8x16xf32>
    %c0_26 = arith.constant 0 : index
    %c8 = arith.constant 8 : index
    %c0_27 = arith.constant 0 : index
    %41 = vector.load %arg6[%c0_26, %c8, %c0_27] : memref<9x64x16xf32, #tpu.memory_space<vmem>>, vector<1x8x16xf32>
    %42 = vector.shape_cast %41 : vector<1x8x16xf32> to vector<8x16xf32>
    %43 = vector.shape_cast %40 : vector<8x16xf32> to vector<1x8x16xf32>
    tpu.vector_store %arg6[%c0_26, %c8, %c0_27], %43 {strides = array<i32>} : memref<9x64x16xf32, #tpu.memory_space<vmem>>, vector<1x8x16xf32>,
    %c72 = arith.constant 72 : index
    %c0_28 = arith.constant 0 : index
    %44 = tpu.strided_load %arg5[%c72, %c0_28] {strides = array<i32: 2, 1>} : memref<324x16xf32, #tpu.memory_space<vmem>>, vector<8x16xf32>
    %c0_29 = arith.constant 0 : index
    %c16 = arith.constant 16 : index
    %c0_30 = arith.constant 0 : index
    %45 = vector.load %arg6[%c0_29, %c16, %c0_30] : memref<9x64x16xf32, #tpu.memory_space<vmem>>, vector<1x8x16xf32>
    %46 = vector.shape_cast %45 : vector<1x8x16xf32> to vector<8x16xf32>
    %47 = vector.shape_cast %44 : vector<8x16xf32> to vector<1x8x16xf32>
    tpu.vector_store %arg6[%c0_29, %c16, %c0_30], %47 {strides = array<i32>} : memref<9x64x16xf32, #tpu.memory_space<vmem>>, vector<1x8x16xf32>,
    %c108 = arith.constant 108 : index
    %c0_31 = arith.constant 0 : index
    %48 = tpu.strided_load %arg5[%c108, %c0_31] {strides = array<i32: 2, 1>} : memref<324x16xf32, #tpu.memory_space<vmem>>, vector<8x16xf32>
    %c0_32 = arith.constant 0 : index
    %c24 = arith.constant 24 : index
    %c0_33 = arith.constant 0 : index
    %49 = vector.load %arg6[%c0_32, %c24, %c0_33] : memref<9x64x16xf32, #tpu.memory_space<vmem>>, vector<1x8x16xf32>
    %50 = vector.shape_cast %49 : vector<1x8x16xf32> to vector<8x16xf32>
    %51 = vector.shape_cast %48 : vector<8x16xf32> to vector<1x8x16xf32>
    tpu.vector_store %arg6[%c0_32, %c24, %c0_33], %51 {strides = array<i32>} : memref<9x64x16xf32, #tpu.memory_space<vmem>>, vector<1x8x16xf32>,
    %c144 = arith.constant 144 : index
    %c0_34 = arith.constant 0 : index
    %52 = tpu.strided_load %arg5[%c144, %c0_34] {strides = array<i32: 2, 1>} : memref<324x16xf32, #tpu.memory_space<vmem>>, vector<8x16xf32>
    %c0_35 = arith.constant 0 : index
    %c32 = arith.constant 32 : index
    %c0_36 = arith.constant 0 : index
    %53 = vector.load %arg6[%c0_35, %c32, %c0_36] : memref<9x64x16xf32, #tpu.memory_space<vmem>>, vector<1x8x16xf32>
    %54 = vector.shape_cast %53 : vector<1x8x16xf32> to vector<8x16xf32>
    %55 = vector.shape_cast %52 : vector<8x16xf32> to vector<1x8x16xf32>
    tpu.vector_store %arg6[%c0_35, %c32, %c0_36], %55 {strides = array<i32>} : memref<9x64x16xf32, #tpu.memory_space<vmem>>, vector<1x8x16xf32>,
    %c180 = arith.constant 180 : index
    %c0_37 = arith.constant 0 : index
    %56 = tpu.strided_load %arg5[%c180, %c0_37] {strides = array<i32: 2, 1>} : memref<324x16xf32, #tpu.memory_space<vmem>>, vector<8x16xf32>
    %c0_38 = arith.constant 0 : index
    %c40 = arith.constant 40 : index
    %c0_39 = arith.constant 0 : index
    %57 = vector.load %arg6[%c0_38, %c40, %c0_39] : memref<9x64x16xf32, #tpu.memory_space<vmem>>, vector<1x8x16xf32>
    %58 = vector.shape_cast %57 : vector<1x8x16xf32> to vector<8x16xf32>
    %59 = vector.shape_cast %56 : vector<8x16xf32> to vector<1x8x16xf32>
    tpu.vector_store %arg6[%c0_38, %c40, %c0_39], %59 {strides = array<i32>} : memref<9x64x16xf32, #tpu.memory_space<vmem>>, vector<1x8x16xf32>,
    %c216 = arith.constant 216 : index
    %c0_40 = arith.constant 0 : index
    %60 = tpu.strided_load %arg5[%c216, %c0_40] {strides = array<i32: 2, 1>} : memref<324x16xf32, #tpu.memory_space<vmem>>, vector<8x16xf32>
    %c0_41 = arith.constant 0 : index
    %c48 = arith.constant 48 : index
    %c0_42 = arith.constant 0 : index
    %61 = vector.load %arg6[%c0_41, %c48, %c0_42] : memref<9x64x16xf32, #tpu.memory_space<vmem>>, vector<1x8x16xf32>
    %62 = vector.shape_cast %61 : vector<1x8x16xf32> to vector<8x16xf32>
    %63 = vector.shape_cast %60 : vector<8x16xf32> to vector<1x8x16xf32>
    tpu.vector_store %arg6[%c0_41, %c48, %c0_42], %63 {strides = array<i32>} : memref<9x64x16xf32, #tpu.memory_space<vmem>>, vector<1x8x16xf32>,
    %c252 = arith.constant 252 : index
    %c0_43 = arith.constant 0 : index
    %64 = tpu.strided_load %arg5[%c252, %c0_43] {strides = array<i32: 2, 1>} : memref<324x16xf32, #tpu.memory_space<vmem>>, vector<8x16xf32>
    %c0_44 = arith.constant 0 : index
    %c56 = arith.constant 56 : index
    %c0_45 = arith.constant 0 : index
    %65 = vector.load %arg6[%c0_44, %c56, %c0_45] : memref<9x64x16xf32, #tpu.memory_space<vmem>>, vector<1x8x16xf32>
    %66 = vector.shape_cast %65 : vector<1x8x16xf32> to vector<8x16xf32>
    %67 = vector.shape_cast %64 : vector<8x16xf32> to vector<1x8x16xf32>
    tpu.vector_store %arg6[%c0_44, %c56, %c0_45], %67 {strides = array<i32>} : memref<9x64x16xf32, #tpu.memory_space<vmem>>, vector<1x8x16xf32>,
    %c1 = arith.constant 1 : index
    %c0_46 = arith.constant 0 : index
    %68 = tpu.strided_load %arg5[%c1, %c0_46] {strides = array<i32: 2, 1>} : memref<324x16xf32, #tpu.memory_space<vmem>>, vector<8x16xf32>
    %c1_47 = arith.constant 1 : index
    %c0_48 = arith.constant 0 : index
    %c0_49 = arith.constant 0 : index
    %69 = vector.load %arg6[%c1_47, %c0_48, %c0_49] : memref<9x64x16xf32, #tpu.memory_space<vmem>>, vector<1x8x16xf32>
    %70 = vector.shape_cast %69 : vector<1x8x16xf32> to vector<8x16xf32>
    %71 = vector.shape_cast %68 : vector<8x16xf32> to vector<1x8x16xf32>
    tpu.vector_store %arg6[%c1_47, %c0_48, %c0_49], %71 {strides = array<i32>} : memref<9x64x16xf32, #tpu.memory_space<vmem>>, vector<1x8x16xf32>,
    %c37_50 = arith.constant 37 : index
    %c0_51 = arith.constant 0 : index
    %72 = tpu.strided_load %arg5[%c37_50, %c0_51] {strides = array<i32: 2, 1>} : memref<324x16xf32, #tpu.memory_space<vmem>>, vector<8x16xf32>
    %c1_52 = arith.constant 1 : index
    %c8_53 = arith.constant 8 : index
    %c0_54 = arith.constant 0 : index
    %73 = vector.load %arg6[%c1_52, %c8_53, %c0_54] : memref<9x64x16xf32, #tpu.memory_space<vmem>>, vector<1x8x16xf32>
    %74 = vector.shape_cast %73 : vector<1x8x16xf32> to vector<8x16xf32>
    %75 = vector.shape_cast %72 : vector<8x16xf32> to vector<1x8x16xf32>
    tpu.vector_store %arg6[%c1_52, %c8_53, %c0_54], %75 {strides = array<i32>} : memref<9x64x16xf32, #tpu.memory_space<vmem>>, vector<1x8x16xf32>,
    %c73_55 = arith.constant 73 : index
    %c0_56 = arith.constant 0 : index
    %76 = tpu.strided_load %arg5[%c73_55, %c0_56] {strides = array<i32: 2, 1>} : memref<324x16xf32, #tpu.memory_space<vmem>>, vector<8x16xf32>
    %c1_57 = arith.constant 1 : index
    %c16_58 = arith.constant 16 : index
    %c0_59 = arith.constant 0 : index
    %77 = vector.load %arg6[%c1_57, %c16_58, %c0_59] : memref<9x64x16xf32, #tpu.memory_space<vmem>>, vector<1x8x16xf32>
    %78 = vector.shape_cast %77 : vector<1x8x16xf32> to vector<8x16xf32>
    %79 = vector.shape_cast %76 : vector<8x16xf32> to vector<1x8x16xf32>
    tpu.vector_store %arg6[%c1_57, %c16_58, %c0_59], %79 {strides = array<i32>} : memref<9x64x16xf32, #tpu.memory_space<vmem>>, vector<1x8x16xf32>,
    %c109_60 = arith.constant 109 : index
    %c0_61 = arith.constant 0 : index
    %80 = tpu.strided_load %arg5[%c109_60, %c0_61] {strides = array<i32: 2, 1>} : memref<324x16xf32, #tpu.memory_space<vmem>>, vector<8x16xf32>
    %c1_62 = arith.constant 1 : index
    %c24_63 = arith.constant 24 : index
    %c0_64 = arith.constant 0 : index
    %81 = vector.load %arg6[%c1_62, %c24_63, %c0_64] : memref<9x64x16xf32, #tpu.memory_space<vmem>>, vector<1x8x16xf32>
    %82 = vector.shape_cast %81 : vector<1x8x16xf32> to vector<8x16xf32>
    %83 = vector.shape_cast %80 : vector<8x16xf32> to vector<1x8x16xf32>
    tpu.vector_store %arg6[%c1_62, %c24_63, %c0_64], %83 {strides = array<i32>} : memref<9x64x16xf32, #tpu.memory_space<vmem>>, vector<1x8x16xf32>,
    %c145_65 = arith.constant 145 : index
    %c0_66 = arith.constant 0 : index
    %84 = tpu.strided_load %arg5[%c145_65, %c0_66] {strides = array<i32: 2, 1>} : memref<324x16xf32, #tpu.memory_space<vmem>>, vector<8x16xf32>
    %c1_67 = arith.constant 1 : index
    %c32_68 = arith.constant 32 : index
    %c0_69 = arith.constant 0 : index
    %85 = vector.load %arg6[%c1_67, %c32_68, %c0_69] : memref<9x64x16xf32, #tpu.memory_space<vmem>>, vector<1x8x16xf32>
    %86 = vector.shape_cast %85 : vector<1x8x16xf32> to vector<8x16xf32>
    %87 = vector.shape_cast %84 : vector<8x16xf32> to vector<1x8x16xf32>
    tpu.vector_store %arg6[%c1_67, %c32_68, %c0_69], %87 {strides = array<i32>} : memref<9x64x16xf32, #tpu.memory_space<vmem>>, vector<1x8x16xf32>,
    %c181_70 = arith.constant 181 : index
    %c0_71 = arith.constant 0 : index
    %88 = tpu.strided_load %arg5[%c181_70, %c0_71] {strides = array<i32: 2, 1>} : memref<324x16xf32, #tpu.memory_space<vmem>>, vector<8x16xf32>
    %c1_72 = arith.constant 1 : index
    %c40_73 = arith.constant 40 : index
    %c0_74 = arith.constant 0 : index
    %89 = vector.load %arg6[%c1_72, %c40_73, %c0_74] : memref<9x64x16xf32, #tpu.memory_space<vmem>>, vector<1x8x16xf32>
    %90 = vector.shape_cast %89 : vector<1x8x16xf32> to vector<8x16xf32>
    %91 = vector.shape_cast %88 : vector<8x16xf32> to vector<1x8x16xf32>
    tpu.vector_store %arg6[%c1_72, %c40_73, %c0_74], %91 {strides = array<i32>} : memref<9x64x16xf32, #tpu.memory_space<vmem>>, vector<1x8x16xf32>,
    %c217_75 = arith.constant 217 : index
    %c0_76 = arith.constant 0 : index
    %92 = tpu.strided_load %arg5[%c217_75, %c0_76] {strides = array<i32: 2, 1>} : memref<324x16xf32, #tpu.memory_space<vmem>>, vector<8x16xf32>
    %c1_77 = arith.constant 1 : index
    %c48_78 = arith.constant 48 : index
    %c0_79 = arith.constant 0 : index
    %93 = vector.load %arg6[%c1_77, %c48_78, %c0_79] : memref<9x64x16xf32, #tpu.memory_space<vmem>>, vector<1x8x16xf32>
    %94 = vector.shape_cast %93 : vector<1x8x16xf32> to vector<8x16xf32>
    %95 = vector.shape_cast %92 : vector<8x16xf32> to vector<1x8x16xf32>
    tpu.vector_store %arg6[%c1_77, %c48_78, %c0_79], %95 {strides = array<i32>} : memref<9x64x16xf32, #tpu.memory_space<vmem>>, vector<1x8x16xf32>,
    %c253_80 = arith.constant 253 : index
    %c0_81 = arith.constant 0 : index
    %96 = tpu.strided_load %arg5[%c253_80, %c0_81] {strides = array<i32: 2, 1>} : memref<324x16xf32, #tpu.memory_space<vmem>>, vector<8x16xf32>
    %c1_82 = arith.constant 1 : index
    %c56_83 = arith.constant 56 : index
    %c0_84 = arith.constant 0 : index
    %97 = vector.load %arg6[%c1_82, %c56_83, %c0_84] : memref<9x64x16xf32, #tpu.memory_space<vmem>>, vector<1x8x16xf32>
    %98 = vector.shape_cast %97 : vector<1x8x16xf32> to vector<8x16xf32>
    %99 = vector.shape_cast %96 : vector<8x16xf32> to vector<1x8x16xf32>
    tpu.vector_store %arg6[%c1_82, %c56_83, %c0_84], %99 {strides = array<i32>} : memref<9x64x16xf32, #tpu.memory_space<vmem>>, vector<1x8x16xf32>,
    %c2 = arith.constant 2 : index
    %c0_85 = arith.constant 0 : index
    %100 = tpu.strided_load %arg5[%c2, %c0_85] {strides = array<i32: 2, 1>} : memref<324x16xf32, #tpu.memory_space<vmem>>, vector<8x16xf32>
    %c2_86 = arith.constant 2 : index
    %c0_87 = arith.constant 0 : index
    %c0_88 = arith.constant 0 : index
    %101 = vector.load %arg6[%c2_86, %c0_87, %c0_88] : memref<9x64x16xf32, #tpu.memory_space<vmem>>, vector<1x8x16xf32>
    %102 = vector.shape_cast %101 : vector<1x8x16xf32> to vector<8x16xf32>
    %103 = vector.shape_cast %100 : vector<8x16xf32> to vector<1x8x16xf32>
    tpu.vector_store %arg6[%c2_86, %c0_87, %c0_88], %103 {strides = array<i32>} : memref<9x64x16xf32, #tpu.memory_space<vmem>>, vector<1x8x16xf32>,
    %c38 = arith.constant 38 : index
    %c0_89 = arith.constant 0 : index
    %104 = tpu.strided_load %arg5[%c38, %c0_89] {strides = array<i32: 2, 1>} : memref<324x16xf32, #tpu.memory_space<vmem>>, vector<8x16xf32>
    %c2_90 = arith.constant 2 : index
    %c8_91 = arith.constant 8 : index
    %c0_92 = arith.constant 0 : index
    %105 = vector.load %arg6[%c2_90, %c8_91, %c0_92] : memref<9x64x16xf32, #tpu.memory_space<vmem>>, vector<1x8x16xf32>
    %106 = vector.shape_cast %105 : vector<1x8x16xf32> to vector<8x16xf32>
    %107 = vector.shape_cast %104 : vector<8x16xf32> to vector<1x8x16xf32>
    tpu.vector_store %arg6[%c2_90, %c8_91, %c0_92], %107 {strides = array<i32>} : memref<9x64x16xf32, #tpu.memory_space<vmem>>, vector<1x8x16xf32>,
    %c74 = arith.constant 74 : index
    %c0_93 = arith.constant 0 : index
    %108 = tpu.strided_load %arg5[%c74, %c0_93] {strides = array<i32: 2, 1>} : memref<324x16xf32, #tpu.memory_space<vmem>>, vector<8x16xf32>
    %c2_94 = arith.constant 2 : index
    %c16_95 = arith.constant 16 : index
    %c0_96 = arith.constant 0 : index
    %109 = vector.load %arg6[%c2_94, %c16_95, %c0_96] : memref<9x64x16xf32, #tpu.memory_space<vmem>>, vector<1x8x16xf32>
    %110 = vector.shape_cast %109 : vector<1x8x16xf32> to vector<8x16xf32>
    %111 = vector.shape_cast %108 : vector<8x16xf32> to vector<1x8x16xf32>
    tpu.vector_store %arg6[%c2_94, %c16_95, %c0_96], %111 {strides = array<i32>} : memref<9x64x16xf32, #tpu.memory_space<vmem>>, vector<1x8x16xf32>,
    %c110 = arith.constant 110 : index
    %c0_97 = arith.constant 0 : index
    %112 = tpu.strided_load %arg5[%c110, %c0_97] {strides = array<i32: 2, 1>} : memref<324x16xf32, #tpu.memory_space<vmem>>, vector<8x16xf32>
    %c2_98 = arith.constant 2 : index
    %c24_99 = arith.constant 24 : index
    %c0_100 = arith.constant 0 : index
    %113 = vector.load %arg6[%c2_98, %c24_99, %c0_100] : memref<9x64x16xf32, #tpu.memory_space<vmem>>, vector<1x8x16xf32>
    %114 = vector.shape_cast %113 : vector<1x8x16xf32> to vector<8x16xf32>
    %115 = vector.shape_cast %112 : vector<8x16xf32> to vector<1x8x16xf32>
    tpu.vector_store %arg6[%c2_98, %c24_99, %c0_100], %115 {strides = array<i32>} : memref<9x64x16xf32, #tpu.memory_space<vmem>>, vector<1x8x16xf32>,
    %c146 = arith.constant 146 : index
    %c0_101 = arith.constant 0 : index
    %116 = tpu.strided_load %arg5[%c146, %c0_101] {strides = array<i32: 2, 1>} : memref<324x16xf32, #tpu.memory_space<vmem>>, vector<8x16xf32>
    %c2_102 = arith.constant 2 : index
    %c32_103 = arith.constant 32 : index
    %c0_104 = arith.constant 0 : index
    %117 = vector.load %arg6[%c2_102, %c32_103, %c0_104] : memref<9x64x16xf32, #tpu.memory_space<vmem>>, vector<1x8x16xf32>
    %118 = vector.shape_cast %117 : vector<1x8x16xf32> to vector<8x16xf32>
    %119 = vector.shape_cast %116 : vector<8x16xf32> to vector<1x8x16xf32>
    tpu.vector_store %arg6[%c2_102, %c32_103, %c0_104], %119 {strides = array<i32>} : memref<9x64x16xf32, #tpu.memory_space<vmem>>, vector<1x8x16xf32>,
    %c182 = arith.constant 182 : index
    %c0_105 = arith.constant 0 : index
    %120 = tpu.strided_load %arg5[%c182, %c0_105] {strides = array<i32: 2, 1>} : memref<324x16xf32, #tpu.memory_space<vmem>>, vector<8x16xf32>
    %c2_106 = arith.constant 2 : index
    %c40_107 = arith.constant 40 : index
    %c0_108 = arith.constant 0 : index
    %121 = vector.load %arg6[%c2_106, %c40_107, %c0_108] : memref<9x64x16xf32, #tpu.memory_space<vmem>>, vector<1x8x16xf32>
    %122 = vector.shape_cast %121 : vector<1x8x16xf32> to vector<8x16xf32>
    %123 = vector.shape_cast %120 : vector<8x16xf32> to vector<1x8x16xf32>
    tpu.vector_store %arg6[%c2_106, %c40_107, %c0_108], %123 {strides = array<i32>} : memref<9x64x16xf32, #tpu.memory_space<vmem>>, vector<1x8x16xf32>,
    %c218 = arith.constant 218 : index
    %c0_109 = arith.constant 0 : index
    %124 = tpu.strided_load %arg5[%c218, %c0_109] {strides = array<i32: 2, 1>} : memref<324x16xf32, #tpu.memory_space<vmem>>, vector<8x16xf32>
    %c2_110 = arith.constant 2 : index
    %c48_111 = arith.constant 48 : index
    %c0_112 = arith.constant 0 : index
    %125 = vector.load %arg6[%c2_110, %c48_111, %c0_112] : memref<9x64x16xf32, #tpu.memory_space<vmem>>, vector<1x8x16xf32>
    %126 = vector.shape_cast %125 : vector<1x8x16xf32> to vector<8x16xf32>
    %127 = vector.shape_cast %124 : vector<8x16xf32> to vector<1x8x16xf32>
    tpu.vector_store %arg6[%c2_110, %c48_111, %c0_112], %127 {strides = array<i32>} : memref<9x64x16xf32, #tpu.memory_space<vmem>>, vector<1x8x16xf32>,
    %c254 = arith.constant 254 : index
    %c0_113 = arith.constant 0 : index
    %128 = tpu.strided_load %arg5[%c254, %c0_113] {strides = array<i32: 2, 1>} : memref<324x16xf32, #tpu.memory_space<vmem>>, vector<8x16xf32>
    %c2_114 = arith.constant 2 : index
    %c56_115 = arith.constant 56 : index
    %c0_116 = arith.constant 0 : index
    %129 = vector.load %arg6[%c2_114, %c56_115, %c0_116] : memref<9x64x16xf32, #tpu.memory_space<vmem>>, vector<1x8x16xf32>
    %130 = vector.shape_cast %129 : vector<1x8x16xf32> to vector<8x16xf32>
    %131 = vector.shape_cast %128 : vector<8x16xf32> to vector<1x8x16xf32>
    tpu.vector_store %arg6[%c2_114, %c56_115, %c0_116], %131 {strides = array<i32>} : memref<9x64x16xf32, #tpu.memory_space<vmem>>, vector<1x8x16xf32>,
    %c18 = arith.constant 18 : index
    %c0_117 = arith.constant 0 : index
    %132 = tpu.strided_load %arg5[%c18, %c0_117] {strides = array<i32: 2, 1>} : memref<324x16xf32, #tpu.memory_space<vmem>>, vector<8x16xf32>
    %c3 = arith.constant 3 : index
    %c0_118 = arith.constant 0 : index
    %c0_119 = arith.constant 0 : index
    %133 = vector.load %arg6[%c3, %c0_118, %c0_119] : memref<9x64x16xf32, #tpu.memory_space<vmem>>, vector<1x8x16xf32>
    %134 = vector.shape_cast %133 : vector<1x8x16xf32> to vector<8x16xf32>
    %135 = vector.shape_cast %132 : vector<8x16xf32> to vector<1x8x16xf32>
    tpu.vector_store %arg6[%c3, %c0_118, %c0_119], %135 {strides = array<i32>} : memref<9x64x16xf32, #tpu.memory_space<vmem>>, vector<1x8x16xf32>,
    %c54 = arith.constant 54 : index
    %c0_120 = arith.constant 0 : index
    %136 = tpu.strided_load %arg5[%c54, %c0_120] {strides = array<i32: 2, 1>} : memref<324x16xf32, #tpu.memory_space<vmem>>, vector<8x16xf32>
    %c3_121 = arith.constant 3 : index
    %c8_122 = arith.constant 8 : index
    %c0_123 = arith.constant 0 : index
    %137 = vector.load %arg6[%c3_121, %c8_122, %c0_123] : memref<9x64x16xf32, #tpu.memory_space<vmem>>, vector<1x8x16xf32>
    %138 = vector.shape_cast %137 : vector<1x8x16xf32> to vector<8x16xf32>
    %139 = vector.shape_cast %136 : vector<8x16xf32> to vector<1x8x16xf32>
    tpu.vector_store %arg6[%c3_121, %c8_122, %c0_123], %139 {strides = array<i32>} : memref<9x64x16xf32, #tpu.memory_space<vmem>>, vector<1x8x16xf32>,
    %c90 = arith.constant 90 : index
    %c0_124 = arith.constant 0 : index
    %140 = tpu.strided_load %arg5[%c90, %c0_124] {strides = array<i32: 2, 1>} : memref<324x16xf32, #tpu.memory_space<vmem>>, vector<8x16xf32>
    %c3_125 = arith.constant 3 : index
    %c16_126 = arith.constant 16 : index
    %c0_127 = arith.constant 0 : index
    %141 = vector.load %arg6[%c3_125, %c16_126, %c0_127] : memref<9x64x16xf32, #tpu.memory_space<vmem>>, vector<1x8x16xf32>
    %142 = vector.shape_cast %141 : vector<1x8x16xf32> to vector<8x16xf32>
    %143 = vector.shape_cast %140 : vector<8x16xf32> to vector<1x8x16xf32>
    tpu.vector_store %arg6[%c3_125, %c16_126, %c0_127], %143 {strides = array<i32>} : memref<9x64x16xf32, #tpu.memory_space<vmem>>, vector<1x8x16xf32>,
    %c126 = arith.constant 126 : index
    %c0_128 = arith.constant 0 : index
    %144 = tpu.strided_load %arg5[%c126, %c0_128] {strides = array<i32: 2, 1>} : memref<324x16xf32, #tpu.memory_space<vmem>>, vector<8x16xf32>
    %c3_129 = arith.constant 3 : index
    %c24_130 = arith.constant 24 : index
    %c0_131 = arith.constant 0 : index
    %145 = vector.load %arg6[%c3_129, %c24_130, %c0_131] : memref<9x64x16xf32, #tpu.memory_space<vmem>>, vector<1x8x16xf32>
    %146 = vector.shape_cast %145 : vector<1x8x16xf32> to vector<8x16xf32>
    %147 = vector.shape_cast %144 : vector<8x16xf32> to vector<1x8x16xf32>
    tpu.vector_store %arg6[%c3_129, %c24_130, %c0_131], %147 {strides = array<i32>} : memref<9x64x16xf32, #tpu.memory_space<vmem>>, vector<1x8x16xf32>,
    %c162 = arith.constant 162 : index
    %c0_132 = arith.constant 0 : index
    %148 = tpu.strided_load %arg5[%c162, %c0_132] {strides = array<i32: 2, 1>} : memref<324x16xf32, #tpu.memory_space<vmem>>, vector<8x16xf32>
    %c3_133 = arith.constant 3 : index
    %c32_134 = arith.constant 32 : index
    %c0_135 = arith.constant 0 : index
    %149 = vector.load %arg6[%c3_133, %c32_134, %c0_135] : memref<9x64x16xf32, #tpu.memory_space<vmem>>, vector<1x8x16xf32>
    %150 = vector.shape_cast %149 : vector<1x8x16xf32> to vector<8x16xf32>
    %151 = vector.shape_cast %148 : vector<8x16xf32> to vector<1x8x16xf32>
    tpu.vector_store %arg6[%c3_133, %c32_134, %c0_135], %151 {strides = array<i32>} : memref<9x64x16xf32, #tpu.memory_space<vmem>>, vector<1x8x16xf32>,
    %c198 = arith.constant 198 : index
    %c0_136 = arith.constant 0 : index
    %152 = tpu.strided_load %arg5[%c198, %c0_136] {strides = array<i32: 2, 1>} : memref<324x16xf32, #tpu.memory_space<vmem>>, vector<8x16xf32>
    %c3_137 = arith.constant 3 : index
    %c40_138 = arith.constant 40 : index
    %c0_139 = arith.constant 0 : index
    %153 = vector.load %arg6[%c3_137, %c40_138, %c0_139] : memref<9x64x16xf32, #tpu.memory_space<vmem>>, vector<1x8x16xf32>
    %154 = vector.shape_cast %153 : vector<1x8x16xf32> to vector<8x16xf32>
    %155 = vector.shape_cast %152 : vector<8x16xf32> to vector<1x8x16xf32>
    tpu.vector_store %arg6[%c3_137, %c40_138, %c0_139], %155 {strides = array<i32>} : memref<9x64x16xf32, #tpu.memory_space<vmem>>, vector<1x8x16xf32>,
    %c234 = arith.constant 234 : index
    %c0_140 = arith.constant 0 : index
    %156 = tpu.strided_load %arg5[%c234, %c0_140] {strides = array<i32: 2, 1>} : memref<324x16xf32, #tpu.memory_space<vmem>>, vector<8x16xf32>
    %c3_141 = arith.constant 3 : index
    %c48_142 = arith.constant 48 : index
    %c0_143 = arith.constant 0 : index
    %157 = vector.load %arg6[%c3_141, %c48_142, %c0_143] : memref<9x64x16xf32, #tpu.memory_space<vmem>>, vector<1x8x16xf32>
    %158 = vector.shape_cast %157 : vector<1x8x16xf32> to vector<8x16xf32>
    %159 = vector.shape_cast %156 : vector<8x16xf32> to vector<1x8x16xf32>
    tpu.vector_store %arg6[%c3_141, %c48_142, %c0_143], %159 {strides = array<i32>} : memref<9x64x16xf32, #tpu.memory_space<vmem>>, vector<1x8x16xf32>,
    %c270 = arith.constant 270 : index
    %c0_144 = arith.constant 0 : index
    %160 = tpu.strided_load %arg5[%c270, %c0_144] {strides = array<i32: 2, 1>} : memref<324x16xf32, #tpu.memory_space<vmem>>, vector<8x16xf32>
    %c3_145 = arith.constant 3 : index
    %c56_146 = arith.constant 56 : index
    %c0_147 = arith.constant 0 : index
    %161 = vector.load %arg6[%c3_145, %c56_146, %c0_147] : memref<9x64x16xf32, #tpu.memory_space<vmem>>, vector<1x8x16xf32>
    %162 = vector.shape_cast %161 : vector<1x8x16xf32> to vector<8x16xf32>
    %163 = vector.shape_cast %160 : vector<8x16xf32> to vector<1x8x16xf32>
    tpu.vector_store %arg6[%c3_145, %c56_146, %c0_147], %163 {strides = array<i32>} : memref<9x64x16xf32, #tpu.memory_space<vmem>>, vector<1x8x16xf32>,
    %c19_148 = arith.constant 19 : index
    %c0_149 = arith.constant 0 : index
    %164 = tpu.strided_load %arg5[%c19_148, %c0_149] {strides = array<i32: 2, 1>} : memref<324x16xf32, #tpu.memory_space<vmem>>, vector<8x16xf32>
    %c4 = arith.constant 4 : index
    %c0_150 = arith.constant 0 : index
    %c0_151 = arith.constant 0 : index
    %165 = vector.load %arg6[%c4, %c0_150, %c0_151] : memref<9x64x16xf32, #tpu.memory_space<vmem>>, vector<1x8x16xf32>
    %166 = vector.shape_cast %165 : vector<1x8x16xf32> to vector<8x16xf32>
    %167 = vector.shape_cast %164 : vector<8x16xf32> to vector<1x8x16xf32>
    tpu.vector_store %arg6[%c4, %c0_150, %c0_151], %167 {strides = array<i32>} : memref<9x64x16xf32, #tpu.memory_space<vmem>>, vector<1x8x16xf32>,
    %c55_152 = arith.constant 55 : index
    %c0_153 = arith.constant 0 : index
    %168 = tpu.strided_load %arg5[%c55_152, %c0_153] {strides = array<i32: 2, 1>} : memref<324x16xf32, #tpu.memory_space<vmem>>, vector<8x16xf32>
    %c4_154 = arith.constant 4 : index
    %c8_155 = arith.constant 8 : index
    %c0_156 = arith.constant 0 : index
    %169 = vector.load %arg6[%c4_154, %c8_155, %c0_156] : memref<9x64x16xf32, #tpu.memory_space<vmem>>, vector<1x8x16xf32>
    %170 = vector.shape_cast %169 : vector<1x8x16xf32> to vector<8x16xf32>
    %171 = vector.shape_cast %168 : vector<8x16xf32> to vector<1x8x16xf32>
    tpu.vector_store %arg6[%c4_154, %c8_155, %c0_156], %171 {strides = array<i32>} : memref<9x64x16xf32, #tpu.memory_space<vmem>>, vector<1x8x16xf32>,
    %c91_157 = arith.constant 91 : index
    %c0_158 = arith.constant 0 : index
    %172 = tpu.strided_load %arg5[%c91_157, %c0_158] {strides = array<i32: 2, 1>} : memref<324x16xf32, #tpu.memory_space<vmem>>, vector<8x16xf32>
    %c4_159 = arith.constant 4 : index
    %c16_160 = arith.constant 16 : index
    %c0_161 = arith.constant 0 : index
    %173 = vector.load %arg6[%c4_159, %c16_160, %c0_161] : memref<9x64x16xf32, #tpu.memory_space<vmem>>, vector<1x8x16xf32>
    %174 = vector.shape_cast %173 : vector<1x8x16xf32> to vector<8x16xf32>
    %175 = vector.shape_cast %172 : vector<8x16xf32> to vector<1x8x16xf32>
    tpu.vector_store %arg6[%c4_159, %c16_160, %c0_161], %175 {strides = array<i32>} : memref<9x64x16xf32, #tpu.memory_space<vmem>>, vector<1x8x16xf32>,
    %c127_162 = arith.constant 127 : index
    %c0_163 = arith.constant 0 : index
    %176 = tpu.strided_load %arg5[%c127_162, %c0_163] {strides = array<i32: 2, 1>} : memref<324x16xf32, #tpu.memory_space<vmem>>, vector<8x16xf32>
    %c4_164 = arith.constant 4 : index
    %c24_165 = arith.constant 24 : index
    %c0_166 = arith.constant 0 : index
    %177 = vector.load %arg6[%c4_164, %c24_165, %c0_166] : memref<9x64x16xf32, #tpu.memory_space<vmem>>, vector<1x8x16xf32>
    %178 = vector.shape_cast %177 : vector<1x8x16xf32> to vector<8x16xf32>
    %179 = vector.shape_cast %176 : vector<8x16xf32> to vector<1x8x16xf32>
    tpu.vector_store %arg6[%c4_164, %c24_165, %c0_166], %179 {strides = array<i32>} : memref<9x64x16xf32, #tpu.memory_space<vmem>>, vector<1x8x16xf32>,
    %c163_167 = arith.constant 163 : index
    %c0_168 = arith.constant 0 : index
    %180 = tpu.strided_load %arg5[%c163_167, %c0_168] {strides = array<i32: 2, 1>} : memref<324x16xf32, #tpu.memory_space<vmem>>, vector<8x16xf32>
    %c4_169 = arith.constant 4 : index
    %c32_170 = arith.constant 32 : index
    %c0_171 = arith.constant 0 : index
    %181 = vector.load %arg6[%c4_169, %c32_170, %c0_171] : memref<9x64x16xf32, #tpu.memory_space<vmem>>, vector<1x8x16xf32>
    %182 = vector.shape_cast %181 : vector<1x8x16xf32> to vector<8x16xf32>
    %183 = vector.shape_cast %180 : vector<8x16xf32> to vector<1x8x16xf32>
    tpu.vector_store %arg6[%c4_169, %c32_170, %c0_171], %183 {strides = array<i32>} : memref<9x64x16xf32, #tpu.memory_space<vmem>>, vector<1x8x16xf32>,
    %c199_172 = arith.constant 199 : index
    %c0_173 = arith.constant 0 : index
    %184 = tpu.strided_load %arg5[%c199_172, %c0_173] {strides = array<i32: 2, 1>} : memref<324x16xf32, #tpu.memory_space<vmem>>, vector<8x16xf32>
    %c4_174 = arith.constant 4 : index
    %c40_175 = arith.constant 40 : index
    %c0_176 = arith.constant 0 : index
    %185 = vector.load %arg6[%c4_174, %c40_175, %c0_176] : memref<9x64x16xf32, #tpu.memory_space<vmem>>, vector<1x8x16xf32>
    %186 = vector.shape_cast %185 : vector<1x8x16xf32> to vector<8x16xf32>
    %187 = vector.shape_cast %184 : vector<8x16xf32> to vector<1x8x16xf32>
    tpu.vector_store %arg6[%c4_174, %c40_175, %c0_176], %187 {strides = array<i32>} : memref<9x64x16xf32, #tpu.memory_space<vmem>>, vector<1x8x16xf32>,
    %c235_177 = arith.constant 235 : index
    %c0_178 = arith.constant 0 : index
    %188 = tpu.strided_load %arg5[%c235_177, %c0_178] {strides = array<i32: 2, 1>} : memref<324x16xf32, #tpu.memory_space<vmem>>, vector<8x16xf32>
    %c4_179 = arith.constant 4 : index
    %c48_180 = arith.constant 48 : index
    %c0_181 = arith.constant 0 : index
    %189 = vector.load %arg6[%c4_179, %c48_180, %c0_181] : memref<9x64x16xf32, #tpu.memory_space<vmem>>, vector<1x8x16xf32>
    %190 = vector.shape_cast %189 : vector<1x8x16xf32> to vector<8x16xf32>
    %191 = vector.shape_cast %188 : vector<8x16xf32> to vector<1x8x16xf32>
    tpu.vector_store %arg6[%c4_179, %c48_180, %c0_181], %191 {strides = array<i32>} : memref<9x64x16xf32, #tpu.memory_space<vmem>>, vector<1x8x16xf32>,
    %c271_182 = arith.constant 271 : index
    %c0_183 = arith.constant 0 : index
    %192 = tpu.strided_load %arg5[%c271_182, %c0_183] {strides = array<i32: 2, 1>} : memref<324x16xf32, #tpu.memory_space<vmem>>, vector<8x16xf32>
    %c4_184 = arith.constant 4 : index
    %c56_185 = arith.constant 56 : index
    %c0_186 = arith.constant 0 : index
    %193 = vector.load %arg6[%c4_184, %c56_185, %c0_186] : memref<9x64x16xf32, #tpu.memory_space<vmem>>, vector<1x8x16xf32>
    %194 = vector.shape_cast %193 : vector<1x8x16xf32> to vector<8x16xf32>
    %195 = vector.shape_cast %192 : vector<8x16xf32> to vector<1x8x16xf32>
    tpu.vector_store %arg6[%c4_184, %c56_185, %c0_186], %195 {strides = array<i32>} : memref<9x64x16xf32, #tpu.memory_space<vmem>>, vector<1x8x16xf32>,
    %c20 = arith.constant 20 : index
    %c0_187 = arith.constant 0 : index
    %196 = tpu.strided_load %arg5[%c20, %c0_187] {strides = array<i32: 2, 1>} : memref<324x16xf32, #tpu.memory_space<vmem>>, vector<8x16xf32>
    %c5 = arith.constant 5 : index
    %c0_188 = arith.constant 0 : index
    %c0_189 = arith.constant 0 : index
    %197 = vector.load %arg6[%c5, %c0_188, %c0_189] : memref<9x64x16xf32, #tpu.memory_space<vmem>>, vector<1x8x16xf32>
    %198 = vector.shape_cast %197 : vector<1x8x16xf32> to vector<8x16xf32>
    %199 = vector.shape_cast %196 : vector<8x16xf32> to vector<1x8x16xf32>
    tpu.vector_store %arg6[%c5, %c0_188, %c0_189], %199 {strides = array<i32>} : memref<9x64x16xf32, #tpu.memory_space<vmem>>, vector<1x8x16xf32>,
    %c56_190 = arith.constant 56 : index
    %c0_191 = arith.constant 0 : index
    %200 = tpu.strided_load %arg5[%c56_190, %c0_191] {strides = array<i32: 2, 1>} : memref<324x16xf32, #tpu.memory_space<vmem>>, vector<8x16xf32>
    %c5_192 = arith.constant 5 : index
    %c8_193 = arith.constant 8 : index
    %c0_194 = arith.constant 0 : index
    %201 = vector.load %arg6[%c5_192, %c8_193, %c0_194] : memref<9x64x16xf32, #tpu.memory_space<vmem>>, vector<1x8x16xf32>
    %202 = vector.shape_cast %201 : vector<1x8x16xf32> to vector<8x16xf32>
    %203 = vector.shape_cast %200 : vector<8x16xf32> to vector<1x8x16xf32>
    tpu.vector_store %arg6[%c5_192, %c8_193, %c0_194], %203 {strides = array<i32>} : memref<9x64x16xf32, #tpu.memory_space<vmem>>, vector<1x8x16xf32>,
    %c92 = arith.constant 92 : index
    %c0_195 = arith.constant 0 : index
    %204 = tpu.strided_load %arg5[%c92, %c0_195] {strides = array<i32: 2, 1>} : memref<324x16xf32, #tpu.memory_space<vmem>>, vector<8x16xf32>
    %c5_196 = arith.constant 5 : index
    %c16_197 = arith.constant 16 : index
    %c0_198 = arith.constant 0 : index
    %205 = vector.load %arg6[%c5_196, %c16_197, %c0_198] : memref<9x64x16xf32, #tpu.memory_space<vmem>>, vector<1x8x16xf32>
    %206 = vector.shape_cast %205 : vector<1x8x16xf32> to vector<8x16xf32>
    %207 = vector.shape_cast %204 : vector<8x16xf32> to vector<1x8x16xf32>
    tpu.vector_store %arg6[%c5_196, %c16_197, %c0_198], %207 {strides = array<i32>} : memref<9x64x16xf32, #tpu.memory_space<vmem>>, vector<1x8x16xf32>,
    %c128 = arith.constant 128 : index
    %c0_199 = arith.constant 0 : index
    %208 = tpu.strided_load %arg5[%c128, %c0_199] {strides = array<i32: 2, 1>} : memref<324x16xf32, #tpu.memory_space<vmem>>, vector<8x16xf32>
    %c5_200 = arith.constant 5 : index
    %c24_201 = arith.constant 24 : index
    %c0_202 = arith.constant 0 : index
    %209 = vector.load %arg6[%c5_200, %c24_201, %c0_202] : memref<9x64x16xf32, #tpu.memory_space<vmem>>, vector<1x8x16xf32>
    %210 = vector.shape_cast %209 : vector<1x8x16xf32> to vector<8x16xf32>
    %211 = vector.shape_cast %208 : vector<8x16xf32> to vector<1x8x16xf32>
    tpu.vector_store %arg6[%c5_200, %c24_201, %c0_202], %211 {strides = array<i32>} : memref<9x64x16xf32, #tpu.memory_space<vmem>>, vector<1x8x16xf32>,
    %c164 = arith.constant 164 : index
    %c0_203 = arith.constant 0 : index
    %212 = tpu.strided_load %arg5[%c164, %c0_203] {strides = array<i32: 2, 1>} : memref<324x16xf32, #tpu.memory_space<vmem>>, vector<8x16xf32>
    %c5_204 = arith.constant 5 : index
    %c32_205 = arith.constant 32 : index
    %c0_206 = arith.constant 0 : index
    %213 = vector.load %arg6[%c5_204, %c32_205, %c0_206] : memref<9x64x16xf32, #tpu.memory_space<vmem>>, vector<1x8x16xf32>
    %214 = vector.shape_cast %213 : vector<1x8x16xf32> to vector<8x16xf32>
    %215 = vector.shape_cast %212 : vector<8x16xf32> to vector<1x8x16xf32>
    tpu.vector_store %arg6[%c5_204, %c32_205, %c0_206], %215 {strides = array<i32>} : memref<9x64x16xf32, #tpu.memory_space<vmem>>, vector<1x8x16xf32>,
    %c200 = arith.constant 200 : index
    %c0_207 = arith.constant 0 : index
    %216 = tpu.strided_load %arg5[%c200, %c0_207] {strides = array<i32: 2, 1>} : memref<324x16xf32, #tpu.memory_space<vmem>>, vector<8x16xf32>
    %c5_208 = arith.constant 5 : index
    %c40_209 = arith.constant 40 : index
    %c0_210 = arith.constant 0 : index
    %217 = vector.load %arg6[%c5_208, %c40_209, %c0_210] : memref<9x64x16xf32, #tpu.memory_space<vmem>>, vector<1x8x16xf32>
    %218 = vector.shape_cast %217 : vector<1x8x16xf32> to vector<8x16xf32>
    %219 = vector.shape_cast %216 : vector<8x16xf32> to vector<1x8x16xf32>
    tpu.vector_store %arg6[%c5_208, %c40_209, %c0_210], %219 {strides = array<i32>} : memref<9x64x16xf32, #tpu.memory_space<vmem>>, vector<1x8x16xf32>,
    %c236 = arith.constant 236 : index
    %c0_211 = arith.constant 0 : index
    %220 = tpu.strided_load %arg5[%c236, %c0_211] {strides = array<i32: 2, 1>} : memref<324x16xf32, #tpu.memory_space<vmem>>, vector<8x16xf32>
    %c5_212 = arith.constant 5 : index
    %c48_213 = arith.constant 48 : index
    %c0_214 = arith.constant 0 : index
    %221 = vector.load %arg6[%c5_212, %c48_213, %c0_214] : memref<9x64x16xf32, #tpu.memory_space<vmem>>, vector<1x8x16xf32>
    %222 = vector.shape_cast %221 : vector<1x8x16xf32> to vector<8x16xf32>
    %223 = vector.shape_cast %220 : vector<8x16xf32> to vector<1x8x16xf32>
    tpu.vector_store %arg6[%c5_212, %c48_213, %c0_214], %223 {strides = array<i32>} : memref<9x64x16xf32, #tpu.memory_space<vmem>>, vector<1x8x16xf32>,
    %c272 = arith.constant 272 : index
    %c0_215 = arith.constant 0 : index
    %224 = tpu.strided_load %arg5[%c272, %c0_215] {strides = array<i32: 2, 1>} : memref<324x16xf32, #tpu.memory_space<vmem>>, vector<8x16xf32>
    %c5_216 = arith.constant 5 : index
    %c56_217 = arith.constant 56 : index
    %c0_218 = arith.constant 0 : index
    %225 = vector.load %arg6[%c5_216, %c56_217, %c0_218] : memref<9x64x16xf32, #tpu.memory_space<vmem>>, vector<1x8x16xf32>
    %226 = vector.shape_cast %225 : vector<1x8x16xf32> to vector<8x16xf32>
    %227 = vector.shape_cast %224 : vector<8x16xf32> to vector<1x8x16xf32>
    tpu.vector_store %arg6[%c5_216, %c56_217, %c0_218], %227 {strides = array<i32>} : memref<9x64x16xf32, #tpu.memory_space<vmem>>, vector<1x8x16xf32>,
    %c36_219 = arith.constant 36 : index
    %c0_220 = arith.constant 0 : index
    %228 = tpu.strided_load %arg5[%c36_219, %c0_220] {strides = array<i32: 2, 1>} : memref<324x16xf32, #tpu.memory_space<vmem>>, vector<8x16xf32>
    %c6 = arith.constant 6 : index
    %c0_221 = arith.constant 0 : index
    %c0_222 = arith.constant 0 : index
    %229 = vector.load %arg6[%c6, %c0_221, %c0_222] : memref<9x64x16xf32, #tpu.memory_space<vmem>>, vector<1x8x16xf32>
    %230 = vector.shape_cast %229 : vector<1x8x16xf32> to vector<8x16xf32>
    %231 = vector.shape_cast %228 : vector<8x16xf32> to vector<1x8x16xf32>
    tpu.vector_store %arg6[%c6, %c0_221, %c0_222], %231 {strides = array<i32>} : memref<9x64x16xf32, #tpu.memory_space<vmem>>, vector<1x8x16xf32>,
    %c72_223 = arith.constant 72 : index
    %c0_224 = arith.constant 0 : index
    %232 = tpu.strided_load %arg5[%c72_223, %c0_224] {strides = array<i32: 2, 1>} : memref<324x16xf32, #tpu.memory_space<vmem>>, vector<8x16xf32>
    %c6_225 = arith.constant 6 : index
    %c8_226 = arith.constant 8 : index
    %c0_227 = arith.constant 0 : index
    %233 = vector.load %arg6[%c6_225, %c8_226, %c0_227] : memref<9x64x16xf32, #tpu.memory_space<vmem>>, vector<1x8x16xf32>
    %234 = vector.shape_cast %233 : vector<1x8x16xf32> to vector<8x16xf32>
    %235 = vector.shape_cast %232 : vector<8x16xf32> to vector<1x8x16xf32>
    tpu.vector_store %arg6[%c6_225, %c8_226, %c0_227], %235 {strides = array<i32>} : memref<9x64x16xf32, #tpu.memory_space<vmem>>, vector<1x8x16xf32>,
    %c108_228 = arith.constant 108 : index
    %c0_229 = arith.constant 0 : index
    %236 = tpu.strided_load %arg5[%c108_228, %c0_229] {strides = array<i32: 2, 1>} : memref<324x16xf32, #tpu.memory_space<vmem>>, vector<8x16xf32>
    %c6_230 = arith.constant 6 : index
    %c16_231 = arith.constant 16 : index
    %c0_232 = arith.constant 0 : index
    %237 = vector.load %arg6[%c6_230, %c16_231, %c0_232] : memref<9x64x16xf32, #tpu.memory_space<vmem>>, vector<1x8x16xf32>
    %238 = vector.shape_cast %237 : vector<1x8x16xf32> to vector<8x16xf32>
    %239 = vector.shape_cast %236 : vector<8x16xf32> to vector<1x8x16xf32>
    tpu.vector_store %arg6[%c6_230, %c16_231, %c0_232], %239 {strides = array<i32>} : memref<9x64x16xf32, #tpu.memory_space<vmem>>, vector<1x8x16xf32>,
    %c144_233 = arith.constant 144 : index
    %c0_234 = arith.constant 0 : index
    %240 = tpu.strided_load %arg5[%c144_233, %c0_234] {strides = array<i32: 2, 1>} : memref<324x16xf32, #tpu.memory_space<vmem>>, vector<8x16xf32>
    %c6_235 = arith.constant 6 : index
    %c24_236 = arith.constant 24 : index
    %c0_237 = arith.constant 0 : index
    %241 = vector.load %arg6[%c6_235, %c24_236, %c0_237] : memref<9x64x16xf32, #tpu.memory_space<vmem>>, vector<1x8x16xf32>
    %242 = vector.shape_cast %241 : vector<1x8x16xf32> to vector<8x16xf32>
    %243 = vector.shape_cast %240 : vector<8x16xf32> to vector<1x8x16xf32>
    tpu.vector_store %arg6[%c6_235, %c24_236, %c0_237], %243 {strides = array<i32>} : memref<9x64x16xf32, #tpu.memory_space<vmem>>, vector<1x8x16xf32>,
    %c180_238 = arith.constant 180 : index
    %c0_239 = arith.constant 0 : index
    %244 = tpu.strided_load %arg5[%c180_238, %c0_239] {strides = array<i32: 2, 1>} : memref<324x16xf32, #tpu.memory_space<vmem>>, vector<8x16xf32>
    %c6_240 = arith.constant 6 : index
    %c32_241 = arith.constant 32 : index
    %c0_242 = arith.constant 0 : index
    %245 = vector.load %arg6[%c6_240, %c32_241, %c0_242] : memref<9x64x16xf32, #tpu.memory_space<vmem>>, vector<1x8x16xf32>
    %246 = vector.shape_cast %245 : vector<1x8x16xf32> to vector<8x16xf32>
    %247 = vector.shape_cast %244 : vector<8x16xf32> to vector<1x8x16xf32>
    tpu.vector_store %arg6[%c6_240, %c32_241, %c0_242], %247 {strides = array<i32>} : memref<9x64x16xf32, #tpu.memory_space<vmem>>, vector<1x8x16xf32>,
    %c216_243 = arith.constant 216 : index
    %c0_244 = arith.constant 0 : index
    %248 = tpu.strided_load %arg5[%c216_243, %c0_244] {strides = array<i32: 2, 1>} : memref<324x16xf32, #tpu.memory_space<vmem>>, vector<8x16xf32>
    %c6_245 = arith.constant 6 : index
    %c40_246 = arith.constant 40 : index
    %c0_247 = arith.constant 0 : index
    %249 = vector.load %arg6[%c6_245, %c40_246, %c0_247] : memref<9x64x16xf32, #tpu.memory_space<vmem>>, vector<1x8x16xf32>
    %250 = vector.shape_cast %249 : vector<1x8x16xf32> to vector<8x16xf32>
    %251 = vector.shape_cast %248 : vector<8x16xf32> to vector<1x8x16xf32>
    tpu.vector_store %arg6[%c6_245, %c40_246, %c0_247], %251 {strides = array<i32>} : memref<9x64x16xf32, #tpu.memory_space<vmem>>, vector<1x8x16xf32>,
    %c252_248 = arith.constant 252 : index
    %c0_249 = arith.constant 0 : index
    %252 = tpu.strided_load %arg5[%c252_248, %c0_249] {strides = array<i32: 2, 1>} : memref<324x16xf32, #tpu.memory_space<vmem>>, vector<8x16xf32>
    %c6_250 = arith.constant 6 : index
    %c48_251 = arith.constant 48 : index
    %c0_252 = arith.constant 0 : index
    %253 = vector.load %arg6[%c6_250, %c48_251, %c0_252] : memref<9x64x16xf32, #tpu.memory_space<vmem>>, vector<1x8x16xf32>
    %254 = vector.shape_cast %253 : vector<1x8x16xf32> to vector<8x16xf32>
    %255 = vector.shape_cast %252 : vector<8x16xf32> to vector<1x8x16xf32>
    tpu.vector_store %arg6[%c6_250, %c48_251, %c0_252], %255 {strides = array<i32>} : memref<9x64x16xf32, #tpu.memory_space<vmem>>, vector<1x8x16xf32>,
    %c288 = arith.constant 288 : index
    %c0_253 = arith.constant 0 : index
    %256 = tpu.strided_load %arg5[%c288, %c0_253] {strides = array<i32: 2, 1>} : memref<324x16xf32, #tpu.memory_space<vmem>>, vector<8x16xf32>
    %c6_254 = arith.constant 6 : index
    %c56_255 = arith.constant 56 : index
    %c0_256 = arith.constant 0 : index
    %257 = vector.load %arg6[%c6_254, %c56_255, %c0_256] : memref<9x64x16xf32, #tpu.memory_space<vmem>>, vector<1x8x16xf32>
    %258 = vector.shape_cast %257 : vector<1x8x16xf32> to vector<8x16xf32>
    %259 = vector.shape_cast %256 : vector<8x16xf32> to vector<1x8x16xf32>
    tpu.vector_store %arg6[%c6_254, %c56_255, %c0_256], %259 {strides = array<i32>} : memref<9x64x16xf32, #tpu.memory_space<vmem>>, vector<1x8x16xf32>,
    %c37_257 = arith.constant 37 : index
    %c0_258 = arith.constant 0 : index
    %260 = tpu.strided_load %arg5[%c37_257, %c0_258] {strides = array<i32: 2, 1>} : memref<324x16xf32, #tpu.memory_space<vmem>>, vector<8x16xf32>
    %c7 = arith.constant 7 : index
    %c0_259 = arith.constant 0 : index
    %c0_260 = arith.constant 0 : index
    %261 = vector.load %arg6[%c7, %c0_259, %c0_260] : memref<9x64x16xf32, #tpu.memory_space<vmem>>, vector<1x8x16xf32>
    %262 = vector.shape_cast %261 : vector<1x8x16xf32> to vector<8x16xf32>
    %263 = vector.shape_cast %260 : vector<8x16xf32> to vector<1x8x16xf32>
    tpu.vector_store %arg6[%c7, %c0_259, %c0_260], %263 {strides = array<i32>} : memref<9x64x16xf32, #tpu.memory_space<vmem>>, vector<1x8x16xf32>,
    %c73_261 = arith.constant 73 : index
    %c0_262 = arith.constant 0 : index
    %264 = tpu.strided_load %arg5[%c73_261, %c0_262] {strides = array<i32: 2, 1>} : memref<324x16xf32, #tpu.memory_space<vmem>>, vector<8x16xf32>
    %c7_263 = arith.constant 7 : index
    %c8_264 = arith.constant 8 : index
    %c0_265 = arith.constant 0 : index
    %265 = vector.load %arg6[%c7_263, %c8_264, %c0_265] : memref<9x64x16xf32, #tpu.memory_space<vmem>>, vector<1x8x16xf32>
    %266 = vector.shape_cast %265 : vector<1x8x16xf32> to vector<8x16xf32>
    %267 = vector.shape_cast %264 : vector<8x16xf32> to vector<1x8x16xf32>
    tpu.vector_store %arg6[%c7_263, %c8_264, %c0_265], %267 {strides = array<i32>} : memref<9x64x16xf32, #tpu.memory_space<vmem>>, vector<1x8x16xf32>,
    %c109_266 = arith.constant 109 : index
    %c0_267 = arith.constant 0 : index
    %268 = tpu.strided_load %arg5[%c109_266, %c0_267] {strides = array<i32: 2, 1>} : memref<324x16xf32, #tpu.memory_space<vmem>>, vector<8x16xf32>
    %c7_268 = arith.constant 7 : index
    %c16_269 = arith.constant 16 : index
    %c0_270 = arith.constant 0 : index
    %269 = vector.load %arg6[%c7_268, %c16_269, %c0_270] : memref<9x64x16xf32, #tpu.memory_space<vmem>>, vector<1x8x16xf32>
    %270 = vector.shape_cast %269 : vector<1x8x16xf32> to vector<8x16xf32>
    %271 = vector.shape_cast %268 : vector<8x16xf32> to vector<1x8x16xf32>
    tpu.vector_store %arg6[%c7_268, %c16_269, %c0_270], %271 {strides = array<i32>} : memref<9x64x16xf32, #tpu.memory_space<vmem>>, vector<1x8x16xf32>,
    %c145_271 = arith.constant 145 : index
    %c0_272 = arith.constant 0 : index
    %272 = tpu.strided_load %arg5[%c145_271, %c0_272] {strides = array<i32: 2, 1>} : memref<324x16xf32, #tpu.memory_space<vmem>>, vector<8x16xf32>
    %c7_273 = arith.constant 7 : index
    %c24_274 = arith.constant 24 : index
    %c0_275 = arith.constant 0 : index
    %273 = vector.load %arg6[%c7_273, %c24_274, %c0_275] : memref<9x64x16xf32, #tpu.memory_space<vmem>>, vector<1x8x16xf32>
    %274 = vector.shape_cast %273 : vector<1x8x16xf32> to vector<8x16xf32>
    %275 = vector.shape_cast %272 : vector<8x16xf32> to vector<1x8x16xf32>
    tpu.vector_store %arg6[%c7_273, %c24_274, %c0_275], %275 {strides = array<i32>} : memref<9x64x16xf32, #tpu.memory_space<vmem>>, vector<1x8x16xf32>,
    %c181_276 = arith.constant 181 : index
    %c0_277 = arith.constant 0 : index
    %276 = tpu.strided_load %arg5[%c181_276, %c0_277] {strides = array<i32: 2, 1>} : memref<324x16xf32, #tpu.memory_space<vmem>>, vector<8x16xf32>
    %c7_278 = arith.constant 7 : index
    %c32_279 = arith.constant 32 : index
    %c0_280 = arith.constant 0 : index
    %277 = vector.load %arg6[%c7_278, %c32_279, %c0_280] : memref<9x64x16xf32, #tpu.memory_space<vmem>>, vector<1x8x16xf32>
    %278 = vector.shape_cast %277 : vector<1x8x16xf32> to vector<8x16xf32>
    %279 = vector.shape_cast %276 : vector<8x16xf32> to vector<1x8x16xf32>
    tpu.vector_store %arg6[%c7_278, %c32_279, %c0_280], %279 {strides = array<i32>} : memref<9x64x16xf32, #tpu.memory_space<vmem>>, vector<1x8x16xf32>,
    %c217_281 = arith.constant 217 : index
    %c0_282 = arith.constant 0 : index
    %280 = tpu.strided_load %arg5[%c217_281, %c0_282] {strides = array<i32: 2, 1>} : memref<324x16xf32, #tpu.memory_space<vmem>>, vector<8x16xf32>
    %c7_283 = arith.constant 7 : index
    %c40_284 = arith.constant 40 : index
    %c0_285 = arith.constant 0 : index
    %281 = vector.load %arg6[%c7_283, %c40_284, %c0_285] : memref<9x64x16xf32, #tpu.memory_space<vmem>>, vector<1x8x16xf32>
    %282 = vector.shape_cast %281 : vector<1x8x16xf32> to vector<8x16xf32>
    %283 = vector.shape_cast %280 : vector<8x16xf32> to vector<1x8x16xf32>
    tpu.vector_store %arg6[%c7_283, %c40_284, %c0_285], %283 {strides = array<i32>} : memref<9x64x16xf32, #tpu.memory_space<vmem>>, vector<1x8x16xf32>,
    %c253_286 = arith.constant 253 : index
    %c0_287 = arith.constant 0 : index
    %284 = tpu.strided_load %arg5[%c253_286, %c0_287] {strides = array<i32: 2, 1>} : memref<324x16xf32, #tpu.memory_space<vmem>>, vector<8x16xf32>
    %c7_288 = arith.constant 7 : index
    %c48_289 = arith.constant 48 : index
    %c0_290 = arith.constant 0 : index
    %285 = vector.load %arg6[%c7_288, %c48_289, %c0_290] : memref<9x64x16xf32, #tpu.memory_space<vmem>>, vector<1x8x16xf32>
    %286 = vector.shape_cast %285 : vector<1x8x16xf32> to vector<8x16xf32>
    %287 = vector.shape_cast %284 : vector<8x16xf32> to vector<1x8x16xf32>
    tpu.vector_store %arg6[%c7_288, %c48_289, %c0_290], %287 {strides = array<i32>} : memref<9x64x16xf32, #tpu.memory_space<vmem>>, vector<1x8x16xf32>,
    %c289_291 = arith.constant 289 : index
    %c0_292 = arith.constant 0 : index
    %288 = tpu.strided_load %arg5[%c289_291, %c0_292] {strides = array<i32: 2, 1>} : memref<324x16xf32, #tpu.memory_space<vmem>>, vector<8x16xf32>
    %c7_293 = arith.constant 7 : index
    %c56_294 = arith.constant 56 : index
    %c0_295 = arith.constant 0 : index
    %289 = vector.load %arg6[%c7_293, %c56_294, %c0_295] : memref<9x64x16xf32, #tpu.memory_space<vmem>>, vector<1x8x16xf32>
    %290 = vector.shape_cast %289 : vector<1x8x16xf32> to vector<8x16xf32>
    %291 = vector.shape_cast %288 : vector<8x16xf32> to vector<1x8x16xf32>
    tpu.vector_store %arg6[%c7_293, %c56_294, %c0_295], %291 {strides = array<i32>} : memref<9x64x16xf32, #tpu.memory_space<vmem>>, vector<1x8x16xf32>,
    %c38_296 = arith.constant 38 : index
    %c0_297 = arith.constant 0 : index
    %292 = tpu.strided_load %arg5[%c38_296, %c0_297] {strides = array<i32: 2, 1>} : memref<324x16xf32, #tpu.memory_space<vmem>>, vector<8x16xf32>
    %c8_298 = arith.constant 8 : index
    %c0_299 = arith.constant 0 : index
    %c0_300 = arith.constant 0 : index
    %293 = vector.load %arg6[%c8_298, %c0_299, %c0_300] : memref<9x64x16xf32, #tpu.memory_space<vmem>>, vector<1x8x16xf32>
    %294 = vector.shape_cast %293 : vector<1x8x16xf32> to vector<8x16xf32>
    %295 = vector.shape_cast %292 : vector<8x16xf32> to vector<1x8x16xf32>
    tpu.vector_store %arg6[%c8_298, %c0_299, %c0_300], %295 {strides = array<i32>} : memref<9x64x16xf32, #tpu.memory_space<vmem>>, vector<1x8x16xf32>,
    %c74_301 = arith.constant 74 : index
    %c0_302 = arith.constant 0 : index
    %296 = tpu.strided_load %arg5[%c74_301, %c0_302] {strides = array<i32: 2, 1>} : memref<324x16xf32, #tpu.memory_space<vmem>>, vector<8x16xf32>
    %c8_303 = arith.constant 8 : index
    %c8_304 = arith.constant 8 : index
    %c0_305 = arith.constant 0 : index
    %297 = vector.load %arg6[%c8_303, %c8_304, %c0_305] : memref<9x64x16xf32, #tpu.memory_space<vmem>>, vector<1x8x16xf32>
    %298 = vector.shape_cast %297 : vector<1x8x16xf32> to vector<8x16xf32>
    %299 = vector.shape_cast %296 : vector<8x16xf32> to vector<1x8x16xf32>
    tpu.vector_store %arg6[%c8_303, %c8_304, %c0_305], %299 {strides = array<i32>} : memref<9x64x16xf32, #tpu.memory_space<vmem>>, vector<1x8x16xf32>,
    %c110_306 = arith.constant 110 : index
    %c0_307 = arith.constant 0 : index
    %300 = tpu.strided_load %arg5[%c110_306, %c0_307] {strides = array<i32: 2, 1>} : memref<324x16xf32, #tpu.memory_space<vmem>>, vector<8x16xf32>
    %c8_308 = arith.constant 8 : index
    %c16_309 = arith.constant 16 : index
    %c0_310 = arith.constant 0 : index
    %301 = vector.load %arg6[%c8_308, %c16_309, %c0_310] : memref<9x64x16xf32, #tpu.memory_space<vmem>>, vector<1x8x16xf32>
    %302 = vector.shape_cast %301 : vector<1x8x16xf32> to vector<8x16xf32>
    %303 = vector.shape_cast %300 : vector<8x16xf32> to vector<1x8x16xf32>
    tpu.vector_store %arg6[%c8_308, %c16_309, %c0_310], %303 {strides = array<i32>} : memref<9x64x16xf32, #tpu.memory_space<vmem>>, vector<1x8x16xf32>,
    %c146_311 = arith.constant 146 : index
    %c0_312 = arith.constant 0 : index
    %304 = tpu.strided_load %arg5[%c146_311, %c0_312] {strides = array<i32: 2, 1>} : memref<324x16xf32, #tpu.memory_space<vmem>>, vector<8x16xf32>
    %c8_313 = arith.constant 8 : index
    %c24_314 = arith.constant 24 : index
    %c0_315 = arith.constant 0 : index
    %305 = vector.load %arg6[%c8_313, %c24_314, %c0_315] : memref<9x64x16xf32, #tpu.memory_space<vmem>>, vector<1x8x16xf32>
    %306 = vector.shape_cast %305 : vector<1x8x16xf32> to vector<8x16xf32>
    %307 = vector.shape_cast %304 : vector<8x16xf32> to vector<1x8x16xf32>
    tpu.vector_store %arg6[%c8_313, %c24_314, %c0_315], %307 {strides = array<i32>} : memref<9x64x16xf32, #tpu.memory_space<vmem>>, vector<1x8x16xf32>,
    %c182_316 = arith.constant 182 : index
    %c0_317 = arith.constant 0 : index
    %308 = tpu.strided_load %arg5[%c182_316, %c0_317] {strides = array<i32: 2, 1>} : memref<324x16xf32, #tpu.memory_space<vmem>>, vector<8x16xf32>
    %c8_318 = arith.constant 8 : index
    %c32_319 = arith.constant 32 : index
    %c0_320 = arith.constant 0 : index
    %309 = vector.load %arg6[%c8_318, %c32_319, %c0_320] : memref<9x64x16xf32, #tpu.memory_space<vmem>>, vector<1x8x16xf32>
    %310 = vector.shape_cast %309 : vector<1x8x16xf32> to vector<8x16xf32>
    %311 = vector.shape_cast %308 : vector<8x16xf32> to vector<1x8x16xf32>
    tpu.vector_store %arg6[%c8_318, %c32_319, %c0_320], %311 {strides = array<i32>} : memref<9x64x16xf32, #tpu.memory_space<vmem>>, vector<1x8x16xf32>,
    %c218_321 = arith.constant 218 : index
    %c0_322 = arith.constant 0 : index
    %312 = tpu.strided_load %arg5[%c218_321, %c0_322] {strides = array<i32: 2, 1>} : memref<324x16xf32, #tpu.memory_space<vmem>>, vector<8x16xf32>
    %c8_323 = arith.constant 8 : index
    %c40_324 = arith.constant 40 : index
    %c0_325 = arith.constant 0 : index
    %313 = vector.load %arg6[%c8_323, %c40_324, %c0_325] : memref<9x64x16xf32, #tpu.memory_space<vmem>>, vector<1x8x16xf32>
    %314 = vector.shape_cast %313 : vector<1x8x16xf32> to vector<8x16xf32>
    %315 = vector.shape_cast %312 : vector<8x16xf32> to vector<1x8x16xf32>
    tpu.vector_store %arg6[%c8_323, %c40_324, %c0_325], %315 {strides = array<i32>} : memref<9x64x16xf32, #tpu.memory_space<vmem>>, vector<1x8x16xf32>,
    %c254_326 = arith.constant 254 : index
    %c0_327 = arith.constant 0 : index
    %316 = tpu.strided_load %arg5[%c254_326, %c0_327] {strides = array<i32: 2, 1>} : memref<324x16xf32, #tpu.memory_space<vmem>>, vector<8x16xf32>
    %c8_328 = arith.constant 8 : index
    %c48_329 = arith.constant 48 : index
    %c0_330 = arith.constant 0 : index
    %317 = vector.load %arg6[%c8_328, %c48_329, %c0_330] : memref<9x64x16xf32, #tpu.memory_space<vmem>>, vector<1x8x16xf32>
    %318 = vector.shape_cast %317 : vector<1x8x16xf32> to vector<8x16xf32>
    %319 = vector.shape_cast %316 : vector<8x16xf32> to vector<1x8x16xf32>
    tpu.vector_store %arg6[%c8_328, %c48_329, %c0_330], %319 {strides = array<i32>} : memref<9x64x16xf32, #tpu.memory_space<vmem>>, vector<1x8x16xf32>,
    %c290 = arith.constant 290 : index
    %c0_331 = arith.constant 0 : index
    %320 = tpu.strided_load %arg5[%c290, %c0_331] {strides = array<i32: 2, 1>} : memref<324x16xf32, #tpu.memory_space<vmem>>, vector<8x16xf32>
    %c8_332 = arith.constant 8 : index
    %c56_333 = arith.constant 56 : index
    %c0_334 = arith.constant 0 : index
    %321 = vector.load %arg6[%c8_332, %c56_333, %c0_334] : memref<9x64x16xf32, #tpu.memory_space<vmem>>, vector<1x8x16xf32>
    %322 = vector.shape_cast %321 : vector<1x8x16xf32> to vector<8x16xf32>
    %323 = vector.shape_cast %320 : vector<8x16xf32> to vector<1x8x16xf32>
    tpu.vector_store %arg6[%c8_332, %c56_333, %c0_334], %323 {strides = array<i32>} : memref<9x64x16xf32, #tpu.memory_space<vmem>>, vector<1x8x16xf32>,
    %c0_335 = arith.constant 0 : index
    %c0_336 = arith.constant 0 : index
    %c0_337 = arith.constant 0 : index
    %324 = vector.load %arg6[%c0_335, %c0_336, %c0_337] : memref<9x64x16xf32, #tpu.memory_space<vmem>>, vector<1x64x16xf32>
    %325 = vector.shape_cast %324 : vector<1x64x16xf32> to vector<64x16xf32>
    %326 = arith.truncf %325 : vector<64x16xf32> to vector<64x16xbf16>
    %c0_338 = arith.constant 0 : index
    %c0_339 = arith.constant 0 : index
    %c0_340 = arith.constant 0 : index
    %327 = vector.load %arg2[%c0_338, %c0_339, %c0_340] : memref<9x16x16xbf16, #tpu.memory_space<vmem>>, vector<1x16x16xbf16>
    %328 = vector.shape_cast %327 : vector<1x16x16xbf16> to vector<16x16xbf16>
    %cst_341 = arith.constant dense<0.000000e+00> : vector<64x16xf32>
    %329 = tpu.matmul %326, %328, %cst_341 {dimension_numbers = #tpu.dot_dimension_numbers<[1], [0], [0], [1], [0, 0, 1, 1], [], []>} : vector<64x16xbf16>, vector<16x16xbf16>, vector<64x16xf32> -> vector<64x16xf32>
    %c1_342 = arith.constant 1 : index
    %c0_343 = arith.constant 0 : index
    %c0_344 = arith.constant 0 : index
    %330 = vector.load %arg6[%c1_342, %c0_343, %c0_344] : memref<9x64x16xf32, #tpu.memory_space<vmem>>, vector<1x64x16xf32>
    %331 = vector.shape_cast %330 : vector<1x64x16xf32> to vector<64x16xf32>
    %332 = arith.truncf %331 : vector<64x16xf32> to vector<64x16xbf16>
    %c1_345 = arith.constant 1 : index
    %c0_346 = arith.constant 0 : index
    %c0_347 = arith.constant 0 : index
    %333 = vector.load %arg2[%c1_345, %c0_346, %c0_347] : memref<9x16x16xbf16, #tpu.memory_space<vmem>>, vector<1x16x16xbf16>
    %334 = vector.shape_cast %333 : vector<1x16x16xbf16> to vector<16x16xbf16>
    %cst_348 = arith.constant dense<0.000000e+00> : vector<64x16xf32>
    %335 = tpu.matmul %332, %334, %cst_348 {dimension_numbers = #tpu.dot_dimension_numbers<[1], [0], [0], [1], [0, 0, 1, 1], [], []>} : vector<64x16xbf16>, vector<16x16xbf16>, vector<64x16xf32> -> vector<64x16xf32>
    %336 = arith.addf %329, %335 : vector<64x16xf32>
    %c2_349 = arith.constant 2 : index
    %c0_350 = arith.constant 0 : index
    %c0_351 = arith.constant 0 : index
    %337 = vector.load %arg6[%c2_349, %c0_350, %c0_351] : memref<9x64x16xf32, #tpu.memory_space<vmem>>, vector<1x64x16xf32>
    %338 = vector.shape_cast %337 : vector<1x64x16xf32> to vector<64x16xf32>
    %339 = arith.truncf %338 : vector<64x16xf32> to vector<64x16xbf16>
    %c2_352 = arith.constant 2 : index
    %c0_353 = arith.constant 0 : index
    %c0_354 = arith.constant 0 : index
    %340 = vector.load %arg2[%c2_352, %c0_353, %c0_354] : memref<9x16x16xbf16, #tpu.memory_space<vmem>>, vector<1x16x16xbf16>
    %341 = vector.shape_cast %340 : vector<1x16x16xbf16> to vector<16x16xbf16>
    %cst_355 = arith.constant dense<0.000000e+00> : vector<64x16xf32>
    %342 = tpu.matmul %339, %341, %cst_355 {dimension_numbers = #tpu.dot_dimension_numbers<[1], [0], [0], [1], [0, 0, 1, 1], [], []>} : vector<64x16xbf16>, vector<16x16xbf16>, vector<64x16xf32> -> vector<64x16xf32>
    %343 = arith.addf %336, %342 : vector<64x16xf32>
    %c3_356 = arith.constant 3 : index
    %c0_357 = arith.constant 0 : index
    %c0_358 = arith.constant 0 : index
    %344 = vector.load %arg6[%c3_356, %c0_357, %c0_358] : memref<9x64x16xf32, #tpu.memory_space<vmem>>, vector<1x64x16xf32>
    %345 = vector.shape_cast %344 : vector<1x64x16xf32> to vector<64x16xf32>
    %346 = arith.truncf %345 : vector<64x16xf32> to vector<64x16xbf16>
    %c3_359 = arith.constant 3 : index
    %c0_360 = arith.constant 0 : index
    %c0_361 = arith.constant 0 : index
    %347 = vector.load %arg2[%c3_359, %c0_360, %c0_361] : memref<9x16x16xbf16, #tpu.memory_space<vmem>>, vector<1x16x16xbf16>
    %348 = vector.shape_cast %347 : vector<1x16x16xbf16> to vector<16x16xbf16>
    %cst_362 = arith.constant dense<0.000000e+00> : vector<64x16xf32>
    %349 = tpu.matmul %346, %348, %cst_362 {dimension_numbers = #tpu.dot_dimension_numbers<[1], [0], [0], [1], [0, 0, 1, 1], [], []>} : vector<64x16xbf16>, vector<16x16xbf16>, vector<64x16xf32> -> vector<64x16xf32>
    %350 = arith.addf %343, %349 : vector<64x16xf32>
    %c4_363 = arith.constant 4 : index
    %c0_364 = arith.constant 0 : index
    %c0_365 = arith.constant 0 : index
    %351 = vector.load %arg6[%c4_363, %c0_364, %c0_365] : memref<9x64x16xf32, #tpu.memory_space<vmem>>, vector<1x64x16xf32>
    %352 = vector.shape_cast %351 : vector<1x64x16xf32> to vector<64x16xf32>
    %353 = arith.truncf %352 : vector<64x16xf32> to vector<64x16xbf16>
    %c4_366 = arith.constant 4 : index
    %c0_367 = arith.constant 0 : index
    %c0_368 = arith.constant 0 : index
    %354 = vector.load %arg2[%c4_366, %c0_367, %c0_368] : memref<9x16x16xbf16, #tpu.memory_space<vmem>>, vector<1x16x16xbf16>
    %355 = vector.shape_cast %354 : vector<1x16x16xbf16> to vector<16x16xbf16>
    %cst_369 = arith.constant dense<0.000000e+00> : vector<64x16xf32>
    %356 = tpu.matmul %353, %355, %cst_369 {dimension_numbers = #tpu.dot_dimension_numbers<[1], [0], [0], [1], [0, 0, 1, 1], [], []>} : vector<64x16xbf16>, vector<16x16xbf16>, vector<64x16xf32> -> vector<64x16xf32>
    %357 = arith.addf %350, %356 : vector<64x16xf32>
    %c5_370 = arith.constant 5 : index
    %c0_371 = arith.constant 0 : index
    %c0_372 = arith.constant 0 : index
    %358 = vector.load %arg6[%c5_370, %c0_371, %c0_372] : memref<9x64x16xf32, #tpu.memory_space<vmem>>, vector<1x64x16xf32>
    %359 = vector.shape_cast %358 : vector<1x64x16xf32> to vector<64x16xf32>
    %360 = arith.truncf %359 : vector<64x16xf32> to vector<64x16xbf16>
    %c5_373 = arith.constant 5 : index
    %c0_374 = arith.constant 0 : index
    %c0_375 = arith.constant 0 : index
    %361 = vector.load %arg2[%c5_373, %c0_374, %c0_375] : memref<9x16x16xbf16, #tpu.memory_space<vmem>>, vector<1x16x16xbf16>
    %362 = vector.shape_cast %361 : vector<1x16x16xbf16> to vector<16x16xbf16>
    %cst_376 = arith.constant dense<0.000000e+00> : vector<64x16xf32>
    %363 = tpu.matmul %360, %362, %cst_376 {dimension_numbers = #tpu.dot_dimension_numbers<[1], [0], [0], [1], [0, 0, 1, 1], [], []>} : vector<64x16xbf16>, vector<16x16xbf16>, vector<64x16xf32> -> vector<64x16xf32>
    %364 = arith.addf %357, %363 : vector<64x16xf32>
    %c6_377 = arith.constant 6 : index
    %c0_378 = arith.constant 0 : index
    %c0_379 = arith.constant 0 : index
    %365 = vector.load %arg6[%c6_377, %c0_378, %c0_379] : memref<9x64x16xf32, #tpu.memory_space<vmem>>, vector<1x64x16xf32>
    %366 = vector.shape_cast %365 : vector<1x64x16xf32> to vector<64x16xf32>
    %367 = arith.truncf %366 : vector<64x16xf32> to vector<64x16xbf16>
    %c6_380 = arith.constant 6 : index
    %c0_381 = arith.constant 0 : index
    %c0_382 = arith.constant 0 : index
    %368 = vector.load %arg2[%c6_380, %c0_381, %c0_382] : memref<9x16x16xbf16, #tpu.memory_space<vmem>>, vector<1x16x16xbf16>
    %369 = vector.shape_cast %368 : vector<1x16x16xbf16> to vector<16x16xbf16>
    %cst_383 = arith.constant dense<0.000000e+00> : vector<64x16xf32>
    %370 = tpu.matmul %367, %369, %cst_383 {dimension_numbers = #tpu.dot_dimension_numbers<[1], [0], [0], [1], [0, 0, 1, 1], [], []>} : vector<64x16xbf16>, vector<16x16xbf16>, vector<64x16xf32> -> vector<64x16xf32>
    %371 = arith.addf %364, %370 : vector<64x16xf32>
    %c7_384 = arith.constant 7 : index
    %c0_385 = arith.constant 0 : index
    %c0_386 = arith.constant 0 : index
    %372 = vector.load %arg6[%c7_384, %c0_385, %c0_386] : memref<9x64x16xf32, #tpu.memory_space<vmem>>, vector<1x64x16xf32>
    %373 = vector.shape_cast %372 : vector<1x64x16xf32> to vector<64x16xf32>
    %374 = arith.truncf %373 : vector<64x16xf32> to vector<64x16xbf16>
    %c7_387 = arith.constant 7 : index
    %c0_388 = arith.constant 0 : index
    %c0_389 = arith.constant 0 : index
    %375 = vector.load %arg2[%c7_387, %c0_388, %c0_389] : memref<9x16x16xbf16, #tpu.memory_space<vmem>>, vector<1x16x16xbf16>
    %376 = vector.shape_cast %375 : vector<1x16x16xbf16> to vector<16x16xbf16>
    %cst_390 = arith.constant dense<0.000000e+00> : vector<64x16xf32>
    %377 = tpu.matmul %374, %376, %cst_390 {dimension_numbers = #tpu.dot_dimension_numbers<[1], [0], [0], [1], [0, 0, 1, 1], [], []>} : vector<64x16xbf16>, vector<16x16xbf16>, vector<64x16xf32> -> vector<64x16xf32>
    %378 = arith.addf %371, %377 : vector<64x16xf32>
    %c8_391 = arith.constant 8 : index
    %c0_392 = arith.constant 0 : index
    %c0_393 = arith.constant 0 : index
    %379 = vector.load %arg6[%c8_391, %c0_392, %c0_393] : memref<9x64x16xf32, #tpu.memory_space<vmem>>, vector<1x64x16xf32>
    %380 = vector.shape_cast %379 : vector<1x64x16xf32> to vector<64x16xf32>
    %381 = arith.truncf %380 : vector<64x16xf32> to vector<64x16xbf16>
    %c8_394 = arith.constant 8 : index
    %c0_395 = arith.constant 0 : index
    %c0_396 = arith.constant 0 : index
    %382 = vector.load %arg2[%c8_394, %c0_395, %c0_396] : memref<9x16x16xbf16, #tpu.memory_space<vmem>>, vector<1x16x16xbf16>
    %383 = vector.shape_cast %382 : vector<1x16x16xbf16> to vector<16x16xbf16>
    %cst_397 = arith.constant dense<0.000000e+00> : vector<64x16xf32>
    %384 = tpu.matmul %381, %383, %cst_397 {dimension_numbers = #tpu.dot_dimension_numbers<[1], [0], [0], [1], [0, 0, 1, 1], [], []>} : vector<64x16xbf16>, vector<16x16xbf16>, vector<64x16xf32> -> vector<64x16xf32>
    %385 = arith.addf %378, %384 : vector<64x16xf32>
    %c0_398 = arith.constant 0 : index
    %c0_399 = arith.constant 0 : index
    %386 = vector.load %arg3[%c0_398, %c0_399] : memref<1x16xf32, #tpu.memory_space<vmem>>, vector<1x16xf32>
    %387 = vector.broadcast %386 : vector<1x16xf32> to vector<64x16xf32>
    %388 = arith.addf %385, %387 : vector<64x16xf32>
    %cst_400 = arith.constant 3.000000e+00 : f32
    %389 = vector.broadcast %cst_400 : f32 to vector<64x16xf32>
    %390 = arith.addf %388, %389 : vector<64x16xf32>
    %cst_401 = arith.constant 0.000000e+00 : f32
    %cst_402 = arith.constant 6.000000e+00 : f32
    %391 = vector.broadcast %cst_401 : f32 to vector<64x16xf32>
    %392 = arith.maximumf %391, %390 : vector<64x16xf32>
    %393 = vector.broadcast %cst_402 : f32 to vector<64x16xf32>
    %394 = arith.minimumf %393, %392 : vector<64x16xf32>
    %cst_403 = arith.constant 0.166666672 : f32
    %395 = vector.broadcast %cst_403 : f32 to vector<64x16xf32>
    %396 = arith.mulf %394, %395 : vector<64x16xf32>
    %397 = arith.mulf %388, %396 : vector<64x16xf32>
    %c0_404 = arith.constant 0 : index
    %c0_405 = arith.constant 0 : index
    %c0_406 = arith.constant 0 : index
    %398 = vector.load %arg4[%c0_404, %c0_405, %c0_406] : memref<1x64x16xf32, #tpu.memory_space<vmem>>, vector<1x64x16xf32>
    %399 = vector.shape_cast %398 : vector<1x64x16xf32> to vector<64x16xf32>
    %400 = vector.shape_cast %397 : vector<64x16xf32> to vector<1x64x16xf32>
    tpu.vector_store %arg4[%c0_404, %c0_405, %c0_406], %400 {strides = array<i32>} : memref<1x64x16xf32, #tpu.memory_space<vmem>>, vector<1x64x16xf32>,
    return
  }
  func.func @transform_0(%arg0: i32) -> (i32, i32, i32) {
    %c0_i32 = arith.constant 0 : i32
    %c0_i32_0 = arith.constant 0 : i32
    %c0_i32_1 = arith.constant 0 : i32
    return %arg0, %c0_i32, %c0_i32_0 : i32, i32, i32
  }
  func.func @transform_1(%arg0: i32) -> (i32, i32, i32) {
    %c0_i32 = arith.constant 0 : i32
    %c0_i32_0 = arith.constant 0 : i32
    %c0_i32_1 = arith.constant 0 : i32
    %c0_i32_2 = arith.constant 0 : i32
    return %c0_i32, %c0_i32_0, %c0_i32_1 : i32, i32, i32
  }
  func.func @transform_2(%arg0: i32) -> (i32, i32) {
    %c0_i32 = arith.constant 0 : i32
    %c0_i32_0 = arith.constant 0 : i32
    %c0_i32_1 = arith.constant 0 : i32
    return %c0_i32, %c0_i32_0 : i32, i32
  }
  func.func @transform_3(%arg0: i32) -> (i32, i32, i32) {
    %c0_i32 = arith.constant 0 : i32
    %c0_i32_0 = arith.constant 0 : i32
    %c0_i32_1 = arith.constant 0 : i32
    return %arg0, %c0_i32, %c0_i32_0 : i32, i32, i32
  }
}

module attributes {stable_mosaic.version = 11 : i64} {
  func.func @_block_kernel(%arg0: i32, %arg1: memref<1x64x16xf32, #tpu.memory_space<vmem>>, %arg2: memref<9x16xf32, #tpu.memory_space<vmem>>, %arg3: memref<1x16xf32, #tpu.memory_space<vmem>>, %arg4: memref<16x8xf32, #tpu.memory_space<vmem>>, %arg5: memref<1x8xf32, #tpu.memory_space<vmem>>, %arg6: memref<8x16xf32, #tpu.memory_space<vmem>>, %arg7: memref<1x16xf32, #tpu.memory_space<vmem>>, %arg8: memref<16x16xbf16, #tpu.memory_space<vmem>>, %arg9: memref<1x16xf32, #tpu.memory_space<vmem>>, %arg10: memref<1x16x16xf32, #tpu.memory_space<vmem>>, %arg11: memref<100x16xf32, #tpu.memory_space<vmem>>, %arg12: memref<16x16xf32, #tpu.memory_space<vmem>>) attributes {dimension_semantics = [#tpu.dimension_semantics<parallel>], iteration_bounds = array<i64: 2>, scalar_prefetch = 0 : i64, scratch_operands = 2 : i64, tpu.core_type = #tpu.core_type<tc>, window_params = [{transform_indices = @transform_0, window_bounds = array<i64: 1, 64, 16>}, {pipeline_mode = #tpu.pipeline_mode<synchronous>, transform_indices = @transform_1, window_bounds = array<i64: 9, 16>}, {pipeline_mode = #tpu.pipeline_mode<synchronous>, transform_indices = @transform_2, window_bounds = array<i64: 1, 16>}, {pipeline_mode = #tpu.pipeline_mode<synchronous>, transform_indices = @transform_3, window_bounds = array<i64: 16, 8>}, {pipeline_mode = #tpu.pipeline_mode<synchronous>, transform_indices = @transform_4, window_bounds = array<i64: 1, 8>}, {pipeline_mode = #tpu.pipeline_mode<synchronous>, transform_indices = @transform_5, window_bounds = array<i64: 8, 16>}, {pipeline_mode = #tpu.pipeline_mode<synchronous>, transform_indices = @transform_6, window_bounds = array<i64: 1, 16>}, {pipeline_mode = #tpu.pipeline_mode<synchronous>, transform_indices = @transform_7, window_bounds = array<i64: 16, 16>}, {pipeline_mode = #tpu.pipeline_mode<synchronous>, transform_indices = @transform_8, window_bounds = array<i64: 1, 16>}, {transform_indices = @transform_9, window_bounds = array<i64: 1, 16, 16>}]} {
    %c0 = arith.constant 0 : index
    %c0_0 = arith.constant 0 : index
    %c0_1 = arith.constant 0 : index
    %0 = vector.load %arg1[%c0, %c0_0, %c0_1] : memref<1x64x16xf32, #tpu.memory_space<vmem>>, vector<1x64x16xf32>
    %1 = vector.shape_cast %0 : vector<1x64x16xf32> to vector<64x16xf32>
    %cst = arith.constant 0.000000e+00 : f32
    %2 = vector.broadcast %cst : f32 to vector<100x16xf32>
    %c0_2 = arith.constant 0 : index
    %c0_3 = arith.constant 0 : index
    %3 = vector.load %arg11[%c0_2, %c0_3] : memref<100x16xf32, #tpu.memory_space<vmem>>, vector<100x16xf32>
    tpu.vector_store %arg11[%c0_2, %c0_3], %2 {strides = array<i32>} : memref<100x16xf32, #tpu.memory_space<vmem>>, vector<100x16xf32>,
    %4 = vector.extract_strided_slice %1 {offsets = [0, 0], sizes = [8, 16], strides = [1, 1]} : vector<64x16xf32> to vector<8x16xf32>
    %c11 = arith.constant 11 : index
    %c0_4 = arith.constant 0 : index
    %5 = vector.load %arg11[%c11, %c0_4] : memref<100x16xf32, #tpu.memory_space<vmem>>, vector<8x16xf32>
    tpu.vector_store %arg11[%c11, %c0_4], %4 {strides = array<i32>} : memref<100x16xf32, #tpu.memory_space<vmem>>, vector<8x16xf32>,
    %6 = vector.extract_strided_slice %1 {offsets = [8, 0], sizes = [8, 16], strides = [1, 1]} : vector<64x16xf32> to vector<8x16xf32>
    %c21 = arith.constant 21 : index
    %c0_5 = arith.constant 0 : index
    %7 = vector.load %arg11[%c21, %c0_5] : memref<100x16xf32, #tpu.memory_space<vmem>>, vector<8x16xf32>
    tpu.vector_store %arg11[%c21, %c0_5], %6 {strides = array<i32>} : memref<100x16xf32, #tpu.memory_space<vmem>>, vector<8x16xf32>,
    %8 = vector.extract_strided_slice %1 {offsets = [16, 0], sizes = [8, 16], strides = [1, 1]} : vector<64x16xf32> to vector<8x16xf32>
    %c31 = arith.constant 31 : index
    %c0_6 = arith.constant 0 : index
    %9 = vector.load %arg11[%c31, %c0_6] : memref<100x16xf32, #tpu.memory_space<vmem>>, vector<8x16xf32>
    tpu.vector_store %arg11[%c31, %c0_6], %8 {strides = array<i32>} : memref<100x16xf32, #tpu.memory_space<vmem>>, vector<8x16xf32>,
    %10 = vector.extract_strided_slice %1 {offsets = [24, 0], sizes = [8, 16], strides = [1, 1]} : vector<64x16xf32> to vector<8x16xf32>
    %c41 = arith.constant 41 : index
    %c0_7 = arith.constant 0 : index
    %11 = vector.load %arg11[%c41, %c0_7] : memref<100x16xf32, #tpu.memory_space<vmem>>, vector<8x16xf32>
    tpu.vector_store %arg11[%c41, %c0_7], %10 {strides = array<i32>} : memref<100x16xf32, #tpu.memory_space<vmem>>, vector<8x16xf32>,
    %12 = vector.extract_strided_slice %1 {offsets = [32, 0], sizes = [8, 16], strides = [1, 1]} : vector<64x16xf32> to vector<8x16xf32>
    %c51 = arith.constant 51 : index
    %c0_8 = arith.constant 0 : index
    %13 = vector.load %arg11[%c51, %c0_8] : memref<100x16xf32, #tpu.memory_space<vmem>>, vector<8x16xf32>
    tpu.vector_store %arg11[%c51, %c0_8], %12 {strides = array<i32>} : memref<100x16xf32, #tpu.memory_space<vmem>>, vector<8x16xf32>,
    %14 = vector.extract_strided_slice %1 {offsets = [40, 0], sizes = [8, 16], strides = [1, 1]} : vector<64x16xf32> to vector<8x16xf32>
    %c61 = arith.constant 61 : index
    %c0_9 = arith.constant 0 : index
    %15 = vector.load %arg11[%c61, %c0_9] : memref<100x16xf32, #tpu.memory_space<vmem>>, vector<8x16xf32>
    tpu.vector_store %arg11[%c61, %c0_9], %14 {strides = array<i32>} : memref<100x16xf32, #tpu.memory_space<vmem>>, vector<8x16xf32>,
    %16 = vector.extract_strided_slice %1 {offsets = [48, 0], sizes = [8, 16], strides = [1, 1]} : vector<64x16xf32> to vector<8x16xf32>
    %c71 = arith.constant 71 : index
    %c0_10 = arith.constant 0 : index
    %17 = vector.load %arg11[%c71, %c0_10] : memref<100x16xf32, #tpu.memory_space<vmem>>, vector<8x16xf32>
    tpu.vector_store %arg11[%c71, %c0_10], %16 {strides = array<i32>} : memref<100x16xf32, #tpu.memory_space<vmem>>, vector<8x16xf32>,
    %18 = vector.extract_strided_slice %1 {offsets = [56, 0], sizes = [8, 16], strides = [1, 1]} : vector<64x16xf32> to vector<8x16xf32>
    %c81 = arith.constant 81 : index
    %c0_11 = arith.constant 0 : index
    %19 = vector.load %arg11[%c81, %c0_11] : memref<100x16xf32, #tpu.memory_space<vmem>>, vector<8x16xf32>
    tpu.vector_store %arg11[%c81, %c0_11], %18 {strides = array<i32>} : memref<100x16xf32, #tpu.memory_space<vmem>>, vector<8x16xf32>,
    %c0_12 = arith.constant 0 : index
    %c0_13 = arith.constant 0 : index
    %20 = vector.load %arg2[%c0_12, %c0_13] : memref<9x16xf32, #tpu.memory_space<vmem>>, vector<9x16xf32>
    %c0_14 = arith.constant 0 : index
    %c0_15 = arith.constant 0 : index
    %21 = vector.load %arg3[%c0_14, %c0_15] : memref<1x16xf32, #tpu.memory_space<vmem>>, vector<1x16xf32>
    %c0_16 = arith.constant 0 : index
    %c0_17 = arith.constant 0 : index
    %22 = tpu.strided_load %arg11[%c0_16, %c0_17] {strides = array<i32: 2, 1>} : memref<100x16xf32, #tpu.memory_space<vmem>>, vector<4x16xf32>
    %23 = vector.extract_strided_slice %20 {offsets = [0, 0], sizes = [1, 16], strides = [1, 1]} : vector<9x16xf32> to vector<1x16xf32>
    %24 = vector.broadcast %23 : vector<1x16xf32> to vector<4x16xf32>
    %25 = arith.mulf %22, %24 : vector<4x16xf32>
    %c1 = arith.constant 1 : index
    %c0_18 = arith.constant 0 : index
    %26 = tpu.strided_load %arg11[%c1, %c0_18] {strides = array<i32: 2, 1>} : memref<100x16xf32, #tpu.memory_space<vmem>>, vector<4x16xf32>
    %27 = vector.extract_strided_slice %20 {offsets = [1, 0], sizes = [1, 16], strides = [1, 1]} : vector<9x16xf32> to vector<1x16xf32>
    %28 = vector.broadcast %27 : vector<1x16xf32> to vector<4x16xf32>
    %29 = arith.mulf %26, %28 : vector<4x16xf32>
    %30 = arith.addf %25, %29 : vector<4x16xf32>
    %c2 = arith.constant 2 : index
    %c0_19 = arith.constant 0 : index
    %31 = tpu.strided_load %arg11[%c2, %c0_19] {strides = array<i32: 2, 1>} : memref<100x16xf32, #tpu.memory_space<vmem>>, vector<4x16xf32>
    %32 = vector.extract_strided_slice %20 {offsets = [2, 0], sizes = [1, 16], strides = [1, 1]} : vector<9x16xf32> to vector<1x16xf32>
    %33 = vector.broadcast %32 : vector<1x16xf32> to vector<4x16xf32>
    %34 = arith.mulf %31, %33 : vector<4x16xf32>
    %35 = arith.addf %30, %34 : vector<4x16xf32>
    %c10 = arith.constant 10 : index
    %c0_20 = arith.constant 0 : index
    %36 = tpu.strided_load %arg11[%c10, %c0_20] {strides = array<i32: 2, 1>} : memref<100x16xf32, #tpu.memory_space<vmem>>, vector<4x16xf32>
    %37 = vector.extract_strided_slice %20 {offsets = [3, 0], sizes = [1, 16], strides = [1, 1]} : vector<9x16xf32> to vector<1x16xf32>
    %38 = vector.broadcast %37 : vector<1x16xf32> to vector<4x16xf32>
    %39 = arith.mulf %36, %38 : vector<4x16xf32>
    %40 = arith.addf %35, %39 : vector<4x16xf32>
    %c11_21 = arith.constant 11 : index
    %c0_22 = arith.constant 0 : index
    %41 = tpu.strided_load %arg11[%c11_21, %c0_22] {strides = array<i32: 2, 1>} : memref<100x16xf32, #tpu.memory_space<vmem>>, vector<4x16xf32>
    %42 = vector.extract_strided_slice %20 {offsets = [4, 0], sizes = [1, 16], strides = [1, 1]} : vector<9x16xf32> to vector<1x16xf32>
    %43 = vector.broadcast %42 : vector<1x16xf32> to vector<4x16xf32>
    %44 = arith.mulf %41, %43 : vector<4x16xf32>
    %45 = arith.addf %40, %44 : vector<4x16xf32>
    %c12 = arith.constant 12 : index
    %c0_23 = arith.constant 0 : index
    %46 = tpu.strided_load %arg11[%c12, %c0_23] {strides = array<i32: 2, 1>} : memref<100x16xf32, #tpu.memory_space<vmem>>, vector<4x16xf32>
    %47 = vector.extract_strided_slice %20 {offsets = [5, 0], sizes = [1, 16], strides = [1, 1]} : vector<9x16xf32> to vector<1x16xf32>
    %48 = vector.broadcast %47 : vector<1x16xf32> to vector<4x16xf32>
    %49 = arith.mulf %46, %48 : vector<4x16xf32>
    %50 = arith.addf %45, %49 : vector<4x16xf32>
    %c20 = arith.constant 20 : index
    %c0_24 = arith.constant 0 : index
    %51 = tpu.strided_load %arg11[%c20, %c0_24] {strides = array<i32: 2, 1>} : memref<100x16xf32, #tpu.memory_space<vmem>>, vector<4x16xf32>
    %52 = vector.extract_strided_slice %20 {offsets = [6, 0], sizes = [1, 16], strides = [1, 1]} : vector<9x16xf32> to vector<1x16xf32>
    %53 = vector.broadcast %52 : vector<1x16xf32> to vector<4x16xf32>
    %54 = arith.mulf %51, %53 : vector<4x16xf32>
    %55 = arith.addf %50, %54 : vector<4x16xf32>
    %c21_25 = arith.constant 21 : index
    %c0_26 = arith.constant 0 : index
    %56 = tpu.strided_load %arg11[%c21_25, %c0_26] {strides = array<i32: 2, 1>} : memref<100x16xf32, #tpu.memory_space<vmem>>, vector<4x16xf32>
    %57 = vector.extract_strided_slice %20 {offsets = [7, 0], sizes = [1, 16], strides = [1, 1]} : vector<9x16xf32> to vector<1x16xf32>
    %58 = vector.broadcast %57 : vector<1x16xf32> to vector<4x16xf32>
    %59 = arith.mulf %56, %58 : vector<4x16xf32>
    %60 = arith.addf %55, %59 : vector<4x16xf32>
    %c22 = arith.constant 22 : index
    %c0_27 = arith.constant 0 : index
    %61 = tpu.strided_load %arg11[%c22, %c0_27] {strides = array<i32: 2, 1>} : memref<100x16xf32, #tpu.memory_space<vmem>>, vector<4x16xf32>
    %62 = vector.extract_strided_slice %20 {offsets = [8, 0], sizes = [1, 16], strides = [1, 1]} : vector<9x16xf32> to vector<1x16xf32>
    %63 = vector.broadcast %62 : vector<1x16xf32> to vector<4x16xf32>
    %64 = arith.mulf %61, %63 : vector<4x16xf32>
    %65 = arith.addf %60, %64 : vector<4x16xf32>
    %66 = vector.broadcast %21 : vector<1x16xf32> to vector<4x16xf32>
    %67 = arith.addf %65, %66 : vector<4x16xf32>
    %cst_28 = arith.constant 0.000000e+00 : f32
    %68 = vector.broadcast %cst_28 : f32 to vector<4x16xf32>
    %69 = arith.maximumf %67, %68 : vector<4x16xf32>
    %c0_29 = arith.constant 0 : index
    %c0_30 = arith.constant 0 : index
    %70 = vector.load %arg12[%c0_29, %c0_30] : memref<16x16xf32, #tpu.memory_space<vmem>>, vector<4x16xf32>
    tpu.vector_store %arg12[%c0_29, %c0_30], %69 {strides = array<i32>} : memref<16x16xf32, #tpu.memory_space<vmem>>, vector<4x16xf32>,
    %c20_31 = arith.constant 20 : index
    %c0_32 = arith.constant 0 : index
    %71 = tpu.strided_load %arg11[%c20_31, %c0_32] {strides = array<i32: 2, 1>} : memref<100x16xf32, #tpu.memory_space<vmem>>, vector<4x16xf32>
    %72 = vector.extract_strided_slice %20 {offsets = [0, 0], sizes = [1, 16], strides = [1, 1]} : vector<9x16xf32> to vector<1x16xf32>
    %73 = vector.broadcast %72 : vector<1x16xf32> to vector<4x16xf32>
    %74 = arith.mulf %71, %73 : vector<4x16xf32>
    %c21_33 = arith.constant 21 : index
    %c0_34 = arith.constant 0 : index
    %75 = tpu.strided_load %arg11[%c21_33, %c0_34] {strides = array<i32: 2, 1>} : memref<100x16xf32, #tpu.memory_space<vmem>>, vector<4x16xf32>
    %76 = vector.extract_strided_slice %20 {offsets = [1, 0], sizes = [1, 16], strides = [1, 1]} : vector<9x16xf32> to vector<1x16xf32>
    %77 = vector.broadcast %76 : vector<1x16xf32> to vector<4x16xf32>
    %78 = arith.mulf %75, %77 : vector<4x16xf32>
    %79 = arith.addf %74, %78 : vector<4x16xf32>
    %c22_35 = arith.constant 22 : index
    %c0_36 = arith.constant 0 : index
    %80 = tpu.strided_load %arg11[%c22_35, %c0_36] {strides = array<i32: 2, 1>} : memref<100x16xf32, #tpu.memory_space<vmem>>, vector<4x16xf32>
    %81 = vector.extract_strided_slice %20 {offsets = [2, 0], sizes = [1, 16], strides = [1, 1]} : vector<9x16xf32> to vector<1x16xf32>
    %82 = vector.broadcast %81 : vector<1x16xf32> to vector<4x16xf32>
    %83 = arith.mulf %80, %82 : vector<4x16xf32>
    %84 = arith.addf %79, %83 : vector<4x16xf32>
    %c30 = arith.constant 30 : index
    %c0_37 = arith.constant 0 : index
    %85 = tpu.strided_load %arg11[%c30, %c0_37] {strides = array<i32: 2, 1>} : memref<100x16xf32, #tpu.memory_space<vmem>>, vector<4x16xf32>
    %86 = vector.extract_strided_slice %20 {offsets = [3, 0], sizes = [1, 16], strides = [1, 1]} : vector<9x16xf32> to vector<1x16xf32>
    %87 = vector.broadcast %86 : vector<1x16xf32> to vector<4x16xf32>
    %88 = arith.mulf %85, %87 : vector<4x16xf32>
    %89 = arith.addf %84, %88 : vector<4x16xf32>
    %c31_38 = arith.constant 31 : index
    %c0_39 = arith.constant 0 : index
    %90 = tpu.strided_load %arg11[%c31_38, %c0_39] {strides = array<i32: 2, 1>} : memref<100x16xf32, #tpu.memory_space<vmem>>, vector<4x16xf32>
    %91 = vector.extract_strided_slice %20 {offsets = [4, 0], sizes = [1, 16], strides = [1, 1]} : vector<9x16xf32> to vector<1x16xf32>
    %92 = vector.broadcast %91 : vector<1x16xf32> to vector<4x16xf32>
    %93 = arith.mulf %90, %92 : vector<4x16xf32>
    %94 = arith.addf %89, %93 : vector<4x16xf32>
    %c32 = arith.constant 32 : index
    %c0_40 = arith.constant 0 : index
    %95 = tpu.strided_load %arg11[%c32, %c0_40] {strides = array<i32: 2, 1>} : memref<100x16xf32, #tpu.memory_space<vmem>>, vector<4x16xf32>
    %96 = vector.extract_strided_slice %20 {offsets = [5, 0], sizes = [1, 16], strides = [1, 1]} : vector<9x16xf32> to vector<1x16xf32>
    %97 = vector.broadcast %96 : vector<1x16xf32> to vector<4x16xf32>
    %98 = arith.mulf %95, %97 : vector<4x16xf32>
    %99 = arith.addf %94, %98 : vector<4x16xf32>
    %c40 = arith.constant 40 : index
    %c0_41 = arith.constant 0 : index
    %100 = tpu.strided_load %arg11[%c40, %c0_41] {strides = array<i32: 2, 1>} : memref<100x16xf32, #tpu.memory_space<vmem>>, vector<4x16xf32>
    %101 = vector.extract_strided_slice %20 {offsets = [6, 0], sizes = [1, 16], strides = [1, 1]} : vector<9x16xf32> to vector<1x16xf32>
    %102 = vector.broadcast %101 : vector<1x16xf32> to vector<4x16xf32>
    %103 = arith.mulf %100, %102 : vector<4x16xf32>
    %104 = arith.addf %99, %103 : vector<4x16xf32>
    %c41_42 = arith.constant 41 : index
    %c0_43 = arith.constant 0 : index
    %105 = tpu.strided_load %arg11[%c41_42, %c0_43] {strides = array<i32: 2, 1>} : memref<100x16xf32, #tpu.memory_space<vmem>>, vector<4x16xf32>
    %106 = vector.extract_strided_slice %20 {offsets = [7, 0], sizes = [1, 16], strides = [1, 1]} : vector<9x16xf32> to vector<1x16xf32>
    %107 = vector.broadcast %106 : vector<1x16xf32> to vector<4x16xf32>
    %108 = arith.mulf %105, %107 : vector<4x16xf32>
    %109 = arith.addf %104, %108 : vector<4x16xf32>
    %c42 = arith.constant 42 : index
    %c0_44 = arith.constant 0 : index
    %110 = tpu.strided_load %arg11[%c42, %c0_44] {strides = array<i32: 2, 1>} : memref<100x16xf32, #tpu.memory_space<vmem>>, vector<4x16xf32>
    %111 = vector.extract_strided_slice %20 {offsets = [8, 0], sizes = [1, 16], strides = [1, 1]} : vector<9x16xf32> to vector<1x16xf32>
    %112 = vector.broadcast %111 : vector<1x16xf32> to vector<4x16xf32>
    %113 = arith.mulf %110, %112 : vector<4x16xf32>
    %114 = arith.addf %109, %113 : vector<4x16xf32>
    %115 = vector.broadcast %21 : vector<1x16xf32> to vector<4x16xf32>
    %116 = arith.addf %114, %115 : vector<4x16xf32>
    %cst_45 = arith.constant 0.000000e+00 : f32
    %117 = vector.broadcast %cst_45 : f32 to vector<4x16xf32>
    %118 = arith.maximumf %116, %117 : vector<4x16xf32>
    %c4 = arith.constant 4 : index
    %c0_46 = arith.constant 0 : index
    %119 = vector.load %arg12[%c4, %c0_46] : memref<16x16xf32, #tpu.memory_space<vmem>>, vector<4x16xf32>
    tpu.vector_store %arg12[%c4, %c0_46], %118 {strides = array<i32>} : memref<16x16xf32, #tpu.memory_space<vmem>>, vector<4x16xf32>,
    %c40_47 = arith.constant 40 : index
    %c0_48 = arith.constant 0 : index
    %120 = tpu.strided_load %arg11[%c40_47, %c0_48] {strides = array<i32: 2, 1>} : memref<100x16xf32, #tpu.memory_space<vmem>>, vector<4x16xf32>
    %121 = vector.extract_strided_slice %20 {offsets = [0, 0], sizes = [1, 16], strides = [1, 1]} : vector<9x16xf32> to vector<1x16xf32>
    %122 = vector.broadcast %121 : vector<1x16xf32> to vector<4x16xf32>
    %123 = arith.mulf %120, %122 : vector<4x16xf32>
    %c41_49 = arith.constant 41 : index
    %c0_50 = arith.constant 0 : index
    %124 = tpu.strided_load %arg11[%c41_49, %c0_50] {strides = array<i32: 2, 1>} : memref<100x16xf32, #tpu.memory_space<vmem>>, vector<4x16xf32>
    %125 = vector.extract_strided_slice %20 {offsets = [1, 0], sizes = [1, 16], strides = [1, 1]} : vector<9x16xf32> to vector<1x16xf32>
    %126 = vector.broadcast %125 : vector<1x16xf32> to vector<4x16xf32>
    %127 = arith.mulf %124, %126 : vector<4x16xf32>
    %128 = arith.addf %123, %127 : vector<4x16xf32>
    %c42_51 = arith.constant 42 : index
    %c0_52 = arith.constant 0 : index
    %129 = tpu.strided_load %arg11[%c42_51, %c0_52] {strides = array<i32: 2, 1>} : memref<100x16xf32, #tpu.memory_space<vmem>>, vector<4x16xf32>
    %130 = vector.extract_strided_slice %20 {offsets = [2, 0], sizes = [1, 16], strides = [1, 1]} : vector<9x16xf32> to vector<1x16xf32>
    %131 = vector.broadcast %130 : vector<1x16xf32> to vector<4x16xf32>
    %132 = arith.mulf %129, %131 : vector<4x16xf32>
    %133 = arith.addf %128, %132 : vector<4x16xf32>
    %c50 = arith.constant 50 : index
    %c0_53 = arith.constant 0 : index
    %134 = tpu.strided_load %arg11[%c50, %c0_53] {strides = array<i32: 2, 1>} : memref<100x16xf32, #tpu.memory_space<vmem>>, vector<4x16xf32>
    %135 = vector.extract_strided_slice %20 {offsets = [3, 0], sizes = [1, 16], strides = [1, 1]} : vector<9x16xf32> to vector<1x16xf32>
    %136 = vector.broadcast %135 : vector<1x16xf32> to vector<4x16xf32>
    %137 = arith.mulf %134, %136 : vector<4x16xf32>
    %138 = arith.addf %133, %137 : vector<4x16xf32>
    %c51_54 = arith.constant 51 : index
    %c0_55 = arith.constant 0 : index
    %139 = tpu.strided_load %arg11[%c51_54, %c0_55] {strides = array<i32: 2, 1>} : memref<100x16xf32, #tpu.memory_space<vmem>>, vector<4x16xf32>
    %140 = vector.extract_strided_slice %20 {offsets = [4, 0], sizes = [1, 16], strides = [1, 1]} : vector<9x16xf32> to vector<1x16xf32>
    %141 = vector.broadcast %140 : vector<1x16xf32> to vector<4x16xf32>
    %142 = arith.mulf %139, %141 : vector<4x16xf32>
    %143 = arith.addf %138, %142 : vector<4x16xf32>
    %c52 = arith.constant 52 : index
    %c0_56 = arith.constant 0 : index
    %144 = tpu.strided_load %arg11[%c52, %c0_56] {strides = array<i32: 2, 1>} : memref<100x16xf32, #tpu.memory_space<vmem>>, vector<4x16xf32>
    %145 = vector.extract_strided_slice %20 {offsets = [5, 0], sizes = [1, 16], strides = [1, 1]} : vector<9x16xf32> to vector<1x16xf32>
    %146 = vector.broadcast %145 : vector<1x16xf32> to vector<4x16xf32>
    %147 = arith.mulf %144, %146 : vector<4x16xf32>
    %148 = arith.addf %143, %147 : vector<4x16xf32>
    %c60 = arith.constant 60 : index
    %c0_57 = arith.constant 0 : index
    %149 = tpu.strided_load %arg11[%c60, %c0_57] {strides = array<i32: 2, 1>} : memref<100x16xf32, #tpu.memory_space<vmem>>, vector<4x16xf32>
    %150 = vector.extract_strided_slice %20 {offsets = [6, 0], sizes = [1, 16], strides = [1, 1]} : vector<9x16xf32> to vector<1x16xf32>
    %151 = vector.broadcast %150 : vector<1x16xf32> to vector<4x16xf32>
    %152 = arith.mulf %149, %151 : vector<4x16xf32>
    %153 = arith.addf %148, %152 : vector<4x16xf32>
    %c61_58 = arith.constant 61 : index
    %c0_59 = arith.constant 0 : index
    %154 = tpu.strided_load %arg11[%c61_58, %c0_59] {strides = array<i32: 2, 1>} : memref<100x16xf32, #tpu.memory_space<vmem>>, vector<4x16xf32>
    %155 = vector.extract_strided_slice %20 {offsets = [7, 0], sizes = [1, 16], strides = [1, 1]} : vector<9x16xf32> to vector<1x16xf32>
    %156 = vector.broadcast %155 : vector<1x16xf32> to vector<4x16xf32>
    %157 = arith.mulf %154, %156 : vector<4x16xf32>
    %158 = arith.addf %153, %157 : vector<4x16xf32>
    %c62 = arith.constant 62 : index
    %c0_60 = arith.constant 0 : index
    %159 = tpu.strided_load %arg11[%c62, %c0_60] {strides = array<i32: 2, 1>} : memref<100x16xf32, #tpu.memory_space<vmem>>, vector<4x16xf32>
    %160 = vector.extract_strided_slice %20 {offsets = [8, 0], sizes = [1, 16], strides = [1, 1]} : vector<9x16xf32> to vector<1x16xf32>
    %161 = vector.broadcast %160 : vector<1x16xf32> to vector<4x16xf32>
    %162 = arith.mulf %159, %161 : vector<4x16xf32>
    %163 = arith.addf %158, %162 : vector<4x16xf32>
    %164 = vector.broadcast %21 : vector<1x16xf32> to vector<4x16xf32>
    %165 = arith.addf %163, %164 : vector<4x16xf32>
    %cst_61 = arith.constant 0.000000e+00 : f32
    %166 = vector.broadcast %cst_61 : f32 to vector<4x16xf32>
    %167 = arith.maximumf %165, %166 : vector<4x16xf32>
    %c8 = arith.constant 8 : index
    %c0_62 = arith.constant 0 : index
    %168 = vector.load %arg12[%c8, %c0_62] : memref<16x16xf32, #tpu.memory_space<vmem>>, vector<4x16xf32>
    tpu.vector_store %arg12[%c8, %c0_62], %167 {strides = array<i32>} : memref<16x16xf32, #tpu.memory_space<vmem>>, vector<4x16xf32>,
    %c60_63 = arith.constant 60 : index
    %c0_64 = arith.constant 0 : index
    %169 = tpu.strided_load %arg11[%c60_63, %c0_64] {strides = array<i32: 2, 1>} : memref<100x16xf32, #tpu.memory_space<vmem>>, vector<4x16xf32>
    %170 = vector.extract_strided_slice %20 {offsets = [0, 0], sizes = [1, 16], strides = [1, 1]} : vector<9x16xf32> to vector<1x16xf32>
    %171 = vector.broadcast %170 : vector<1x16xf32> to vector<4x16xf32>
    %172 = arith.mulf %169, %171 : vector<4x16xf32>
    %c61_65 = arith.constant 61 : index
    %c0_66 = arith.constant 0 : index
    %173 = tpu.strided_load %arg11[%c61_65, %c0_66] {strides = array<i32: 2, 1>} : memref<100x16xf32, #tpu.memory_space<vmem>>, vector<4x16xf32>
    %174 = vector.extract_strided_slice %20 {offsets = [1, 0], sizes = [1, 16], strides = [1, 1]} : vector<9x16xf32> to vector<1x16xf32>
    %175 = vector.broadcast %174 : vector<1x16xf32> to vector<4x16xf32>
    %176 = arith.mulf %173, %175 : vector<4x16xf32>
    %177 = arith.addf %172, %176 : vector<4x16xf32>
    %c62_67 = arith.constant 62 : index
    %c0_68 = arith.constant 0 : index
    %178 = tpu.strided_load %arg11[%c62_67, %c0_68] {strides = array<i32: 2, 1>} : memref<100x16xf32, #tpu.memory_space<vmem>>, vector<4x16xf32>
    %179 = vector.extract_strided_slice %20 {offsets = [2, 0], sizes = [1, 16], strides = [1, 1]} : vector<9x16xf32> to vector<1x16xf32>
    %180 = vector.broadcast %179 : vector<1x16xf32> to vector<4x16xf32>
    %181 = arith.mulf %178, %180 : vector<4x16xf32>
    %182 = arith.addf %177, %181 : vector<4x16xf32>
    %c70 = arith.constant 70 : index
    %c0_69 = arith.constant 0 : index
    %183 = tpu.strided_load %arg11[%c70, %c0_69] {strides = array<i32: 2, 1>} : memref<100x16xf32, #tpu.memory_space<vmem>>, vector<4x16xf32>
    %184 = vector.extract_strided_slice %20 {offsets = [3, 0], sizes = [1, 16], strides = [1, 1]} : vector<9x16xf32> to vector<1x16xf32>
    %185 = vector.broadcast %184 : vector<1x16xf32> to vector<4x16xf32>
    %186 = arith.mulf %183, %185 : vector<4x16xf32>
    %187 = arith.addf %182, %186 : vector<4x16xf32>
    %c71_70 = arith.constant 71 : index
    %c0_71 = arith.constant 0 : index
    %188 = tpu.strided_load %arg11[%c71_70, %c0_71] {strides = array<i32: 2, 1>} : memref<100x16xf32, #tpu.memory_space<vmem>>, vector<4x16xf32>
    %189 = vector.extract_strided_slice %20 {offsets = [4, 0], sizes = [1, 16], strides = [1, 1]} : vector<9x16xf32> to vector<1x16xf32>
    %190 = vector.broadcast %189 : vector<1x16xf32> to vector<4x16xf32>
    %191 = arith.mulf %188, %190 : vector<4x16xf32>
    %192 = arith.addf %187, %191 : vector<4x16xf32>
    %c72 = arith.constant 72 : index
    %c0_72 = arith.constant 0 : index
    %193 = tpu.strided_load %arg11[%c72, %c0_72] {strides = array<i32: 2, 1>} : memref<100x16xf32, #tpu.memory_space<vmem>>, vector<4x16xf32>
    %194 = vector.extract_strided_slice %20 {offsets = [5, 0], sizes = [1, 16], strides = [1, 1]} : vector<9x16xf32> to vector<1x16xf32>
    %195 = vector.broadcast %194 : vector<1x16xf32> to vector<4x16xf32>
    %196 = arith.mulf %193, %195 : vector<4x16xf32>
    %197 = arith.addf %192, %196 : vector<4x16xf32>
    %c80 = arith.constant 80 : index
    %c0_73 = arith.constant 0 : index
    %198 = tpu.strided_load %arg11[%c80, %c0_73] {strides = array<i32: 2, 1>} : memref<100x16xf32, #tpu.memory_space<vmem>>, vector<4x16xf32>
    %199 = vector.extract_strided_slice %20 {offsets = [6, 0], sizes = [1, 16], strides = [1, 1]} : vector<9x16xf32> to vector<1x16xf32>
    %200 = vector.broadcast %199 : vector<1x16xf32> to vector<4x16xf32>
    %201 = arith.mulf %198, %200 : vector<4x16xf32>
    %202 = arith.addf %197, %201 : vector<4x16xf32>
    %c81_74 = arith.constant 81 : index
    %c0_75 = arith.constant 0 : index
    %203 = tpu.strided_load %arg11[%c81_74, %c0_75] {strides = array<i32: 2, 1>} : memref<100x16xf32, #tpu.memory_space<vmem>>, vector<4x16xf32>
    %204 = vector.extract_strided_slice %20 {offsets = [7, 0], sizes = [1, 16], strides = [1, 1]} : vector<9x16xf32> to vector<1x16xf32>
    %205 = vector.broadcast %204 : vector<1x16xf32> to vector<4x16xf32>
    %206 = arith.mulf %203, %205 : vector<4x16xf32>
    %207 = arith.addf %202, %206 : vector<4x16xf32>
    %c82 = arith.constant 82 : index
    %c0_76 = arith.constant 0 : index
    %208 = tpu.strided_load %arg11[%c82, %c0_76] {strides = array<i32: 2, 1>} : memref<100x16xf32, #tpu.memory_space<vmem>>, vector<4x16xf32>
    %209 = vector.extract_strided_slice %20 {offsets = [8, 0], sizes = [1, 16], strides = [1, 1]} : vector<9x16xf32> to vector<1x16xf32>
    %210 = vector.broadcast %209 : vector<1x16xf32> to vector<4x16xf32>
    %211 = arith.mulf %208, %210 : vector<4x16xf32>
    %212 = arith.addf %207, %211 : vector<4x16xf32>
    %213 = vector.broadcast %21 : vector<1x16xf32> to vector<4x16xf32>
    %214 = arith.addf %212, %213 : vector<4x16xf32>
    %cst_77 = arith.constant 0.000000e+00 : f32
    %215 = vector.broadcast %cst_77 : f32 to vector<4x16xf32>
    %216 = arith.maximumf %214, %215 : vector<4x16xf32>
    %c12_78 = arith.constant 12 : index
    %c0_79 = arith.constant 0 : index
    %217 = vector.load %arg12[%c12_78, %c0_79] : memref<16x16xf32, #tpu.memory_space<vmem>>, vector<4x16xf32>
    tpu.vector_store %arg12[%c12_78, %c0_79], %216 {strides = array<i32>} : memref<16x16xf32, #tpu.memory_space<vmem>>, vector<4x16xf32>,
    %c0_80 = arith.constant 0 : index
    %c0_81 = arith.constant 0 : index
    %218 = vector.load %arg12[%c0_80, %c0_81] : memref<16x16xf32, #tpu.memory_space<vmem>>, vector<16x16xf32>
    %cst_82 = arith.constant dense<0.000000e+00> : vector<16xf32>
    %219 = vector.multi_reduction <add>, %218, %cst_82 [0] : vector<16x16xf32> to vector<16xf32>
    %220 = vector.shape_cast %219 : vector<16xf32> to vector<1x16xf32>
    %cst_83 = arith.constant 1.600000e+01 : f32
    %221 = vector.broadcast %cst_83 : f32 to vector<1x16xf32>
    %222 = arith.divf %220, %221 : vector<1x16xf32>
    %c0_84 = arith.constant 0 : index
    %c0_85 = arith.constant 0 : index
    %223 = vector.load %arg4[%c0_84, %c0_85] : memref<16x8xf32, #tpu.memory_space<vmem>>, vector<16x8xf32>
    %cst_86 = arith.constant dense<0.000000e+00> : vector<1x8xf32>
    %224 = tpu.matmul %222, %223, %cst_86 {dimension_numbers = #tpu.dot_dimension_numbers<[1], [0], [0], [1], [0, 0, 1, 1], [], []>} : vector<1x16xf32>, vector<16x8xf32>, vector<1x8xf32> -> vector<1x8xf32>
    %c0_87 = arith.constant 0 : index
    %c0_88 = arith.constant 0 : index
    %225 = vector.load %arg5[%c0_87, %c0_88] : memref<1x8xf32, #tpu.memory_space<vmem>>, vector<1x8xf32>
    %226 = arith.addf %224, %225 : vector<1x8xf32>
    %cst_89 = arith.constant 0.000000e+00 : f32
    %227 = vector.broadcast %cst_89 : f32 to vector<1x8xf32>
    %228 = arith.maximumf %226, %227 : vector<1x8xf32>
    %c0_90 = arith.constant 0 : index
    %c0_91 = arith.constant 0 : index
    %229 = vector.load %arg6[%c0_90, %c0_91] : memref<8x16xf32, #tpu.memory_space<vmem>>, vector<8x16xf32>
    %cst_92 = arith.constant dense<0.000000e+00> : vector<1x16xf32>
    %230 = tpu.matmul %228, %229, %cst_92 {dimension_numbers = #tpu.dot_dimension_numbers<[1], [0], [0], [1], [0, 0, 1, 1], [], []>} : vector<1x8xf32>, vector<8x16xf32>, vector<1x16xf32> -> vector<1x16xf32>
    %c0_93 = arith.constant 0 : index
    %c0_94 = arith.constant 0 : index
    %231 = vector.load %arg7[%c0_93, %c0_94] : memref<1x16xf32, #tpu.memory_space<vmem>>, vector<1x16xf32>
    %232 = arith.addf %230, %231 : vector<1x16xf32>
    %cst_95 = arith.constant 3.000000e+00 : f32
    %233 = vector.broadcast %cst_95 : f32 to vector<1x16xf32>
    %234 = arith.addf %232, %233 : vector<1x16xf32>
    %cst_96 = arith.constant 0.000000e+00 : f32
    %cst_97 = arith.constant 6.000000e+00 : f32
    %235 = vector.broadcast %cst_96 : f32 to vector<1x16xf32>
    %236 = arith.maximumf %235, %234 : vector<1x16xf32>
    %237 = vector.broadcast %cst_97 : f32 to vector<1x16xf32>
    %238 = arith.minimumf %237, %236 : vector<1x16xf32>
    %cst_98 = arith.constant 0.166666672 : f32
    %239 = vector.broadcast %cst_98 : f32 to vector<1x16xf32>
    %240 = arith.mulf %238, %239 : vector<1x16xf32>
    %241 = vector.broadcast %240 : vector<1x16xf32> to vector<16x16xf32>
    %242 = arith.mulf %218, %241 : vector<16x16xf32>
    %243 = arith.truncf %242 : vector<16x16xf32> to vector<16x16xbf16>
    %c0_99 = arith.constant 0 : index
    %c0_100 = arith.constant 0 : index
    %244 = vector.load %arg8[%c0_99, %c0_100] : memref<16x16xbf16, #tpu.memory_space<vmem>>, vector<16x16xbf16>
    %cst_101 = arith.constant dense<0.000000e+00> : vector<16x16xf32>
    %245 = tpu.matmul %243, %244, %cst_101 {dimension_numbers = #tpu.dot_dimension_numbers<[1], [0], [0], [1], [0, 0, 1, 1], [], []>} : vector<16x16xbf16>, vector<16x16xbf16>, vector<16x16xf32> -> vector<16x16xf32>
    %c0_102 = arith.constant 0 : index
    %c0_103 = arith.constant 0 : index
    %246 = vector.load %arg9[%c0_102, %c0_103] : memref<1x16xf32, #tpu.memory_space<vmem>>, vector<1x16xf32>
    %247 = vector.broadcast %246 : vector<1x16xf32> to vector<16x16xf32>
    %248 = arith.addf %245, %247 : vector<16x16xf32>
    %c0_104 = arith.constant 0 : index
    %c0_105 = arith.constant 0 : index
    %c0_106 = arith.constant 0 : index
    %249 = vector.load %arg10[%c0_104, %c0_105, %c0_106] : memref<1x16x16xf32, #tpu.memory_space<vmem>>, vector<1x16x16xf32>
    %250 = vector.shape_cast %249 : vector<1x16x16xf32> to vector<16x16xf32>
    %251 = vector.shape_cast %248 : vector<16x16xf32> to vector<1x16x16xf32>
    tpu.vector_store %arg10[%c0_104, %c0_105, %c0_106], %251 {strides = array<i32>} : memref<1x16x16xf32, #tpu.memory_space<vmem>>, vector<1x16x16xf32>,
    return
  }
  func.func @transform_0(%arg0: i32) -> (i32, i32, i32) {
    %c0_i32 = arith.constant 0 : i32
    %c0_i32_0 = arith.constant 0 : i32
    %c0_i32_1 = arith.constant 0 : i32
    return %arg0, %c0_i32, %c0_i32_0 : i32, i32, i32
  }
  func.func @transform_1(%arg0: i32) -> (i32, i32) {
    %c0_i32 = arith.constant 0 : i32
    %c0_i32_0 = arith.constant 0 : i32
    %c0_i32_1 = arith.constant 0 : i32
    return %c0_i32, %c0_i32_0 : i32, i32
  }
  func.func @transform_2(%arg0: i32) -> (i32, i32) {
    %c0_i32 = arith.constant 0 : i32
    %c0_i32_0 = arith.constant 0 : i32
    %c0_i32_1 = arith.constant 0 : i32
    return %c0_i32, %c0_i32_0 : i32, i32
  }
  func.func @transform_3(%arg0: i32) -> (i32, i32) {
    %c0_i32 = arith.constant 0 : i32
    %c0_i32_0 = arith.constant 0 : i32
    %c0_i32_1 = arith.constant 0 : i32
    return %c0_i32, %c0_i32_0 : i32, i32
  }
  func.func @transform_4(%arg0: i32) -> (i32, i32) {
    %c0_i32 = arith.constant 0 : i32
    %c0_i32_0 = arith.constant 0 : i32
    %c0_i32_1 = arith.constant 0 : i32
    return %c0_i32, %c0_i32_0 : i32, i32
  }
  func.func @transform_5(%arg0: i32) -> (i32, i32) {
    %c0_i32 = arith.constant 0 : i32
    %c0_i32_0 = arith.constant 0 : i32
    %c0_i32_1 = arith.constant 0 : i32
    return %c0_i32, %c0_i32_0 : i32, i32
  }
  func.func @transform_6(%arg0: i32) -> (i32, i32) {
    %c0_i32 = arith.constant 0 : i32
    %c0_i32_0 = arith.constant 0 : i32
    %c0_i32_1 = arith.constant 0 : i32
    return %c0_i32, %c0_i32_0 : i32, i32
  }
  func.func @transform_7(%arg0: i32) -> (i32, i32) {
    %c0_i32 = arith.constant 0 : i32
    %c0_i32_0 = arith.constant 0 : i32
    %c0_i32_1 = arith.constant 0 : i32
    return %c0_i32, %c0_i32_0 : i32, i32
  }
  func.func @transform_8(%arg0: i32) -> (i32, i32) {
    %c0_i32 = arith.constant 0 : i32
    %c0_i32_0 = arith.constant 0 : i32
    %c0_i32_1 = arith.constant 0 : i32
    return %c0_i32, %c0_i32_0 : i32, i32
  }
  func.func @transform_9(%arg0: i32) -> (i32, i32, i32) {
    %c0_i32 = arith.constant 0 : i32
    %c0_i32_0 = arith.constant 0 : i32
    %c0_i32_1 = arith.constant 0 : i32
    return %arg0, %c0_i32, %c0_i32_0 : i32, i32, i32
  }
}

module attributes {stable_mosaic.version = 11 : i64} {
  func.func @_block_kernel(%arg0: i32, %arg1: memref<1x16x16xf32, #tpu.memory_space<vmem>>, %arg2: memref<16x72xbf16, #tpu.memory_space<vmem>>, %arg3: memref<1x72xf32, #tpu.memory_space<vmem>>, %arg4: memref<9x72xf32, #tpu.memory_space<vmem>>, %arg5: memref<1x72xf32, #tpu.memory_space<vmem>>, %arg6: memref<72x24xbf16, #tpu.memory_space<vmem>>, %arg7: memref<1x24xf32, #tpu.memory_space<vmem>>, %arg8: memref<1x4x24xf32, #tpu.memory_space<vmem>>, %arg9: memref<36x72xf32, #tpu.memory_space<vmem>>, %arg10: memref<4x72xf32, #tpu.memory_space<vmem>>) attributes {dimension_semantics = [#tpu.dimension_semantics<parallel>], iteration_bounds = array<i64: 2>, scalar_prefetch = 0 : i64, scratch_operands = 2 : i64, tpu.core_type = #tpu.core_type<tc>, window_params = [{transform_indices = @transform_0, window_bounds = array<i64: 1, 16, 16>}, {pipeline_mode = #tpu.pipeline_mode<synchronous>, transform_indices = @transform_1, window_bounds = array<i64: 16, 72>}, {pipeline_mode = #tpu.pipeline_mode<synchronous>, transform_indices = @transform_2, window_bounds = array<i64: 1, 72>}, {pipeline_mode = #tpu.pipeline_mode<synchronous>, transform_indices = @transform_3, window_bounds = array<i64: 9, 72>}, {pipeline_mode = #tpu.pipeline_mode<synchronous>, transform_indices = @transform_4, window_bounds = array<i64: 1, 72>}, {pipeline_mode = #tpu.pipeline_mode<synchronous>, transform_indices = @transform_5, window_bounds = array<i64: 72, 24>}, {pipeline_mode = #tpu.pipeline_mode<synchronous>, transform_indices = @transform_6, window_bounds = array<i64: 1, 24>}, {transform_indices = @transform_7, window_bounds = array<i64: 1, 4, 24>}]} {
    %c0 = arith.constant 0 : index
    %c0_0 = arith.constant 0 : index
    %c0_1 = arith.constant 0 : index
    %0 = vector.load %arg1[%c0, %c0_0, %c0_1] : memref<1x16x16xf32, #tpu.memory_space<vmem>>, vector<1x16x16xf32>
    %1 = vector.shape_cast %0 : vector<1x16x16xf32> to vector<16x16xf32>
    %2 = arith.truncf %1 : vector<16x16xf32> to vector<16x16xbf16>
    %c0_2 = arith.constant 0 : index
    %c0_3 = arith.constant 0 : index
    %3 = vector.load %arg2[%c0_2, %c0_3] : memref<16x72xbf16, #tpu.memory_space<vmem>>, vector<16x72xbf16>
    %cst = arith.constant dense<0.000000e+00> : vector<16x72xf32>
    %4 = tpu.matmul %2, %3, %cst {dimension_numbers = #tpu.dot_dimension_numbers<[1], [0], [0], [1], [0, 0, 1, 1], [], []>} : vector<16x16xbf16>, vector<16x72xbf16>, vector<16x72xf32> -> vector<16x72xf32>
    %c0_4 = arith.constant 0 : index
    %c0_5 = arith.constant 0 : index
    %5 = vector.load %arg3[%c0_4, %c0_5] : memref<1x72xf32, #tpu.memory_space<vmem>>, vector<1x72xf32>
    %6 = vector.broadcast %5 : vector<1x72xf32> to vector<16x72xf32>
    %7 = arith.addf %4, %6 : vector<16x72xf32>
    %cst_6 = arith.constant 0.000000e+00 : f32
    %8 = vector.broadcast %cst_6 : f32 to vector<16x72xf32>
    %9 = arith.maximumf %7, %8 : vector<16x72xf32>
    %cst_7 = arith.constant 0.000000e+00 : f32
    %10 = vector.broadcast %cst_7 : f32 to vector<36x72xf32>
    %c0_8 = arith.constant 0 : index
    %c0_9 = arith.constant 0 : index
    %11 = vector.load %arg9[%c0_8, %c0_9] : memref<36x72xf32, #tpu.memory_space<vmem>>, vector<36x72xf32>
    tpu.vector_store %arg9[%c0_8, %c0_9], %10 {strides = array<i32>} : memref<36x72xf32, #tpu.memory_space<vmem>>, vector<36x72xf32>,
    %12 = vector.extract_strided_slice %9 {offsets = [0, 0], sizes = [4, 72], strides = [1, 1]} : vector<16x72xf32> to vector<4x72xf32>
    %c7 = arith.constant 7 : index
    %c0_10 = arith.constant 0 : index
    %13 = vector.load %arg9[%c7, %c0_10] : memref<36x72xf32, #tpu.memory_space<vmem>>, vector<4x72xf32>
    tpu.vector_store %arg9[%c7, %c0_10], %12 {strides = array<i32>} : memref<36x72xf32, #tpu.memory_space<vmem>>, vector<4x72xf32>,
    %14 = vector.extract_strided_slice %9 {offsets = [4, 0], sizes = [4, 72], strides = [1, 1]} : vector<16x72xf32> to vector<4x72xf32>
    %c13 = arith.constant 13 : index
    %c0_11 = arith.constant 0 : index
    %15 = vector.load %arg9[%c13, %c0_11] : memref<36x72xf32, #tpu.memory_space<vmem>>, vector<4x72xf32>
    tpu.vector_store %arg9[%c13, %c0_11], %14 {strides = array<i32>} : memref<36x72xf32, #tpu.memory_space<vmem>>, vector<4x72xf32>,
    %16 = vector.extract_strided_slice %9 {offsets = [8, 0], sizes = [4, 72], strides = [1, 1]} : vector<16x72xf32> to vector<4x72xf32>
    %c19 = arith.constant 19 : index
    %c0_12 = arith.constant 0 : index
    %17 = vector.load %arg9[%c19, %c0_12] : memref<36x72xf32, #tpu.memory_space<vmem>>, vector<4x72xf32>
    tpu.vector_store %arg9[%c19, %c0_12], %16 {strides = array<i32>} : memref<36x72xf32, #tpu.memory_space<vmem>>, vector<4x72xf32>,
    %18 = vector.extract_strided_slice %9 {offsets = [12, 0], sizes = [4, 72], strides = [1, 1]} : vector<16x72xf32> to vector<4x72xf32>
    %c25 = arith.constant 25 : index
    %c0_13 = arith.constant 0 : index
    %19 = vector.load %arg9[%c25, %c0_13] : memref<36x72xf32, #tpu.memory_space<vmem>>, vector<4x72xf32>
    tpu.vector_store %arg9[%c25, %c0_13], %18 {strides = array<i32>} : memref<36x72xf32, #tpu.memory_space<vmem>>, vector<4x72xf32>,
    %c0_14 = arith.constant 0 : index
    %c0_15 = arith.constant 0 : index
    %20 = vector.load %arg4[%c0_14, %c0_15] : memref<9x72xf32, #tpu.memory_space<vmem>>, vector<9x72xf32>
    %c0_16 = arith.constant 0 : index
    %c0_17 = arith.constant 0 : index
    %21 = vector.load %arg5[%c0_16, %c0_17] : memref<1x72xf32, #tpu.memory_space<vmem>>, vector<1x72xf32>
    %c0_18 = arith.constant 0 : index
    %c0_19 = arith.constant 0 : index
    %22 = tpu.strided_load %arg9[%c0_18, %c0_19] {strides = array<i32: 2, 1>} : memref<36x72xf32, #tpu.memory_space<vmem>>, vector<2x72xf32>
    %23 = vector.extract_strided_slice %20 {offsets = [0, 0], sizes = [1, 72], strides = [1, 1]} : vector<9x72xf32> to vector<1x72xf32>
    %24 = vector.broadcast %23 : vector<1x72xf32> to vector<2x72xf32>
    %25 = arith.mulf %22, %24 : vector<2x72xf32>
    %c1 = arith.constant 1 : index
    %c0_20 = arith.constant 0 : index
    %26 = tpu.strided_load %arg9[%c1, %c0_20] {strides = array<i32: 2, 1>} : memref<36x72xf32, #tpu.memory_space<vmem>>, vector<2x72xf32>
    %27 = vector.extract_strided_slice %20 {offsets = [1, 0], sizes = [1, 72], strides = [1, 1]} : vector<9x72xf32> to vector<1x72xf32>
    %28 = vector.broadcast %27 : vector<1x72xf32> to vector<2x72xf32>
    %29 = arith.mulf %26, %28 : vector<2x72xf32>
    %30 = arith.addf %25, %29 : vector<2x72xf32>
    %c2 = arith.constant 2 : index
    %c0_21 = arith.constant 0 : index
    %31 = tpu.strided_load %arg9[%c2, %c0_21] {strides = array<i32: 2, 1>} : memref<36x72xf32, #tpu.memory_space<vmem>>, vector<2x72xf32>
    %32 = vector.extract_strided_slice %20 {offsets = [2, 0], sizes = [1, 72], strides = [1, 1]} : vector<9x72xf32> to vector<1x72xf32>
    %33 = vector.broadcast %32 : vector<1x72xf32> to vector<2x72xf32>
    %34 = arith.mulf %31, %33 : vector<2x72xf32>
    %35 = arith.addf %30, %34 : vector<2x72xf32>
    %c6 = arith.constant 6 : index
    %c0_22 = arith.constant 0 : index
    %36 = tpu.strided_load %arg9[%c6, %c0_22] {strides = array<i32: 2, 1>} : memref<36x72xf32, #tpu.memory_space<vmem>>, vector<2x72xf32>
    %37 = vector.extract_strided_slice %20 {offsets = [3, 0], sizes = [1, 72], strides = [1, 1]} : vector<9x72xf32> to vector<1x72xf32>
    %38 = vector.broadcast %37 : vector<1x72xf32> to vector<2x72xf32>
    %39 = arith.mulf %36, %38 : vector<2x72xf32>
    %40 = arith.addf %35, %39 : vector<2x72xf32>
    %c7_23 = arith.constant 7 : index
    %c0_24 = arith.constant 0 : index
    %41 = tpu.strided_load %arg9[%c7_23, %c0_24] {strides = array<i32: 2, 1>} : memref<36x72xf32, #tpu.memory_space<vmem>>, vector<2x72xf32>
    %42 = vector.extract_strided_slice %20 {offsets = [4, 0], sizes = [1, 72], strides = [1, 1]} : vector<9x72xf32> to vector<1x72xf32>
    %43 = vector.broadcast %42 : vector<1x72xf32> to vector<2x72xf32>
    %44 = arith.mulf %41, %43 : vector<2x72xf32>
    %45 = arith.addf %40, %44 : vector<2x72xf32>
    %c8 = arith.constant 8 : index
    %c0_25 = arith.constant 0 : index
    %46 = tpu.strided_load %arg9[%c8, %c0_25] {strides = array<i32: 2, 1>} : memref<36x72xf32, #tpu.memory_space<vmem>>, vector<2x72xf32>
    %47 = vector.extract_strided_slice %20 {offsets = [5, 0], sizes = [1, 72], strides = [1, 1]} : vector<9x72xf32> to vector<1x72xf32>
    %48 = vector.broadcast %47 : vector<1x72xf32> to vector<2x72xf32>
    %49 = arith.mulf %46, %48 : vector<2x72xf32>
    %50 = arith.addf %45, %49 : vector<2x72xf32>
    %c12 = arith.constant 12 : index
    %c0_26 = arith.constant 0 : index
    %51 = tpu.strided_load %arg9[%c12, %c0_26] {strides = array<i32: 2, 1>} : memref<36x72xf32, #tpu.memory_space<vmem>>, vector<2x72xf32>
    %52 = vector.extract_strided_slice %20 {offsets = [6, 0], sizes = [1, 72], strides = [1, 1]} : vector<9x72xf32> to vector<1x72xf32>
    %53 = vector.broadcast %52 : vector<1x72xf32> to vector<2x72xf32>
    %54 = arith.mulf %51, %53 : vector<2x72xf32>
    %55 = arith.addf %50, %54 : vector<2x72xf32>
    %c13_27 = arith.constant 13 : index
    %c0_28 = arith.constant 0 : index
    %56 = tpu.strided_load %arg9[%c13_27, %c0_28] {strides = array<i32: 2, 1>} : memref<36x72xf32, #tpu.memory_space<vmem>>, vector<2x72xf32>
    %57 = vector.extract_strided_slice %20 {offsets = [7, 0], sizes = [1, 72], strides = [1, 1]} : vector<9x72xf32> to vector<1x72xf32>
    %58 = vector.broadcast %57 : vector<1x72xf32> to vector<2x72xf32>
    %59 = arith.mulf %56, %58 : vector<2x72xf32>
    %60 = arith.addf %55, %59 : vector<2x72xf32>
    %c14 = arith.constant 14 : index
    %c0_29 = arith.constant 0 : index
    %61 = tpu.strided_load %arg9[%c14, %c0_29] {strides = array<i32: 2, 1>} : memref<36x72xf32, #tpu.memory_space<vmem>>, vector<2x72xf32>
    %62 = vector.extract_strided_slice %20 {offsets = [8, 0], sizes = [1, 72], strides = [1, 1]} : vector<9x72xf32> to vector<1x72xf32>
    %63 = vector.broadcast %62 : vector<1x72xf32> to vector<2x72xf32>
    %64 = arith.mulf %61, %63 : vector<2x72xf32>
    %65 = arith.addf %60, %64 : vector<2x72xf32>
    %66 = vector.broadcast %21 : vector<1x72xf32> to vector<2x72xf32>
    %67 = arith.addf %65, %66 : vector<2x72xf32>
    %cst_30 = arith.constant 0.000000e+00 : f32
    %68 = vector.broadcast %cst_30 : f32 to vector<2x72xf32>
    %69 = arith.maximumf %67, %68 : vector<2x72xf32>
    %c0_31 = arith.constant 0 : index
    %c0_32 = arith.constant 0 : index
    %70 = vector.load %arg10[%c0_31, %c0_32] : memref<4x72xf32, #tpu.memory_space<vmem>>, vector<2x72xf32>
    tpu.vector_store %arg10[%c0_31, %c0_32], %69 {strides = array<i32>} : memref<4x72xf32, #tpu.memory_space<vmem>>, vector<2x72xf32>,
    %c12_33 = arith.constant 12 : index
    %c0_34 = arith.constant 0 : index
    %71 = tpu.strided_load %arg9[%c12_33, %c0_34] {strides = array<i32: 2, 1>} : memref<36x72xf32, #tpu.memory_space<vmem>>, vector<2x72xf32>
    %72 = vector.extract_strided_slice %20 {offsets = [0, 0], sizes = [1, 72], strides = [1, 1]} : vector<9x72xf32> to vector<1x72xf32>
    %73 = vector.broadcast %72 : vector<1x72xf32> to vector<2x72xf32>
    %74 = arith.mulf %71, %73 : vector<2x72xf32>
    %c13_35 = arith.constant 13 : index
    %c0_36 = arith.constant 0 : index
    %75 = tpu.strided_load %arg9[%c13_35, %c0_36] {strides = array<i32: 2, 1>} : memref<36x72xf32, #tpu.memory_space<vmem>>, vector<2x72xf32>
    %76 = vector.extract_strided_slice %20 {offsets = [1, 0], sizes = [1, 72], strides = [1, 1]} : vector<9x72xf32> to vector<1x72xf32>
    %77 = vector.broadcast %76 : vector<1x72xf32> to vector<2x72xf32>
    %78 = arith.mulf %75, %77 : vector<2x72xf32>
    %79 = arith.addf %74, %78 : vector<2x72xf32>
    %c14_37 = arith.constant 14 : index
    %c0_38 = arith.constant 0 : index
    %80 = tpu.strided_load %arg9[%c14_37, %c0_38] {strides = array<i32: 2, 1>} : memref<36x72xf32, #tpu.memory_space<vmem>>, vector<2x72xf32>
    %81 = vector.extract_strided_slice %20 {offsets = [2, 0], sizes = [1, 72], strides = [1, 1]} : vector<9x72xf32> to vector<1x72xf32>
    %82 = vector.broadcast %81 : vector<1x72xf32> to vector<2x72xf32>
    %83 = arith.mulf %80, %82 : vector<2x72xf32>
    %84 = arith.addf %79, %83 : vector<2x72xf32>
    %c18 = arith.constant 18 : index
    %c0_39 = arith.constant 0 : index
    %85 = tpu.strided_load %arg9[%c18, %c0_39] {strides = array<i32: 2, 1>} : memref<36x72xf32, #tpu.memory_space<vmem>>, vector<2x72xf32>
    %86 = vector.extract_strided_slice %20 {offsets = [3, 0], sizes = [1, 72], strides = [1, 1]} : vector<9x72xf32> to vector<1x72xf32>
    %87 = vector.broadcast %86 : vector<1x72xf32> to vector<2x72xf32>
    %88 = arith.mulf %85, %87 : vector<2x72xf32>
    %89 = arith.addf %84, %88 : vector<2x72xf32>
    %c19_40 = arith.constant 19 : index
    %c0_41 = arith.constant 0 : index
    %90 = tpu.strided_load %arg9[%c19_40, %c0_41] {strides = array<i32: 2, 1>} : memref<36x72xf32, #tpu.memory_space<vmem>>, vector<2x72xf32>
    %91 = vector.extract_strided_slice %20 {offsets = [4, 0], sizes = [1, 72], strides = [1, 1]} : vector<9x72xf32> to vector<1x72xf32>
    %92 = vector.broadcast %91 : vector<1x72xf32> to vector<2x72xf32>
    %93 = arith.mulf %90, %92 : vector<2x72xf32>
    %94 = arith.addf %89, %93 : vector<2x72xf32>
    %c20 = arith.constant 20 : index
    %c0_42 = arith.constant 0 : index
    %95 = tpu.strided_load %arg9[%c20, %c0_42] {strides = array<i32: 2, 1>} : memref<36x72xf32, #tpu.memory_space<vmem>>, vector<2x72xf32>
    %96 = vector.extract_strided_slice %20 {offsets = [5, 0], sizes = [1, 72], strides = [1, 1]} : vector<9x72xf32> to vector<1x72xf32>
    %97 = vector.broadcast %96 : vector<1x72xf32> to vector<2x72xf32>
    %98 = arith.mulf %95, %97 : vector<2x72xf32>
    %99 = arith.addf %94, %98 : vector<2x72xf32>
    %c24 = arith.constant 24 : index
    %c0_43 = arith.constant 0 : index
    %100 = tpu.strided_load %arg9[%c24, %c0_43] {strides = array<i32: 2, 1>} : memref<36x72xf32, #tpu.memory_space<vmem>>, vector<2x72xf32>
    %101 = vector.extract_strided_slice %20 {offsets = [6, 0], sizes = [1, 72], strides = [1, 1]} : vector<9x72xf32> to vector<1x72xf32>
    %102 = vector.broadcast %101 : vector<1x72xf32> to vector<2x72xf32>
    %103 = arith.mulf %100, %102 : vector<2x72xf32>
    %104 = arith.addf %99, %103 : vector<2x72xf32>
    %c25_44 = arith.constant 25 : index
    %c0_45 = arith.constant 0 : index
    %105 = tpu.strided_load %arg9[%c25_44, %c0_45] {strides = array<i32: 2, 1>} : memref<36x72xf32, #tpu.memory_space<vmem>>, vector<2x72xf32>
    %106 = vector.extract_strided_slice %20 {offsets = [7, 0], sizes = [1, 72], strides = [1, 1]} : vector<9x72xf32> to vector<1x72xf32>
    %107 = vector.broadcast %106 : vector<1x72xf32> to vector<2x72xf32>
    %108 = arith.mulf %105, %107 : vector<2x72xf32>
    %109 = arith.addf %104, %108 : vector<2x72xf32>
    %c26 = arith.constant 26 : index
    %c0_46 = arith.constant 0 : index
    %110 = tpu.strided_load %arg9[%c26, %c0_46] {strides = array<i32: 2, 1>} : memref<36x72xf32, #tpu.memory_space<vmem>>, vector<2x72xf32>
    %111 = vector.extract_strided_slice %20 {offsets = [8, 0], sizes = [1, 72], strides = [1, 1]} : vector<9x72xf32> to vector<1x72xf32>
    %112 = vector.broadcast %111 : vector<1x72xf32> to vector<2x72xf32>
    %113 = arith.mulf %110, %112 : vector<2x72xf32>
    %114 = arith.addf %109, %113 : vector<2x72xf32>
    %115 = vector.broadcast %21 : vector<1x72xf32> to vector<2x72xf32>
    %116 = arith.addf %114, %115 : vector<2x72xf32>
    %cst_47 = arith.constant 0.000000e+00 : f32
    %117 = vector.broadcast %cst_47 : f32 to vector<2x72xf32>
    %118 = arith.maximumf %116, %117 : vector<2x72xf32>
    %c2_48 = arith.constant 2 : index
    %c0_49 = arith.constant 0 : index
    %119 = vector.load %arg10[%c2_48, %c0_49] : memref<4x72xf32, #tpu.memory_space<vmem>>, vector<2x72xf32>
    tpu.vector_store %arg10[%c2_48, %c0_49], %118 {strides = array<i32>} : memref<4x72xf32, #tpu.memory_space<vmem>>, vector<2x72xf32>,
    %c0_50 = arith.constant 0 : index
    %c0_51 = arith.constant 0 : index
    %120 = vector.load %arg10[%c0_50, %c0_51] : memref<4x72xf32, #tpu.memory_space<vmem>>, vector<4x72xf32>
    %121 = arith.truncf %120 : vector<4x72xf32> to vector<4x72xbf16>
    %c0_52 = arith.constant 0 : index
    %c0_53 = arith.constant 0 : index
    %122 = vector.load %arg6[%c0_52, %c0_53] : memref<72x24xbf16, #tpu.memory_space<vmem>>, vector<72x24xbf16>
    %cst_54 = arith.constant dense<0.000000e+00> : vector<4x24xf32>
    %123 = tpu.matmul %121, %122, %cst_54 {dimension_numbers = #tpu.dot_dimension_numbers<[1], [0], [0], [1], [0, 0, 1, 1], [], []>} : vector<4x72xbf16>, vector<72x24xbf16>, vector<4x24xf32> -> vector<4x24xf32>
    %c0_55 = arith.constant 0 : index
    %c0_56 = arith.constant 0 : index
    %124 = vector.load %arg7[%c0_55, %c0_56] : memref<1x24xf32, #tpu.memory_space<vmem>>, vector<1x24xf32>
    %125 = vector.broadcast %124 : vector<1x24xf32> to vector<4x24xf32>
    %126 = arith.addf %123, %125 : vector<4x24xf32>
    %c0_57 = arith.constant 0 : index
    %c0_58 = arith.constant 0 : index
    %c0_59 = arith.constant 0 : index
    %127 = vector.load %arg8[%c0_57, %c0_58, %c0_59] : memref<1x4x24xf32, #tpu.memory_space<vmem>>, vector<1x4x24xf32>
    %128 = vector.shape_cast %127 : vector<1x4x24xf32> to vector<4x24xf32>
    %129 = vector.shape_cast %126 : vector<4x24xf32> to vector<1x4x24xf32>
    tpu.vector_store %arg8[%c0_57, %c0_58, %c0_59], %129 {strides = array<i32>} : memref<1x4x24xf32, #tpu.memory_space<vmem>>, vector<1x4x24xf32>,
    return
  }
  func.func @transform_0(%arg0: i32) -> (i32, i32, i32) {
    %c0_i32 = arith.constant 0 : i32
    %c0_i32_0 = arith.constant 0 : i32
    %c0_i32_1 = arith.constant 0 : i32
    return %arg0, %c0_i32, %c0_i32_0 : i32, i32, i32
  }
  func.func @transform_1(%arg0: i32) -> (i32, i32) {
    %c0_i32 = arith.constant 0 : i32
    %c0_i32_0 = arith.constant 0 : i32
    %c0_i32_1 = arith.constant 0 : i32
    return %c0_i32, %c0_i32_0 : i32, i32
  }
  func.func @transform_2(%arg0: i32) -> (i32, i32) {
    %c0_i32 = arith.constant 0 : i32
    %c0_i32_0 = arith.constant 0 : i32
    %c0_i32_1 = arith.constant 0 : i32
    return %c0_i32, %c0_i32_0 : i32, i32
  }
  func.func @transform_3(%arg0: i32) -> (i32, i32) {
    %c0_i32 = arith.constant 0 : i32
    %c0_i32_0 = arith.constant 0 : i32
    %c0_i32_1 = arith.constant 0 : i32
    return %c0_i32, %c0_i32_0 : i32, i32
  }
  func.func @transform_4(%arg0: i32) -> (i32, i32) {
    %c0_i32 = arith.constant 0 : i32
    %c0_i32_0 = arith.constant 0 : i32
    %c0_i32_1 = arith.constant 0 : i32
    return %c0_i32, %c0_i32_0 : i32, i32
  }
  func.func @transform_5(%arg0: i32) -> (i32, i32) {
    %c0_i32 = arith.constant 0 : i32
    %c0_i32_0 = arith.constant 0 : i32
    %c0_i32_1 = arith.constant 0 : i32
    return %c0_i32, %c0_i32_0 : i32, i32
  }
  func.func @transform_6(%arg0: i32) -> (i32, i32) {
    %c0_i32 = arith.constant 0 : i32
    %c0_i32_0 = arith.constant 0 : i32
    %c0_i32_1 = arith.constant 0 : i32
    return %c0_i32, %c0_i32_0 : i32, i32
  }
  func.func @transform_7(%arg0: i32) -> (i32, i32, i32) {
    %c0_i32 = arith.constant 0 : i32
    %c0_i32_0 = arith.constant 0 : i32
    %c0_i32_1 = arith.constant 0 : i32
    return %arg0, %c0_i32, %c0_i32_0 : i32, i32, i32
  }
}

module attributes {stable_mosaic.version = 11 : i64} {
  func.func @_block_kernel(%arg0: i32, %arg1: memref<1x4x24xf32, #tpu.memory_space<vmem>>, %arg2: memref<24x96xbf16, #tpu.memory_space<vmem>>, %arg3: memref<1x96xf32, #tpu.memory_space<vmem>>, %arg4: memref<25x96xf32, #tpu.memory_space<vmem>>, %arg5: memref<1x96xf32, #tpu.memory_space<vmem>>, %arg6: memref<96x24xf32, #tpu.memory_space<vmem>>, %arg7: memref<1x24xf32, #tpu.memory_space<vmem>>, %arg8: memref<24x96xf32, #tpu.memory_space<vmem>>, %arg9: memref<1x96xf32, #tpu.memory_space<vmem>>, %arg10: memref<96x24xbf16, #tpu.memory_space<vmem>>, %arg11: memref<1x24xf32, #tpu.memory_space<vmem>>, %arg12: memref<1x4x24xf32, #tpu.memory_space<vmem>>, %arg13: memref<36x96xf32, #tpu.memory_space<vmem>>, %arg14: memref<4x96xf32, #tpu.memory_space<vmem>>) attributes {dimension_semantics = [#tpu.dimension_semantics<parallel>], iteration_bounds = array<i64: 2>, scalar_prefetch = 0 : i64, scratch_operands = 2 : i64, tpu.core_type = #tpu.core_type<tc>, window_params = [{transform_indices = @transform_0, window_bounds = array<i64: 1, 4, 24>}, {pipeline_mode = #tpu.pipeline_mode<synchronous>, transform_indices = @transform_1, window_bounds = array<i64: 24, 96>}, {pipeline_mode = #tpu.pipeline_mode<synchronous>, transform_indices = @transform_2, window_bounds = array<i64: 1, 96>}, {pipeline_mode = #tpu.pipeline_mode<synchronous>, transform_indices = @transform_3, window_bounds = array<i64: 25, 96>}, {pipeline_mode = #tpu.pipeline_mode<synchronous>, transform_indices = @transform_4, window_bounds = array<i64: 1, 96>}, {pipeline_mode = #tpu.pipeline_mode<synchronous>, transform_indices = @transform_5, window_bounds = array<i64: 96, 24>}, {pipeline_mode = #tpu.pipeline_mode<synchronous>, transform_indices = @transform_6, window_bounds = array<i64: 1, 24>}, {pipeline_mode = #tpu.pipeline_mode<synchronous>, transform_indices = @transform_7, window_bounds = array<i64: 24, 96>}, {pipeline_mode = #tpu.pipeline_mode<synchronous>, transform_indices = @transform_8, window_bounds = array<i64: 1, 96>}, {pipeline_mode = #tpu.pipeline_mode<synchronous>, transform_indices = @transform_9, window_bounds = array<i64: 96, 24>}, {pipeline_mode = #tpu.pipeline_mode<synchronous>, transform_indices = @transform_10, window_bounds = array<i64: 1, 24>}, {transform_indices = @transform_11, window_bounds = array<i64: 1, 4, 24>}]} {
    %c0 = arith.constant 0 : index
    %c0_0 = arith.constant 0 : index
    %c0_1 = arith.constant 0 : index
    %0 = vector.load %arg1[%c0, %c0_0, %c0_1] : memref<1x4x24xf32, #tpu.memory_space<vmem>>, vector<1x4x24xf32>
    %1 = vector.shape_cast %0 : vector<1x4x24xf32> to vector<4x24xf32>
    %2 = arith.truncf %1 : vector<4x24xf32> to vector<4x24xbf16>
    %c0_2 = arith.constant 0 : index
    %c0_3 = arith.constant 0 : index
    %3 = vector.load %arg2[%c0_2, %c0_3] : memref<24x96xbf16, #tpu.memory_space<vmem>>, vector<24x96xbf16>
    %cst = arith.constant dense<0.000000e+00> : vector<4x96xf32>
    %4 = tpu.matmul %2, %3, %cst {dimension_numbers = #tpu.dot_dimension_numbers<[1], [0], [0], [1], [0, 0, 1, 1], [], []>} : vector<4x24xbf16>, vector<24x96xbf16>, vector<4x96xf32> -> vector<4x96xf32>
    %c0_4 = arith.constant 0 : index
    %c0_5 = arith.constant 0 : index
    %5 = vector.load %arg3[%c0_4, %c0_5] : memref<1x96xf32, #tpu.memory_space<vmem>>, vector<1x96xf32>
    %6 = vector.broadcast %5 : vector<1x96xf32> to vector<4x96xf32>
    %7 = arith.addf %4, %6 : vector<4x96xf32>
    %cst_6 = arith.constant 3.000000e+00 : f32
    %8 = vector.broadcast %cst_6 : f32 to vector<4x96xf32>
    %9 = arith.addf %7, %8 : vector<4x96xf32>
    %cst_7 = arith.constant 0.000000e+00 : f32
    %cst_8 = arith.constant 6.000000e+00 : f32
    %10 = vector.broadcast %cst_7 : f32 to vector<4x96xf32>
    %11 = arith.maximumf %10, %9 : vector<4x96xf32>
    %12 = vector.broadcast %cst_8 : f32 to vector<4x96xf32>
    %13 = arith.minimumf %12, %11 : vector<4x96xf32>
    %cst_9 = arith.constant 0.166666672 : f32
    %14 = vector.broadcast %cst_9 : f32 to vector<4x96xf32>
    %15 = arith.mulf %13, %14 : vector<4x96xf32>
    %16 = arith.mulf %7, %15 : vector<4x96xf32>
    %cst_10 = arith.constant 0.000000e+00 : f32
    %17 = vector.broadcast %cst_10 : f32 to vector<36x96xf32>
    %c0_11 = arith.constant 0 : index
    %c0_12 = arith.constant 0 : index
    %18 = vector.load %arg13[%c0_11, %c0_12] : memref<36x96xf32, #tpu.memory_space<vmem>>, vector<36x96xf32>
    tpu.vector_store %arg13[%c0_11, %c0_12], %17 {strides = array<i32>} : memref<36x96xf32, #tpu.memory_space<vmem>>, vector<36x96xf32>,
    %19 = vector.extract_strided_slice %16 {offsets = [0, 0], sizes = [2, 96], strides = [1, 1]} : vector<4x96xf32> to vector<2x96xf32>
    %c14 = arith.constant 14 : index
    %c0_13 = arith.constant 0 : index
    %20 = vector.load %arg13[%c14, %c0_13] : memref<36x96xf32, #tpu.memory_space<vmem>>, vector<2x96xf32>
    tpu.vector_store %arg13[%c14, %c0_13], %19 {strides = array<i32>} : memref<36x96xf32, #tpu.memory_space<vmem>>, vector<2x96xf32>,
    %21 = vector.extract_strided_slice %16 {offsets = [2, 0], sizes = [2, 96], strides = [1, 1]} : vector<4x96xf32> to vector<2x96xf32>
    %c20 = arith.constant 20 : index
    %c0_14 = arith.constant 0 : index
    %22 = vector.load %arg13[%c20, %c0_14] : memref<36x96xf32, #tpu.memory_space<vmem>>, vector<2x96xf32>
    tpu.vector_store %arg13[%c20, %c0_14], %21 {strides = array<i32>} : memref<36x96xf32, #tpu.memory_space<vmem>>, vector<2x96xf32>,
    %c0_15 = arith.constant 0 : index
    %c0_16 = arith.constant 0 : index
    %23 = vector.load %arg4[%c0_15, %c0_16] : memref<25x96xf32, #tpu.memory_space<vmem>>, vector<25x96xf32>
    %c0_17 = arith.constant 0 : index
    %c0_18 = arith.constant 0 : index
    %24 = vector.load %arg5[%c0_17, %c0_18] : memref<1x96xf32, #tpu.memory_space<vmem>>, vector<1x96xf32>
    %c0_19 = arith.constant 0 : index
    %c0_20 = arith.constant 0 : index
    %25 = vector.load %arg13[%c0_19, %c0_20] : memref<36x96xf32, #tpu.memory_space<vmem>>, vector<2x96xf32>
    %26 = vector.extract_strided_slice %23 {offsets = [0, 0], sizes = [1, 96], strides = [1, 1]} : vector<25x96xf32> to vector<1x96xf32>
    %27 = vector.broadcast %26 : vector<1x96xf32> to vector<2x96xf32>
    %28 = arith.mulf %25, %27 : vector<2x96xf32>
    %c1 = arith.constant 1 : index
    %c0_21 = arith.constant 0 : index
    %29 = vector.load %arg13[%c1, %c0_21] : memref<36x96xf32, #tpu.memory_space<vmem>>, vector<2x96xf32>
    %30 = vector.extract_strided_slice %23 {offsets = [1, 0], sizes = [1, 96], strides = [1, 1]} : vector<25x96xf32> to vector<1x96xf32>
    %31 = vector.broadcast %30 : vector<1x96xf32> to vector<2x96xf32>
    %32 = arith.mulf %29, %31 : vector<2x96xf32>
    %33 = arith.addf %28, %32 : vector<2x96xf32>
    %c2 = arith.constant 2 : index
    %c0_22 = arith.constant 0 : index
    %34 = vector.load %arg13[%c2, %c0_22] : memref<36x96xf32, #tpu.memory_space<vmem>>, vector<2x96xf32>
    %35 = vector.extract_strided_slice %23 {offsets = [2, 0], sizes = [1, 96], strides = [1, 1]} : vector<25x96xf32> to vector<1x96xf32>
    %36 = vector.broadcast %35 : vector<1x96xf32> to vector<2x96xf32>
    %37 = arith.mulf %34, %36 : vector<2x96xf32>
    %38 = arith.addf %33, %37 : vector<2x96xf32>
    %c3 = arith.constant 3 : index
    %c0_23 = arith.constant 0 : index
    %39 = vector.load %arg13[%c3, %c0_23] : memref<36x96xf32, #tpu.memory_space<vmem>>, vector<2x96xf32>
    %40 = vector.extract_strided_slice %23 {offsets = [3, 0], sizes = [1, 96], strides = [1, 1]} : vector<25x96xf32> to vector<1x96xf32>
    %41 = vector.broadcast %40 : vector<1x96xf32> to vector<2x96xf32>
    %42 = arith.mulf %39, %41 : vector<2x96xf32>
    %43 = arith.addf %38, %42 : vector<2x96xf32>
    %c4 = arith.constant 4 : index
    %c0_24 = arith.constant 0 : index
    %44 = vector.load %arg13[%c4, %c0_24] : memref<36x96xf32, #tpu.memory_space<vmem>>, vector<2x96xf32>
    %45 = vector.extract_strided_slice %23 {offsets = [4, 0], sizes = [1, 96], strides = [1, 1]} : vector<25x96xf32> to vector<1x96xf32>
    %46 = vector.broadcast %45 : vector<1x96xf32> to vector<2x96xf32>
    %47 = arith.mulf %44, %46 : vector<2x96xf32>
    %48 = arith.addf %43, %47 : vector<2x96xf32>
    %c6 = arith.constant 6 : index
    %c0_25 = arith.constant 0 : index
    %49 = vector.load %arg13[%c6, %c0_25] : memref<36x96xf32, #tpu.memory_space<vmem>>, vector<2x96xf32>
    %50 = vector.extract_strided_slice %23 {offsets = [5, 0], sizes = [1, 96], strides = [1, 1]} : vector<25x96xf32> to vector<1x96xf32>
    %51 = vector.broadcast %50 : vector<1x96xf32> to vector<2x96xf32>
    %52 = arith.mulf %49, %51 : vector<2x96xf32>
    %53 = arith.addf %48, %52 : vector<2x96xf32>
    %c7 = arith.constant 7 : index
    %c0_26 = arith.constant 0 : index
    %54 = vector.load %arg13[%c7, %c0_26] : memref<36x96xf32, #tpu.memory_space<vmem>>, vector<2x96xf32>
    %55 = vector.extract_strided_slice %23 {offsets = [6, 0], sizes = [1, 96], strides = [1, 1]} : vector<25x96xf32> to vector<1x96xf32>
    %56 = vector.broadcast %55 : vector<1x96xf32> to vector<2x96xf32>
    %57 = arith.mulf %54, %56 : vector<2x96xf32>
    %58 = arith.addf %53, %57 : vector<2x96xf32>
    %c8 = arith.constant 8 : index
    %c0_27 = arith.constant 0 : index
    %59 = vector.load %arg13[%c8, %c0_27] : memref<36x96xf32, #tpu.memory_space<vmem>>, vector<2x96xf32>
    %60 = vector.extract_strided_slice %23 {offsets = [7, 0], sizes = [1, 96], strides = [1, 1]} : vector<25x96xf32> to vector<1x96xf32>
    %61 = vector.broadcast %60 : vector<1x96xf32> to vector<2x96xf32>
    %62 = arith.mulf %59, %61 : vector<2x96xf32>
    %63 = arith.addf %58, %62 : vector<2x96xf32>
    %c9 = arith.constant 9 : index
    %c0_28 = arith.constant 0 : index
    %64 = vector.load %arg13[%c9, %c0_28] : memref<36x96xf32, #tpu.memory_space<vmem>>, vector<2x96xf32>
    %65 = vector.extract_strided_slice %23 {offsets = [8, 0], sizes = [1, 96], strides = [1, 1]} : vector<25x96xf32> to vector<1x96xf32>
    %66 = vector.broadcast %65 : vector<1x96xf32> to vector<2x96xf32>
    %67 = arith.mulf %64, %66 : vector<2x96xf32>
    %68 = arith.addf %63, %67 : vector<2x96xf32>
    %c10 = arith.constant 10 : index
    %c0_29 = arith.constant 0 : index
    %69 = vector.load %arg13[%c10, %c0_29] : memref<36x96xf32, #tpu.memory_space<vmem>>, vector<2x96xf32>
    %70 = vector.extract_strided_slice %23 {offsets = [9, 0], sizes = [1, 96], strides = [1, 1]} : vector<25x96xf32> to vector<1x96xf32>
    %71 = vector.broadcast %70 : vector<1x96xf32> to vector<2x96xf32>
    %72 = arith.mulf %69, %71 : vector<2x96xf32>
    %73 = arith.addf %68, %72 : vector<2x96xf32>
    %c12 = arith.constant 12 : index
    %c0_30 = arith.constant 0 : index
    %74 = vector.load %arg13[%c12, %c0_30] : memref<36x96xf32, #tpu.memory_space<vmem>>, vector<2x96xf32>
    %75 = vector.extract_strided_slice %23 {offsets = [10, 0], sizes = [1, 96], strides = [1, 1]} : vector<25x96xf32> to vector<1x96xf32>
    %76 = vector.broadcast %75 : vector<1x96xf32> to vector<2x96xf32>
    %77 = arith.mulf %74, %76 : vector<2x96xf32>
    %78 = arith.addf %73, %77 : vector<2x96xf32>
    %c13 = arith.constant 13 : index
    %c0_31 = arith.constant 0 : index
    %79 = vector.load %arg13[%c13, %c0_31] : memref<36x96xf32, #tpu.memory_space<vmem>>, vector<2x96xf32>
    %80 = vector.extract_strided_slice %23 {offsets = [11, 0], sizes = [1, 96], strides = [1, 1]} : vector<25x96xf32> to vector<1x96xf32>
    %81 = vector.broadcast %80 : vector<1x96xf32> to vector<2x96xf32>
    %82 = arith.mulf %79, %81 : vector<2x96xf32>
    %83 = arith.addf %78, %82 : vector<2x96xf32>
    %c14_32 = arith.constant 14 : index
    %c0_33 = arith.constant 0 : index
    %84 = vector.load %arg13[%c14_32, %c0_33] : memref<36x96xf32, #tpu.memory_space<vmem>>, vector<2x96xf32>
    %85 = vector.extract_strided_slice %23 {offsets = [12, 0], sizes = [1, 96], strides = [1, 1]} : vector<25x96xf32> to vector<1x96xf32>
    %86 = vector.broadcast %85 : vector<1x96xf32> to vector<2x96xf32>
    %87 = arith.mulf %84, %86 : vector<2x96xf32>
    %88 = arith.addf %83, %87 : vector<2x96xf32>
    %c15 = arith.constant 15 : index
    %c0_34 = arith.constant 0 : index
    %89 = vector.load %arg13[%c15, %c0_34] : memref<36x96xf32, #tpu.memory_space<vmem>>, vector<2x96xf32>
    %90 = vector.extract_strided_slice %23 {offsets = [13, 0], sizes = [1, 96], strides = [1, 1]} : vector<25x96xf32> to vector<1x96xf32>
    %91 = vector.broadcast %90 : vector<1x96xf32> to vector<2x96xf32>
    %92 = arith.mulf %89, %91 : vector<2x96xf32>
    %93 = arith.addf %88, %92 : vector<2x96xf32>
    %c16 = arith.constant 16 : index
    %c0_35 = arith.constant 0 : index
    %94 = vector.load %arg13[%c16, %c0_35] : memref<36x96xf32, #tpu.memory_space<vmem>>, vector<2x96xf32>
    %95 = vector.extract_strided_slice %23 {offsets = [14, 0], sizes = [1, 96], strides = [1, 1]} : vector<25x96xf32> to vector<1x96xf32>
    %96 = vector.broadcast %95 : vector<1x96xf32> to vector<2x96xf32>
    %97 = arith.mulf %94, %96 : vector<2x96xf32>
    %98 = arith.addf %93, %97 : vector<2x96xf32>
    %c18 = arith.constant 18 : index
    %c0_36 = arith.constant 0 : index
    %99 = vector.load %arg13[%c18, %c0_36] : memref<36x96xf32, #tpu.memory_space<vmem>>, vector<2x96xf32>
    %100 = vector.extract_strided_slice %23 {offsets = [15, 0], sizes = [1, 96], strides = [1, 1]} : vector<25x96xf32> to vector<1x96xf32>
    %101 = vector.broadcast %100 : vector<1x96xf32> to vector<2x96xf32>
    %102 = arith.mulf %99, %101 : vector<2x96xf32>
    %103 = arith.addf %98, %102 : vector<2x96xf32>
    %c19 = arith.constant 19 : index
    %c0_37 = arith.constant 0 : index
    %104 = vector.load %arg13[%c19, %c0_37] : memref<36x96xf32, #tpu.memory_space<vmem>>, vector<2x96xf32>
    %105 = vector.extract_strided_slice %23 {offsets = [16, 0], sizes = [1, 96], strides = [1, 1]} : vector<25x96xf32> to vector<1x96xf32>
    %106 = vector.broadcast %105 : vector<1x96xf32> to vector<2x96xf32>
    %107 = arith.mulf %104, %106 : vector<2x96xf32>
    %108 = arith.addf %103, %107 : vector<2x96xf32>
    %c20_38 = arith.constant 20 : index
    %c0_39 = arith.constant 0 : index
    %109 = vector.load %arg13[%c20_38, %c0_39] : memref<36x96xf32, #tpu.memory_space<vmem>>, vector<2x96xf32>
    %110 = vector.extract_strided_slice %23 {offsets = [17, 0], sizes = [1, 96], strides = [1, 1]} : vector<25x96xf32> to vector<1x96xf32>
    %111 = vector.broadcast %110 : vector<1x96xf32> to vector<2x96xf32>
    %112 = arith.mulf %109, %111 : vector<2x96xf32>
    %113 = arith.addf %108, %112 : vector<2x96xf32>
    %c21 = arith.constant 21 : index
    %c0_40 = arith.constant 0 : index
    %114 = vector.load %arg13[%c21, %c0_40] : memref<36x96xf32, #tpu.memory_space<vmem>>, vector<2x96xf32>
    %115 = vector.extract_strided_slice %23 {offsets = [18, 0], sizes = [1, 96], strides = [1, 1]} : vector<25x96xf32> to vector<1x96xf32>
    %116 = vector.broadcast %115 : vector<1x96xf32> to vector<2x96xf32>
    %117 = arith.mulf %114, %116 : vector<2x96xf32>
    %118 = arith.addf %113, %117 : vector<2x96xf32>
    %c22 = arith.constant 22 : index
    %c0_41 = arith.constant 0 : index
    %119 = vector.load %arg13[%c22, %c0_41] : memref<36x96xf32, #tpu.memory_space<vmem>>, vector<2x96xf32>
    %120 = vector.extract_strided_slice %23 {offsets = [19, 0], sizes = [1, 96], strides = [1, 1]} : vector<25x96xf32> to vector<1x96xf32>
    %121 = vector.broadcast %120 : vector<1x96xf32> to vector<2x96xf32>
    %122 = arith.mulf %119, %121 : vector<2x96xf32>
    %123 = arith.addf %118, %122 : vector<2x96xf32>
    %c24 = arith.constant 24 : index
    %c0_42 = arith.constant 0 : index
    %124 = vector.load %arg13[%c24, %c0_42] : memref<36x96xf32, #tpu.memory_space<vmem>>, vector<2x96xf32>
    %125 = vector.extract_strided_slice %23 {offsets = [20, 0], sizes = [1, 96], strides = [1, 1]} : vector<25x96xf32> to vector<1x96xf32>
    %126 = vector.broadcast %125 : vector<1x96xf32> to vector<2x96xf32>
    %127 = arith.mulf %124, %126 : vector<2x96xf32>
    %128 = arith.addf %123, %127 : vector<2x96xf32>
    %c25 = arith.constant 25 : index
    %c0_43 = arith.constant 0 : index
    %129 = vector.load %arg13[%c25, %c0_43] : memref<36x96xf32, #tpu.memory_space<vmem>>, vector<2x96xf32>
    %130 = vector.extract_strided_slice %23 {offsets = [21, 0], sizes = [1, 96], strides = [1, 1]} : vector<25x96xf32> to vector<1x96xf32>
    %131 = vector.broadcast %130 : vector<1x96xf32> to vector<2x96xf32>
    %132 = arith.mulf %129, %131 : vector<2x96xf32>
    %133 = arith.addf %128, %132 : vector<2x96xf32>
    %c26 = arith.constant 26 : index
    %c0_44 = arith.constant 0 : index
    %134 = vector.load %arg13[%c26, %c0_44] : memref<36x96xf32, #tpu.memory_space<vmem>>, vector<2x96xf32>
    %135 = vector.extract_strided_slice %23 {offsets = [22, 0], sizes = [1, 96], strides = [1, 1]} : vector<25x96xf32> to vector<1x96xf32>
    %136 = vector.broadcast %135 : vector<1x96xf32> to vector<2x96xf32>
    %137 = arith.mulf %134, %136 : vector<2x96xf32>
    %138 = arith.addf %133, %137 : vector<2x96xf32>
    %c27 = arith.constant 27 : index
    %c0_45 = arith.constant 0 : index
    %139 = vector.load %arg13[%c27, %c0_45] : memref<36x96xf32, #tpu.memory_space<vmem>>, vector<2x96xf32>
    %140 = vector.extract_strided_slice %23 {offsets = [23, 0], sizes = [1, 96], strides = [1, 1]} : vector<25x96xf32> to vector<1x96xf32>
    %141 = vector.broadcast %140 : vector<1x96xf32> to vector<2x96xf32>
    %142 = arith.mulf %139, %141 : vector<2x96xf32>
    %143 = arith.addf %138, %142 : vector<2x96xf32>
    %c28 = arith.constant 28 : index
    %c0_46 = arith.constant 0 : index
    %144 = vector.load %arg13[%c28, %c0_46] : memref<36x96xf32, #tpu.memory_space<vmem>>, vector<2x96xf32>
    %145 = vector.extract_strided_slice %23 {offsets = [24, 0], sizes = [1, 96], strides = [1, 1]} : vector<25x96xf32> to vector<1x96xf32>
    %146 = vector.broadcast %145 : vector<1x96xf32> to vector<2x96xf32>
    %147 = arith.mulf %144, %146 : vector<2x96xf32>
    %148 = arith.addf %143, %147 : vector<2x96xf32>
    %149 = vector.broadcast %24 : vector<1x96xf32> to vector<2x96xf32>
    %150 = arith.addf %148, %149 : vector<2x96xf32>
    %c0_47 = arith.constant 0 : index
    %c0_48 = arith.constant 0 : index
    %151 = vector.load %arg14[%c0_47, %c0_48] : memref<4x96xf32, #tpu.memory_space<vmem>>, vector<2x96xf32>
    tpu.vector_store %arg14[%c0_47, %c0_48], %150 {strides = array<i32>} : memref<4x96xf32, #tpu.memory_space<vmem>>, vector<2x96xf32>,
    %c6_49 = arith.constant 6 : index
    %c0_50 = arith.constant 0 : index
    %152 = vector.load %arg13[%c6_49, %c0_50] : memref<36x96xf32, #tpu.memory_space<vmem>>, vector<2x96xf32>
    %153 = vector.extract_strided_slice %23 {offsets = [0, 0], sizes = [1, 96], strides = [1, 1]} : vector<25x96xf32> to vector<1x96xf32>
    %154 = vector.broadcast %153 : vector<1x96xf32> to vector<2x96xf32>
    %155 = arith.mulf %152, %154 : vector<2x96xf32>
    %c7_51 = arith.constant 7 : index
    %c0_52 = arith.constant 0 : index
    %156 = vector.load %arg13[%c7_51, %c0_52] : memref<36x96xf32, #tpu.memory_space<vmem>>, vector<2x96xf32>
    %157 = vector.extract_strided_slice %23 {offsets = [1, 0], sizes = [1, 96], strides = [1, 1]} : vector<25x96xf32> to vector<1x96xf32>
    %158 = vector.broadcast %157 : vector<1x96xf32> to vector<2x96xf32>
    %159 = arith.mulf %156, %158 : vector<2x96xf32>
    %160 = arith.addf %155, %159 : vector<2x96xf32>
    %c8_53 = arith.constant 8 : index
    %c0_54 = arith.constant 0 : index
    %161 = vector.load %arg13[%c8_53, %c0_54] : memref<36x96xf32, #tpu.memory_space<vmem>>, vector<2x96xf32>
    %162 = vector.extract_strided_slice %23 {offsets = [2, 0], sizes = [1, 96], strides = [1, 1]} : vector<25x96xf32> to vector<1x96xf32>
    %163 = vector.broadcast %162 : vector<1x96xf32> to vector<2x96xf32>
    %164 = arith.mulf %161, %163 : vector<2x96xf32>
    %165 = arith.addf %160, %164 : vector<2x96xf32>
    %c9_55 = arith.constant 9 : index
    %c0_56 = arith.constant 0 : index
    %166 = vector.load %arg13[%c9_55, %c0_56] : memref<36x96xf32, #tpu.memory_space<vmem>>, vector<2x96xf32>
    %167 = vector.extract_strided_slice %23 {offsets = [3, 0], sizes = [1, 96], strides = [1, 1]} : vector<25x96xf32> to vector<1x96xf32>
    %168 = vector.broadcast %167 : vector<1x96xf32> to vector<2x96xf32>
    %169 = arith.mulf %166, %168 : vector<2x96xf32>
    %170 = arith.addf %165, %169 : vector<2x96xf32>
    %c10_57 = arith.constant 10 : index
    %c0_58 = arith.constant 0 : index
    %171 = vector.load %arg13[%c10_57, %c0_58] : memref<36x96xf32, #tpu.memory_space<vmem>>, vector<2x96xf32>
    %172 = vector.extract_strided_slice %23 {offsets = [4, 0], sizes = [1, 96], strides = [1, 1]} : vector<25x96xf32> to vector<1x96xf32>
    %173 = vector.broadcast %172 : vector<1x96xf32> to vector<2x96xf32>
    %174 = arith.mulf %171, %173 : vector<2x96xf32>
    %175 = arith.addf %170, %174 : vector<2x96xf32>
    %c12_59 = arith.constant 12 : index
    %c0_60 = arith.constant 0 : index
    %176 = vector.load %arg13[%c12_59, %c0_60] : memref<36x96xf32, #tpu.memory_space<vmem>>, vector<2x96xf32>
    %177 = vector.extract_strided_slice %23 {offsets = [5, 0], sizes = [1, 96], strides = [1, 1]} : vector<25x96xf32> to vector<1x96xf32>
    %178 = vector.broadcast %177 : vector<1x96xf32> to vector<2x96xf32>
    %179 = arith.mulf %176, %178 : vector<2x96xf32>
    %180 = arith.addf %175, %179 : vector<2x96xf32>
    %c13_61 = arith.constant 13 : index
    %c0_62 = arith.constant 0 : index
    %181 = vector.load %arg13[%c13_61, %c0_62] : memref<36x96xf32, #tpu.memory_space<vmem>>, vector<2x96xf32>
    %182 = vector.extract_strided_slice %23 {offsets = [6, 0], sizes = [1, 96], strides = [1, 1]} : vector<25x96xf32> to vector<1x96xf32>
    %183 = vector.broadcast %182 : vector<1x96xf32> to vector<2x96xf32>
    %184 = arith.mulf %181, %183 : vector<2x96xf32>
    %185 = arith.addf %180, %184 : vector<2x96xf32>
    %c14_63 = arith.constant 14 : index
    %c0_64 = arith.constant 0 : index
    %186 = vector.load %arg13[%c14_63, %c0_64] : memref<36x96xf32, #tpu.memory_space<vmem>>, vector<2x96xf32>
    %187 = vector.extract_strided_slice %23 {offsets = [7, 0], sizes = [1, 96], strides = [1, 1]} : vector<25x96xf32> to vector<1x96xf32>
    %188 = vector.broadcast %187 : vector<1x96xf32> to vector<2x96xf32>
    %189 = arith.mulf %186, %188 : vector<2x96xf32>
    %190 = arith.addf %185, %189 : vector<2x96xf32>
    %c15_65 = arith.constant 15 : index
    %c0_66 = arith.constant 0 : index
    %191 = vector.load %arg13[%c15_65, %c0_66] : memref<36x96xf32, #tpu.memory_space<vmem>>, vector<2x96xf32>
    %192 = vector.extract_strided_slice %23 {offsets = [8, 0], sizes = [1, 96], strides = [1, 1]} : vector<25x96xf32> to vector<1x96xf32>
    %193 = vector.broadcast %192 : vector<1x96xf32> to vector<2x96xf32>
    %194 = arith.mulf %191, %193 : vector<2x96xf32>
    %195 = arith.addf %190, %194 : vector<2x96xf32>
    %c16_67 = arith.constant 16 : index
    %c0_68 = arith.constant 0 : index
    %196 = vector.load %arg13[%c16_67, %c0_68] : memref<36x96xf32, #tpu.memory_space<vmem>>, vector<2x96xf32>
    %197 = vector.extract_strided_slice %23 {offsets = [9, 0], sizes = [1, 96], strides = [1, 1]} : vector<25x96xf32> to vector<1x96xf32>
    %198 = vector.broadcast %197 : vector<1x96xf32> to vector<2x96xf32>
    %199 = arith.mulf %196, %198 : vector<2x96xf32>
    %200 = arith.addf %195, %199 : vector<2x96xf32>
    %c18_69 = arith.constant 18 : index
    %c0_70 = arith.constant 0 : index
    %201 = vector.load %arg13[%c18_69, %c0_70] : memref<36x96xf32, #tpu.memory_space<vmem>>, vector<2x96xf32>
    %202 = vector.extract_strided_slice %23 {offsets = [10, 0], sizes = [1, 96], strides = [1, 1]} : vector<25x96xf32> to vector<1x96xf32>
    %203 = vector.broadcast %202 : vector<1x96xf32> to vector<2x96xf32>
    %204 = arith.mulf %201, %203 : vector<2x96xf32>
    %205 = arith.addf %200, %204 : vector<2x96xf32>
    %c19_71 = arith.constant 19 : index
    %c0_72 = arith.constant 0 : index
    %206 = vector.load %arg13[%c19_71, %c0_72] : memref<36x96xf32, #tpu.memory_space<vmem>>, vector<2x96xf32>
    %207 = vector.extract_strided_slice %23 {offsets = [11, 0], sizes = [1, 96], strides = [1, 1]} : vector<25x96xf32> to vector<1x96xf32>
    %208 = vector.broadcast %207 : vector<1x96xf32> to vector<2x96xf32>
    %209 = arith.mulf %206, %208 : vector<2x96xf32>
    %210 = arith.addf %205, %209 : vector<2x96xf32>
    %c20_73 = arith.constant 20 : index
    %c0_74 = arith.constant 0 : index
    %211 = vector.load %arg13[%c20_73, %c0_74] : memref<36x96xf32, #tpu.memory_space<vmem>>, vector<2x96xf32>
    %212 = vector.extract_strided_slice %23 {offsets = [12, 0], sizes = [1, 96], strides = [1, 1]} : vector<25x96xf32> to vector<1x96xf32>
    %213 = vector.broadcast %212 : vector<1x96xf32> to vector<2x96xf32>
    %214 = arith.mulf %211, %213 : vector<2x96xf32>
    %215 = arith.addf %210, %214 : vector<2x96xf32>
    %c21_75 = arith.constant 21 : index
    %c0_76 = arith.constant 0 : index
    %216 = vector.load %arg13[%c21_75, %c0_76] : memref<36x96xf32, #tpu.memory_space<vmem>>, vector<2x96xf32>
    %217 = vector.extract_strided_slice %23 {offsets = [13, 0], sizes = [1, 96], strides = [1, 1]} : vector<25x96xf32> to vector<1x96xf32>
    %218 = vector.broadcast %217 : vector<1x96xf32> to vector<2x96xf32>
    %219 = arith.mulf %216, %218 : vector<2x96xf32>
    %220 = arith.addf %215, %219 : vector<2x96xf32>
    %c22_77 = arith.constant 22 : index
    %c0_78 = arith.constant 0 : index
    %221 = vector.load %arg13[%c22_77, %c0_78] : memref<36x96xf32, #tpu.memory_space<vmem>>, vector<2x96xf32>
    %222 = vector.extract_strided_slice %23 {offsets = [14, 0], sizes = [1, 96], strides = [1, 1]} : vector<25x96xf32> to vector<1x96xf32>
    %223 = vector.broadcast %222 : vector<1x96xf32> to vector<2x96xf32>
    %224 = arith.mulf %221, %223 : vector<2x96xf32>
    %225 = arith.addf %220, %224 : vector<2x96xf32>
    %c24_79 = arith.constant 24 : index
    %c0_80 = arith.constant 0 : index
    %226 = vector.load %arg13[%c24_79, %c0_80] : memref<36x96xf32, #tpu.memory_space<vmem>>, vector<2x96xf32>
    %227 = vector.extract_strided_slice %23 {offsets = [15, 0], sizes = [1, 96], strides = [1, 1]} : vector<25x96xf32> to vector<1x96xf32>
    %228 = vector.broadcast %227 : vector<1x96xf32> to vector<2x96xf32>
    %229 = arith.mulf %226, %228 : vector<2x96xf32>
    %230 = arith.addf %225, %229 : vector<2x96xf32>
    %c25_81 = arith.constant 25 : index
    %c0_82 = arith.constant 0 : index
    %231 = vector.load %arg13[%c25_81, %c0_82] : memref<36x96xf32, #tpu.memory_space<vmem>>, vector<2x96xf32>
    %232 = vector.extract_strided_slice %23 {offsets = [16, 0], sizes = [1, 96], strides = [1, 1]} : vector<25x96xf32> to vector<1x96xf32>
    %233 = vector.broadcast %232 : vector<1x96xf32> to vector<2x96xf32>
    %234 = arith.mulf %231, %233 : vector<2x96xf32>
    %235 = arith.addf %230, %234 : vector<2x96xf32>
    %c26_83 = arith.constant 26 : index
    %c0_84 = arith.constant 0 : index
    %236 = vector.load %arg13[%c26_83, %c0_84] : memref<36x96xf32, #tpu.memory_space<vmem>>, vector<2x96xf32>
    %237 = vector.extract_strided_slice %23 {offsets = [17, 0], sizes = [1, 96], strides = [1, 1]} : vector<25x96xf32> to vector<1x96xf32>
    %238 = vector.broadcast %237 : vector<1x96xf32> to vector<2x96xf32>
    %239 = arith.mulf %236, %238 : vector<2x96xf32>
    %240 = arith.addf %235, %239 : vector<2x96xf32>
    %c27_85 = arith.constant 27 : index
    %c0_86 = arith.constant 0 : index
    %241 = vector.load %arg13[%c27_85, %c0_86] : memref<36x96xf32, #tpu.memory_space<vmem>>, vector<2x96xf32>
    %242 = vector.extract_strided_slice %23 {offsets = [18, 0], sizes = [1, 96], strides = [1, 1]} : vector<25x96xf32> to vector<1x96xf32>
    %243 = vector.broadcast %242 : vector<1x96xf32> to vector<2x96xf32>
    %244 = arith.mulf %241, %243 : vector<2x96xf32>
    %245 = arith.addf %240, %244 : vector<2x96xf32>
    %c28_87 = arith.constant 28 : index
    %c0_88 = arith.constant 0 : index
    %246 = vector.load %arg13[%c28_87, %c0_88] : memref<36x96xf32, #tpu.memory_space<vmem>>, vector<2x96xf32>
    %247 = vector.extract_strided_slice %23 {offsets = [19, 0], sizes = [1, 96], strides = [1, 1]} : vector<25x96xf32> to vector<1x96xf32>
    %248 = vector.broadcast %247 : vector<1x96xf32> to vector<2x96xf32>
    %249 = arith.mulf %246, %248 : vector<2x96xf32>
    %250 = arith.addf %245, %249 : vector<2x96xf32>
    %c30 = arith.constant 30 : index
    %c0_89 = arith.constant 0 : index
    %251 = vector.load %arg13[%c30, %c0_89] : memref<36x96xf32, #tpu.memory_space<vmem>>, vector<2x96xf32>
    %252 = vector.extract_strided_slice %23 {offsets = [20, 0], sizes = [1, 96], strides = [1, 1]} : vector<25x96xf32> to vector<1x96xf32>
    %253 = vector.broadcast %252 : vector<1x96xf32> to vector<2x96xf32>
    %254 = arith.mulf %251, %253 : vector<2x96xf32>
    %255 = arith.addf %250, %254 : vector<2x96xf32>
    %c31 = arith.constant 31 : index
    %c0_90 = arith.constant 0 : index
    %256 = vector.load %arg13[%c31, %c0_90] : memref<36x96xf32, #tpu.memory_space<vmem>>, vector<2x96xf32>
    %257 = vector.extract_strided_slice %23 {offsets = [21, 0], sizes = [1, 96], strides = [1, 1]} : vector<25x96xf32> to vector<1x96xf32>
    %258 = vector.broadcast %257 : vector<1x96xf32> to vector<2x96xf32>
    %259 = arith.mulf %256, %258 : vector<2x96xf32>
    %260 = arith.addf %255, %259 : vector<2x96xf32>
    %c32 = arith.constant 32 : index
    %c0_91 = arith.constant 0 : index
    %261 = vector.load %arg13[%c32, %c0_91] : memref<36x96xf32, #tpu.memory_space<vmem>>, vector<2x96xf32>
    %262 = vector.extract_strided_slice %23 {offsets = [22, 0], sizes = [1, 96], strides = [1, 1]} : vector<25x96xf32> to vector<1x96xf32>
    %263 = vector.broadcast %262 : vector<1x96xf32> to vector<2x96xf32>
    %264 = arith.mulf %261, %263 : vector<2x96xf32>
    %265 = arith.addf %260, %264 : vector<2x96xf32>
    %c33 = arith.constant 33 : index
    %c0_92 = arith.constant 0 : index
    %266 = vector.load %arg13[%c33, %c0_92] : memref<36x96xf32, #tpu.memory_space<vmem>>, vector<2x96xf32>
    %267 = vector.extract_strided_slice %23 {offsets = [23, 0], sizes = [1, 96], strides = [1, 1]} : vector<25x96xf32> to vector<1x96xf32>
    %268 = vector.broadcast %267 : vector<1x96xf32> to vector<2x96xf32>
    %269 = arith.mulf %266, %268 : vector<2x96xf32>
    %270 = arith.addf %265, %269 : vector<2x96xf32>
    %c34 = arith.constant 34 : index
    %c0_93 = arith.constant 0 : index
    %271 = vector.load %arg13[%c34, %c0_93] : memref<36x96xf32, #tpu.memory_space<vmem>>, vector<2x96xf32>
    %272 = vector.extract_strided_slice %23 {offsets = [24, 0], sizes = [1, 96], strides = [1, 1]} : vector<25x96xf32> to vector<1x96xf32>
    %273 = vector.broadcast %272 : vector<1x96xf32> to vector<2x96xf32>
    %274 = arith.mulf %271, %273 : vector<2x96xf32>
    %275 = arith.addf %270, %274 : vector<2x96xf32>
    %276 = vector.broadcast %24 : vector<1x96xf32> to vector<2x96xf32>
    %277 = arith.addf %275, %276 : vector<2x96xf32>
    %c2_94 = arith.constant 2 : index
    %c0_95 = arith.constant 0 : index
    %278 = vector.load %arg14[%c2_94, %c0_95] : memref<4x96xf32, #tpu.memory_space<vmem>>, vector<2x96xf32>
    tpu.vector_store %arg14[%c2_94, %c0_95], %277 {strides = array<i32>} : memref<4x96xf32, #tpu.memory_space<vmem>>, vector<2x96xf32>,
    %c0_96 = arith.constant 0 : index
    %c0_97 = arith.constant 0 : index
    %279 = vector.load %arg14[%c0_96, %c0_97] : memref<4x96xf32, #tpu.memory_space<vmem>>, vector<4x96xf32>
    %cst_98 = arith.constant dense<0.000000e+00> : vector<96xf32>
    %280 = vector.multi_reduction <add>, %279, %cst_98 [0] : vector<4x96xf32> to vector<96xf32>
    %281 = vector.shape_cast %280 : vector<96xf32> to vector<1x96xf32>
    %cst_99 = arith.constant 4.000000e+00 : f32
    %282 = vector.broadcast %cst_99 : f32 to vector<1x96xf32>
    %283 = arith.divf %281, %282 : vector<1x96xf32>
    %c0_100 = arith.constant 0 : index
    %c0_101 = arith.constant 0 : index
    %284 = vector.load %arg6[%c0_100, %c0_101] : memref<96x24xf32, #tpu.memory_space<vmem>>, vector<96x24xf32>
    %cst_102 = arith.constant dense<0.000000e+00> : vector<1x24xf32>
    %285 = tpu.matmul %283, %284, %cst_102 {dimension_numbers = #tpu.dot_dimension_numbers<[1], [0], [0], [1], [0, 0, 1, 1], [], []>} : vector<1x96xf32>, vector<96x24xf32>, vector<1x24xf32> -> vector<1x24xf32>
    %c0_103 = arith.constant 0 : index
    %c0_104 = arith.constant 0 : index
    %286 = vector.load %arg7[%c0_103, %c0_104] : memref<1x24xf32, #tpu.memory_space<vmem>>, vector<1x24xf32>
    %287 = arith.addf %285, %286 : vector<1x24xf32>
    %cst_105 = arith.constant 0.000000e+00 : f32
    %288 = vector.broadcast %cst_105 : f32 to vector<1x24xf32>
    %289 = arith.maximumf %287, %288 : vector<1x24xf32>
    %c0_106 = arith.constant 0 : index
    %c0_107 = arith.constant 0 : index
    %290 = vector.load %arg8[%c0_106, %c0_107] : memref<24x96xf32, #tpu.memory_space<vmem>>, vector<24x96xf32>
    %cst_108 = arith.constant dense<0.000000e+00> : vector<1x96xf32>
    %291 = tpu.matmul %289, %290, %cst_108 {dimension_numbers = #tpu.dot_dimension_numbers<[1], [0], [0], [1], [0, 0, 1, 1], [], []>} : vector<1x24xf32>, vector<24x96xf32>, vector<1x96xf32> -> vector<1x96xf32>
    %c0_109 = arith.constant 0 : index
    %c0_110 = arith.constant 0 : index
    %292 = vector.load %arg9[%c0_109, %c0_110] : memref<1x96xf32, #tpu.memory_space<vmem>>, vector<1x96xf32>
    %293 = arith.addf %291, %292 : vector<1x96xf32>
    %cst_111 = arith.constant 3.000000e+00 : f32
    %294 = vector.broadcast %cst_111 : f32 to vector<1x96xf32>
    %295 = arith.addf %293, %294 : vector<1x96xf32>
    %cst_112 = arith.constant 0.000000e+00 : f32
    %cst_113 = arith.constant 6.000000e+00 : f32
    %296 = vector.broadcast %cst_112 : f32 to vector<1x96xf32>
    %297 = arith.maximumf %296, %295 : vector<1x96xf32>
    %298 = vector.broadcast %cst_113 : f32 to vector<1x96xf32>
    %299 = arith.minimumf %298, %297 : vector<1x96xf32>
    %cst_114 = arith.constant 0.166666672 : f32
    %300 = vector.broadcast %cst_114 : f32 to vector<1x96xf32>
    %301 = arith.mulf %299, %300 : vector<1x96xf32>
    %302 = vector.broadcast %301 : vector<1x96xf32> to vector<4x96xf32>
    %303 = arith.mulf %279, %302 : vector<4x96xf32>
    %cst_115 = arith.constant 3.000000e+00 : f32
    %304 = vector.broadcast %cst_115 : f32 to vector<4x96xf32>
    %305 = arith.addf %303, %304 : vector<4x96xf32>
    %cst_116 = arith.constant 0.000000e+00 : f32
    %cst_117 = arith.constant 6.000000e+00 : f32
    %306 = vector.broadcast %cst_116 : f32 to vector<4x96xf32>
    %307 = arith.maximumf %306, %305 : vector<4x96xf32>
    %308 = vector.broadcast %cst_117 : f32 to vector<4x96xf32>
    %309 = arith.minimumf %308, %307 : vector<4x96xf32>
    %cst_118 = arith.constant 0.166666672 : f32
    %310 = vector.broadcast %cst_118 : f32 to vector<4x96xf32>
    %311 = arith.mulf %309, %310 : vector<4x96xf32>
    %312 = arith.mulf %303, %311 : vector<4x96xf32>
    %313 = arith.truncf %312 : vector<4x96xf32> to vector<4x96xbf16>
    %c0_119 = arith.constant 0 : index
    %c0_120 = arith.constant 0 : index
    %314 = vector.load %arg10[%c0_119, %c0_120] : memref<96x24xbf16, #tpu.memory_space<vmem>>, vector<96x24xbf16>
    %cst_121 = arith.constant dense<0.000000e+00> : vector<4x24xf32>
    %315 = tpu.matmul %313, %314, %cst_121 {dimension_numbers = #tpu.dot_dimension_numbers<[1], [0], [0], [1], [0, 0, 1, 1], [], []>} : vector<4x96xbf16>, vector<96x24xbf16>, vector<4x24xf32> -> vector<4x24xf32>
    %c0_122 = arith.constant 0 : index
    %c0_123 = arith.constant 0 : index
    %316 = vector.load %arg11[%c0_122, %c0_123] : memref<1x24xf32, #tpu.memory_space<vmem>>, vector<1x24xf32>
    %317 = vector.broadcast %316 : vector<1x24xf32> to vector<4x24xf32>
    %318 = arith.addf %315, %317 : vector<4x24xf32>
    %319 = arith.addf %318, %1 : vector<4x24xf32>
    %c0_124 = arith.constant 0 : index
    %c0_125 = arith.constant 0 : index
    %c0_126 = arith.constant 0 : index
    %320 = vector.load %arg12[%c0_124, %c0_125, %c0_126] : memref<1x4x24xf32, #tpu.memory_space<vmem>>, vector<1x4x24xf32>
    %321 = vector.shape_cast %320 : vector<1x4x24xf32> to vector<4x24xf32>
    %322 = vector.shape_cast %319 : vector<4x24xf32> to vector<1x4x24xf32>
    tpu.vector_store %arg12[%c0_124, %c0_125, %c0_126], %322 {strides = array<i32>} : memref<1x4x24xf32, #tpu.memory_space<vmem>>, vector<1x4x24xf32>,
    return
  }
  func.func @transform_0(%arg0: i32) -> (i32, i32, i32) {
    %c0_i32 = arith.constant 0 : i32
    %c0_i32_0 = arith.constant 0 : i32
    %c0_i32_1 = arith.constant 0 : i32
    return %arg0, %c0_i32, %c0_i32_0 : i32, i32, i32
  }
  func.func @transform_1(%arg0: i32) -> (i32, i32) {
    %c0_i32 = arith.constant 0 : i32
    %c0_i32_0 = arith.constant 0 : i32
    %c0_i32_1 = arith.constant 0 : i32
    return %c0_i32, %c0_i32_0 : i32, i32
  }
  func.func @transform_2(%arg0: i32) -> (i32, i32) {
    %c0_i32 = arith.constant 0 : i32
    %c0_i32_0 = arith.constant 0 : i32
    %c0_i32_1 = arith.constant 0 : i32
    return %c0_i32, %c0_i32_0 : i32, i32
  }
  func.func @transform_3(%arg0: i32) -> (i32, i32) {
    %c0_i32 = arith.constant 0 : i32
    %c0_i32_0 = arith.constant 0 : i32
    %c0_i32_1 = arith.constant 0 : i32
    return %c0_i32, %c0_i32_0 : i32, i32
  }
  func.func @transform_4(%arg0: i32) -> (i32, i32) {
    %c0_i32 = arith.constant 0 : i32
    %c0_i32_0 = arith.constant 0 : i32
    %c0_i32_1 = arith.constant 0 : i32
    return %c0_i32, %c0_i32_0 : i32, i32
  }
  func.func @transform_5(%arg0: i32) -> (i32, i32) {
    %c0_i32 = arith.constant 0 : i32
    %c0_i32_0 = arith.constant 0 : i32
    %c0_i32_1 = arith.constant 0 : i32
    return %c0_i32, %c0_i32_0 : i32, i32
  }
  func.func @transform_6(%arg0: i32) -> (i32, i32) {
    %c0_i32 = arith.constant 0 : i32
    %c0_i32_0 = arith.constant 0 : i32
    %c0_i32_1 = arith.constant 0 : i32
    return %c0_i32, %c0_i32_0 : i32, i32
  }
  func.func @transform_7(%arg0: i32) -> (i32, i32) {
    %c0_i32 = arith.constant 0 : i32
    %c0_i32_0 = arith.constant 0 : i32
    %c0_i32_1 = arith.constant 0 : i32
    return %c0_i32, %c0_i32_0 : i32, i32
  }
  func.func @transform_8(%arg0: i32) -> (i32, i32) {
    %c0_i32 = arith.constant 0 : i32
    %c0_i32_0 = arith.constant 0 : i32
    %c0_i32_1 = arith.constant 0 : i32
    return %c0_i32, %c0_i32_0 : i32, i32
  }
  func.func @transform_9(%arg0: i32) -> (i32, i32) {
    %c0_i32 = arith.constant 0 : i32
    %c0_i32_0 = arith.constant 0 : i32
    %c0_i32_1 = arith.constant 0 : i32
    return %c0_i32, %c0_i32_0 : i32, i32
  }
  func.func @transform_10(%arg0: i32) -> (i32, i32) {
    %c0_i32 = arith.constant 0 : i32
    %c0_i32_0 = arith.constant 0 : i32
    %c0_i32_1 = arith.constant 0 : i32
    return %c0_i32, %c0_i32_0 : i32, i32
  }
  func.func @transform_11(%arg0: i32) -> (i32, i32, i32) {
    %c0_i32 = arith.constant 0 : i32
    %c0_i32_0 = arith.constant 0 : i32
    %c0_i32_1 = arith.constant 0 : i32
    return %arg0, %c0_i32, %c0_i32_0 : i32, i32, i32
  }
}

module attributes {stable_mosaic.version = 11 : i64} {
  func.func @_pool_bn_kernel(%arg0: memref<2x4x24xf32, #tpu.memory_space<vmem>>, %arg1: memref<1x24xf32, #tpu.memory_space<vmem>>, %arg2: memref<1x24xf32, #tpu.memory_space<vmem>>, %arg3: memref<2x24xf32, #tpu.memory_space<vmem>>) attributes {dimension_semantics = [], scalar_prefetch = 0 : i64, scratch_operands = 0 : i64, tpu.core_type = #tpu.core_type<tc>} {
    %c0 = arith.constant 0 : index
    %c0_0 = arith.constant 0 : index
    %c0_1 = arith.constant 0 : index
    %0 = vector.load %arg0[%c0, %c0_0, %c0_1] : memref<2x4x24xf32, #tpu.memory_space<vmem>>, vector<2x4x24xf32>
    %cst = arith.constant dense<0.000000e+00> : vector<2x24xf32>
    %1 = vector.multi_reduction <add>, %0, %cst [1] : vector<2x4x24xf32> to vector<2x24xf32>
    %cst_2 = arith.constant 4.000000e+00 : f32
    %2 = vector.broadcast %cst_2 : f32 to vector<2x24xf32>
    %3 = arith.divf %1, %2 : vector<2x24xf32>
    %c0_3 = arith.constant 0 : index
    %c0_4 = arith.constant 0 : index
    %4 = vector.load %arg1[%c0_3, %c0_4] : memref<1x24xf32, #tpu.memory_space<vmem>>, vector<1x24xf32>
    %5 = vector.broadcast %4 : vector<1x24xf32> to vector<2x24xf32>
    %6 = arith.mulf %3, %5 : vector<2x24xf32>
    %c0_5 = arith.constant 0 : index
    %c0_6 = arith.constant 0 : index
    %7 = vector.load %arg2[%c0_5, %c0_6] : memref<1x24xf32, #tpu.memory_space<vmem>>, vector<1x24xf32>
    %8 = vector.broadcast %7 : vector<1x24xf32> to vector<2x24xf32>
    %9 = arith.addf %6, %8 : vector<2x24xf32>
    %c0_7 = arith.constant 0 : index
    %c0_8 = arith.constant 0 : index
    %10 = vector.load %arg3[%c0_7, %c0_8] : memref<2x24xf32, #tpu.memory_space<vmem>>, vector<2x24xf32>
    tpu.vector_store %arg3[%c0_7, %c0_8], %9 {strides = array<i32>} : memref<2x24xf32, #tpu.memory_space<vmem>>, vector<2x24xf32>,
    return
  }
}

</mosaic_0001>

<llo_original>
// kernel: _lambda_.6
$region0: #{_lambda_.6}
  #allocation0 [shape = 'u32[]', space=smem, size = 0x4, offset = 0x4, fixed_abs, tag = 'smem constant byte address 0x4 - core index']
  #allocation1 [shape = 'u32[144,128]{1,0:T(1,128)}', space=vmem, size = 0x12000, scoped, tag = 'internal scratch']
  #allocation2 [shape = 'f32[100,16]{1,0:T(8,128)}', space=vmem, size = 0xd000, scoped, tag = 'scratch operand']
  #allocation3 [shape = 'f32[16,16]{1,0:T(8,128)}', space=vmem, size = 0x2000, scoped, tag = 'scratch operand']
  %s0 = inlined_call_operand.vmem [shape: f32[2,64,16], index: 0, kind: input, shape index: {}]
  %s1 = inlined_call_operand.vmem [shape: f32[9,16], index: 1, kind: input, shape index: {}]
  %s2 = inlined_call_operand.vmem [shape: f32[1,16], index: 2, kind: input, shape index: {}, may-alias: {2,6,8}]
  %s3 = inlined_call_operand.vmem [shape: f32[16,8], index: 3, kind: input, shape index: {}]
  %s4 = inlined_call_operand.vmem [shape: f32[1,8], index: 4, kind: input, shape index: {}]
  %s5 = inlined_call_operand.vmem [shape: f32[8,16], index: 5, kind: input, shape index: {}]
  %s6 = inlined_call_operand.vmem [shape: f32[1,16], index: 6, kind: input, shape index: {}, may-alias: {2,6,8}]
  %s7 = inlined_call_operand.vmem [shape: bf16[16,16], index: 7, kind: input, shape index: {}]
  %s8 = inlined_call_operand.vmem [shape: f32[1,16], index: 8, kind: input, shape index: {}, may-alias: {2,6,8}]
  %s9 = inlined_call_operand.vmem [shape: f32[2,16,16], index: 9, kind: output, shape index: {}]
  %s10 = sld [smem:[#allocation0]]
  $region69: #{_lambda_.6} parent=0
    _
  %s12 = ssub.s32 1, %s10
  %s13 = scalar_select 0, %s12, %s10
  loop: start=0, step=1, limit=4
  $region2: #{_lambda_.6} parent=0 // loop_pre_header
    _
  $region3: #{_lambda_.6} parent=0 // loop_header
    %s15 = sphi 0, %s19
    %p16 = scmp.ge.s32.totalorder %s15, 4
    %s25 = sphi 0, %s27
    %s28 = sphi 0, %s25
    %s29 = sphi 0, %s28
    %s45 = sphi 0, %s29
    %s49 = sphi 0, %s49
    %s51 = sphi 0, %s49
    %s52 = sphi 0, %s51
    %s66 = sphi 0, %s52
    %s70 = sphi 0, %s70
    %s72 = sphi 0, %s70
    %s73 = sphi 0, %s72
    %s87 = sphi 0, %s73
    %s91 = sphi 0, %s91
    %s93 = sphi 0, %s91
    %s94 = sphi 0, %s93
    %s108 = sphi 0, %s94
    %s112 = sphi 0, %s112
    %s114 = sphi 0, %s112
    %s115 = sphi 0, %s114
    %s129 = sphi 0, %s115
    %s133 = sphi 0, %s133
    %s135 = sphi 0, %s133
    %s136 = sphi 0, %s135
    %s150 = sphi 0, %s136
    %s154 = sphi 0, %s154
    %s156 = sphi 0, %s154
    %s157 = sphi 0, %s156
    %s171 = sphi 0, %s157
    %s175 = sphi 0, %s175
    %s177 = sphi 0, %s175
    %s178 = sphi 0, %s177
    %s192 = sphi 0, %s178
    %s196 = sphi 0, %s196
    %s198 = sphi 0, %s196
    %s199 = sphi 0, %s198
    %s213 = sphi 0, %s199
    %s219 = sphi 0, %s221
    %s222 = sphi 0, %s219
    %s223 = sphi 0, %s222
    %s239 = sphi 0, %s223
  $region4: #{_lambda_.6} parent=0 // loop_header_branch
    %18 = sbr.rel (%p16) target = $region8
  $region5: #{_lambda_.6} parent=0 // loop_body
    %s20 = ssub.s32 %s15, 1
    %s21 = ssub.s32 %s15, 2
    %s22 = sadd.s32 %s15, 1
    %s23 = ssub.s32 %s15, %s22
    %p24 = scmp.eq.s32.totalorder %s23, 0
    %s26 = sadd.s32 %s25, 1
    %s27 = scalar_select %p24, %s25, %s26
    %p30 = pneg %p24
    %p31 = scmp.eq.s32.totalorder %s15, 1
    %p32 = por %p30, %p31
    %p33 = scmp.ne.s32.totalorder %s25, %s28
    %p34 = scmp.eq.s32.totalorder %s15, 0
    %p35 = por %p33, %p34
    %p36 = scmp.ne.s32.totalorder %s25, %s28
    %p37 = scmp.eq.s32.totalorder %s20, 1
    %p38 = por %p36, %p37
    %p39 = scmp.ne.s32.totalorder %s28, %s29
    %p40 = scmp.eq.s32.totalorder %s20, 0
    %p41 = por %p39, %p40
    %p42 = scmp.ne.s32.totalorder %s28, %s29
    %p43 = scmp.eq.s32.totalorder %s21, 1
    %p44 = por %p42, %p43
    %p46 = scmp.ne.s32.totalorder %s29, %s45
    %p47 = scmp.eq.s32.totalorder %s21, 0
    %p48 = por %p46, %p47
    %s50 = sadd.s32 %s49, 1
    %p53 = scmp.eq.s32.totalorder %s15, 1
    %p54 = scmp.ne.s32.totalorder %s49, %s51
    %p55 = scmp.eq.s32.totalorder %s15, 0
    %p56 = por %p54, %p55
    %p57 = scmp.ne.s32.totalorder %s49, %s51
    %p58 = scmp.eq.s32.totalorder %s20, 1
    %p59 = por %p57, %p58
    %p60 = scmp.ne.s32.totalorder %s51, %s52
    %p61 = scmp.eq.s32.totalorder %s20, 0
    %p62 = por %p60, %p61
    %p63 = scmp.ne.s32.totalorder %s51, %s52
    %p64 = scmp.eq.s32.totalorder %s21, 1
    %p65 = por %p63, %p64
    %p67 = scmp.ne.s32.totalorder %s52, %s66
    %p68 = scmp.eq.s32.totalorder %s21, 0
    %p69 = por %p67, %p68
    %s71 = sadd.s32 %s70, 1
    %p74 = scmp.eq.s32.totalorder %s15, 1
    %p75 = scmp.ne.s32.totalorder %s70, %s72
    %p76 = scmp.eq.s32.totalorder %s15, 0
    %p77 = por %p75, %p76
    %p78 = scmp.ne.s32.totalorder %s70, %s72
    %p79 = scmp.eq.s32.totalorder %s20, 1
    %p80 = por %p78, %p79
    %p81 = scmp.ne.s32.totalorder %s72, %s73
    %p82 = scmp.eq.s32.totalorder %s20, 0
    %p83 = por %p81, %p82
    %p84 = scmp.ne.s32.totalorder %s72, %s73
    %p85 = scmp.eq.s32.totalorder %s21, 1
    %p86 = por %p84, %p85
    %p88 = scmp.ne.s32.totalorder %s73, %s87
    %p89 = scmp.eq.s32.totalorder %s21, 0
    %p90 = por %p88, %p89
    %s92 = sadd.s32 %s91, 1
    %p95 = scmp.eq.s32.totalorder %s15, 1
    %p96 = scmp.ne.s32.totalorder %s91, %s93
    %p97 = scmp.eq.s32.totalorder %s15, 0
    %p98 = por %p96, %p97
    %p99 = scmp.ne.s32.totalorder %s91, %s93
    %p100 = scmp.eq.s32.totalorder %s20, 1
    %p101 = por %p99, %p100
    %p102 = scmp.ne.s32.totalorder %s93, %s94
    %p103 = scmp.eq.s32.totalorder %s20, 0
    %p104 = por %p102, %p103
    %p105 = scmp.ne.s32.totalorder %s93, %s94
    %p106 = scmp.eq.s32.totalorder %s21, 1
    %p107 = por %p105, %p106
    %p109 = scmp.ne.s32.totalorder %s94, %s108
    %p110 = scmp.eq.s32.totalorder %s21, 0
    %p111 = por %p109, %p110
    %s113 = sadd.s32 %s112, 1
    %p116 = scmp.eq.s32.totalorder %s15, 1
    %p117 = scmp.ne.s32.totalorder %s112, %s114
    %p118 = scmp.eq.s32.totalorder %s15, 0
    %p119 = por %p117, %p118
    %p120 = scmp.ne.s32.totalorder %s112, %s114
    %p121 = scmp.eq.s32.totalorder %s20, 1
    %p122 = por %p120, %p121
    %p123 = scmp.ne.s32.totalorder %s114, %s115
    %p124 = scmp.eq.s32.totalorder %s20, 0
    %p125 = por %p123, %p124
    %p126 = scmp.ne.s32.totalorder %s114, %s115
    %p127 = scmp.eq.s32.totalorder %s21, 1
    %p128 = por %p126, %p127
    %p130 = scmp.ne.s32.totalorder %s115, %s129
    %p131 = scmp.eq.s32.totalorder %s21, 0
    %p132 = por %p130, %p131
    %s134 = sadd.s32 %s133, 1
    %p137 = scmp.eq.s32.totalorder %s15, 1
    %p138 = scmp.ne.s32.totalorder %s133, %s135
    %p139 = scmp.eq.s32.totalorder %s15, 0
    %p140 = por %p138, %p139
    %p141 = scmp.ne.s32.totalorder %s133, %s135
    %p142 = scmp.eq.s32.totalorder %s20, 1
    %p143 = por %p141, %p142
    %p144 = scmp.ne.s32.totalorder %s135, %s136
    %p145 = scmp.eq.s32.totalorder %s20, 0
    %p146 = por %p144, %p145
    %p147 = scmp.ne.s32.totalorder %s135, %s136
    %p148 = scmp.eq.s32.totalorder %s21, 1
    %p149 = por %p147, %p148
    %p151 = scmp.ne.s32.totalorder %s136, %s150
    %p152 = scmp.eq.s32.totalorder %s21, 0
    %p153 = por %p151, %p152
    %s155 = sadd.s32 %s154, 1
    %p158 = scmp.eq.s32.totalorder %s15, 1
    %p159 = scmp.ne.s32.totalorder %s154, %s156
    %p160 = scmp.eq.s32.totalorder %s15, 0
    %p161 = por %p159, %p160
    %p162 = scmp.ne.s32.totalorder %s154, %s156
    %p163 = scmp.eq.s32.totalorder %s20, 1
    %p164 = por %p162, %p163
    %p165 = scmp.ne.s32.totalorder %s156, %s157
    %p166 = scmp.eq.s32.totalorder %s20, 0
    %p167 = por %p165, %p166
    %p168 = scmp.ne.s32.totalorder %s156, %s157
    %p169 = scmp.eq.s32.totalorder %s21, 1
    %p170 = por %p168, %p169
    %p172 = scmp.ne.s32.totalorder %s157, %s171
    %p173 = scmp.eq.s32.totalorder %s21, 0
    %p174 = por %p172, %p173
    %s176 = sadd.s32 %s175, 1
    %p179 = scmp.eq.s32.totalorder %s15, 1
    %p180 = scmp.ne.s32.totalorder %s175, %s177
    %p181 = scmp.eq.s32.totalorder %s15, 0
    %p182 = por %p180, %p181
    %p183 = scmp.ne.s32.totalorder %s175, %s177
    %p184 = scmp.eq.s32.totalorder %s20, 1
    %p185 = por %p183, %p184
    %p186 = scmp.ne.s32.totalorder %s177, %s178
    %p187 = scmp.eq.s32.totalorder %s20, 0
    %p188 = por %p186, %p187
    %p189 = scmp.ne.s32.totalorder %s177, %s178
    %p190 = scmp.eq.s32.totalorder %s21, 1
    %p191 = por %p189, %p190
    %p193 = scmp.ne.s32.totalorder %s178, %s192
    %p194 = scmp.eq.s32.totalorder %s21, 0
    %p195 = por %p193, %p194
    %s197 = sadd.s32 %s196, 1
    %p200 = scmp.eq.s32.totalorder %s15, 1
    %p201 = scmp.ne.s32.totalorder %s196, %s198
    %p202 = scmp.eq.s32.totalorder %s15, 0
    %p203 = por %p201, %p202
    %p204 = scmp.ne.s32.totalorder %s196, %s198
    %p205 = scmp.eq.s32.totalorder %s20, 1
    %p206 = por %p204, %p205
    %p207 = scmp.ne.s32.totalorder %s198, %s199
    %p208 = scmp.eq.s32.totalorder %s20, 0
    %p209 = por %p207, %p208
    %p210 = scmp.ne.s32.totalorder %s198, %s199
    %p211 = scmp.eq.s32.totalorder %s21, 1
    %p212 = por %p210, %p211
    %p214 = scmp.ne.s32.totalorder %s199, %s213
    %p215 = scmp.eq.s32.totalorder %s21, 0
    %p216 = por %p214, %p215
    %s217 = ssub.s32 %s15, %s22
    %p218 = scmp.eq.s32.totalorder %s217, 0
    %s220 = sadd.s32 %s219, 1
    %s221 = scalar_select %p218, %s219, %s220
    %p224 = pneg %p218
    %p225 = scmp.eq.s32.totalorder %s15, 1
    %p226 = por %p224, %p225
    %p227 = scmp.ne.s32.totalorder %s219, %s222
    %p228 = scmp.eq.s32.totalorder %s15, 0
    %p229 = por %p227, %p228
    %p230 = scmp.ne.s32.totalorder %s219, %s222
    %p231 = scmp.eq.s32.totalorder %s20, 1
    %p232 = por %p230, %p231
    %p233 = scmp.ne.s32.totalorder %s222, %s223
    %p234 = scmp.eq.s32.totalorder %s20, 0
    %p235 = por %p233, %p234
    %p236 = scmp.ne.s32.totalorder %s222, %s223
    %p237 = scmp.eq.s32.totalorder %s21, 1
    %p238 = por %p236, %p237
    %p240 = scmp.ne.s32.totalorder %s223, %s239
    %p241 = scmp.eq.s32.totalorder %s21, 0
    %p242 = por %p240, %p241
    %p243 = scmp.le.s32.totalorder 1, %s15
    %p244 = scmp.lt.s32.totalorder %s15, 3
    %p245 = pnand %p243, %p244
    %p246 = pneg %p245
    // Predicated region
    $region9: #{_lambda_.6} parent=5 // pred_check
      _
    $region10: #{_lambda_.6} parent=5 // pred_check_branch
      %248 = sbr.rel (%p245) target = $region12
    $region11: #{_lambda_.6} parent=5 // pred_region
      %s249 = ssub.s32 %s15, 1
      // Predicated region
      $region13: #{_lambda_.6} parent=11 // pred_check
        %p250 = pneg %p62
      $region14: #{_lambda_.6} parent=11 // pred_check_branch
        %252 = sbr.rel (%p250) target = $region16
      $region15: #{_lambda_.6} parent=11 // pred_region
        _
      $region16: #{_lambda_.6} parent=11 // pred_fallthru
        _
      // Predicated region
      $region17: #{_lambda_.6} parent=11 // pred_check
        %p253 = pneg %p83
      $region18: #{_lambda_.6} parent=11 // pred_check_branch
        %255 = sbr.rel (%p253) target = $region20
      $region19: #{_lambda_.6} parent=11 // pred_region
        _
      $region20: #{_lambda_.6} parent=11 // pred_fallthru
        _
      // Predicated region
      $region21: #{_lambda_.6} parent=11 // pred_check
        %p256 = pneg %p104
      $region22: #{_lambda_.6} parent=11 // pred_check_branch
        %258 = sbr.rel (%p256) target = $region24
      $region23: #{_lambda_.6} parent=11 // pred_region
        _
      $region24: #{_lambda_.6} parent=11 // pred_fallthru
        _
      // Predicated region
      $region25: #{_lambda_.6} parent=11 // pred_check
        %p259 = pneg %p125
      $region26: #{_lambda_.6} parent=11 // pred_check_branch
        %261 = sbr.rel (%p259) target = $region28
      $region27: #{_lambda_.6} parent=11 // pred_region
        _
      $region28: #{_lambda_.6} parent=11 // pred_fallthru
        _
      // Predicated region
      $region29: #{_lambda_.6} parent=11 // pred_check
        %p262 = pneg %p146
      $region30: #{_lambda_.6} parent=11 // pred_check_branch
        %264 = sbr.rel (%p262) target = $region32
      $region31: #{_lambda_.6} parent=11 // pred_region
        _
      $region32: #{_lambda_.6} parent=11 // pred_fallthru
        _
      // Predicated region
      $region33: #{_lambda_.6} parent=11 // pred_check
        %p265 = pneg %p167
      $region34: #{_lambda_.6} parent=11 // pred_check_branch
        %267 = sbr.rel (%p265) target = $region36
      $region35: #{_lambda_.6} parent=11 // pred_region
        _
      $region36: #{_lambda_.6} parent=11 // pred_fallthru
        _
      // Predicated region
      $region37: #{_lambda_.6} parent=11 // pred_check
        %p268 = pneg %p188
      $region38: #{_lambda_.6} parent=11 // pred_check_branch
        %270 = sbr.rel (%p268) target = $region40
      $region39: #{_lambda_.6} parent=11 // pred_region
        _
      $region40: #{_lambda_.6} parent=11 // pred_fallthru
        _
      // Predicated region
      $region41: #{_lambda_.6} parent=11 // pred_check
        %p271 = pneg %p209
      $region42: #{_lambda_.6} parent=11 // pred_check_branch
        %273 = sbr.rel (%p271) target = $region44
      $region43: #{_lambda_.6} parent=11 // pred_region
        _
      $region44: #{_lambda_.6} parent=11 // pred_fallthru
        _
    $region12: #{_lambda_.6} parent=5 // pred_fallthru
      _
    %p274 = scmp.lt.s32.totalorder %s15, 2
    // Predicated region
    $region45: #{_lambda_.6} parent=5 // pred_check
      %p275 = pneg %p274
    $region46: #{_lambda_.6} parent=5 // pred_check_branch
      %277 = sbr.rel (%p275) target = $region48
    $region47: #{_lambda_.6} parent=5 // pred_region
      // Predicated region
      $region49: #{_lambda_.6} parent=47 // pred_check
        %p278 = pneg %p35
      $region50: #{_lambda_.6} parent=47 // pred_check_branch
        %280 = sbr.rel (%p278) target = $region52
      $region51: #{_lambda_.6} parent=47 // pred_region
        %p281 = scmp.lt.s32.totalorder %s15, 1
        %s282 = scalar_select %p281, %s15, 1
        %s283 = smul.addr %s282, 8
        %s284 = smul.addr %s283, 8
        %s285 = scalar_lea.vmem %s0, %s284
      $region52: #{_lambda_.6} parent=47 // pred_fallthru
        _
    $region48: #{_lambda_.6} parent=5 // pred_fallthru
      _
    %p286 = scmp.le.s32.totalorder 1, %s15
    %p287 = scmp.lt.s32.totalorder %s15, 3
    %p288 = pnand %p286, %p287
    %p289 = pneg %p288
    // Predicated region
    $region53: #{_lambda_.6} parent=5 // pred_check
      _
    $region54: #{_lambda_.6} parent=5 // pred_check_branch
      %291 = sbr.rel (%p288) target = $region56
    $region55: #{_lambda_.6} parent=5 // pred_region
      %s292 = ssub.s32 %s15, 1
      %p293 = scmp.lt.s32.totalorder %s20, 1
      %s294 = scalar_select %p293, %s20, 1
      %s295 = smul.addr %s294, 8
      %s296 = smul.addr %s295, 8
      %s297 = scalar_lea.vmem %s0, %s296
      %p298 = pneg %p41
      %p299 = pneg %p38
      %p300 = pneg %p62
      %p301 = pneg %p59
      %p302 = pneg %p83
      %p303 = pneg %p80
      %p304 = pneg %p104
      %p305 = pneg %p101
      %p306 = pneg %p125
      %p307 = pneg %p122
      %p308 = pneg %p146
      %p309 = pneg %p143
      %p310 = pneg %p167
      %p311 = pneg %p164
      %p312 = pneg %p188
      %p313 = pneg %p185
      %p314 = pneg %p209
      %p315 = pneg %p206
      %p316 = pneg %p235
      %p317 = pneg %p232
      %p318 = scmp.lt.s32.totalorder %s20, 1
      %s319 = scalar_select %p318, %s20, 1
      %s320 = smul.addr %s319, 2
      %s321 = smul.addr %s320, 8
      %s322 = scalar_lea.vmem %s9, %s321
      %p323 = scmp.lt.s32.totalorder %s20, 1
      %s324 = scalar_select %p323, %s20, 1
      %s325 = smul.addr %s324, 8
      %s326 = smul.addr %s325, 8
      %s327 = scalar_lea.vmem %s0, %s326
      %p328 = scmp.lt.s32.totalorder %s20, 1
      %s329 = scalar_select %p328, %s20, 1
      %s330 = smul.addr %s329, 2
      %s331 = smul.addr %s330, 8
      %s332 = scalar_lea.vmem %s9, %s331
      %v334 = vld [vmem:[%s327] sm:$0xff]
      %v335 = vld [vmem:[%s327 + $0x8] sm:$0xff]
      %v336 = vld [vmem:[%s327 + $0x10] sm:$0xff]
      %v337 = vld [vmem:[%s327 + $0x18] sm:$0xff]
      %v338 = vld [vmem:[%s327 + $0x20] sm:$0xff]
      %v339 = vld [vmem:[%s327 + $0x28] sm:$0xff]
      %v340 = vld [vmem:[%s327 + $0x30] sm:$0xff]
      %v341 = vld [vmem:[%s327 + $0x38] sm:$0xff]
      %vm342 = vcmask 130048
      %343 = vst.msk [vmem:[#allocation2] sm:$0xff] %vm342, 0.0
      %344 = vst.msk [vmem:[#allocation2 + $0x8] sm:$0xff] %vm342, 0.0
      %345 = vst.msk [vmem:[#allocation2 + $0x10] sm:$0xff] %vm342, 0.0
      %346 = vst.msk [vmem:[#allocation2 + $0x18] sm:$0xff] %vm342, 0.0
      %347 = vst.msk [vmem:[#allocation2 + $0x20] sm:$0xff] %vm342, 0.0
      %348 = vst.msk [vmem:[#allocation2 + $0x28] sm:$0xff] %vm342, 0.0
      %349 = vst.msk [vmem:[#allocation2 + $0x30] sm:$0xff] %vm342, 0.0
      %350 = vst.msk [vmem:[#allocation2 + $0x38] sm:$0xff] %vm342, 0.0
      %351 = vst.msk [vmem:[#allocation2 + $0x40] sm:$0xff] %vm342, 0.0
      %352 = vst.msk [vmem:[#allocation2 + $0x48] sm:$0xff] %vm342, 0.0
      %353 = vst.msk [vmem:[#allocation2 + $0x50] sm:$0xff] %vm342, 0.0
      %354 = vst.msk [vmem:[#allocation2 + $0x58] sm:$0xff] %vm342, 0.0
      %vm355 = vcmask 125952
      %356 = vst.msk [vmem:[#allocation2 + $0x60] sm:$0xf] %vm355, 0.0
      %357 = vst.msk [vmem:[#allocation2 + $0xb] sm:$0xff] %vm342, %v334
      %358 = vst.msk [vmem:[#allocation2 + $0x15] sm:$0xff] %vm342, %v335
      %359 = vst.msk [vmem:[#allocation2 + $0x1f] sm:$0xff] %vm342, %v336
      %360 = vst.msk [vmem:[#allocation2 + $0x29] sm:$0xff] %vm342, %v337
      %361 = vst.msk [vmem:[#allocation2 + $0x33] sm:$0xff] %vm342, %v338
      %362 = vst.msk [vmem:[#allocation2 + $0x3d] sm:$0xff] %vm342, %v339
      %363 = vst.msk [vmem:[#allocation2 + $0x47] sm:$0xff] %vm342, %v340
      %364 = vst.msk [vmem:[#allocation2 + $0x51] sm:$0xff] %vm342, %v341
      %v365 = vld [vmem:[%s1] sm:$0xff]
      %v366 = vld [vmem:[%s1 + $0x8] sm:$0x1]
      %v367 = vld [vmem:[%s2] sm:$0x1]
      %v368 = vld [vmem:[#allocation2] ss:$2 sm:$0xf]
      %v369 = vlaneseq
      %v370 = vshrl.u32 %v369, 7
      %v371 = vsub.s32 0, %v370
      %v372 = vrot.slane %v365, %v371
      %v373 = vmul.f32 %v368, %v372
      %s374 = scalar_lea.vmem [#allocation2], 1
      %v375 = vld [vmem:[%s374] ss:$2 sm:$0xf]
      %v376 = vlaneseq
      %v377 = vshrl.u32 %v376, 7
      %v378 = vsub.s32 1, %v377
      %v379 = vrot.slane %v365, %v378
      %v380 = vmul.f32 %v375, %v379
      %v381 = vadd.f32 %v373, %v380
      %s382 = scalar_lea.vmem [#allocation2], 2
      %v383 = vld [vmem:[%s382] ss:$2 sm:$0xf]
      %v384 = vlaneseq
      %v385 = vshrl.u32 %v384, 7
      %v386 = vsub.s32 2, %v385
      %v387 = vrot.slane %v365, %v386
      %v388 = vmul.f32 %v383, %v387
      %v389 = vadd.f32 %v381, %v388
      %s390 = scalar_lea.vmem [#allocation2], 10
      %v391 = vld [vmem:[%s390] ss:$2 sm:$0xf]
      %v392 = vlaneseq
      %v393 = vshrl.u32 %v392, 7
      %v394 = vsub.s32 3, %v393
      %v395 = vrot.slane %v365, %v394
      %v396 = vmul.f32 %v391, %v395
      %v397 = vadd.f32 %v389, %v396
      %s398 = scalar_lea.vmem [#allocation2], 11
      %v399 = vld [vmem:[%s398] ss:$2 sm:$0xf]
      %v400 = vlaneseq
      %v401 = vshrl.u32 %v400, 7
      %v402 = vsub.s32 4, %v401
      %v403 = vrot.slane %v365, %v402
      %v404 = vmul.f32 %v399, %v403
      %v405 = vadd.f32 %v397, %v404
      %s406 = scalar_lea.vmem [#allocation2], 12
      %v407 = vld [vmem:[%s406] ss:$2 sm:$0xf]
      %v408 = vlaneseq
      %v409 = vshrl.u32 %v408, 7
      %v410 = vsub.s32 5, %v409
      %v411 = vrot.slane %v365, %v410
      %v412 = vmul.f32 %v407, %v411
      %v413 = vadd.f32 %v405, %v412
      %s414 = scalar_lea.vmem [#allocation2], 20
      %v415 = vld [vmem:[%s414] ss:$2 sm:$0xf]
      %v416 = vlaneseq
      %v417 = vshrl.u32 %v416, 7
      %v418 = vsub.s32 6, %v417
      %v419 = vrot.slane %v365, %v418
      %v420 = vmul.f32 %v415, %v419
      %v421 = vadd.f32 %v413, %v420
      %s422 = scalar_lea.vmem [#allocation2], 21
      %v423 = vld [vmem:[%s422] ss:$2 sm:$0xf]
      %v424 = vlaneseq
      %v425 = vshrl.u32 %v424, 7
      %v426 = vsub.s32 7, %v425
      %v427 = vrot.slane %v365, %v426
      %v428 = vmul.f32 %v423, %v427
      %v429 = vadd.f32 %v421, %v428
      %s430 = scalar_lea.vmem [#allocation2], 22
      %v431 = vld [vmem:[%s430] ss:$2 sm:$0xf]
      %v432 = vlaneseq
      %v433 = vshrl.u32 %v432, 7
      %v434 = vsub.s32 0, %v433
      %v435 = vrot.slane %v366, %v434
      %v436 = vmul.f32 %v431, %v435
      %v437 = vadd.f32 %v429, %v436
      %v439 = vlaneseq
      %v440 = vshrl.u32 %v439, 7
      %v441 = vsub.s32 0, %v440
      %v442 = vrot.slane %v367, %v441
      %v444 = vadd.f32 %v437, %v442
      %v445 = vmax.f32 %v444, 0.0
      %446 = vst.msk [vmem:[#allocation3] sm:$0xf] %vm355, %v445
      %v447 = vld [vmem:[%s414] ss:$2 sm:$0xf]
      %v448 = vmul.f32 %v447, %v372
      %v449 = vld [vmem:[%s422] ss:$2 sm:$0xf]
      %v450 = vmul.f32 %v449, %v379
      %v451 = vadd.f32 %v448, %v450
      %v452 = vld [vmem:[%s430] ss:$2 sm:$0xf]
      %v453 = vmul.f32 %v452, %v387
      %v454 = vadd.f32 %v451, %v453
      %s455 = scalar_lea.vmem [#allocation2], 30
      %v456 = vld [vmem:[%s455] ss:$2 sm:$0xf]
      %v457 = vmul.f32 %v456, %v395
      %v458 = vadd.f32 %v454, %v457
      %s459 = scalar_lea.vmem [#allocation2], 31
      %v460 = vld [vmem:[%s459] ss:$2 sm:$0xf]
      %v461 = vmul.f32 %v460, %v403
      %v462 = vadd.f32 %v458, %v461
      %s463 = scalar_lea.vmem [#allocation2], 32
      %v464 = vld [vmem:[%s463] ss:$2 sm:$0xf]
      %v465 = vmul.f32 %v464, %v411
      %v466 = vadd.f32 %v462, %v465
      %s467 = scalar_lea.vmem [#allocation2], 40
      %v468 = vld [vmem:[%s467] ss:$2 sm:$0xf]
      %v469 = vmul.f32 %v468, %v419
      %v470 = vadd.f32 %v466, %v469
      %s471 = scalar_lea.vmem [#allocation2], 41
      %v472 = vld [vmem:[%s471] ss:$2 sm:$0xf]
      %v473 = vmul.f32 %v472, %v427
      %v474 = vadd.f32 %v470, %v473
      %s475 = scalar_lea.vmem [#allocation2], 42
      %v476 = vld [vmem:[%s475] ss:$2 sm:$0xf]
      %v477 = vmul.f32 %v476, %v435
      %v478 = vadd.f32 %v474, %v477
      %v479 = vadd.f32 %v478, %v442
      %v480 = vmax.f32 %v479, 0.0
      %481 = vst.msk [vmem:[#allocation3 + $0x4] sm:$0xf] %vm355, %v480
      %v482 = vld [vmem:[%s467] ss:$2 sm:$0xf]
      %v483 = vmul.f32 %v482, %v372
      %v484 = vld [vmem:[%s471] ss:$2 sm:$0xf]
      %v485 = vmul.f32 %v484, %v379
      %v486 = vadd.f32 %v483, %v485
      %v487 = vld [vmem:[%s475] ss:$2 sm:$0xf]
      %v488 = vmul.f32 %v487, %v387
      %v489 = vadd.f32 %v486, %v488
      %s490 = scalar_lea.vmem [#allocation2], 50
      %v491 = vld [vmem:[%s490] ss:$2 sm:$0xf]
      %v492 = vmul.f32 %v491, %v395
      %v493 = vadd.f32 %v489, %v492
      %s494 = scalar_lea.vmem [#allocation2], 51
      %v495 = vld [vmem:[%s494] ss:$2 sm:$0xf]
      %v496 = vmul.f32 %v495, %v403
      %v497 = vadd.f32 %v493, %v496
      %s498 = scalar_lea.vmem [#allocation2], 52
      %v499 = vld [vmem:[%s498] ss:$2 sm:$0xf]
      %v500 = vmul.f32 %v499, %v411
      %v501 = vadd.f32 %v497, %v500
      %s502 = scalar_lea.vmem [#allocation2], 60
      %v503 = vld [vmem:[%s502] ss:$2 sm:$0xf]
      %v504 = vmul.f32 %v503, %v419
      %v505 = vadd.f32 %v501, %v504
      %s506 = scalar_lea.vmem [#allocation2], 61
      %v507 = vld [vmem:[%s506] ss:$2 sm:$0xf]
      %v508 = vmul.f32 %v507, %v427
      %v509 = vadd.f32 %v505, %v508
      %s510 = scalar_lea.vmem [#allocation2], 62
      %v511 = vld [vmem:[%s510] ss:$2 sm:$0xf]
      %v512 = vmul.f32 %v511, %v435
      %v513 = vadd.f32 %v509, %v512
      %v514 = vadd.f32 %v513, %v442
      %v515 = vmax.f32 %v514, 0.0
      %516 = vst.msk [vmem:[#allocation3 + $0x8] sm:$0xf] %vm355, %v515
      %v517 = vld [vmem:[%s502] ss:$2 sm:$0xf]
      %v518 = vmul.f32 %v517, %v372
      %v519 = vld [vmem:[%s506] ss:$2 sm:$0xf]
      %v520 = vmul.f32 %v519, %v379
      %v521 = vadd.f32 %v518, %v520
      %v522 = vld [vmem:[%s510] ss:$2 sm:$0xf]
      %v523 = vmul.f32 %v522, %v387
      %v524 = vadd.f32 %v521, %v523
      %s525 = scalar_lea.vmem [#allocation2], 70
      %v526 = vld [vmem:[%s525] ss:$2 sm:$0xf]
      %v527 = vmul.f32 %v526, %v395
      %v528 = vadd.f32 %v524, %v527
      %s529 = scalar_lea.vmem [#allocation2], 71
      %v530 = vld [vmem:[%s529] ss:$2 sm:$0xf]
      %v531 = vmul.f32 %v530, %v403
      %v532 = vadd.f32 %v528, %v531
      %s533 = scalar_lea.vmem [#allocation2], 72
      %v534 = vld [vmem:[%s533] ss:$2 sm:$0xf]
      %v535 = vmul.f32 %v534, %v411
      %v536 = vadd.f32 %v532, %v535
      %s537 = scalar_lea.vmem [#allocation2], 80
      %v538 = vld [vmem:[%s537] ss:$2 sm:$0xf]
      %v539 = vmul.f32 %v538, %v419
      %v540 = vadd.f32 %v536, %v539
      %s541 = scalar_lea.vmem [#allocation2], 81
      %v542 = vld [vmem:[%s541] ss:$2 sm:$0xf]
      %v543 = vmul.f32 %v542, %v427
      %v544 = vadd.f32 %v540, %v543
      %s545 = scalar_lea.vmem [#allocation2], 82
      %v546 = vld [vmem:[%s545] ss:$2 sm:$0xf]
      %v547 = vmul.f32 %v546, %v435
      %v548 = vadd.f32 %v544, %v547
      %v549 = vadd.f32 %v548, %v442
      %v550 = vmax.f32 %v549, 0.0
      %551 = vst.msk [vmem:[#allocation3 + $0xc] sm:$0xf] %vm355, %v550
      %v552 = vld [vmem:[#allocation3] sm:$0xff]
      %v553 = vld [vmem:[#allocation3 + $0x8] sm:$0xff]
      %v554 = vsel %vm342, %v552, 0.0
      %v555 = vsel %vm342, %v553, 0.0
      %v556 = vadd.f32 %v554, %v555
      %v557 = vrot.slane %v556, 4
      %v558 = vadd.f32 %v556, %v557
      %v559 = vrot.slane %v558, 2
      %v560 = vadd.f32 %v558, %v559
      %v561 = vrot.slane %v560, 1
      %v562 = vadd.f32 %v560, %v561
      %v563 = vrcp.pop 16.0
      %v564 = vmul.f32 %v562, %v563
      %v565 = vld [vmem:[%s3] sm:$0xff]
      %v566 = vld [vmem:[%s3 + $0x8] sm:$0xff]
      %v567 = vld [vmem:[%s4] sm:$0x1]
      %v569 = vsel %vm342, %v564, 0
      %571 = vmatprep.subr.mxu0 0.0
      %572 = vmatpush1.msra.mxu0 0.0
      %573 = vmatprep.subr.mxu0 0.0
      %574 = vmatpush1.msra.mxu0 0.0
      %575 = vmatprep.subr.mxu0 0.0
      %576 = vmatpush1.msra.mxu0 0.0
      %577 = vmatprep.subr.mxu0 0.0
      %578 = vmatpush1.msra.mxu0 0.0
      %579 = vmatprep.subr.mxu0 0.0
      %580 = vmatpush1.msra.mxu0 0.0
      %581 = vmatprep.subr.mxu0 0.0
      %582 = vmatpush1.msra.mxu0 0.0
      %583 = vmatprep.subr.mxu0 0.0
      %584 = vmatpush1.msra.mxu0 0.0
      %585 = vmatprep.subr.mxu0 0.0
      %586 = vmatpush1.msra.mxu0 0.0
      %587 = vmatprep.subr.mxu0 0.0
      %588 = vmatpush1.msra.mxu0 0.0
      %589 = vmatprep.subr.mxu0 0.0
      %590 = vmatpush1.msra.mxu0 0.0
      %591 = vmatprep.subr.mxu0 0.0
      %592 = vmatpush1.msra.mxu0 0.0
      %593 = vmatprep.subr.mxu0 0.0
      %594 = vmatpush1.msra.mxu0 0.0
      %595 = vmatprep.subr.mxu0 0.0
      %596 = vmatpush1.msra.mxu0 0.0
      %597 = vmatprep.subr.mxu0 0.0
      %598 = vmatpush1.msra.mxu0 0.0
      %599 = vmatprep.subr.mxu0 0.0
      %600 = vmatpush1.msra.mxu0 %v566
      %601 = vmatprep.subr.mxu0 0.0
      %602 = vmatpush1.msra.mxu0 %v565
      %603 = vmatprep.subr.mxu0 0.0
      %604 = vmatpush2.msra.mxu0 0.0
      %605 = vmatprep.subr.mxu0 0.0
      %606 = vmatpush2.msra.mxu0 0.0
      %607 = vmatprep.subr.mxu0 0.0
      %608 = vmatpush2.msra.mxu0 0.0
      %609 = vmatprep.subr.mxu0 0.0
      %610 = vmatpush2.msra.mxu0 0.0
      %611 = vmatprep.subr.mxu0 0.0
      %612 = vmatpush2.msra.mxu0 0.0
      %613 = vmatprep.subr.mxu0 0.0
      %614 = vmatpush2.msra.mxu0 0.0
      %615 = vmatprep.subr.mxu0 0.0
      %616 = vmatpush2.msra.mxu0 0.0
      %617 = vmatprep.subr.mxu0 0.0
      %618 = vmatpush2.msra.mxu0 0.0
      %619 = vmatprep.subr.mxu0 0.0
      %620 = vmatpush2.msra.mxu0 0.0
      %621 = vmatprep.subr.mxu0 0.0
      %622 = vmatpush2.msra.mxu0 0.0
      %623 = vmatprep.subr.mxu0 0.0
      %624 = vmatpush2.msra.mxu0 0.0
      %625 = vmatprep.subr.mxu0 0.0
      %626 = vmatpush2.msra.mxu0 0.0
      %627 = vmatprep.subr.mxu0 0.0
      %628 = vmatpush2.msra.mxu0 0.0
      %629 = vmatprep.subr.mxu0 0.0
      %630 = vmatpush2.msra.mxu0 0.0
      %631 = vmatprep.subr.mxu0 0.0
      %632 = vmatpush2.msra.mxu0 0.0
      %633 = vmatprep.subr.mxu0 0.0
      %634 = vmatpush2.msra.mxu0 0.0
      %635 = vmatprep.mubr.f32.mxu0 0.0
      %636 = vmatmul.mubr.f32.gmra.mxu0 %v569
      %v637 = vpop.f32.mrf.mxu0
      %v638 = vadd.f32 %v567, %v637
      %v639 = vpop.f32.mrf.mxu0
      %640 = vdwg.mxu0
      %v641 = vmax.f32 %v638, 0.0
      %v642 = vld [vmem:[%s5] sm:$0xff]
      %v643 = vld [vmem:[%s6] sm:$0x1]
      %vm644 = vcmask 64512
      %v646 = vsel %vm644, %v641, 0
      %648 = vmatprep.subr.mxu0 0.0
      %649 = vmatpush1.msra.mxu0 0.0
      %650 = vmatprep.subr.mxu0 0.0
      %651 = vmatpush1.msra.mxu0 0.0
      %652 = vmatprep.subr.mxu0 0.0
      %653 = vmatpush1.msra.mxu0 0.0
      %654 = vmatprep.subr.mxu0 0.0
      %655 = vmatpush1.msra.mxu0 0.0
      %656 = vmatprep.subr.mxu0 0.0
      %657 = vmatpush1.msra.mxu0 0.0
      %658 = vmatprep.subr.mxu0 0.0
      %659 = vmatpush1.msra.mxu0 0.0
      %660 = vmatprep.subr.mxu0 0.0
      %661 = vmatpush1.msra.mxu0 0.0
      %662 = vmatprep.subr.mxu0 0.0
      %663 = vmatpush1.msra.mxu0 0.0
      %664 = vmatprep.subr.mxu0 0.0
      %665 = vmatpush1.msra.mxu0 0.0
      %666 = vmatprep.subr.mxu0 0.0
      %667 = vmatpush1.msra.mxu0 0.0
      %668 = vmatprep.subr.mxu0 0.0
      %669 = vmatpush1.msra.mxu0 0.0
      %670 = vmatprep.subr.mxu0 0.0
      %671 = vmatpush1.msra.mxu0 0.0
      %672 = vmatprep.subr.mxu0 0.0
      %673 = vmatpush1.msra.mxu0 0.0
      %674 = vmatprep.subr.mxu0 0.0
      %675 = vmatpush1.msra.mxu0 0.0
      %676 = vmatprep.subr.mxu0 0.0
      %677 = vmatpush1.msra.mxu0 0.0
      %678 = vmatprep.subr.mxu0 0.0
      %679 = vmatpush1.msra.mxu0 %v642
      %680 = vmatprep.subr.mxu0 0.0
      %681 = vmatpush2.msra.mxu0 0.0
      %682 = vmatprep.subr.mxu0 0.0
      %683 = vmatpush2.msra.mxu0 0.0
      %684 = vmatprep.subr.mxu0 0.0
      %685 = vmatpush2.msra.mxu0 0.0
      %686 = vmatprep.subr.mxu0 0.0
      %687 = vmatpush2.msra.mxu0 0.0
      %688 = vmatprep.subr.mxu0 0.0
      %689 = vmatpush2.msra.mxu0 0.0
      %690 = vmatprep.subr.mxu0 0.0
      %691 = vmatpush2.msra.mxu0 0.0
      %692 = vmatprep.subr.mxu0 0.0
      %693 = vmatpush2.msra.mxu0 0.0
      %694 = vmatprep.subr.mxu0 0.0
      %695 = vmatpush2.msra.mxu0 0.0
      %696 = vmatprep.subr.mxu0 0.0
      %697 = vmatpush2.msra.mxu0 0.0
      %698 = vmatprep.subr.mxu0 0.0
      %699 = vmatpush2.msra.mxu0 0.0
      %700 = vmatprep.subr.mxu0 0.0
      %701 = vmatpush2.msra.mxu0 0.0
      %702 = vmatprep.subr.mxu0 0.0
      %703 = vmatpush2.msra.mxu0 0.0
      %704 = vmatprep.subr.mxu0 0.0
      %705 = vmatpush2.msra.mxu0 0.0
      %706 = vmatprep.subr.mxu0 0.0
      %707 = vmatpush2.msra.mxu0 0.0
      %708 = vmatprep.subr.mxu0 0.0
      %709 = vmatpush2.msra.mxu0 0.0
      %710 = vmatprep.subr.mxu0 0.0
      %711 = vmatpush2.msra.mxu0 0.0
      %712 = vmatprep.mubr.f32.mxu0 0.0
      %713 = vmatmul.mubr.f32.gmra.mxu0 %v646
      %v714 = vpop.f32.mrf.mxu0
      %v715 = vadd.f32 %v643, %v714
      %v716 = vpop.f32.mrf.mxu0
      %717 = vdwg.mxu0
      %v718 = vadd.f32 %v715, 3.0
      %v719 = vmax.f32 %v718, 0.0
      %v720 = vmin.f32 %v719, 6.0
      %v721 = vmul.f32 %v720, 0.16666667
      %v722 = vlaneseq
      %v723 = vshrl.u32 %v722, 7
      %v724 = vsub.s32 0, %v723
      %v725 = vrot.slane %v721, %v724
      %v726 = vmul.f32 %v552, %v725
      %v727 = vmul.f32 %v553, %v725
      %v728 = vpack.c.bf16 %v727, %v726
      %v729 = vld [vmem:[%s7] sm:$0xf]
      %v730 = vld [vmem:[%s7 + $0x4] sm:$0xf]
      %v731 = vld [vmem:[%s8] sm:$0x1]
      %v733 = vlaneseq
      %v734 = vshrl.u32 %v733, 7
      %v735 = vsub.s32 0, %v734
      %v736 = vrot.slane %v731, %v735
      %v740 = vunpack.c.l.b16 %v729
      %v741 = vunpack.c.l.b16 %v730
      %v742 = vpack.c.b16 %v741, %v740
      %v745 = vsel %vm342, %v728, 0
      %747 = vmatprep.subr.bf16.mxu0 0
      %748 = vmatpush1.bf16.msra.mxu0 0
      %749 = vmatprep.subr.bf16.mxu0 0
      %750 = vmatpush1.bf16.msra.mxu0 0
      %751 = vmatprep.subr.bf16.mxu0 0
      %752 = vmatpush1.bf16.msra.mxu0 0
      %753 = vmatprep.subr.bf16.mxu0 0
      %754 = vmatpush1.bf16.msra.mxu0 0
      %755 = vmatprep.subr.bf16.mxu0 0
      %756 = vmatpush1.bf16.msra.mxu0 0
      %757 = vmatprep.subr.bf16.mxu0 0
      %758 = vmatpush1.bf16.msra.mxu0 0
      %759 = vmatprep.subr.bf16.mxu0 0
      %760 = vmatpush1.bf16.msra.mxu0 0
      %761 = vmatprep.subr.bf16.mxu0 0
      %762 = vmatpush1.bf16.msra.mxu0 %v742
      %763 = vmatprep.subr.bf16.mxu0 0
      %764 = vmatpush2.bf16.msra.mxu0 0
      %765 = vmatprep.subr.bf16.mxu0 0
      %766 = vmatpush2.bf16.msra.mxu0 0
      %767 = vmatprep.subr.bf16.mxu0 0
      %768 = vmatpush2.bf16.msra.mxu0 0
      %769 = vmatprep.subr.bf16.mxu0 0
      %770 = vmatpush2.bf16.msra.mxu0 0
      %771 = vmatprep.subr.bf16.mxu0 0
      %772 = vmatpush2.bf16.msra.mxu0 0
      %773 = vmatprep.subr.bf16.mxu0 0
      %774 = vmatpush2.bf16.msra.mxu0 0
      %775 = vmatprep.subr.bf16.mxu0 0
      %776 = vmatpush2.bf16.msra.mxu0 0
      %777 = vmatprep.subr.bf16.mxu0 0
      %778 = vmatpush2.bf16.msra.mxu0 0
      %779 = vmatprep.mubr.bf16.mxu0 0
      %780 = vmatmul.mubr.bf16.gmra.mxu0 %v745
      %v781 = vpop.f32.mrf.mxu0
      %v782 = vadd.f32 %v736, %v781
      %v783 = vpop.f32.mrf.mxu0
      %v784 = vpop.f32.mrf.mxu0
      %v785 = vadd.f32 %v736, %v784
      %v786 = vpop.f32.mrf.mxu0
      %787 = vdwg.mxu0
      %788 = vst.msk [vmem:[%s332] sm:$0xff] %vm342, %v782
      %789 = vst.msk [vmem:[%s332 + $0x8] sm:$0xff] %vm342, %v785
      %p790 = scmp.lt.s32.totalorder %s20, 1
      %s791 = scalar_select %p790, %s20, 1
      %s792 = smul.addr %s791, 2
      %s793 = smul.addr %s792, 8
      %s794 = scalar_lea.vmem %s9, %s793
      // Predicated region
      $region57: #{_lambda_.6} parent=55 // pred_check
        %p795 = pneg %p232
      $region58: #{_lambda_.6} parent=55 // pred_check_branch
        %797 = sbr.rel (%p795) target = $region60
      $region59: #{_lambda_.6} parent=55 // pred_region
        _
      $region60: #{_lambda_.6} parent=55 // pred_fallthru
        _
    $region56: #{_lambda_.6} parent=5 // pred_fallthru
      _
    %p798 = scmp.le.s32.totalorder 2, %s15
    // Predicated region
    $region61: #{_lambda_.6} parent=5 // pred_check
      %p799 = pneg %p798
    $region62: #{_lambda_.6} parent=5 // pred_check_branch
      %801 = sbr.rel (%p799) target = $region64
    $region63: #{_lambda_.6} parent=5 // pred_region
      %s802 = ssub.s32 %s15, 2
      // Predicated region
      $region65: #{_lambda_.6} parent=63 // pred_check
        %p803 = pneg %p238
      $region66: #{_lambda_.6} parent=63 // pred_check_branch
        %805 = sbr.rel (%p803) target = $region68
      $region67: #{_lambda_.6} parent=63 // pred_region
        %p806 = scmp.lt.s32.totalorder %s21, 1
        %s807 = scalar_select %p806, %s21, 1
        %s808 = smul.addr %s807, 2
        %s809 = smul.addr %s808, 8
        %s810 = scalar_lea.vmem %s9, %s809
      $region68: #{_lambda_.6} parent=63 // pred_fallthru
        _
    $region64: #{_lambda_.6} parent=5 // pred_fallthru
      _
  $region6: #{_lambda_.6} parent=0 // loop_footer
    %s19 = sadd.s32 1, %s15
  $region7: #{_lambda_.6} parent=0 // loop_footer_branch
    %14 = sbr.rel target = $region3
  $region8: #{_lambda_.6} parent=0 // loop_exit
    _

// kernel: _lambda_.7
$region0: #{_lambda_.7}
  #allocation0 [shape = 'u32[]', space=smem, size = 0x4, offset = 0x4, fixed_abs, tag = 'smem constant byte address 0x4 - core index']
  #allocation1 [shape = 'u32[144,128]{1,0:T(1,128)}', space=vmem, size = 0x12000, scoped, tag = 'internal scratch']
  #allocation2 [shape = 'f32[36,72]{1,0:T(8,128)}', space=vmem, size = 0x5000, scoped, tag = 'scratch operand']
  #allocation3 [shape = 'f32[4,72]{1,0:T(4,128)}', space=vmem, size = 0x800, scoped, tag = 'scratch operand']
  %s0 = inlined_call_operand.vmem [shape: f32[2,16,16], index: 0, kind: input, shape index: {}]
  %s1 = inlined_call_operand.vmem [shape: bf16[16,72], index: 1, kind: input, shape index: {}]
  %s2 = inlined_call_operand.vmem [shape: f32[1,72], index: 2, kind: input, shape index: {}, may-alias: {2,4}]
  %s3 = inlined_call_operand.vmem [shape: f32[9,72], index: 3, kind: input, shape index: {}]
  %s4 = inlined_call_operand.vmem [shape: f32[1,72], index: 4, kind: input, shape index: {}, may-alias: {2,4}]
  %s5 = inlined_call_operand.vmem [shape: bf16[72,24], index: 5, kind: input, shape index: {}]
  %s6 = inlined_call_operand.vmem [shape: f32[1,24], index: 6, kind: input, shape index: {}]
  %s7 = inlined_call_operand.vmem [shape: f32[2,4,24], index: 7, kind: output, shape index: {}]
  %s8 = sld [smem:[#allocation0]]
  $region61: #{_lambda_.7} parent=0
    _
  %s10 = ssub.s32 1, %s8
  %s11 = scalar_select 0, %s10, %s8
  loop: start=0, step=1, limit=4
  $region2: #{_lambda_.7} parent=0 // loop_pre_header
    _
  $region3: #{_lambda_.7} parent=0 // loop_header
    %s13 = sphi 0, %s17
    %p14 = scmp.ge.s32.totalorder %s13, 4
    %s23 = sphi 0, %s25
    %s26 = sphi 0, %s23
    %s27 = sphi 0, %s26
    %s43 = sphi 0, %s27
    %s47 = sphi 0, %s47
    %s49 = sphi 0, %s47
    %s50 = sphi 0, %s49
    %s64 = sphi 0, %s50
    %s68 = sphi 0, %s68
    %s70 = sphi 0, %s68
    %s71 = sphi 0, %s70
    %s85 = sphi 0, %s71
    %s89 = sphi 0, %s89
    %s91 = sphi 0, %s89
    %s92 = sphi 0, %s91
    %s106 = sphi 0, %s92
    %s110 = sphi 0, %s110
    %s112 = sphi 0, %s110
    %s113 = sphi 0, %s112
    %s127 = sphi 0, %s113
    %s131 = sphi 0, %s131
    %s133 = sphi 0, %s131
    %s134 = sphi 0, %s133
    %s148 = sphi 0, %s134
    %s152 = sphi 0, %s152
    %s154 = sphi 0, %s152
    %s155 = sphi 0, %s154
    %s169 = sphi 0, %s155
    %s175 = sphi 0, %s177
    %s178 = sphi 0, %s175
    %s179 = sphi 0, %s178
    %s195 = sphi 0, %s179
  $region4: #{_lambda_.7} parent=0 // loop_header_branch
    %16 = sbr.rel (%p14) target = $region8
  $region5: #{_lambda_.7} parent=0 // loop_body
    %s18 = ssub.s32 %s13, 1
    %s19 = ssub.s32 %s13, 2
    %s20 = sadd.s32 %s13, 1
    %s21 = ssub.s32 %s13, %s20
    %p22 = scmp.eq.s32.totalorder %s21, 0
    %s24 = sadd.s32 %s23, 1
    %s25 = scalar_select %p22, %s23, %s24
    %p28 = pneg %p22
    %p29 = scmp.eq.s32.totalorder %s13, 1
    %p30 = por %p28, %p29
    %p31 = scmp.ne.s32.totalorder %s23, %s26
    %p32 = scmp.eq.s32.totalorder %s13, 0
    %p33 = por %p31, %p32
    %p34 = scmp.ne.s32.totalorder %s23, %s26
    %p35 = scmp.eq.s32.totalorder %s18, 1
    %p36 = por %p34, %p35
    %p37 = scmp.ne.s32.totalorder %s26, %s27
    %p38 = scmp.eq.s32.totalorder %s18, 0
    %p39 = por %p37, %p38
    %p40 = scmp.ne.s32.totalorder %s26, %s27
    %p41 = scmp.eq.s32.totalorder %s19, 1
    %p42 = por %p40, %p41
    %p44 = scmp.ne.s32.totalorder %s27, %s43
    %p45 = scmp.eq.s32.totalorder %s19, 0
    %p46 = por %p44, %p45
    %s48 = sadd.s32 %s47, 1
    %p51 = scmp.eq.s32.totalorder %s13, 1
    %p52 = scmp.ne.s32.totalorder %s47, %s49
    %p53 = scmp.eq.s32.totalorder %s13, 0
    %p54 = por %p52, %p53
    %p55 = scmp.ne.s32.totalorder %s47, %s49
    %p56 = scmp.eq.s32.totalorder %s18, 1
    %p57 = por %p55, %p56
    %p58 = scmp.ne.s32.totalorder %s49, %s50
    %p59 = scmp.eq.s32.totalorder %s18, 0
    %p60 = por %p58, %p59
    %p61 = scmp.ne.s32.totalorder %s49, %s50
    %p62 = scmp.eq.s32.totalorder %s19, 1
    %p63 = por %p61, %p62
    %p65 = scmp.ne.s32.totalorder %s50, %s64
    %p66 = scmp.eq.s32.totalorder %s19, 0
    %p67 = por %p65, %p66
    %s69 = sadd.s32 %s68, 1
    %p72 = scmp.eq.s32.totalorder %s13, 1
    %p73 = scmp.ne.s32.totalorder %s68, %s70
    %p74 = scmp.eq.s32.totalorder %s13, 0
    %p75 = por %p73, %p74
    %p76 = scmp.ne.s32.totalorder %s68, %s70
    %p77 = scmp.eq.s32.totalorder %s18, 1
    %p78 = por %p76, %p77
    %p79 = scmp.ne.s32.totalorder %s70, %s71
    %p80 = scmp.eq.s32.totalorder %s18, 0
    %p81 = por %p79, %p80
    %p82 = scmp.ne.s32.totalorder %s70, %s71
    %p83 = scmp.eq.s32.totalorder %s19, 1
    %p84 = por %p82, %p83
    %p86 = scmp.ne.s32.totalorder %s71, %s85
    %p87 = scmp.eq.s32.totalorder %s19, 0
    %p88 = por %p86, %p87
    %s90 = sadd.s32 %s89, 1
    %p93 = scmp.eq.s32.totalorder %s13, 1
    %p94 = scmp.ne.s32.totalorder %s89, %s91
    %p95 = scmp.eq.s32.totalorder %s13, 0
    %p96 = por %p94, %p95
    %p97 = scmp.ne.s32.totalorder %s89, %s91
    %p98 = scmp.eq.s32.totalorder %s18, 1
    %p99 = por %p97, %p98
    %p100 = scmp.ne.s32.totalorder %s91, %s92
    %p101 = scmp.eq.s32.totalorder %s18, 0
    %p102 = por %p100, %p101
    %p103 = scmp.ne.s32.totalorder %s91, %s92
    %p104 = scmp.eq.s32.totalorder %s19, 1
    %p105 = por %p103, %p104
    %p107 = scmp.ne.s32.totalorder %s92, %s106
    %p108 = scmp.eq.s32.totalorder %s19, 0
    %p109 = por %p107, %p108
    %s111 = sadd.s32 %s110, 1
    %p114 = scmp.eq.s32.totalorder %s13, 1
    %p115 = scmp.ne.s32.totalorder %s110, %s112
    %p116 = scmp.eq.s32.totalorder %s13, 0
    %p117 = por %p115, %p116
    %p118 = scmp.ne.s32.totalorder %s110, %s112
    %p119 = scmp.eq.s32.totalorder %s18, 1
    %p120 = por %p118, %p119
    %p121 = scmp.ne.s32.totalorder %s112, %s113
    %p122 = scmp.eq.s32.totalorder %s18, 0
    %p123 = por %p121, %p122
    %p124 = scmp.ne.s32.totalorder %s112, %s113
    %p125 = scmp.eq.s32.totalorder %s19, 1
    %p126 = por %p124, %p125
    %p128 = scmp.ne.s32.totalorder %s113, %s127
    %p129 = scmp.eq.s32.totalorder %s19, 0
    %p130 = por %p128, %p129
    %s132 = sadd.s32 %s131, 1
    %p135 = scmp.eq.s32.totalorder %s13, 1
    %p136 = scmp.ne.s32.totalorder %s131, %s133
    %p137 = scmp.eq.s32.totalorder %s13, 0
    %p138 = por %p136, %p137
    %p139 = scmp.ne.s32.totalorder %s131, %s133
    %p140 = scmp.eq.s32.totalorder %s18, 1
    %p141 = por %p139, %p140
    %p142 = scmp.ne.s32.totalorder %s133, %s134
    %p143 = scmp.eq.s32.totalorder %s18, 0
    %p144 = por %p142, %p143
    %p145 = scmp.ne.s32.totalorder %s133, %s134
    %p146 = scmp.eq.s32.totalorder %s19, 1
    %p147 = por %p145, %p146
    %p149 = scmp.ne.s32.totalorder %s134, %s148
    %p150 = scmp.eq.s32.totalorder %s19, 0
    %p151 = por %p149, %p150
    %s153 = sadd.s32 %s152, 1
    %p156 = scmp.eq.s32.totalorder %s13, 1
    %p157 = scmp.ne.s32.totalorder %s152, %s154
    %p158 = scmp.eq.s32.totalorder %s13, 0
    %p159 = por %p157, %p158
    %p160 = scmp.ne.s32.totalorder %s152, %s154
    %p161 = scmp.eq.s32.totalorder %s18, 1
    %p162 = por %p160, %p161
    %p163 = scmp.ne.s32.totalorder %s154, %s155
    %p164 = scmp.eq.s32.totalorder %s18, 0
    %p165 = por %p163, %p164
    %p166 = scmp.ne.s32.totalorder %s154, %s155
    %p167 = scmp.eq.s32.totalorder %s19, 1
    %p168 = por %p166, %p167
    %p170 = scmp.ne.s32.totalorder %s155, %s169
    %p171 = scmp.eq.s32.totalorder %s19, 0
    %p172 = por %p170, %p171
    %s173 = ssub.s32 %s13, %s20
    %p174 = scmp.eq.s32.totalorder %s173, 0
    %s176 = sadd.s32 %s175, 1
    %s177 = scalar_select %p174, %s175, %s176
    %p180 = pneg %p174
    %p181 = scmp.eq.s32.totalorder %s13, 1
    %p182 = por %p180, %p181
    %p183 = scmp.ne.s32.totalorder %s175, %s178
    %p184 = scmp.eq.s32.totalorder %s13, 0
    %p185 = por %p183, %p184
    %p186 = scmp.ne.s32.totalorder %s175, %s178
    %p187 = scmp.eq.s32.totalorder %s18, 1
    %p188 = por %p186, %p187
    %p189 = scmp.ne.s32.totalorder %s178, %s179
    %p190 = scmp.eq.s32.totalorder %s18, 0
    %p191 = por %p189, %p190
    %p192 = scmp.ne.s32.totalorder %s178, %s179
    %p193 = scmp.eq.s32.totalorder %s19, 1
    %p194 = por %p192, %p193
    %p196 = scmp.ne.s32.totalorder %s179, %s195
    %p197 = scmp.eq.s32.totalorder %s19, 0
    %p198 = por %p196, %p197
    %p199 = scmp.le.s32.totalorder 1, %s13
    %p200 = scmp.lt.s32.totalorder %s13, 3
    %p201 = pnand %p199, %p200
    %p202 = pneg %p201
    // Predicated region
    $region9: #{_lambda_.7} parent=5 // pred_check
      _
    $region10: #{_lambda_.7} parent=5 // pred_check_branch
      %204 = sbr.rel (%p201) target = $region12
    $region11: #{_lambda_.7} parent=5 // pred_region
      %s205 = ssub.s32 %s13, 1
      // Predicated region
      $region13: #{_lambda_.7} parent=11 // pred_check
        %p206 = pneg %p60
      $region14: #{_lambda_.7} parent=11 // pred_check_branch
        %208 = sbr.rel (%p206) target = $region16
      $region15: #{_lambda_.7} parent=11 // pred_region
        _
      $region16: #{_lambda_.7} parent=11 // pred_fallthru
        _
      // Predicated region
      $region17: #{_lambda_.7} parent=11 // pred_check
        %p209 = pneg %p81
      $region18: #{_lambda_.7} parent=11 // pred_check_branch
        %211 = sbr.rel (%p209) target = $region20
      $region19: #{_lambda_.7} parent=11 // pred_region
        _
      $region20: #{_lambda_.7} parent=11 // pred_fallthru
        _
      // Predicated region
      $region21: #{_lambda_.7} parent=11 // pred_check
        %p212 = pneg %p102
      $region22: #{_lambda_.7} parent=11 // pred_check_branch
        %214 = sbr.rel (%p212) target = $region24
      $region23: #{_lambda_.7} parent=11 // pred_region
        _
      $region24: #{_lambda_.7} parent=11 // pred_fallthru
        _
      // Predicated region
      $region25: #{_lambda_.7} parent=11 // pred_check
        %p215 = pneg %p123
      $region26: #{_lambda_.7} parent=11 // pred_check_branch
        %217 = sbr.rel (%p215) target = $region28
      $region27: #{_lambda_.7} parent=11 // pred_region
        _
      $region28: #{_lambda_.7} parent=11 // pred_fallthru
        _
      // Predicated region
      $region29: #{_lambda_.7} parent=11 // pred_check
        %p218 = pneg %p144
      $region30: #{_lambda_.7} parent=11 // pred_check_branch
        %220 = sbr.rel (%p218) target = $region32
      $region31: #{_lambda_.7} parent=11 // pred_region
        _
      $region32: #{_lambda_.7} parent=11 // pred_fallthru
        _
      // Predicated region
      $region33: #{_lambda_.7} parent=11 // pred_check
        %p221 = pneg %p165
      $region34: #{_lambda_.7} parent=11 // pred_check_branch
        %223 = sbr.rel (%p221) target = $region36
      $region35: #{_lambda_.7} parent=11 // pred_region
        _
      $region36: #{_lambda_.7} parent=11 // pred_fallthru
        _
    $region12: #{_lambda_.7} parent=5 // pred_fallthru
      _
    %p224 = scmp.lt.s32.totalorder %s13, 2
    // Predicated region
    $region37: #{_lambda_.7} parent=5 // pred_check
      %p225 = pneg %p224
    $region38: #{_lambda_.7} parent=5 // pred_check_branch
      %227 = sbr.rel (%p225) target = $region40
    $region39: #{_lambda_.7} parent=5 // pred_region
      // Predicated region
      $region41: #{_lambda_.7} parent=39 // pred_check
        %p228 = pneg %p33
      $region42: #{_lambda_.7} parent=39 // pred_check_branch
        %230 = sbr.rel (%p228) target = $region44
      $region43: #{_lambda_.7} parent=39 // pred_region
        %p231 = scmp.lt.s32.totalorder %s13, 1
        %s232 = scalar_select %p231, %s13, 1
        %s233 = smul.addr %s232, 2
        %s234 = smul.addr %s233, 8
        %s235 = scalar_lea.vmem %s0, %s234
      $region44: #{_lambda_.7} parent=39 // pred_fallthru
        _
    $region40: #{_lambda_.7} parent=5 // pred_fallthru
      _
    %p236 = scmp.le.s32.totalorder 1, %s13
    %p237 = scmp.lt.s32.totalorder %s13, 3
    %p238 = pnand %p236, %p237
    %p239 = pneg %p238
    // Predicated region
    $region45: #{_lambda_.7} parent=5 // pred_check
      _
    $region46: #{_lambda_.7} parent=5 // pred_check_branch
      %241 = sbr.rel (%p238) target = $region48
    $region47: #{_lambda_.7} parent=5 // pred_region
      %s242 = ssub.s32 %s13, 1
      %p243 = scmp.lt.s32.totalorder %s18, 1
      %s244 = scalar_select %p243, %s18, 1
      %s245 = smul.addr %s244, 2
      %s246 = smul.addr %s245, 8
      %s247 = scalar_lea.vmem %s0, %s246
      %p248 = pneg %p39
      %p249 = pneg %p36
      %p250 = pneg %p60
      %p251 = pneg %p57
      %p252 = pneg %p81
      %p253 = pneg %p78
      %p254 = pneg %p102
      %p255 = pneg %p99
      %p256 = pneg %p123
      %p257 = pneg %p120
      %p258 = pneg %p144
      %p259 = pneg %p141
      %p260 = pneg %p165
      %p261 = pneg %p162
      %p262 = pneg %p191
      %p263 = pneg %p188
      %p264 = scmp.lt.s32.totalorder %s18, 1
      %s265 = scalar_select %p264, %s18, 1
      %s266 = smul.addr %s265, 4
      %s267 = scalar_lea.vmem %s7, %s266
      %p268 = scmp.lt.s32.totalorder %s18, 1
      %s269 = scalar_select %p268, %s18, 1
      %s270 = smul.addr %s269, 2
      %s271 = smul.addr %s270, 8
      %s272 = scalar_lea.vmem %s0, %s271
      %p273 = scmp.lt.s32.totalorder %s18, 1
      %s274 = scalar_select %p273, %s18, 1
      %s275 = smul.addr %s274, 4
      %s276 = scalar_lea.vmem %s7, %s275
      %v278 = vld [vmem:[%s272] sm:$0xff]
      %v279 = vld [vmem:[%s272 + $0x8] sm:$0xff]
      %v280 = vpack.c.bf16 %v279, %v278
      %v281 = vld [vmem:[%s1] sm:$0xf]
      %v282 = vld [vmem:[%s1 + $0x4] sm:$0xf]
      %v283 = vld [vmem:[%s2] sm:$0x1]
      %v285 = vlaneseq
      %v286 = vshrl.u32 %v285, 7
      %v287 = vsub.s32 0, %v286
      %v288 = vrot.slane %v283, %v287
      %v292 = vunpack.c.l.b16 %v281
      %v293 = vunpack.c.l.b16 %v282
      %v294 = vpack.c.b16 %v293, %v292
      %vm296 = vcmask 130048
      %v298 = vsel %vm296, %v280, 0
      %300 = vmatprep.subr.bf16.mxu0 0
      %301 = vmatpush1.bf16.msra.mxu0 0
      %302 = vmatprep.subr.bf16.mxu0 0
      %303 = vmatpush1.bf16.msra.mxu0 0
      %304 = vmatprep.subr.bf16.mxu0 0
      %305 = vmatpush1.bf16.msra.mxu0 0
      %306 = vmatprep.subr.bf16.mxu0 0
      %307 = vmatpush1.bf16.msra.mxu0 0
      %308 = vmatprep.subr.bf16.mxu0 0
      %309 = vmatpush1.bf16.msra.mxu0 0
      %310 = vmatprep.subr.bf16.mxu0 0
      %311 = vmatpush1.bf16.msra.mxu0 0
      %312 = vmatprep.subr.bf16.mxu0 0
      %313 = vmatpush1.bf16.msra.mxu0 0
      %314 = vmatprep.subr.bf16.mxu0 0
      %315 = vmatpush1.bf16.msra.mxu0 %v294
      %316 = vmatprep.subr.bf16.mxu0 0
      %317 = vmatpush2.bf16.msra.mxu0 0
      %318 = vmatprep.subr.bf16.mxu0 0
      %319 = vmatpush2.bf16.msra.mxu0 0
      %320 = vmatprep.subr.bf16.mxu0 0
      %321 = vmatpush2.bf16.msra.mxu0 0
      %322 = vmatprep.subr.bf16.mxu0 0
      %323 = vmatpush2.bf16.msra.mxu0 0
      %324 = vmatprep.subr.bf16.mxu0 0
      %325 = vmatpush2.bf16.msra.mxu0 0
      %326 = vmatprep.subr.bf16.mxu0 0
      %327 = vmatpush2.bf16.msra.mxu0 0
      %328 = vmatprep.subr.bf16.mxu0 0
      %329 = vmatpush2.bf16.msra.mxu0 0
      %330 = vmatprep.subr.bf16.mxu0 0
      %331 = vmatpush2.bf16.msra.mxu0 0
      %332 = vmatprep.mubr.bf16.mxu0 0
      %333 = vmatmul.mubr.bf16.gmra.mxu0 %v298
      %v334 = vpop.f32.mrf.mxu0
      %v335 = vadd.f32 %v288, %v334
      %v336 = vpop.f32.mrf.mxu0
      %v337 = vpop.f32.mrf.mxu0
      %v338 = vadd.f32 %v288, %v337
      %v339 = vpop.f32.mrf.mxu0
      %340 = vdwg.mxu0
      %v341 = vmax.f32 %v335, 0.0
      %v342 = vmax.f32 %v338, 0.0
      %vm343 = vcmask 588800
      %344 = vst.msk [vmem:[#allocation2] sm:$0xff] %vm343, 0.0
      %345 = vst.msk [vmem:[#allocation2 + $0x8] sm:$0xff] %vm343, 0.0
      %346 = vst.msk [vmem:[#allocation2 + $0x10] sm:$0xff] %vm343, 0.0
      %347 = vst.msk [vmem:[#allocation2 + $0x18] sm:$0xff] %vm343, 0.0
      %vm348 = vcmask 584704
      %349 = vst.msk [vmem:[#allocation2 + $0x20] sm:$0xf] %vm348, 0.0
      %350 = vst.msk [vmem:[#allocation2 + $0x7] sm:$0xf] %vm348, %v341
      %vm351 = vcmask 588804
      %352 = vst.msk [vmem:[#allocation2 + $0x9] sm:$0xf0] %vm351, %v341
      %353 = vst.msk [vmem:[#allocation2 + $0x13] sm:$0xf] %vm348, %v342
      %354 = vst.msk [vmem:[#allocation2 + $0x15] sm:$0xf0] %vm351, %v342
      %v355 = vld [vmem:[%s3] sm:$0xff]
      %v356 = vld [vmem:[%s3 + $0x8] sm:$0x1]
      %v357 = vld [vmem:[%s4] sm:$0x1]
      %v358 = vld [vmem:[#allocation2] ss:$2 sm:$0x3]
      %v359 = vlaneseq
      %v360 = vshrl.u32 %v359, 7
      %v361 = vsub.s32 0, %v360
      %v362 = vrot.slane %v355, %v361
      %v363 = vmul.f32 %v358, %v362
      %s364 = scalar_lea.vmem [#allocation2], 1
      %v365 = vld [vmem:[%s364] ss:$2 sm:$0x3]
      %v366 = vlaneseq
      %v367 = vshrl.u32 %v366, 7
      %v368 = vsub.s32 1, %v367
      %v369 = vrot.slane %v355, %v368
      %v370 = vmul.f32 %v365, %v369
      %v371 = vadd.f32 %v363, %v370
      %s372 = scalar_lea.vmem [#allocation2], 2
      %v373 = vld [vmem:[%s372] ss:$2 sm:$0x3]
      %v374 = vlaneseq
      %v375 = vshrl.u32 %v374, 7
      %v376 = vsub.s32 2, %v375
      %v377 = vrot.slane %v355, %v376
      %v378 = vmul.f32 %v373, %v377
      %v379 = vadd.f32 %v371, %v378
      %s380 = scalar_lea.vmem [#allocation2], 6
      %v381 = vld [vmem:[%s380] ss:$2 sm:$0x3]
      %v382 = vlaneseq
      %v383 = vshrl.u32 %v382, 7
      %v384 = vsub.s32 3, %v383
      %v385 = vrot.slane %v355, %v384
      %v386 = vmul.f32 %v381, %v385
      %v387 = vadd.f32 %v379, %v386
      %s388 = scalar_lea.vmem [#allocation2], 7
      %v389 = vld [vmem:[%s388] ss:$2 sm:$0x3]
      %v390 = vlaneseq
      %v391 = vshrl.u32 %v390, 7
      %v392 = vsub.s32 4, %v391
      %v393 = vrot.slane %v355, %v392
      %v394 = vmul.f32 %v389, %v393
      %v395 = vadd.f32 %v387, %v394
      %s396 = scalar_lea.vmem [#allocation2], 8
      %v397 = vld [vmem:[%s396] ss:$2 sm:$0x3]
      %v398 = vlaneseq
      %v399 = vshrl.u32 %v398, 7
      %v400 = vsub.s32 5, %v399
      %v401 = vrot.slane %v355, %v400
      %v402 = vmul.f32 %v397, %v401
      %v403 = vadd.f32 %v395, %v402
      %s404 = scalar_lea.vmem [#allocation2], 12
      %v405 = vld [vmem:[%s404] ss:$2 sm:$0x3]
      %v406 = vlaneseq
      %v407 = vshrl.u32 %v406, 7
      %v408 = vsub.s32 6, %v407
      %v409 = vrot.slane %v355, %v408
      %v410 = vmul.f32 %v405, %v409
      %v411 = vadd.f32 %v403, %v410
      %s412 = scalar_lea.vmem [#allocation2], 13
      %v413 = vld [vmem:[%s412] ss:$2 sm:$0x3]
      %v414 = vlaneseq
      %v415 = vshrl.u32 %v414, 7
      %v416 = vsub.s32 7, %v415
      %v417 = vrot.slane %v355, %v416
      %v418 = vmul.f32 %v413, %v417
      %v419 = vadd.f32 %v411, %v418
      %s420 = scalar_lea.vmem [#allocation2], 14
      %v421 = vld [vmem:[%s420] ss:$2 sm:$0x3]
      %v422 = vlaneseq
      %v423 = vshrl.u32 %v422, 7
      %v424 = vsub.s32 0, %v423
      %v425 = vrot.slane %v356, %v424
      %v426 = vmul.f32 %v421, %v425
      %v427 = vadd.f32 %v419, %v426
      %v429 = vlaneseq
      %v430 = vshrl.u32 %v429, 7
      %v431 = vsub.s32 0, %v430
      %v432 = vrot.slane %v357, %v431
      %v434 = vadd.f32 %v427, %v432
      %v435 = vmax.f32 %v434, 0.0
      %vm436 = vcmask 582656
      %437 = vst.msk [vmem:[#allocation3] sm:$0x3] %vm436, %v435
      %v438 = vld [vmem:[%s404] ss:$2 sm:$0x3]
      %v439 = vmul.f32 %v438, %v362
      %v440 = vld [vmem:[%s412] ss:$2 sm:$0x3]
      %v441 = vmul.f32 %v440, %v369
      %v442 = vadd.f32 %v439, %v441
      %v443 = vld [vmem:[%s420] ss:$2 sm:$0x3]
      %v444 = vmul.f32 %v443, %v377
      %v445 = vadd.f32 %v442, %v444
      %s446 = scalar_lea.vmem [#allocation2], 18
      %v447 = vld [vmem:[%s446] ss:$2 sm:$0x3]
      %v448 = vmul.f32 %v447, %v385
      %v449 = vadd.f32 %v445, %v448
      %s450 = scalar_lea.vmem [#allocation2], 19
      %v451 = vld [vmem:[%s450] ss:$2 sm:$0x3]
      %v452 = vmul.f32 %v451, %v393
      %v453 = vadd.f32 %v449, %v452
      %s454 = scalar_lea.vmem [#allocation2], 20
      %v455 = vld [vmem:[%s454] ss:$2 sm:$0x3]
      %v456 = vmul.f32 %v455, %v401
      %v457 = vadd.f32 %v453, %v456
      %s458 = scalar_lea.vmem [#allocation2], 24
      %v459 = vld [vmem:[%s458] ss:$2 sm:$0x3]
      %v460 = vmul.f32 %v459, %v409
      %v461 = vadd.f32 %v457, %v460
      %s462 = scalar_lea.vmem [#allocation2], 25
      %v463 = vld [vmem:[%s462] ss:$2 sm:$0x3]
      %v464 = vmul.f32 %v463, %v417
      %v465 = vadd.f32 %v461, %v464
      %s466 = scalar_lea.vmem [#allocation2], 26
      %v467 = vld [vmem:[%s466] ss:$2 sm:$0x3]
      %v468 = vmul.f32 %v467, %v425
      %v469 = vadd.f32 %v465, %v468
      %v470 = vadd.f32 %v469, %v432
      %v471 = vmax.f32 %v470, 0.0
      %472 = vst.msk [vmem:[#allocation3 + $0x2] sm:$0x3] %vm436, %v471
      %v473 = vld [vmem:[#allocation3] sm:$0xf]
      %v474 = vpack.c.bf16 %v473, %v473
      %v475 = vld [vmem:[%s5] sm:$0xf]
      %v476 = vld [vmem:[%s5 + $0x4] sm:$0xf]
      %v477 = vld [vmem:[%s5 + $0x8] sm:$0xf]
      %v478 = vld [vmem:[%s5 + $0xc] sm:$0xf]
      %v479 = vld [vmem:[%s5 + $0x10] sm:$0xf]
      %v480 = vld [vmem:[%s5 + $0x14] sm:$0xf]
      %v481 = vld [vmem:[%s5 + $0x18] sm:$0xf]
      %v482 = vld [vmem:[%s5 + $0x1c] sm:$0xf]
      %v483 = vld [vmem:[%s5 + $0x20] sm:$0xf]
      %v484 = vld [vmem:[%s6] sm:$0x1]
      %v486 = vlaneseq
      %v487 = vshrl.u32 %v486, 7
      %v488 = vsub.s32 0, %v487
      %v489 = vrot.slane %v484, %v488
      %v500 = vunpack.c.l.b16 %v475
      %v501 = vunpack.c.l.b16 %v476
      %v502 = vunpack.c.l.b16 %v477
      %v503 = vunpack.c.l.b16 %v478
      %v504 = vunpack.c.l.b16 %v479
      %v505 = vunpack.c.l.b16 %v480
      %v506 = vunpack.c.l.b16 %v481
      %v507 = vunpack.c.l.b16 %v482
      %v508 = vunpack.c.l.b16 %v483
      %v509 = vpack.c.b16 %v501, %v500
      %v510 = vpack.c.b16 %v503, %v502
      %v511 = vpack.c.b16 %v505, %v504
      %v512 = vpack.c.b16 %v507, %v506
      %v513 = vpack.c.b16 %v508, %v508
      %v519 = vsel %vm343, %v474, 0
      %vm521 = vcmask 1043456
      %v523 = vsel %vm521, %v513, 0
      %525 = vmatprep.subr.bf16.mxu0 0
      %526 = vmatpush1.bf16.msra.mxu0 0
      %527 = vmatprep.subr.bf16.mxu0 0
      %528 = vmatpush1.bf16.msra.mxu0 0
      %529 = vmatprep.subr.bf16.mxu0 0
      %530 = vmatpush1.bf16.msra.mxu0 0
      %531 = vmatprep.subr.bf16.mxu0 0
      %532 = vmatpush1.bf16.msra.mxu0 %v523
      %533 = vmatprep.subr.bf16.mxu0 0
      %534 = vmatpush1.bf16.msra.mxu0 %v512
      %535 = vmatprep.subr.bf16.mxu0 0
      %536 = vmatpush1.bf16.msra.mxu0 %v511
      %537 = vmatprep.subr.bf16.mxu0 0
      %538 = vmatpush1.bf16.msra.mxu0 %v510
      %539 = vmatprep.subr.bf16.mxu0 0
      %540 = vmatpush1.bf16.msra.mxu0 %v509
      %541 = vmatprep.subr.bf16.mxu0 0
      %542 = vmatpush2.bf16.msra.mxu0 0
      %543 = vmatprep.subr.bf16.mxu0 0
      %544 = vmatpush2.bf16.msra.mxu0 0
      %545 = vmatprep.subr.bf16.mxu0 0
      %546 = vmatpush2.bf16.msra.mxu0 0
      %547 = vmatprep.subr.bf16.mxu0 0
      %548 = vmatpush2.bf16.msra.mxu0 0
      %549 = vmatprep.subr.bf16.mxu0 0
      %550 = vmatpush2.bf16.msra.mxu0 0
      %551 = vmatprep.subr.bf16.mxu0 0
      %552 = vmatpush2.bf16.msra.mxu0 0
      %553 = vmatprep.subr.bf16.mxu0 0
      %554 = vmatpush2.bf16.msra.mxu0 0
      %555 = vmatprep.subr.bf16.mxu0 0
      %556 = vmatpush2.bf16.msra.mxu0 0
      %557 = vmatprep.mubr.bf16.mxu0 0
      %558 = vmatmul.mubr.bf16.gmra.mxu0 %v519
      %v559 = vpop.f32.mrf.mxu0
      %v560 = vadd.f32 %v489, %v559
      %v561 = vpop.f32.mrf.mxu0
      %v562 = vpop.f32.mrf.mxu0
      %v563 = vpop.f32.mrf.mxu0
      %564 = vdwg.mxu0
      %vm565 = vcmask 191488
      %566 = vst.msk [vmem:[%s276] sm:$0xf] %vm565, %v560
      %p567 = scmp.lt.s32.totalorder %s18, 1
      %s568 = scalar_select %p567, %s18, 1
      %s569 = smul.addr %s568, 4
      %s570 = scalar_lea.vmem %s7, %s569
      // Predicated region
      $region49: #{_lambda_.7} parent=47 // pred_check
        %p571 = pneg %p188
      $region50: #{_lambda_.7} parent=47 // pred_check_branch
        %573 = sbr.rel (%p571) target = $region52
      $region51: #{_lambda_.7} parent=47 // pred_region
        _
      $region52: #{_lambda_.7} parent=47 // pred_fallthru
        _
    $region48: #{_lambda_.7} parent=5 // pred_fallthru
      _
    %p574 = scmp.le.s32.totalorder 2, %s13
    // Predicated region
    $region53: #{_lambda_.7} parent=5 // pred_check
      %p575 = pneg %p574
    $region54: #{_lambda_.7} parent=5 // pred_check_branch
      %577 = sbr.rel (%p575) target = $region56
    $region55: #{_lambda_.7} parent=5 // pred_region
      %s578 = ssub.s32 %s13, 2
      // Predicated region
      $region57: #{_lambda_.7} parent=55 // pred_check
        %p579 = pneg %p194
      $region58: #{_lambda_.7} parent=55 // pred_check_branch
        %581 = sbr.rel (%p579) target = $region60
      $region59: #{_lambda_.7} parent=55 // pred_region
        %p582 = scmp.lt.s32.totalorder %s19, 1
        %s583 = scalar_select %p582, %s19, 1
        %s584 = smul.addr %s583, 4
        %s585 = scalar_lea.vmem %s7, %s584
      $region60: #{_lambda_.7} parent=55 // pred_fallthru
        _
    $region56: #{_lambda_.7} parent=5 // pred_fallthru
      _
  $region6: #{_lambda_.7} parent=0 // loop_footer
    %s17 = sadd.s32 1, %s13
  $region7: #{_lambda_.7} parent=0 // loop_footer_branch
    %12 = sbr.rel target = $region3
  $region8: #{_lambda_.7} parent=0 // loop_exit
    _

// kernel: _lambda_.5
$region0: #{_lambda_.5}
  #allocation0 [shape = 'u32[]', space=smem, size = 0x4, offset = 0x4, fixed_abs, tag = 'smem constant byte address 0x4 - core index']
  #allocation1 [shape = 'u32[144,128]{1,0:T(1,128)}', space=vmem, size = 0x12000, scoped, tag = 'internal scratch']
  #allocation2 [shape = 'f32[324,16]{1,0:T(8,128)}', space=vmem, size = 0x29000, scoped, tag = 'scratch operand']
  #allocation3 [shape = 'f32[9,64,16]{2,1,0:T(8,128)}', space=vmem, size = 0x48000, scoped, tag = 'scratch operand']
  %s0 = inlined_call_operand.vmem [shape: f32[2,256,16], index: 0, kind: input, shape index: {}]
  %s1 = inlined_call_operand.vmem [shape: bf16[9,16,16], index: 1, kind: input, shape index: {}]
  %s2 = inlined_call_operand.vmem [shape: f32[1,16], index: 2, kind: input, shape index: {}]
  %s3 = inlined_call_operand.vmem [shape: f32[2,64,16], index: 3, kind: output, shape index: {}]
  %s4 = sld [smem:[#allocation0]]
  $region45: #{_lambda_.5} parent=0
    _
  %s6 = ssub.s32 1, %s4
  %s7 = scalar_select 0, %s6, %s4
  loop: start=0, step=1, limit=4
  $region2: #{_lambda_.5} parent=0 // loop_pre_header
    _
  $region3: #{_lambda_.5} parent=0 // loop_header
    %s9 = sphi 0, %s13
    %p10 = scmp.ge.s32.totalorder %s9, 4
    %s19 = sphi 0, %s21
    %s22 = sphi 0, %s19
    %s23 = sphi 0, %s22
    %s39 = sphi 0, %s23
    %s43 = sphi 0, %s43
    %s45 = sphi 0, %s43
    %s46 = sphi 0, %s45
    %s60 = sphi 0, %s46
    %s64 = sphi 0, %s64
    %s66 = sphi 0, %s64
    %s67 = sphi 0, %s66
    %s81 = sphi 0, %s67
    %s87 = sphi 0, %s89
    %s90 = sphi 0, %s87
    %s91 = sphi 0, %s90
    %s107 = sphi 0, %s91
  $region4: #{_lambda_.5} parent=0 // loop_header_branch
    %12 = sbr.rel (%p10) target = $region8
  $region5: #{_lambda_.5} parent=0 // loop_body
    %s14 = ssub.s32 %s9, 1
    %s15 = ssub.s32 %s9, 2
    %s16 = sadd.s32 %s9, 1
    %s17 = ssub.s32 %s9, %s16
    %p18 = scmp.eq.s32.totalorder %s17, 0
    %s20 = sadd.s32 %s19, 1
    %s21 = scalar_select %p18, %s19, %s20
    %p24 = pneg %p18
    %p25 = scmp.eq.s32.totalorder %s9, 1
    %p26 = por %p24, %p25
    %p27 = scmp.ne.s32.totalorder %s19, %s22
    %p28 = scmp.eq.s32.totalorder %s9, 0
    %p29 = por %p27, %p28
    %p30 = scmp.ne.s32.totalorder %s19, %s22
    %p31 = scmp.eq.s32.totalorder %s14, 1
    %p32 = por %p30, %p31
    %p33 = scmp.ne.s32.totalorder %s22, %s23
    %p34 = scmp.eq.s32.totalorder %s14, 0
    %p35 = por %p33, %p34
    %p36 = scmp.ne.s32.totalorder %s22, %s23
    %p37 = scmp.eq.s32.totalorder %s15, 1
    %p38 = por %p36, %p37
    %p40 = scmp.ne.s32.totalorder %s23, %s39
    %p41 = scmp.eq.s32.totalorder %s15, 0
    %p42 = por %p40, %p41
    %s44 = sadd.s32 %s43, 1
    %p47 = scmp.eq.s32.totalorder %s9, 1
    %p48 = scmp.ne.s32.totalorder %s43, %s45
    %p49 = scmp.eq.s32.totalorder %s9, 0
    %p50 = por %p48, %p49
    %p51 = scmp.ne.s32.totalorder %s43, %s45
    %p52 = scmp.eq.s32.totalorder %s14, 1
    %p53 = por %p51, %p52
    %p54 = scmp.ne.s32.totalorder %s45, %s46
    %p55 = scmp.eq.s32.totalorder %s14, 0
    %p56 = por %p54, %p55
    %p57 = scmp.ne.s32.totalorder %s45, %s46
    %p58 = scmp.eq.s32.totalorder %s15, 1
    %p59 = por %p57, %p58
    %p61 = scmp.ne.s32.totalorder %s46, %s60
    %p62 = scmp.eq.s32.totalorder %s15, 0
    %p63 = por %p61, %p62
    %s65 = sadd.s32 %s64, 1
    %p68 = scmp.eq.s32.totalorder %s9, 1
    %p69 = scmp.ne.s32.totalorder %s64, %s66
    %p70 = scmp.eq.s32.totalorder %s9, 0
    %p71 = por %p69, %p70
    %p72 = scmp.ne.s32.totalorder %s64, %s66
    %p73 = scmp.eq.s32.totalorder %s14, 1
    %p74 = por %p72, %p73
    %p75 = scmp.ne.s32.totalorder %s66, %s67
    %p76 = scmp.eq.s32.totalorder %s14, 0
    %p77 = por %p75, %p76
    %p78 = scmp.ne.s32.totalorder %s66, %s67
    %p79 = scmp.eq.s32.totalorder %s15, 1
    %p80 = por %p78, %p79
    %p82 = scmp.ne.s32.totalorder %s67, %s81
    %p83 = scmp.eq.s32.totalorder %s15, 0
    %p84 = por %p82, %p83
    %s85 = ssub.s32 %s9, %s16
    %p86 = scmp.eq.s32.totalorder %s85, 0
    %s88 = sadd.s32 %s87, 1
    %s89 = scalar_select %p86, %s87, %s88
    %p92 = pneg %p86
    %p93 = scmp.eq.s32.totalorder %s9, 1
    %p94 = por %p92, %p93
    %p95 = scmp.ne.s32.totalorder %s87, %s90
    %p96 = scmp.eq.s32.totalorder %s9, 0
    %p97 = por %p95, %p96
    %p98 = scmp.ne.s32.totalorder %s87, %s90
    %p99 = scmp.eq.s32.totalorder %s14, 1
    %p100 = por %p98, %p99
    %p101 = scmp.ne.s32.totalorder %s90, %s91
    %p102 = scmp.eq.s32.totalorder %s14, 0
    %p103 = por %p101, %p102
    %p104 = scmp.ne.s32.totalorder %s90, %s91
    %p105 = scmp.eq.s32.totalorder %s15, 1
    %p106 = por %p104, %p105
    %p108 = scmp.ne.s32.totalorder %s91, %s107
    %p109 = scmp.eq.s32.totalorder %s15, 0
    %p110 = por %p108, %p109
    %p111 = scmp.le.s32.totalorder 1, %s9
    %p112 = scmp.lt.s32.totalorder %s9, 3
    %p113 = pnand %p111, %p112
    %p114 = pneg %p113
    // Predicated region
    $region9: #{_lambda_.5} parent=5 // pred_check
      _
    $region10: #{_lambda_.5} parent=5 // pred_check_branch
      %116 = sbr.rel (%p113) target = $region12
    $region11: #{_lambda_.5} parent=5 // pred_region
      %s117 = ssub.s32 %s9, 1
      // Predicated region
      $region13: #{_lambda_.5} parent=11 // pred_check
        %p118 = pneg %p56
      $region14: #{_lambda_.5} parent=11 // pred_check_branch
        %120 = sbr.rel (%p118) target = $region16
      $region15: #{_lambda_.5} parent=11 // pred_region
        _
      $region16: #{_lambda_.5} parent=11 // pred_fallthru
        _
      // Predicated region
      $region17: #{_lambda_.5} parent=11 // pred_check
        %p121 = pneg %p77
      $region18: #{_lambda_.5} parent=11 // pred_check_branch
        %123 = sbr.rel (%p121) target = $region20
      $region19: #{_lambda_.5} parent=11 // pred_region
        _
      $region20: #{_lambda_.5} parent=11 // pred_fallthru
        _
    $region12: #{_lambda_.5} parent=5 // pred_fallthru
      _
    %p124 = scmp.lt.s32.totalorder %s9, 2
    // Predicated region
    $region21: #{_lambda_.5} parent=5 // pred_check
      %p125 = pneg %p124
    $region22: #{_lambda_.5} parent=5 // pred_check_branch
      %127 = sbr.rel (%p125) target = $region24
    $region23: #{_lambda_.5} parent=5 // pred_region
      // Predicated region
      $region25: #{_lambda_.5} parent=23 // pred_check
        %p128 = pneg %p29
      $region26: #{_lambda_.5} parent=23 // pred_check_branch
        %130 = sbr.rel (%p128) target = $region28
      $region27: #{_lambda_.5} parent=23 // pred_region
        %p131 = scmp.lt.s32.totalorder %s9, 1
        %s132 = scalar_select %p131, %s9, 1
        %s133 = smul.addr %s132, 32
        %s134 = smul.addr %s133, 8
        %s135 = scalar_lea.vmem %s0, %s134
      $region28: #{_lambda_.5} parent=23 // pred_fallthru
        _
    $region24: #{_lambda_.5} parent=5 // pred_fallthru
      _
    %p136 = scmp.le.s32.totalorder 1, %s9
    %p137 = scmp.lt.s32.totalorder %s9, 3
    %p138 = pnand %p136, %p137
    %p139 = pneg %p138
    // Predicated region
    $region29: #{_lambda_.5} parent=5 // pred_check
      _
    $region30: #{_lambda_.5} parent=5 // pred_check_branch
      %141 = sbr.rel (%p138) target = $region32
    $region31: #{_lambda_.5} parent=5 // pred_region
      %s142 = ssub.s32 %s9, 1
      %p143 = scmp.lt.s32.totalorder %s14, 1
      %s144 = scalar_select %p143, %s14, 1
      %s145 = smul.addr %s144, 32
      %s146 = smul.addr %s145, 8
      %s147 = scalar_lea.vmem %s0, %s146
      %p148 = pneg %p35
      %p149 = pneg %p32
      %p150 = pneg %p56
      %p151 = pneg %p53
      %p152 = pneg %p77
      %p153 = pneg %p74
      %p154 = pneg %p103
      %p155 = pneg %p100
      %p156 = scmp.lt.s32.totalorder %s14, 1
      %s157 = scalar_select %p156, %s14, 1
      %s158 = smul.addr %s157, 8
      %s159 = smul.addr %s158, 8
      %s160 = scalar_lea.vmem %s3, %s159
      %p161 = scmp.lt.s32.totalorder %s14, 1
      %s162 = scalar_select %p161, %s14, 1
      %s163 = smul.addr %s162, 32
      %s164 = smul.addr %s163, 8
      %s165 = scalar_lea.vmem %s0, %s164
      %p166 = scmp.lt.s32.totalorder %s14, 1
      %s167 = scalar_select %p166, %s14, 1
      %s168 = smul.addr %s167, 8
      %s169 = smul.addr %s168, 8
      %s170 = scalar_lea.vmem %s3, %s169
      %v172 = vld [vmem:[%s165] sm:$0xff]
      %v173 = vld [vmem:[%s165 + $0x8] sm:$0xff]
      %v174 = vld [vmem:[%s165 + $0x10] sm:$0xff]
      %v175 = vld [vmem:[%s165 + $0x18] sm:$0xff]
      %v176 = vld [vmem:[%s165 + $0x20] sm:$0xff]
      %v177 = vld [vmem:[%s165 + $0x28] sm:$0xff]
      %v178 = vld [vmem:[%s165 + $0x30] sm:$0xff]
      %v179 = vld [vmem:[%s165 + $0x38] sm:$0xff]
      %v180 = vld [vmem:[%s165 + $0x40] sm:$0xff]
      %v181 = vld [vmem:[%s165 + $0x48] sm:$0xff]
      %v182 = vld [vmem:[%s165 + $0x50] sm:$0xff]
      %v183 = vld [vmem:[%s165 + $0x58] sm:$0xff]
      %v184 = vld [vmem:[%s165 + $0x60] sm:$0xff]
      %v185 = vld [vmem:[%s165 + $0x68] sm:$0xff]
      %v186 = vld [vmem:[%s165 + $0x70] sm:$0xff]
      %v187 = vld [vmem:[%s165 + $0x78] sm:$0xff]
      %v188 = vld [vmem:[%s165 + $0x80] sm:$0xff]
      %v189 = vld [vmem:[%s165 + $0x88] sm:$0xff]
      %v190 = vld [vmem:[%s165 + $0x90] sm:$0xff]
      %v191 = vld [vmem:[%s165 + $0x98] sm:$0xff]
      %v192 = vld [vmem:[%s165 + $0xa0] sm:$0xff]
      %v193 = vld [vmem:[%s165 + $0xa8] sm:$0xff]
      %v194 = vld [vmem:[%s165 + $0xb0] sm:$0xff]
      %v195 = vld [vmem:[%s165 + $0xb8] sm:$0xff]
      %v196 = vld [vmem:[%s165 + $0xc0] sm:$0xff]
      %v197 = vld [vmem:[%s165 + $0xc8] sm:$0xff]
      %v198 = vld [vmem:[%s165 + $0xd0] sm:$0xff]
      %v199 = vld [vmem:[%s165 + $0xd8] sm:$0xff]
      %v200 = vld [vmem:[%s165 + $0xe0] sm:$0xff]
      %v201 = vld [vmem:[%s165 + $0xe8] sm:$0xff]
      %v202 = vld [vmem:[%s165 + $0xf0] sm:$0xff]
      %v203 = vld [vmem:[%s165 + $0xf8] sm:$0xff]
      %vm204 = vcmask 130048
      %205 = vst.msk [vmem:[#allocation2] sm:$0xff] %vm204, 0.0
      %206 = vst.msk [vmem:[#allocation2 + $0x8] sm:$0xff] %vm204, 0.0
      %207 = vst.msk [vmem:[#allocation2 + $0x10] sm:$0xff] %vm204, 0.0
      %208 = vst.msk [vmem:[#allocation2 + $0x18] sm:$0xff] %vm204, 0.0
      %209 = vst.msk [vmem:[#allocation2 + $0x20] sm:$0xff] %vm204, 0.0
      %210 = vst.msk [vmem:[#allocation2 + $0x28] sm:$0xff] %vm204, 0.0
      %211 = vst.msk [vmem:[#allocation2 + $0x30] sm:$0xff] %vm204, 0.0
      %212 = vst.msk [vmem:[#allocation2 + $0x38] sm:$0xff] %vm204, 0.0
      %213 = vst.msk [vmem:[#allocation2 + $0x40] sm:$0xff] %vm204, 0.0
      %214 = vst.msk [vmem:[#allocation2 + $0x48] sm:$0xff] %vm204, 0.0
      %215 = vst.msk [vmem:[#allocation2 + $0x50] sm:$0xff] %vm204, 0.0
      %216 = vst.msk [vmem:[#allocation2 + $0x58] sm:$0xff] %vm204, 0.0
      %217 = vst.msk [vmem:[#allocation2 + $0x60] sm:$0xff] %vm204, 0.0
      %218 = vst.msk [vmem:[#allocation2 + $0x68] sm:$0xff] %vm204, 0.0
      %219 = vst.msk [vmem:[#allocation2 + $0x70] sm:$0xff] %vm204, 0.0
      %220 = vst.msk [vmem:[#allocation2 + $0x78] sm:$0xff] %vm204, 0.0
      %221 = vst.msk [vmem:[#allocation2 + $0x80] sm:$0xff] %vm204, 0.0
      %222 = vst.msk [vmem:[#allocation2 + $0x88] sm:$0xff] %vm204, 0.0
      %223 = vst.msk [vmem:[#allocation2 + $0x90] sm:$0xff] %vm204, 0.0
      %224 = vst.msk [vmem:[#allocation2 + $0x98] sm:$0xff] %vm204, 0.0
      %225 = vst.msk [vmem:[#allocation2 + $0xa0] sm:$0xff] %vm204, 0.0
      %226 = vst.msk [vmem:[#allocation2 + $0xa8] sm:$0xff] %vm204, 0.0
      %227 = vst.msk [vmem:[#allocation2 + $0xb0] sm:$0xff] %vm204, 0.0
      %228 = vst.msk [vmem:[#allocation2 + $0xb8] sm:$0xff] %vm204, 0.0
      %229 = vst.msk [vmem:[#allocation2 + $0xc0] sm:$0xff] %vm204, 0.0
      %230 = vst.msk [vmem:[#allocation2 + $0xc8] sm:$0xff] %vm204, 0.0
      %231 = vst.msk [vmem:[#allocation2 + $0xd0] sm:$0xff] %vm204, 0.0
      %232 = vst.msk [vmem:[#allocation2 + $0xd8] sm:$0xff] %vm204, 0.0
      %233 = vst.msk [vmem:[#allocation2 + $0xe0] sm:$0xff] %vm204, 0.0
      %234 = vst.msk [vmem:[#allocation2 + $0xe8] sm:$0xff] %vm204, 0.0
      %235 = vst.msk [vmem:[#allocation2 + $0xf0] sm:$0xff] %vm204, 0.0
      %236 = vst.msk [vmem:[#allocation2 + $0xf8] sm:$0xff] %vm204, 0.0
      %237 = vst.msk [vmem:[#allocation2 + $0x100] sm:$0xff] %vm204, 0.0
      %238 = vst.msk [vmem:[#allocation2 + $0x108] sm:$0xff] %vm204, 0.0
      %239 = vst.msk [vmem:[#allocation2 + $0x110] sm:$0xff] %vm204, 0.0
      %240 = vst.msk [vmem:[#allocation2 + $0x118] sm:$0xff] %vm204, 0.0
      %241 = vst.msk [vmem:[#allocation2 + $0x120] sm:$0xff] %vm204, 0.0
      %242 = vst.msk [vmem:[#allocation2 + $0x128] sm:$0xff] %vm204, 0.0
      %243 = vst.msk [vmem:[#allocation2 + $0x130] sm:$0xff] %vm204, 0.0
      %244 = vst.msk [vmem:[#allocation2 + $0x138] sm:$0xff] %vm204, 0.0
      %vm245 = vcmask 125952
      %246 = vst.msk [vmem:[#allocation2 + $0x140] sm:$0xf] %vm245, 0.0
      %247 = vst.msk [vmem:[#allocation2 + $0x13] sm:$0xff] %vm204, %v172
      %248 = vst.msk [vmem:[#allocation2 + $0x1b] sm:$0xff] %vm204, %v173
      %249 = vst.msk [vmem:[#allocation2 + $0x25] sm:$0xff] %vm204, %v174
      %250 = vst.msk [vmem:[#allocation2 + $0x2d] sm:$0xff] %vm204, %v175
      %251 = vst.msk [vmem:[#allocation2 + $0x37] sm:$0xff] %vm204, %v176
      %252 = vst.msk [vmem:[#allocation2 + $0x3f] sm:$0xff] %vm204, %v177
      %253 = vst.msk [vmem:[#allocation2 + $0x49] sm:$0xff] %vm204, %v178
      %254 = vst.msk [vmem:[#allocation2 + $0x51] sm:$0xff] %vm204, %v179
      %255 = vst.msk [vmem:[#allocation2 + $0x5b] sm:$0xff] %vm204, %v180
      %256 = vst.msk [vmem:[#allocation2 + $0x63] sm:$0xff] %vm204, %v181
      %257 = vst.msk [vmem:[#allocation2 + $0x6d] sm:$0xff] %vm204, %v182
      %258 = vst.msk [vmem:[#allocation2 + $0x75] sm:$0xff] %vm204, %v183
      %259 = vst.msk [vmem:[#allocation2 + $0x7f] sm:$0xff] %vm204, %v184
      %260 = vst.msk [vmem:[#allocation2 + $0x87] sm:$0xff] %vm204, %v185
      %261 = vst.msk [vmem:[#allocation2 + $0x91] sm:$0xff] %vm204, %v186
      %262 = vst.msk [vmem:[#allocation2 + $0x99] sm:$0xff] %vm204, %v187
      %263 = vst.msk [vmem:[#allocation2 + $0xa3] sm:$0xff] %vm204, %v188
      %264 = vst.msk [vmem:[#allocation2 + $0xab] sm:$0xff] %vm204, %v189
      %265 = vst.msk [vmem:[#allocation2 + $0xb5] sm:$0xff] %vm204, %v190
      %266 = vst.msk [vmem:[#allocation2 + $0xbd] sm:$0xff] %vm204, %v191
      %267 = vst.msk [vmem:[#allocation2 + $0xc7] sm:$0xff] %vm204, %v192
      %268 = vst.msk [vmem:[#allocation2 + $0xcf] sm:$0xff] %vm204, %v193
      %269 = vst.msk [vmem:[#allocation2 + $0xd9] sm:$0xff] %vm204, %v194
      %270 = vst.msk [vmem:[#allocation2 + $0xe1] sm:$0xff] %vm204, %v195
      %271 = vst.msk [vmem:[#allocation2 + $0xeb] sm:$0xff] %vm204, %v196
      %272 = vst.msk [vmem:[#allocation2 + $0xf3] sm:$0xff] %vm204, %v197
      %273 = vst.msk [vmem:[#allocation2 + $0xfd] sm:$0xff] %vm204, %v198
      %274 = vst.msk [vmem:[#allocation2 + $0x105] sm:$0xff] %vm204, %v199
      %275 = vst.msk [vmem:[#allocation2 + $0x10f] sm:$0xff] %vm204, %v200
      %276 = vst.msk [vmem:[#allocation2 + $0x117] sm:$0xff] %vm204, %v201
      %277 = vst.msk [vmem:[#allocation2 + $0x121] sm:$0xff] %vm204, %v202
      %278 = vst.msk [vmem:[#allocation2 + $0x129] sm:$0xff] %vm204, %v203
      %v279 = vld [vmem:[#allocation2] ss:$2 sm:$0xff]
      %280 = vst.msk [vmem:[#allocation3] sm:$0xff] %vm204, %v279
      %s281 = scalar_lea.vmem [#allocation2], 36
      %v282 = vld [vmem:[%s281] ss:$2 sm:$0xff]
      %283 = vst.msk [vmem:[#allocation3 + $0x8] sm:$0xff] %vm204, %v282
      %s284 = scalar_lea.vmem [#allocation2], 72
      %v285 = vld [vmem:[%s284] ss:$2 sm:$0xff]
      %286 = vst.msk [vmem:[#allocation3 + $0x10] sm:$0xff] %vm204, %v285
      %s287 = scalar_lea.vmem [#allocation2], 108
      %v288 = vld [vmem:[%s287] ss:$2 sm:$0xff]
      %289 = vst.msk [vmem:[#allocation3 + $0x18] sm:$0xff] %vm204, %v288
      %s290 = scalar_lea.vmem [#allocation2], 144
      %v291 = vld [vmem:[%s290] ss:$2 sm:$0xff]
      %292 = vst.msk [vmem:[#allocation3 + $0x20] sm:$0xff] %vm204, %v291
      %s293 = scalar_lea.vmem [#allocation2], 180
      %v294 = vld [vmem:[%s293] ss:$2 sm:$0xff]
      %295 = vst.msk [vmem:[#allocation3 + $0x28] sm:$0xff] %vm204, %v294
      %s296 = scalar_lea.vmem [#allocation2], 216
      %v297 = vld [vmem:[%s296] ss:$2 sm:$0xff]
      %298 = vst.msk [vmem:[#allocation3 + $0x30] sm:$0xff] %vm204, %v297
      %s299 = scalar_lea.vmem [#allocation2], 252
      %v300 = vld [vmem:[%s299] ss:$2 sm:$0xff]
      %301 = vst.msk [vmem:[#allocation3 + $0x38] sm:$0xff] %vm204, %v300
      %s302 = scalar_lea.vmem [#allocation2], 1
      %v303 = vld [vmem:[%s302] ss:$2 sm:$0xff]
      %s304 = scalar_lea.vmem [#allocation3], 64
      %305 = vst.msk [vmem:[%s304] sm:$0xff] %vm204, %v303
      %s306 = scalar_lea.vmem [#allocation2], 37
      %v307 = vld [vmem:[%s306] ss:$2 sm:$0xff]
      %308 = vst.msk [vmem:[%s304 + $0x8] sm:$0xff] %vm204, %v307
      %s309 = scalar_lea.vmem [#allocation2], 73
      %v310 = vld [vmem:[%s309] ss:$2 sm:$0xff]
      %311 = vst.msk [vmem:[%s304 + $0x10] sm:$0xff] %vm204, %v310
      %s312 = scalar_lea.vmem [#allocation2], 109
      %v313 = vld [vmem:[%s312] ss:$2 sm:$0xff]
      %314 = vst.msk [vmem:[%s304 + $0x18] sm:$0xff] %vm204, %v313
      %s315 = scalar_lea.vmem [#allocation2], 145
      %v316 = vld [vmem:[%s315] ss:$2 sm:$0xff]
      %317 = vst.msk [vmem:[%s304 + $0x20] sm:$0xff] %vm204, %v316
      %s318 = scalar_lea.vmem [#allocation2], 181
      %v319 = vld [vmem:[%s318] ss:$2 sm:$0xff]
      %320 = vst.msk [vmem:[%s304 + $0x28] sm:$0xff] %vm204, %v319
      %s321 = scalar_lea.vmem [#allocation2], 217
      %v322 = vld [vmem:[%s321] ss:$2 sm:$0xff]
      %323 = vst.msk [vmem:[%s304 + $0x30] sm:$0xff] %vm204, %v322
      %s324 = scalar_lea.vmem [#allocation2], 253
      %v325 = vld [vmem:[%s324] ss:$2 sm:$0xff]
      %326 = vst.msk [vmem:[%s304 + $0x38] sm:$0xff] %vm204, %v325
      %s327 = scalar_lea.vmem [#allocation2], 2
      %v328 = vld [vmem:[%s327] ss:$2 sm:$0xff]
      %s329 = scalar_lea.vmem [#allocation3], 128
      %330 = vst.msk [vmem:[%s329] sm:$0xff] %vm204, %v328
      %s331 = scalar_lea.vmem [#allocation2], 38
      %v332 = vld [vmem:[%s331] ss:$2 sm:$0xff]
      %333 = vst.msk [vmem:[%s329 + $0x8] sm:$0xff] %vm204, %v332
      %s334 = scalar_lea.vmem [#allocation2], 74
      %v335 = vld [vmem:[%s334] ss:$2 sm:$0xff]
      %336 = vst.msk [vmem:[%s329 + $0x10] sm:$0xff] %vm204, %v335
      %s337 = scalar_lea.vmem [#allocation2], 110
      %v338 = vld [vmem:[%s337] ss:$2 sm:$0xff]
      %339 = vst.msk [vmem:[%s329 + $0x18] sm:$0xff] %vm204, %v338
      %s340 = scalar_lea.vmem [#allocation2], 146
      %v341 = vld [vmem:[%s340] ss:$2 sm:$0xff]
      %342 = vst.msk [vmem:[%s329 + $0x20] sm:$0xff] %vm204, %v341
      %s343 = scalar_lea.vmem [#allocation2], 182
      %v344 = vld [vmem:[%s343] ss:$2 sm:$0xff]
      %345 = vst.msk [vmem:[%s329 + $0x28] sm:$0xff] %vm204, %v344
      %s346 = scalar_lea.vmem [#allocation2], 218
      %v347 = vld [vmem:[%s346] ss:$2 sm:$0xff]
      %348 = vst.msk [vmem:[%s329 + $0x30] sm:$0xff] %vm204, %v347
      %s349 = scalar_lea.vmem [#allocation2], 254
      %v350 = vld [vmem:[%s349] ss:$2 sm:$0xff]
      %351 = vst.msk [vmem:[%s329 + $0x38] sm:$0xff] %vm204, %v350
      %s352 = scalar_lea.vmem [#allocation2], 18
      %v353 = vld [vmem:[%s352] ss:$2 sm:$0xff]
      %s354 = scalar_lea.vmem [#allocation3], 192
      %355 = vst.msk [vmem:[%s354] sm:$0xff] %vm204, %v353
      %s356 = scalar_lea.vmem [#allocation2], 54
      %v357 = vld [vmem:[%s356] ss:$2 sm:$0xff]
      %358 = vst.msk [vmem:[%s354 + $0x8] sm:$0xff] %vm204, %v357
      %s359 = scalar_lea.vmem [#allocation2], 90
      %v360 = vld [vmem:[%s359] ss:$2 sm:$0xff]
      %361 = vst.msk [vmem:[%s354 + $0x10] sm:$0xff] %vm204, %v360
      %s362 = scalar_lea.vmem [#allocation2], 126
      %v363 = vld [vmem:[%s362] ss:$2 sm:$0xff]
      %364 = vst.msk [vmem:[%s354 + $0x18] sm:$0xff] %vm204, %v363
      %s365 = scalar_lea.vmem [#allocation2], 162
      %v366 = vld [vmem:[%s365] ss:$2 sm:$0xff]
      %367 = vst.msk [vmem:[%s354 + $0x20] sm:$0xff] %vm204, %v366
      %s368 = scalar_lea.vmem [#allocation2], 198
      %v369 = vld [vmem:[%s368] ss:$2 sm:$0xff]
      %370 = vst.msk [vmem:[%s354 + $0x28] sm:$0xff] %vm204, %v369
      %s371 = scalar_lea.vmem [#allocation2], 234
      %v372 = vld [vmem:[%s371] ss:$2 sm:$0xff]
      %373 = vst.msk [vmem:[%s354 + $0x30] sm:$0xff] %vm204, %v372
      %s374 = scalar_lea.vmem [#allocation2], 270
      %v375 = vld [vmem:[%s374] ss:$2 sm:$0xff]
      %376 = vst.msk [vmem:[%s354 + $0x38] sm:$0xff] %vm204, %v375
      %s377 = scalar_lea.vmem [#allocation2], 19
      %v378 = vld [vmem:[%s377] ss:$2 sm:$0xff]
      %s379 = scalar_lea.vmem [#allocation3], 256
      %380 = vst.msk [vmem:[%s379] sm:$0xff] %vm204, %v378
      %s381 = scalar_lea.vmem [#allocation2], 55
      %v382 = vld [vmem:[%s381] ss:$2 sm:$0xff]
      %383 = vst.msk [vmem:[%s379 + $0x8] sm:$0xff] %vm204, %v382
      %s384 = scalar_lea.vmem [#allocation2], 91
      %v385 = vld [vmem:[%s384] ss:$2 sm:$0xff]
      %386 = vst.msk [vmem:[%s379 + $0x10] sm:$0xff] %vm204, %v385
      %s387 = scalar_lea.vmem [#allocation2], 127
      %v388 = vld [vmem:[%s387] ss:$2 sm:$0xff]
      %389 = vst.msk [vmem:[%s379 + $0x18] sm:$0xff] %vm204, %v388
      %s390 = scalar_lea.vmem [#allocation2], 163
      %v391 = vld [vmem:[%s390] ss:$2 sm:$0xff]
      %392 = vst.msk [vmem:[%s379 + $0x20] sm:$0xff] %vm204, %v391
      %s393 = scalar_lea.vmem [#allocation2], 199
      %v394 = vld [vmem:[%s393] ss:$2 sm:$0xff]
      %395 = vst.msk [vmem:[%s379 + $0x28] sm:$0xff] %vm204, %v394
      %s396 = scalar_lea.vmem [#allocation2], 235
      %v397 = vld [vmem:[%s396] ss:$2 sm:$0xff]
      %398 = vst.msk [vmem:[%s379 + $0x30] sm:$0xff] %vm204, %v397
      %s399 = scalar_lea.vmem [#allocation2], 271
      %v400 = vld [vmem:[%s399] ss:$2 sm:$0xff]
      %401 = vst.msk [vmem:[%s379 + $0x38] sm:$0xff] %vm204, %v400
      %s402 = scalar_lea.vmem [#allocation2], 20
      %v403 = vld [vmem:[%s402] ss:$2 sm:$0xff]
      %s404 = scalar_lea.vmem [#allocation3], 320
      %405 = vst.msk [vmem:[%s404] sm:$0xff] %vm204, %v403
      %s406 = scalar_lea.vmem [#allocation2], 56
      %v407 = vld [vmem:[%s406] ss:$2 sm:$0xff]
      %408 = vst.msk [vmem:[%s404 + $0x8] sm:$0xff] %vm204, %v407
      %s409 = scalar_lea.vmem [#allocation2], 92
      %v410 = vld [vmem:[%s409] ss:$2 sm:$0xff]
      %411 = vst.msk [vmem:[%s404 + $0x10] sm:$0xff] %vm204, %v410
      %s412 = scalar_lea.vmem [#allocation2], 128
      %v413 = vld [vmem:[%s412] ss:$2 sm:$0xff]
      %414 = vst.msk [vmem:[%s404 + $0x18] sm:$0xff] %vm204, %v413
      %s415 = scalar_lea.vmem [#allocation2], 164
      %v416 = vld [vmem:[%s415] ss:$2 sm:$0xff]
      %417 = vst.msk [vmem:[%s404 + $0x20] sm:$0xff] %vm204, %v416
      %s418 = scalar_lea.vmem [#allocation2], 200
      %v419 = vld [vmem:[%s418] ss:$2 sm:$0xff]
      %420 = vst.msk [vmem:[%s404 + $0x28] sm:$0xff] %vm204, %v419
      %s421 = scalar_lea.vmem [#allocation2], 236
      %v422 = vld [vmem:[%s421] ss:$2 sm:$0xff]
      %423 = vst.msk [vmem:[%s404 + $0x30] sm:$0xff] %vm204, %v422
      %s424 = scalar_lea.vmem [#allocation2], 272
      %v425 = vld [vmem:[%s424] ss:$2 sm:$0xff]
      %426 = vst.msk [vmem:[%s404 + $0x38] sm:$0xff] %vm204, %v425
      %v427 = vld [vmem:[%s281] ss:$2 sm:$0xff]
      %s428 = scalar_lea.vmem [#allocation3], 384
      %429 = vst.msk [vmem:[%s428] sm:$0xff] %vm204, %v427
      %v430 = vld [vmem:[%s284] ss:$2 sm:$0xff]
      %431 = vst.msk [vmem:[%s428 + $0x8] sm:$0xff] %vm204, %v430
      %v432 = vld [vmem:[%s287] ss:$2 sm:$0xff]
      %433 = vst.msk [vmem:[%s428 + $0x10] sm:$0xff] %vm204, %v432
      %v434 = vld [vmem:[%s290] ss:$2 sm:$0xff]
      %435 = vst.msk [vmem:[%s428 + $0x18] sm:$0xff] %vm204, %v434
      %v436 = vld [vmem:[%s293] ss:$2 sm:$0xff]
      %437 = vst.msk [vmem:[%s428 + $0x20] sm:$0xff] %vm204, %v436
      %v438 = vld [vmem:[%s296] ss:$2 sm:$0xff]
      %439 = vst.msk [vmem:[%s428 + $0x28] sm:$0xff] %vm204, %v438
      %v440 = vld [vmem:[%s299] ss:$2 sm:$0xff]
      %441 = vst.msk [vmem:[%s428 + $0x30] sm:$0xff] %vm204, %v440
      %s442 = scalar_lea.vmem [#allocation2], 288
      %v443 = vld [vmem:[%s442] ss:$2 sm:$0xff]
      %444 = vst.msk [vmem:[%s428 + $0x38] sm:$0xff] %vm204, %v443
      %v445 = vld [vmem:[%s306] ss:$2 sm:$0xff]
      %s446 = scalar_lea.vmem [#allocation3], 448
      %447 = vst.msk [vmem:[%s446] sm:$0xff] %vm204, %v445
      %v448 = vld [vmem:[%s309] ss:$2 sm:$0xff]
      %449 = vst.msk [vmem:[%s446 + $0x8] sm:$0xff] %vm204, %v448
      %v450 = vld [vmem:[%s312] ss:$2 sm:$0xff]
      %451 = vst.msk [vmem:[%s446 + $0x10] sm:$0xff] %vm204, %v450
      %v452 = vld [vmem:[%s315] ss:$2 sm:$0xff]
      %453 = vst.msk [vmem:[%s446 + $0x18] sm:$0xff] %vm204, %v452
      %v454 = vld [vmem:[%s318] ss:$2 sm:$0xff]
      %455 = vst.msk [vmem:[%s446 + $0x20] sm:$0xff] %vm204, %v454
      %v456 = vld [vmem:[%s321] ss:$2 sm:$0xff]
      %457 = vst.msk [vmem:[%s446 + $0x28] sm:$0xff] %vm204, %v456
      %v458 = vld [vmem:[%s324] ss:$2 sm:$0xff]
      %459 = vst.msk [vmem:[%s446 + $0x30] sm:$0xff] %vm204, %v458
      %s460 = scalar_lea.vmem [#allocation2], 289
      %v461 = vld [vmem:[%s460] ss:$2 sm:$0xff]
      %462 = vst.msk [vmem:[%s446 + $0x38] sm:$0xff] %vm204, %v461
      %v463 = vld [vmem:[%s331] ss:$2 sm:$0xff]
      %s464 = scalar_lea.vmem [#allocation3], 512
      %465 = vst.msk [vmem:[%s464] sm:$0xff] %vm204, %v463
      %v466 = vld [vmem:[%s334] ss:$2 sm:$0xff]
      %467 = vst.msk [vmem:[%s464 + $0x8] sm:$0xff] %vm204, %v466
      %v468 = vld [vmem:[%s337] ss:$2 sm:$0xff]
      %469 = vst.msk [vmem:[%s464 + $0x10] sm:$0xff] %vm204, %v468
      %v470 = vld [vmem:[%s340] ss:$2 sm:$0xff]
      %471 = vst.msk [vmem:[%s464 + $0x18] sm:$0xff] %vm204, %v470
      %v472 = vld [vmem:[%s343] ss:$2 sm:$0xff]
      %473 = vst.msk [vmem:[%s464 + $0x20] sm:$0xff] %vm204, %v472
      %v474 = vld [vmem:[%s346] ss:$2 sm:$0xff]
      %475 = vst.msk [vmem:[%s464 + $0x28] sm:$0xff] %vm204, %v474
      %v476 = vld [vmem:[%s349] ss:$2 sm:$0xff]
      %477 = vst.msk [vmem:[%s464 + $0x30] sm:$0xff] %vm204, %v476
      %s478 = scalar_lea.vmem [#allocation2], 290
      %v479 = vld [vmem:[%s478] ss:$2 sm:$0xff]
      %480 = vst.msk [vmem:[%s464 + $0x38] sm:$0xff] %vm204, %v479
      %v481 = vld [vmem:[#allocation3] sm:$0xff]
      %v482 = vld [vmem:[#allocation3 + $0x8] sm:$0xff]
      %v483 = vld [vmem:[#allocation3 + $0x10] sm:$0xff]
      %v484 = vld [vmem:[#allocation3 + $0x18] sm:$0xff]
      %v485 = vld [vmem:[#allocation3 + $0x20] sm:$0xff]
      %v486 = vld [vmem:[#allocation3 + $0x28] sm:$0xff]
      %v487 = vld [vmem:[#allocation3 + $0x30] sm:$0xff]
      %v488 = vld [vmem:[#allocation3 + $0x38] sm:$0xff]
      %v489 = vpack.c.bf16 %v482, %v481
      %v490 = vpack.c.bf16 %v484, %v483
      %v491 = vpack.c.bf16 %v486, %v485
      %v492 = vpack.c.bf16 %v488, %v487
      %v493 = vld [vmem:[%s1] sm:$0xf]
      %v494 = vld [vmem:[%s1 + $0x4] sm:$0xf]
      %v495 = vld [vmem:[%s304] sm:$0xff]
      %v496 = vld [vmem:[%s304 + $0x8] sm:$0xff]
      %v497 = vld [vmem:[%s304 + $0x10] sm:$0xff]
      %v498 = vld [vmem:[%s304 + $0x18] sm:$0xff]
      %v499 = vld [vmem:[%s304 + $0x20] sm:$0xff]
      %v500 = vld [vmem:[%s304 + $0x28] sm:$0xff]
      %v501 = vld [vmem:[%s304 + $0x30] sm:$0xff]
      %v502 = vld [vmem:[%s304 + $0x38] sm:$0xff]
      %v503 = vpack.c.bf16 %v496, %v495
      %v504 = vpack.c.bf16 %v498, %v497
      %v505 = vpack.c.bf16 %v500, %v499
      %v506 = vpack.c.bf16 %v502, %v501
      %s507 = scalar_lea.vmem %s1, 8
      %v508 = vld [vmem:[%s507] sm:$0xf]
      %v509 = vld [vmem:[%s507 + $0x4] sm:$0xf]
      %v512 = vunpack.c.l.b16 %v508
      %v513 = vunpack.c.l.b16 %v509
      %v514 = vpack.c.b16 %v513, %v512
      %v517 = vsel %vm204, %v503, 0
      %v520 = vsel %vm204, %v504, 0
      %v523 = vsel %vm204, %v505, 0
      %v526 = vsel %vm204, %v506, 0
      %528 = vmatprep.subr.bf16.mxu0 0
      %529 = vmatpush1.bf16.msra.mxu0 0
      %530 = vmatprep.subr.bf16.mxu0 0
      %531 = vmatpush1.bf16.msra.mxu0 0
      %532 = vmatprep.subr.bf16.mxu0 0
      %533 = vmatpush1.bf16.msra.mxu0 0
      %534 = vmatprep.subr.bf16.mxu0 0
      %535 = vmatpush1.bf16.msra.mxu0 0
      %536 = vmatprep.subr.bf16.mxu0 0
      %537 = vmatpush1.bf16.msra.mxu0 0
      %538 = vmatprep.subr.bf16.mxu0 0
      %539 = vmatpush1.bf16.msra.mxu0 0
      %540 = vmatprep.subr.bf16.mxu0 0
      %541 = vmatpush1.bf16.msra.mxu0 0
      %542 = vmatprep.subr.bf16.mxu0 0
      %543 = vmatpush1.bf16.msra.mxu0 %v514
      %544 = vmatprep.subr.bf16.mxu0 0
      %545 = vmatpush2.bf16.msra.mxu0 0
      %546 = vmatprep.subr.bf16.mxu0 0
      %547 = vmatpush2.bf16.msra.mxu0 0
      %548 = vmatprep.subr.bf16.mxu0 0
      %549 = vmatpush2.bf16.msra.mxu0 0
      %550 = vmatprep.subr.bf16.mxu0 0
      %551 = vmatpush2.bf16.msra.mxu0 0
      %552 = vmatprep.subr.bf16.mxu0 0
      %553 = vmatpush2.bf16.msra.mxu0 0
      %554 = vmatprep.subr.bf16.mxu0 0
      %555 = vmatpush2.bf16.msra.mxu0 0
      %556 = vmatprep.subr.bf16.mxu0 0
      %557 = vmatpush2.bf16.msra.mxu0 0
      %558 = vmatprep.subr.bf16.mxu0 0
      %559 = vmatpush2.bf16.msra.mxu0 0
      %560 = vmatprep.mubr.bf16.mxu0 0
      %561 = vmatmul.mubr.bf16.gmra.mxu0 %v517
      %v562 = vpop.f32.mrf.mxu0
      %v563 = vadd.f32 0.0, %v562
      %v564 = vpop.f32.mrf.mxu0
      %v565 = vpop.f32.mrf.mxu0
      %v566 = vadd.f32 0.0, %v565
      %v567 = vpop.f32.mrf.mxu0
      %568 = vmatprep.mubr.bf16.mxu0 0
      %569 = vmatmul.mubr.bf16.gmra.mxu0 %v520
      %v570 = vpop.f32.mrf.mxu0
      %v571 = vadd.f32 0.0, %v570
      %v572 = vpop.f32.mrf.mxu0
      %v573 = vpop.f32.mrf.mxu0
      %v574 = vadd.f32 0.0, %v573
      %v575 = vpop.f32.mrf.mxu0
      %576 = vmatprep.mubr.bf16.mxu0 0
      %577 = vmatmul.mubr.bf16.gmra.mxu0 %v523
      %v578 = vpop.f32.mrf.mxu0
      %v579 = vadd.f32 0.0, %v578
      %v580 = vpop.f32.mrf.mxu0
      %v581 = vpop.f32.mrf.mxu0
      %v582 = vadd.f32 0.0, %v581
      %v583 = vpop.f32.mrf.mxu0
      %584 = vmatprep.mubr.bf16.mxu0 0
      %585 = vmatmul.mubr.bf16.gmra.mxu0 %v526
      %v586 = vpop.f32.mrf.mxu0
      %v587 = vadd.f32 0.0, %v586
      %v588 = vpop.f32.mrf.mxu0
      %v589 = vpop.f32.mrf.mxu0
      %v590 = vadd.f32 0.0, %v589
      %v591 = vpop.f32.mrf.mxu0
      %592 = vdwg.mxu0
      %v595 = vunpack.c.l.b16 %v493
      %v596 = vunpack.c.l.b16 %v494
      %v597 = vpack.c.b16 %v596, %v595
      %v600 = vsel %vm204, %v489, 0
      %v603 = vsel %vm204, %v490, 0
      %v606 = vsel %vm204, %v491, 0
      %v609 = vsel %vm204, %v492, 0
      %611 = vmatprep.subr.bf16.mxu0 0
      %612 = vmatpush1.bf16.msra.mxu0 0
      %613 = vmatprep.subr.bf16.mxu0 0
      %614 = vmatpush1.bf16.msra.mxu0 0
      %615 = vmatprep.subr.bf16.mxu0 0
      %616 = vmatpush1.bf16.msra.mxu0 0
      %617 = vmatprep.subr.bf16.mxu0 0
      %618 = vmatpush1.bf16.msra.mxu0 0
      %619 = vmatprep.subr.bf16.mxu0 0
      %620 = vmatpush1.bf16.msra.mxu0 0
      %621 = vmatprep.subr.bf16.mxu0 0
      %622 = vmatpush1.bf16.msra.mxu0 0
      %623 = vmatprep.subr.bf16.mxu0 0
      %624 = vmatpush1.bf16.msra.mxu0 0
      %625 = vmatprep.subr.bf16.mxu0 0
      %626 = vmatpush1.bf16.msra.mxu0 %v597
      %627 = vmatprep.subr.bf16.mxu0 0
      %628 = vmatpush2.bf16.msra.mxu0 0
      %629 = vmatprep.subr.bf16.mxu0 0
      %630 = vmatpush2.bf16.msra.mxu0 0
      %631 = vmatprep.subr.bf16.mxu0 0
      %632 = vmatpush2.bf16.msra.mxu0 0
      %633 = vmatprep.subr.bf16.mxu0 0
      %634 = vmatpush2.bf16.msra.mxu0 0
      %635 = vmatprep.subr.bf16.mxu0 0
      %636 = vmatpush2.bf16.msra.mxu0 0
      %637 = vmatprep.subr.bf16.mxu0 0
      %638 = vmatpush2.bf16.msra.mxu0 0
      %639 = vmatprep.subr.bf16.mxu0 0
      %640 = vmatpush2.bf16.msra.mxu0 0
      %641 = vmatprep.subr.bf16.mxu0 0
      %642 = vmatpush2.bf16.msra.mxu0 0
      %643 = vmatprep.mubr.bf16.mxu0 0
      %644 = vmatmul.mubr.bf16.gmra.mxu0 %v600
      %v645 = vpop.f32.mrf.mxu0
      %v646 = vadd.f32 %v563, %v645
      %v647 = vpop.f32.mrf.mxu0
      %v648 = vpop.f32.mrf.mxu0
      %v649 = vadd.f32 %v566, %v648
      %v650 = vpop.f32.mrf.mxu0
      %651 = vmatprep.mubr.bf16.mxu0 0
      %652 = vmatmul.mubr.bf16.gmra.mxu0 %v603
      %v653 = vpop.f32.mrf.mxu0
      %v654 = vadd.f32 %v571, %v653
      %v655 = vpop.f32.mrf.mxu0
      %v656 = vpop.f32.mrf.mxu0
      %v657 = vadd.f32 %v574, %v656
      %v658 = vpop.f32.mrf.mxu0
      %659 = vmatprep.mubr.bf16.mxu0 0
      %660 = vmatmul.mubr.bf16.gmra.mxu0 %v606
      %v661 = vpop.f32.mrf.mxu0
      %v662 = vadd.f32 %v579, %v661
      %v663 = vpop.f32.mrf.mxu0
      %v664 = vpop.f32.mrf.mxu0
      %v665 = vadd.f32 %v582, %v664
      %v666 = vpop.f32.mrf.mxu0
      %667 = vmatprep.mubr.bf16.mxu0 0
      %668 = vmatmul.mubr.bf16.gmra.mxu0 %v609
      %v669 = vpop.f32.mrf.mxu0
      %v670 = vadd.f32 %v587, %v669
      %v671 = vpop.f32.mrf.mxu0
      %v672 = vpop.f32.mrf.mxu0
      %v673 = vadd.f32 %v590, %v672
      %v674 = vpop.f32.mrf.mxu0
      %675 = vdwg.mxu0
      %v676 = vld [vmem:[%s329] sm:$0xff]
      %v677 = vld [vmem:[%s329 + $0x8] sm:$0xff]
      %v678 = vld [vmem:[%s329 + $0x10] sm:$0xff]
      %v679 = vld [vmem:[%s329 + $0x18] sm:$0xff]
      %v680 = vld [vmem:[%s329 + $0x20] sm:$0xff]
      %v681 = vld [vmem:[%s329 + $0x28] sm:$0xff]
      %v682 = vld [vmem:[%s329 + $0x30] sm:$0xff]
      %v683 = vld [vmem:[%s329 + $0x38] sm:$0xff]
      %v684 = vpack.c.bf16 %v677, %v676
      %v685 = vpack.c.bf16 %v679, %v678
      %v686 = vpack.c.bf16 %v681, %v680
      %v687 = vpack.c.bf16 %v683, %v682
      %s688 = scalar_lea.vmem %s1, 16
      %v689 = vld [vmem:[%s688] sm:$0xf]
      %v690 = vld [vmem:[%s688 + $0x4] sm:$0xf]
      %v693 = vunpack.c.l.b16 %v689
      %v694 = vunpack.c.l.b16 %v690
      %v695 = vpack.c.b16 %v694, %v693
      %v698 = vsel %vm204, %v684, 0
      %v701 = vsel %vm204, %v685, 0
      %v704 = vsel %vm204, %v686, 0
      %v707 = vsel %vm204, %v687, 0
      %709 = vmatprep.subr.bf16.mxu0 0
      %710 = vmatpush1.bf16.msra.mxu0 0
      %711 = vmatprep.subr.bf16.mxu0 0
      %712 = vmatpush1.bf16.msra.mxu0 0
      %713 = vmatprep.subr.bf16.mxu0 0
      %714 = vmatpush1.bf16.msra.mxu0 0
      %715 = vmatprep.subr.bf16.mxu0 0
      %716 = vmatpush1.bf16.msra.mxu0 0
      %717 = vmatprep.subr.bf16.mxu0 0
      %718 = vmatpush1.bf16.msra.mxu0 0
      %719 = vmatprep.subr.bf16.mxu0 0
      %720 = vmatpush1.bf16.msra.mxu0 0
      %721 = vmatprep.subr.bf16.mxu0 0
      %722 = vmatpush1.bf16.msra.mxu0 0
      %723 = vmatprep.subr.bf16.mxu0 0
      %724 = vmatpush1.bf16.msra.mxu0 %v695
      %725 = vmatprep.subr.bf16.mxu0 0
      %726 = vmatpush2.bf16.msra.mxu0 0
      %727 = vmatprep.subr.bf16.mxu0 0
      %728 = vmatpush2.bf16.msra.mxu0 0
      %729 = vmatprep.subr.bf16.mxu0 0
      %730 = vmatpush2.bf16.msra.mxu0 0
      %731 = vmatprep.subr.bf16.mxu0 0
      %732 = vmatpush2.bf16.msra.mxu0 0
      %733 = vmatprep.subr.bf16.mxu0 0
      %734 = vmatpush2.bf16.msra.mxu0 0
      %735 = vmatprep.subr.bf16.mxu0 0
      %736 = vmatpush2.bf16.msra.mxu0 0
      %737 = vmatprep.subr.bf16.mxu0 0
      %738 = vmatpush2.bf16.msra.mxu0 0
      %739 = vmatprep.subr.bf16.mxu0 0
      %740 = vmatpush2.bf16.msra.mxu0 0
      %741 = vmatprep.mubr.bf16.mxu0 0
      %742 = vmatmul.mubr.bf16.gmra.mxu0 %v698
      %v743 = vpop.f32.mrf.mxu0
      %v744 = vadd.f32 0.0, %v743
      %v745 = vpop.f32.mrf.mxu0
      %v746 = vpop.f32.mrf.mxu0
      %v747 = vadd.f32 0.0, %v746
      %v748 = vpop.f32.mrf.mxu0
      %749 = vmatprep.mubr.bf16.mxu0 0
      %750 = vmatmul.mubr.bf16.gmra.mxu0 %v701
      %v751 = vpop.f32.mrf.mxu0
      %v752 = vadd.f32 0.0, %v751
      %v753 = vpop.f32.mrf.mxu0
      %v754 = vpop.f32.mrf.mxu0
      %v755 = vadd.f32 0.0, %v754
      %v756 = vpop.f32.mrf.mxu0
      %757 = vmatprep.mubr.bf16.mxu0 0
      %758 = vmatmul.mubr.bf16.gmra.mxu0 %v704
      %v759 = vpop.f32.mrf.mxu0
      %v760 = vadd.f32 0.0, %v759
      %v761 = vpop.f32.mrf.mxu0
      %v762 = vpop.f32.mrf.mxu0
      %v763 = vadd.f32 0.0, %v762
      %v764 = vpop.f32.mrf.mxu0
      %765 = vmatprep.mubr.bf16.mxu0 0
      %766 = vmatmul.mubr.bf16.gmra.mxu0 %v707
      %v767 = vpop.f32.mrf.mxu0
      %v768 = vadd.f32 0.0, %v767
      %v769 = vpop.f32.mrf.mxu0
      %v770 = vpop.f32.mrf.mxu0
      %v771 = vadd.f32 0.0, %v770
      %v772 = vpop.f32.mrf.mxu0
      %773 = vdwg.mxu0
      %v774 = vadd.f32 %v646, %v744
      %v775 = vadd.f32 %v649, %v747
      %v776 = vadd.f32 %v654, %v752
      %v777 = vadd.f32 %v657, %v755
      %v778 = vadd.f32 %v662, %v760
      %v779 = vadd.f32 %v665, %v763
      %v780 = vadd.f32 %v670, %v768
      %v781 = vadd.f32 %v673, %v771
      %v782 = vld [vmem:[%s354] sm:$0xff]
      %v783 = vld [vmem:[%s354 + $0x8] sm:$0xff]
      %v784 = vld [vmem:[%s354 + $0x10] sm:$0xff]
      %v785 = vld [vmem:[%s354 + $0x18] sm:$0xff]
      %v786 = vld [vmem:[%s354 + $0x20] sm:$0xff]
      %v787 = vld [vmem:[%s354 + $0x28] sm:$0xff]
      %v788 = vld [vmem:[%s354 + $0x30] sm:$0xff]
      %v789 = vld [vmem:[%s354 + $0x38] sm:$0xff]
      %v790 = vpack.c.bf16 %v783, %v782
      %v791 = vpack.c.bf16 %v785, %v784
      %v792 = vpack.c.bf16 %v787, %v786
      %v793 = vpack.c.bf16 %v789, %v788
      %s794 = scalar_lea.vmem %s1, 24
      %v795 = vld [vmem:[%s794] sm:$0xf]
      %v796 = vld [vmem:[%s794 + $0x4] sm:$0xf]
      %v799 = vunpack.c.l.b16 %v795
      %v800 = vunpack.c.l.b16 %v796
      %v801 = vpack.c.b16 %v800, %v799
      %v804 = vsel %vm204, %v790, 0
      %v807 = vsel %vm204, %v791, 0
      %v810 = vsel %vm204, %v792, 0
      %v813 = vsel %vm204, %v793, 0
      %815 = vmatprep.subr.bf16.mxu0 0
      %816 = vmatpush1.bf16.msra.mxu0 0
      %817 = vmatprep.subr.bf16.mxu0 0
      %818 = vmatpush1.bf16.msra.mxu0 0
      %819 = vmatprep.subr.bf16.mxu0 0
      %820 = vmatpush1.bf16.msra.mxu0 0
      %821 = vmatprep.subr.bf16.mxu0 0
      %822 = vmatpush1.bf16.msra.mxu0 0
      %823 = vmatprep.subr.bf16.mxu0 0
      %824 = vmatpush1.bf16.msra.mxu0 0
      %825 = vmatprep.subr.bf16.mxu0 0
      %826 = vmatpush1.bf16.msra.mxu0 0
      %827 = vmatprep.subr.bf16.mxu0 0
      %828 = vmatpush1.bf16.msra.mxu0 0
      %829 = vmatprep.subr.bf16.mxu0 0
      %830 = vmatpush1.bf16.msra.mxu0 %v801
      %831 = vmatprep.subr.bf16.mxu0 0
      %832 = vmatpush2.bf16.msra.mxu0 0
      %833 = vmatprep.subr.bf16.mxu0 0
      %834 = vmatpush2.bf16.msra.mxu0 0
      %835 = vmatprep.subr.bf16.mxu0 0
      %836 = vmatpush2.bf16.msra.mxu0 0
      %837 = vmatprep.subr.bf16.mxu0 0
      %838 = vmatpush2.bf16.msra.mxu0 0
      %839 = vmatprep.subr.bf16.mxu0 0
      %840 = vmatpush2.bf16.msra.mxu0 0
      %841 = vmatprep.subr.bf16.mxu0 0
      %842 = vmatpush2.bf16.msra.mxu0 0
      %843 = vmatprep.subr.bf16.mxu0 0
      %844 = vmatpush2.bf16.msra.mxu0 0
      %845 = vmatprep.subr.bf16.mxu0 0
      %846 = vmatpush2.bf16.msra.mxu0 0
      %847 = vmatprep.mubr.bf16.mxu0 0
      %848 = vmatmul.mubr.bf16.gmra.mxu0 %v804
      %v849 = vpop.f32.mrf.mxu0
      %v850 = vadd.f32 0.0, %v849
      %v851 = vpop.f32.mrf.mxu0
      %v852 = vpop.f32.mrf.mxu0
      %v853 = vadd.f32 0.0, %v852
      %v854 = vpop.f32.mrf.mxu0
      %855 = vmatprep.mubr.bf16.mxu0 0
      %856 = vmatmul.mubr.bf16.gmra.mxu0 %v807
      %v857 = vpop.f32.mrf.mxu0
      %v858 = vadd.f32 0.0, %v857
      %v859 = vpop.f32.mrf.mxu0
      %v860 = vpop.f32.mrf.mxu0
      %v861 = vadd.f32 0.0, %v860
      %v862 = vpop.f32.mrf.mxu0
      %863 = vmatprep.mubr.bf16.mxu0 0
      %864 = vmatmul.mubr.bf16.gmra.mxu0 %v810
      %v865 = vpop.f32.mrf.mxu0
      %v866 = vadd.f32 0.0, %v865
      %v867 = vpop.f32.mrf.mxu0
      %v868 = vpop.f32.mrf.mxu0
      %v869 = vadd.f32 0.0, %v868
      %v870 = vpop.f32.mrf.mxu0
      %871 = vmatprep.mubr.bf16.mxu0 0
      %872 = vmatmul.mubr.bf16.gmra.mxu0 %v813
      %v873 = vpop.f32.mrf.mxu0
      %v874 = vadd.f32 0.0, %v873
      %v875 = vpop.f32.mrf.mxu0
      %v876 = vpop.f32.mrf.mxu0
      %v877 = vadd.f32 0.0, %v876
      %v878 = vpop.f32.mrf.mxu0
      %879 = vdwg.mxu0
      %v880 = vadd.f32 %v774, %v850
      %v881 = vadd.f32 %v775, %v853
      %v882 = vadd.f32 %v776, %v858
      %v883 = vadd.f32 %v777, %v861
      %v884 = vadd.f32 %v778, %v866
      %v885 = vadd.f32 %v779, %v869
      %v886 = vadd.f32 %v780, %v874
      %v887 = vadd.f32 %v781, %v877
      %v888 = vld [vmem:[%s379] sm:$0xff]
      %v889 = vld [vmem:[%s379 + $0x8] sm:$0xff]
      %v890 = vld [vmem:[%s379 + $0x10] sm:$0xff]
      %v891 = vld [vmem:[%s379 + $0x18] sm:$0xff]
      %v892 = vld [vmem:[%s379 + $0x20] sm:$0xff]
      %v893 = vld [vmem:[%s379 + $0x28] sm:$0xff]
      %v894 = vld [vmem:[%s379 + $0x30] sm:$0xff]
      %v895 = vld [vmem:[%s379 + $0x38] sm:$0xff]
      %v896 = vpack.c.bf16 %v889, %v888
      %v897 = vpack.c.bf16 %v891, %v890
      %v898 = vpack.c.bf16 %v893, %v892
      %v899 = vpack.c.bf16 %v895, %v894
      %s900 = scalar_lea.vmem %s1, 32
      %v901 = vld [vmem:[%s900] sm:$0xf]
      %v902 = vld [vmem:[%s900 + $0x4] sm:$0xf]
      %v905 = vunpack.c.l.b16 %v901
      %v906 = vunpack.c.l.b16 %v902
      %v907 = vpack.c.b16 %v906, %v905
      %v910 = vsel %vm204, %v896, 0
      %v913 = vsel %vm204, %v897, 0
      %v916 = vsel %vm204, %v898, 0
      %v919 = vsel %vm204, %v899, 0
      %921 = vmatprep.subr.bf16.mxu0 0
      %922 = vmatpush1.bf16.msra.mxu0 0
      %923 = vmatprep.subr.bf16.mxu0 0
      %924 = vmatpush1.bf16.msra.mxu0 0
      %925 = vmatprep.subr.bf16.mxu0 0
      %926 = vmatpush1.bf16.msra.mxu0 0
      %927 = vmatprep.subr.bf16.mxu0 0
      %928 = vmatpush1.bf16.msra.mxu0 0
      %929 = vmatprep.subr.bf16.mxu0 0
      %930 = vmatpush1.bf16.msra.mxu0 0
      %931 = vmatprep.subr.bf16.mxu0 0
      %932 = vmatpush1.bf16.msra.mxu0 0
      %933 = vmatprep.subr.bf16.mxu0 0
      %934 = vmatpush1.bf16.msra.mxu0 0
      %935 = vmatprep.subr.bf16.mxu0 0
      %936 = vmatpush1.bf16.msra.mxu0 %v907
      %937 = vmatprep.subr.bf16.mxu0 0
      %938 = vmatpush2.bf16.msra.mxu0 0
      %939 = vmatprep.subr.bf16.mxu0 0
      %940 = vmatpush2.bf16.msra.mxu0 0
      %941 = vmatprep.subr.bf16.mxu0 0
      %942 = vmatpush2.bf16.msra.mxu0 0
      %943 = vmatprep.subr.bf16.mxu0 0
      %944 = vmatpush2.bf16.msra.mxu0 0
      %945 = vmatprep.subr.bf16.mxu0 0
      %946 = vmatpush2.bf16.msra.mxu0 0
      %947 = vmatprep.subr.bf16.mxu0 0
      %948 = vmatpush2.bf16.msra.mxu0 0
      %949 = vmatprep.subr.bf16.mxu0 0
      %950 = vmatpush2.bf16.msra.mxu0 0
      %951 = vmatprep.subr.bf16.mxu0 0
      %952 = vmatpush2.bf16.msra.mxu0 0
      %953 = vmatprep.mubr.bf16.mxu0 0
      %954 = vmatmul.mubr.bf16.gmra.mxu0 %v910
      %v955 = vpop.f32.mrf.mxu0
      %v956 = vadd.f32 0.0, %v955
      %v957 = vpop.f32.mrf.mxu0
      %v958 = vpop.f32.mrf.mxu0
      %v959 = vadd.f32 0.0, %v958
      %v960 = vpop.f32.mrf.mxu0
      %961 = vmatprep.mubr.bf16.mxu0 0
      %962 = vmatmul.mubr.bf16.gmra.mxu0 %v913
      %v963 = vpop.f32.mrf.mxu0
      %v964 = vadd.f32 0.0, %v963
      %v965 = vpop.f32.mrf.mxu0
      %v966 = vpop.f32.mrf.mxu0
      %v967 = vadd.f32 0.0, %v966
      %v968 = vpop.f32.mrf.mxu0
      %969 = vmatprep.mubr.bf16.mxu0 0
      %970 = vmatmul.mubr.bf16.gmra.mxu0 %v916
      %v971 = vpop.f32.mrf.mxu0
      %v972 = vadd.f32 0.0, %v971
      %v973 = vpop.f32.mrf.mxu0
      %v974 = vpop.f32.mrf.mxu0
      %v975 = vadd.f32 0.0, %v974
      %v976 = vpop.f32.mrf.mxu0
      %977 = vmatprep.mubr.bf16.mxu0 0
      %978 = vmatmul.mubr.bf16.gmra.mxu0 %v919
      %v979 = vpop.f32.mrf.mxu0
      %v980 = vadd.f32 0.0, %v979
      %v981 = vpop.f32.mrf.mxu0
      %v982 = vpop.f32.mrf.mxu0
      %v983 = vadd.f32 0.0, %v982
      %v984 = vpop.f32.mrf.mxu0
      %985 = vdwg.mxu0
      %v986 = vadd.f32 %v880, %v956
      %v987 = vadd.f32 %v881, %v959
      %v988 = vadd.f32 %v882, %v964
      %v989 = vadd.f32 %v883, %v967
      %v990 = vadd.f32 %v884, %v972
      %v991 = vadd.f32 %v885, %v975
      %v992 = vadd.f32 %v886, %v980
      %v993 = vadd.f32 %v887, %v983
      %v994 = vld [vmem:[%s404] sm:$0xff]
      %v995 = vld [vmem:[%s404 + $0x8] sm:$0xff]
      %v996 = vld [vmem:[%s404 + $0x10] sm:$0xff]
      %v997 = vld [vmem:[%s404 + $0x18] sm:$0xff]
      %v998 = vld [vmem:[%s404 + $0x20] sm:$0xff]
      %v999 = vld [vmem:[%s404 + $0x28] sm:$0xff]
      %v1000 = vld [vmem:[%s404 + $0x30] sm:$0xff]
      %v1001 = vld [vmem:[%s404 + $0x38] sm:$0xff]
      %v1002 = vpack.c.bf16 %v995, %v994
      %v1003 = vpack.c.bf16 %v997, %v996
      %v1004 = vpack.c.bf16 %v999, %v998
      %v1005 = vpack.c.bf16 %v1001, %v1000
      %s1006 = scalar_lea.vmem %s1, 40
      %v1007 = vld [vmem:[%s1006] sm:$0xf]
      %v1008 = vld [vmem:[%s1006 + $0x4] sm:$0xf]
      %v1011 = vunpack.c.l.b16 %v1007
      %v1012 = vunpack.c.l.b16 %v1008
      %v1013 = vpack.c.b16 %v1012, %v1011
      %v1016 = vsel %vm204, %v1002, 0
      %v1019 = vsel %vm204, %v1003, 0
      %v1022 = vsel %vm204, %v1004, 0
      %v1025 = vsel %vm204, %v1005, 0
      %1027 = vmatprep.subr.bf16.mxu0 0
      %1028 = vmatpush1.bf16.msra.mxu0 0
      %1029 = vmatprep.subr.bf16.mxu0 0
      %1030 = vmatpush1.bf16.msra.mxu0 0
      %1031 = vmatprep.subr.bf16.mxu0 0
      %1032 = vmatpush1.bf16.msra.mxu0 0
      %1033 = vmatprep.subr.bf16.mxu0 0
      %1034 = vmatpush1.bf16.msra.mxu0 0
      %1035 = vmatprep.subr.bf16.mxu0 0
      %1036 = vmatpush1.bf16.msra.mxu0 0
      %1037 = vmatprep.subr.bf16.mxu0 0
      %1038 = vmatpush1.bf16.msra.mxu0 0
      %1039 = vmatprep.subr.bf16.mxu0 0
      %1040 = vmatpush1.bf16.msra.mxu0 0
      %1041 = vmatprep.subr.bf16.mxu0 0
      %1042 = vmatpush1.bf16.msra.mxu0 %v1013
      %1043 = vmatprep.subr.bf16.mxu0 0
      %1044 = vmatpush2.bf16.msra.mxu0 0
      %1045 = vmatprep.subr.bf16.mxu0 0
      %1046 = vmatpush2.bf16.msra.mxu0 0
      %1047 = vmatprep.subr.bf16.mxu0 0
      %1048 = vmatpush2.bf16.msra.mxu0 0
      %1049 = vmatprep.subr.bf16.mxu0 0
      %1050 = vmatpush2.bf16.msra.mxu0 0
      %1051 = vmatprep.subr.bf16.mxu0 0
      %1052 = vmatpush2.bf16.msra.mxu0 0
      %1053 = vmatprep.subr.bf16.mxu0 0
      %1054 = vmatpush2.bf16.msra.mxu0 0
      %1055 = vmatprep.subr.bf16.mxu0 0
      %1056 = vmatpush2.bf16.msra.mxu0 0
      %1057 = vmatprep.subr.bf16.mxu0 0
      %1058 = vmatpush2.bf16.msra.mxu0 0
      %1059 = vmatprep.mubr.bf16.mxu0 0
      %1060 = vmatmul.mubr.bf16.gmra.mxu0 %v1016
      %v1061 = vpop.f32.mrf.mxu0
      %v1062 = vadd.f32 0.0, %v1061
      %v1063 = vpop.f32.mrf.mxu0
      %v1064 = vpop.f32.mrf.mxu0
      %v1065 = vadd.f32 0.0, %v1064
      %v1066 = vpop.f32.mrf.mxu0
      %1067 = vmatprep.mubr.bf16.mxu0 0
      %1068 = vmatmul.mubr.bf16.gmra.mxu0 %v1019
      %v1069 = vpop.f32.mrf.mxu0
      %v1070 = vadd.f32 0.0, %v1069
      %v1071 = vpop.f32.mrf.mxu0
      %v1072 = vpop.f32.mrf.mxu0
      %v1073 = vadd.f32 0.0, %v1072
      %v1074 = vpop.f32.mrf.mxu0
      %1075 = vmatprep.mubr.bf16.mxu0 0
      %1076 = vmatmul.mubr.bf16.gmra.mxu0 %v1022
      %v1077 = vpop.f32.mrf.mxu0
      %v1078 = vadd.f32 0.0, %v1077
      %v1079 = vpop.f32.mrf.mxu0
      %v1080 = vpop.f32.mrf.mxu0
      %v1081 = vadd.f32 0.0, %v1080
      %v1082 = vpop.f32.mrf.mxu0
      %1083 = vmatprep.mubr.bf16.mxu0 0
      %1084 = vmatmul.mubr.bf16.gmra.mxu0 %v1025
      %v1085 = vpop.f32.mrf.mxu0
      %v1086 = vadd.f32 0.0, %v1085
      %v1087 = vpop.f32.mrf.mxu0
      %v1088 = vpop.f32.mrf.mxu0
      %v1089 = vadd.f32 0.0, %v1088
      %v1090 = vpop.f32.mrf.mxu0
      %1091 = vdwg.mxu0
      %v1092 = vadd.f32 %v986, %v1062
      %v1093 = vadd.f32 %v987, %v1065
      %v1094 = vadd.f32 %v988, %v1070
      %v1095 = vadd.f32 %v989, %v1073
      %v1096 = vadd.f32 %v990, %v1078
      %v1097 = vadd.f32 %v991, %v1081
      %v1098 = vadd.f32 %v992, %v1086
      %v1099 = vadd.f32 %v993, %v1089
      %v1100 = vld [vmem:[%s428] sm:$0xff]
      %v1101 = vld [vmem:[%s428 + $0x8] sm:$0xff]
      %v1102 = vld [vmem:[%s428 + $0x10] sm:$0xff]
      %v1103 = vld [vmem:[%s428 + $0x18] sm:$0xff]
      %v1104 = vld [vmem:[%s428 + $0x20] sm:$0xff]
      %v1105 = vld [vmem:[%s428 + $0x28] sm:$0xff]
      %v1106 = vld [vmem:[%s428 + $0x30] sm:$0xff]
      %v1107 = vld [vmem:[%s428 + $0x38] sm:$0xff]
      %v1108 = vpack.c.bf16 %v1101, %v1100
      %v1109 = vpack.c.bf16 %v1103, %v1102
      %v1110 = vpack.c.bf16 %v1105, %v1104
      %v1111 = vpack.c.bf16 %v1107, %v1106
      %s1112 = scalar_lea.vmem %s1, 48
      %v1113 = vld [vmem:[%s1112] sm:$0xf]
      %v1114 = vld [vmem:[%s1112 + $0x4] sm:$0xf]
      %v1117 = vunpack.c.l.b16 %v1113
      %v1118 = vunpack.c.l.b16 %v1114
      %v1119 = vpack.c.b16 %v1118, %v1117
      %v1122 = vsel %vm204, %v1108, 0
      %v1125 = vsel %vm204, %v1109, 0
      %v1128 = vsel %vm204, %v1110, 0
      %v1131 = vsel %vm204, %v1111, 0
      %1133 = vmatprep.subr.bf16.mxu0 0
      %1134 = vmatpush1.bf16.msra.mxu0 0
      %1135 = vmatprep.subr.bf16.mxu0 0
      %1136 = vmatpush1.bf16.msra.mxu0 0
      %1137 = vmatprep.subr.bf16.mxu0 0
      %1138 = vmatpush1.bf16.msra.mxu0 0
      %1139 = vmatprep.subr.bf16.mxu0 0
      %1140 = vmatpush1.bf16.msra.mxu0 0
      %1141 = vmatprep.subr.bf16.mxu0 0
      %1142 = vmatpush1.bf16.msra.mxu0 0
      %1143 = vmatprep.subr.bf16.mxu0 0
      %1144 = vmatpush1.bf16.msra.mxu0 0
      %1145 = vmatprep.subr.bf16.mxu0 0
      %1146 = vmatpush1.bf16.msra.mxu0 0
      %1147 = vmatprep.subr.bf16.mxu0 0
      %1148 = vmatpush1.bf16.msra.mxu0 %v1119
      %1149 = vmatprep.subr.bf16.mxu0 0
      %1150 = vmatpush2.bf16.msra.mxu0 0
      %1151 = vmatprep.subr.bf16.mxu0 0
      %1152 = vmatpush2.bf16.msra.mxu0 0
      %1153 = vmatprep.subr.bf16.mxu0 0
      %1154 = vmatpush2.bf16.msra.mxu0 0
      %1155 = vmatprep.subr.bf16.mxu0 0
      %1156 = vmatpush2.bf16.msra.mxu0 0
      %1157 = vmatprep.subr.bf16.mxu0 0
      %1158 = vmatpush2.bf16.msra.mxu0 0
      %1159 = vmatprep.subr.bf16.mxu0 0
      %1160 = vmatpush2.bf16.msra.mxu0 0
      %1161 = vmatprep.subr.bf16.mxu0 0
      %1162 = vmatpush2.bf16.msra.mxu0 0
      %1163 = vmatprep.subr.bf16.mxu0 0
      %1164 = vmatpush2.bf16.msra.mxu0 0
      %1165 = vmatprep.mubr.bf16.mxu0 0
      %1166 = vmatmul.mubr.bf16.gmra.mxu0 %v1122
      %v1167 = vpop.f32.mrf.mxu0
      %v1168 = vadd.f32 0.0, %v1167
      %v1169 = vpop.f32.mrf.mxu0
      %v1170 = vpop.f32.mrf.mxu0
      %v1171 = vadd.f32 0.0, %v1170
      %v1172 = vpop.f32.mrf.mxu0
      %1173 = vmatprep.mubr.bf16.mxu0 0
      %1174 = vmatmul.mubr.bf16.gmra.mxu0 %v1125
      %v1175 = vpop.f32.mrf.mxu0
      %v1176 = vadd.f32 0.0, %v1175
      %v1177 = vpop.f32.mrf.mxu0
      %v1178 = vpop.f32.mrf.mxu0
      %v1179 = vadd.f32 0.0, %v1178
      %v1180 = vpop.f32.mrf.mxu0
      %1181 = vmatprep.mubr.bf16.mxu0 0
      %1182 = vmatmul.mubr.bf16.gmra.mxu0 %v1128
      %v1183 = vpop.f32.mrf.mxu0
      %v1184 = vadd.f32 0.0, %v1183
      %v1185 = vpop.f32.mrf.mxu0
      %v1186 = vpop.f32.mrf.mxu0
      %v1187 = vadd.f32 0.0, %v1186
      %v1188 = vpop.f32.mrf.mxu0
      %1189 = vmatprep.mubr.bf16.mxu0 0
      %1190 = vmatmul.mubr.bf16.gmra.mxu0 %v1131
      %v1191 = vpop.f32.mrf.mxu0
      %v1192 = vadd.f32 0.0, %v1191
      %v1193 = vpop.f32.mrf.mxu0
      %v1194 = vpop.f32.mrf.mxu0
      %v1195 = vadd.f32 0.0, %v1194
      %v1196 = vpop.f32.mrf.mxu0
      %1197 = vdwg.mxu0
      %v1198 = vadd.f32 %v1092, %v1168
      %v1199 = vadd.f32 %v1093, %v1171
      %v1200 = vadd.f32 %v1094, %v1176
      %v1201 = vadd.f32 %v1095, %v1179
      %v1202 = vadd.f32 %v1096, %v1184
      %v1203 = vadd.f32 %v1097, %v1187
      %v1204 = vadd.f32 %v1098, %v1192
      %v1205 = vadd.f32 %v1099, %v1195
      %v1206 = vld [vmem:[%s446] sm:$0xff]
      %v1207 = vld [vmem:[%s446 + $0x8] sm:$0xff]
      %v1208 = vld [vmem:[%s446 + $0x10] sm:$0xff]
      %v1209 = vld [vmem:[%s446 + $0x18] sm:$0xff]
      %v1210 = vld [vmem:[%s446 + $0x20] sm:$0xff]
      %v1211 = vld [vmem:[%s446 + $0x28] sm:$0xff]
      %v1212 = vld [vmem:[%s446 + $0x30] sm:$0xff]
      %v1213 = vld [vmem:[%s446 + $0x38] sm:$0xff]
      %v1214 = vpack.c.bf16 %v1207, %v1206
      %v1215 = vpack.c.bf16 %v1209, %v1208
      %v1216 = vpack.c.bf16 %v1211, %v1210
      %v1217 = vpack.c.bf16 %v1213, %v1212
      %s1218 = scalar_lea.vmem %s1, 56
      %v1219 = vld [vmem:[%s1218] sm:$0xf]
      %v1220 = vld [vmem:[%s1218 + $0x4] sm:$0xf]
      %v1223 = vunpack.c.l.b16 %v1219
      %v1224 = vunpack.c.l.b16 %v1220
      %v1225 = vpack.c.b16 %v1224, %v1223
      %v1228 = vsel %vm204, %v1214, 0
      %v1231 = vsel %vm204, %v1215, 0
      %v1234 = vsel %vm204, %v1216, 0
      %v1237 = vsel %vm204, %v1217, 0
      %1239 = vmatprep.subr.bf16.mxu0 0
      %1240 = vmatpush1.bf16.msra.mxu0 0
      %1241 = vmatprep.subr.bf16.mxu0 0
      %1242 = vmatpush1.bf16.msra.mxu0 0
      %1243 = vmatprep.subr.bf16.mxu0 0
      %1244 = vmatpush1.bf16.msra.mxu0 0
      %1245 = vmatprep.subr.bf16.mxu0 0
      %1246 = vmatpush1.bf16.msra.mxu0 0
      %1247 = vmatprep.subr.bf16.mxu0 0
      %1248 = vmatpush1.bf16.msra.mxu0 0
      %1249 = vmatprep.subr.bf16.mxu0 0
      %1250 = vmatpush1.bf16.msra.mxu0 0
      %1251 = vmatprep.subr.bf16.mxu0 0
      %1252 = vmatpush1.bf16.msra.mxu0 0
      %1253 = vmatprep.subr.bf16.mxu0 0
      %1254 = vmatpush1.bf16.msra.mxu0 %v1225
      %1255 = vmatprep.subr.bf16.mxu0 0
      %1256 = vmatpush2.bf16.msra.mxu0 0
      %1257 = vmatprep.subr.bf16.mxu0 0
      %1258 = vmatpush2.bf16.msra.mxu0 0
      %1259 = vmatprep.subr.bf16.mxu0 0
      %1260 = vmatpush2.bf16.msra.mxu0 0
      %1261 = vmatprep.subr.bf16.mxu0 0
      %1262 = vmatpush2.bf16.msra.mxu0 0
      %1263 = vmatprep.subr.bf16.mxu0 0
      %1264 = vmatpush2.bf16.msra.mxu0 0
      %1265 = vmatprep.subr.bf16.mxu0 0
      %1266 = vmatpush2.bf16.msra.mxu0 0
      %1267 = vmatprep.subr.bf16.mxu0 0
      %1268 = vmatpush2.bf16.msra.mxu0 0
      %1269 = vmatprep.subr.bf16.mxu0 0
      %1270 = vmatpush2.bf16.msra.mxu0 0
      %1271 = vmatprep.mubr.bf16.mxu0 0
      %1272 = vmatmul.mubr.bf16.gmra.mxu0 %v1228
      %v1273 = vpop.f32.mrf.mxu0
      %v1274 = vadd.f32 0.0, %v1273
      %v1275 = vpop.f32.mrf.mxu0
      %v1276 = vpop.f32.mrf.mxu0
      %v1277 = vadd.f32 0.0, %v1276
      %v1278 = vpop.f32.mrf.mxu0
      %1279 = vmatprep.mubr.bf16.mxu0 0
      %1280 = vmatmul.mubr.bf16.gmra.mxu0 %v1231
      %v1281 = vpop.f32.mrf.mxu0
      %v1282 = vadd.f32 0.0, %v1281
      %v1283 = vpop.f32.mrf.mxu0
      %v1284 = vpop.f32.mrf.mxu0
      %v1285 = vadd.f32 0.0, %v1284
      %v1286 = vpop.f32.mrf.mxu0
      %1287 = vmatprep.mubr.bf16.mxu0 0
      %1288 = vmatmul.mubr.bf16.gmra.mxu0 %v1234
      %v1289 = vpop.f32.mrf.mxu0
      %v1290 = vadd.f32 0.0, %v1289
      %v1291 = vpop.f32.mrf.mxu0
      %v1292 = vpop.f32.mrf.mxu0
      %v1293 = vadd.f32 0.0, %v1292
      %v1294 = vpop.f32.mrf.mxu0
      %1295 = vmatprep.mubr.bf16.mxu0 0
      %1296 = vmatmul.mubr.bf16.gmra.mxu0 %v1237
      %v1297 = vpop.f32.mrf.mxu0
      %v1298 = vadd.f32 0.0, %v1297
      %v1299 = vpop.f32.mrf.mxu0
      %v1300 = vpop.f32.mrf.mxu0
      %v1301 = vadd.f32 0.0, %v1300
      %v1302 = vpop.f32.mrf.mxu0
      %1303 = vdwg.mxu0
      %v1304 = vadd.f32 %v1198, %v1274
      %v1305 = vadd.f32 %v1199, %v1277
      %v1306 = vadd.f32 %v1200, %v1282
      %v1307 = vadd.f32 %v1201, %v1285
      %v1308 = vadd.f32 %v1202, %v1290
      %v1309 = vadd.f32 %v1203, %v1293
      %v1310 = vadd.f32 %v1204, %v1298
      %v1311 = vadd.f32 %v1205, %v1301
      %v1312 = vld [vmem:[%s464] sm:$0xff]
      %v1313 = vld [vmem:[%s464 + $0x8] sm:$0xff]
      %v1314 = vld [vmem:[%s464 + $0x10] sm:$0xff]
      %v1315 = vld [vmem:[%s464 + $0x18] sm:$0xff]
      %v1316 = vld [vmem:[%s464 + $0x20] sm:$0xff]
      %v1317 = vld [vmem:[%s464 + $0x28] sm:$0xff]
      %v1318 = vld [vmem:[%s464 + $0x30] sm:$0xff]
      %v1319 = vld [vmem:[%s464 + $0x38] sm:$0xff]
      %v1320 = vpack.c.bf16 %v1313, %v1312
      %v1321 = vpack.c.bf16 %v1315, %v1314
      %v1322 = vpack.c.bf16 %v1317, %v1316
      %v1323 = vpack.c.bf16 %v1319, %v1318
      %s1324 = scalar_lea.vmem %s1, 64
      %v1325 = vld [vmem:[%s1324] sm:$0xf]
      %v1326 = vld [vmem:[%s1324 + $0x4] sm:$0xf]
      %v1329 = vunpack.c.l.b16 %v1325
      %v1330 = vunpack.c.l.b16 %v1326
      %v1331 = vpack.c.b16 %v1330, %v1329
      %v1334 = vsel %vm204, %v1320, 0
      %v1337 = vsel %vm204, %v1321, 0
      %v1340 = vsel %vm204, %v1322, 0
      %v1343 = vsel %vm204, %v1323, 0
      %1345 = vmatprep.subr.bf16.mxu0 0
      %1346 = vmatpush1.bf16.msra.mxu0 0
      %1347 = vmatprep.subr.bf16.mxu0 0
      %1348 = vmatpush1.bf16.msra.mxu0 0
      %1349 = vmatprep.subr.bf16.mxu0 0
      %1350 = vmatpush1.bf16.msra.mxu0 0
      %1351 = vmatprep.subr.bf16.mxu0 0
      %1352 = vmatpush1.bf16.msra.mxu0 0
      %1353 = vmatprep.subr.bf16.mxu0 0
      %1354 = vmatpush1.bf16.msra.mxu0 0
      %1355 = vmatprep.subr.bf16.mxu0 0
      %1356 = vmatpush1.bf16.msra.mxu0 0
      %1357 = vmatprep.subr.bf16.mxu0 0
      %1358 = vmatpush1.bf16.msra.mxu0 0
      %1359 = vmatprep.subr.bf16.mxu0 0
      %1360 = vmatpush1.bf16.msra.mxu0 %v1331
      %1361 = vmatprep.subr.bf16.mxu0 0
      %1362 = vmatpush2.bf16.msra.mxu0 0
      %1363 = vmatprep.subr.bf16.mxu0 0
      %1364 = vmatpush2.bf16.msra.mxu0 0
      %1365 = vmatprep.subr.bf16.mxu0 0
      %1366 = vmatpush2.bf16.msra.mxu0 0
      %1367 = vmatprep.subr.bf16.mxu0 0
      %1368 = vmatpush2.bf16.msra.mxu0 0
      %1369 = vmatprep.subr.bf16.mxu0 0
      %1370 = vmatpush2.bf16.msra.mxu0 0
      %1371 = vmatprep.subr.bf16.mxu0 0
      %1372 = vmatpush2.bf16.msra.mxu0 0
      %1373 = vmatprep.subr.bf16.mxu0 0
      %1374 = vmatpush2.bf16.msra.mxu0 0
      %1375 = vmatprep.subr.bf16.mxu0 0
      %1376 = vmatpush2.bf16.msra.mxu0 0
      %1377 = vmatprep.mubr.bf16.mxu0 0
      %1378 = vmatmul.mubr.bf16.gmra.mxu0 %v1334
      %v1379 = vpop.f32.mrf.mxu0
      %v1380 = vadd.f32 0.0, %v1379
      %v1381 = vpop.f32.mrf.mxu0
      %v1382 = vpop.f32.mrf.mxu0
      %v1383 = vadd.f32 0.0, %v1382
      %v1384 = vpop.f32.mrf.mxu0
      %1385 = vmatprep.mubr.bf16.mxu0 0
      %1386 = vmatmul.mubr.bf16.gmra.mxu0 %v1337
      %v1387 = vpop.f32.mrf.mxu0
      %v1388 = vadd.f32 0.0, %v1387
      %v1389 = vpop.f32.mrf.mxu0
      %v1390 = vpop.f32.mrf.mxu0
      %v1391 = vadd.f32 0.0, %v1390
      %v1392 = vpop.f32.mrf.mxu0
      %1393 = vmatprep.mubr.bf16.mxu0 0
      %1394 = vmatmul.mubr.bf16.gmra.mxu0 %v1340
      %v1395 = vpop.f32.mrf.mxu0
      %v1396 = vadd.f32 0.0, %v1395
      %v1397 = vpop.f32.mrf.mxu0
      %v1398 = vpop.f32.mrf.mxu0
      %v1399 = vadd.f32 0.0, %v1398
      %v1400 = vpop.f32.mrf.mxu0
      %1401 = vmatprep.mubr.bf16.mxu0 0
      %1402 = vmatmul.mubr.bf16.gmra.mxu0 %v1343
      %v1403 = vpop.f32.mrf.mxu0
      %v1404 = vadd.f32 0.0, %v1403
      %v1405 = vpop.f32.mrf.mxu0
      %v1406 = vpop.f32.mrf.mxu0
      %v1407 = vadd.f32 0.0, %v1406
      %v1408 = vpop.f32.mrf.mxu0
      %1409 = vdwg.mxu0
      %v1410 = vadd.f32 %v1304, %v1380
      %v1411 = vadd.f32 %v1305, %v1383
      %v1412 = vadd.f32 %v1306, %v1388
      %v1413 = vadd.f32 %v1307, %v1391
      %v1414 = vadd.f32 %v1308, %v1396
      %v1415 = vadd.f32 %v1309, %v1399
      %v1416 = vadd.f32 %v1310, %v1404
      %v1417 = vadd.f32 %v1311, %v1407
      %v1418 = vld [vmem:[%s2] sm:$0x1]
      %v1420 = vlaneseq
      %v1421 = vshrl.u32 %v1420, 7
      %v1422 = vsub.s32 0, %v1421
      %v1423 = vrot.slane %v1418, %v1422
      %v1425 = vadd.f32 %v1410, %v1423
      %v1426 = vadd.f32 %v1411, %v1423
      %v1427 = vadd.f32 %v1412, %v1423
      %v1428 = vadd.f32 %v1413, %v1423
      %v1429 = vadd.f32 %v1414, %v1423
      %v1430 = vadd.f32 %v1415, %v1423
      %v1431 = vadd.f32 %v1416, %v1423
      %v1432 = vadd.f32 %v1417, %v1423
      %v1433 = vadd.f32 %v1425, 3.0
      %v1434 = vadd.f32 %v1426, 3.0
      %v1435 = vadd.f32 %v1427, 3.0
      %v1436 = vadd.f32 %v1428, 3.0
      %v1437 = vadd.f32 %v1429, 3.0
      %v1438 = vadd.f32 %v1430, 3.0
      %v1439 = vadd.f32 %v1431, 3.0
      %v1440 = vadd.f32 %v1432, 3.0
      %v1441 = vmax.f32 %v1433, 0.0
      %v1442 = vmax.f32 %v1434, 0.0
      %v1443 = vmax.f32 %v1435, 0.0
      %v1444 = vmax.f32 %v1436, 0.0
      %v1445 = vmax.f32 %v1437, 0.0
      %v1446 = vmax.f32 %v1438, 0.0
      %v1447 = vmax.f32 %v1439, 0.0
      %v1448 = vmax.f32 %v1440, 0.0
      %v1449 = vmin.f32 %v1441, 6.0
      %v1450 = vmin.f32 %v1442, 6.0
      %v1451 = vmin.f32 %v1443, 6.0
      %v1452 = vmin.f32 %v1444, 6.0
      %v1453 = vmin.f32 %v1445, 6.0
      %v1454 = vmin.f32 %v1446, 6.0
      %v1455 = vmin.f32 %v1447, 6.0
      %v1456 = vmin.f32 %v1448, 6.0
      %v1457 = vmul.f32 %v1449, 0.16666667
      %v1458 = vmul.f32 %v1450, 0.16666667
      %v1459 = vmul.f32 %v1451, 0.16666667
      %v1460 = vmul.f32 %v1452, 0.16666667
      %v1461 = vmul.f32 %v1453, 0.16666667
      %v1462 = vmul.f32 %v1454, 0.16666667
      %v1463 = vmul.f32 %v1455, 0.16666667
      %v1464 = vmul.f32 %v1456, 0.16666667
      %v1465 = vmul.f32 %v1425, %v1457
      %v1466 = vmul.f32 %v1426, %v1458
      %v1467 = vmul.f32 %v1427, %v1459
      %v1468 = vmul.f32 %v1428, %v1460
      %v1469 = vmul.f32 %v1429, %v1461
      %v1470 = vmul.f32 %v1430, %v1462
      %v1471 = vmul.f32 %v1431, %v1463
      %v1472 = vmul.f32 %v1432, %v1464
      %1473 = vst.msk [vmem:[%s170] sm:$0xff] %vm204, %v1465
      %1474 = vst.msk [vmem:[%s170 + $0x8] sm:$0xff] %vm204, %v1466
      %1475 = vst.msk [vmem:[%s170 + $0x10] sm:$0xff] %vm204, %v1467
      %1476 = vst.msk [vmem:[%s170 + $0x18] sm:$0xff] %vm204, %v1468
      %1477 = vst.msk [vmem:[%s170 + $0x20] sm:$0xff] %vm204, %v1469
      %1478 = vst.msk [vmem:[%s170 + $0x28] sm:$0xff] %vm204, %v1470
      %1479 = vst.msk [vmem:[%s170 + $0x30] sm:$0xff] %vm204, %v1471
      %1480 = vst.msk [vmem:[%s170 + $0x38] sm:$0xff] %vm204, %v1472
      %p1481 = scmp.lt.s32.totalorder %s14, 1
      %s1482 = scalar_select %p1481, %s14, 1
      %s1483 = smul.addr %s1482, 8
      %s1484 = smul.addr %s1483, 8
      %s1485 = scalar_lea.vmem %s3, %s1484
      // Predicated region
      $region33: #{_lambda_.5} parent=31 // pred_check
        %p1486 = pneg %p100
      $region34: #{_lambda_.5} parent=31 // pred_check_branch
        %1488 = sbr.rel (%p1486) target = $region36
      $region35: #{_lambda_.5} parent=31 // pred_region
        _
      $region36: #{_lambda_.5} parent=31 // pred_fallthru
        _
    $region32: #{_lambda_.5} parent=5 // pred_fallthru
      _
    %p1489 = scmp.le.s32.totalorder 2, %s9
    // Predicated region
    $region37: #{_lambda_.5} parent=5 // pred_check
      %p1490 = pneg %p1489
    $region38: #{_lambda_.5} parent=5 // pred_check_branch
      %1492 = sbr.rel (%p1490) target = $region40
    $region39: #{_lambda_.5} parent=5 // pred_region
      %s1493 = ssub.s32 %s9, 2
      // Predicated region
      $region41: #{_lambda_.5} parent=39 // pred_check
        %p1494 = pneg %p106
      $region42: #{_lambda_.5} parent=39 // pred_check_branch
        %1496 = sbr.rel (%p1494) target = $region44
      $region43: #{_lambda_.5} parent=39 // pred_region
        %p1497 = scmp.lt.s32.totalorder %s15, 1
        %s1498 = scalar_select %p1497, %s15, 1
        %s1499 = smul.addr %s1498, 8
        %s1500 = smul.addr %s1499, 8
        %s1501 = scalar_lea.vmem %s3, %s1500
      $region44: #{_lambda_.5} parent=39 // pred_fallthru
        _
    $region40: #{_lambda_.5} parent=5 // pred_fallthru
      _
  $region6: #{_lambda_.5} parent=0 // loop_footer
    %s13 = sadd.s32 1, %s9
  $region7: #{_lambda_.5} parent=0 // loop_footer_branch
    %8 = sbr.rel target = $region3
  $region8: #{_lambda_.5} parent=0 // loop_exit
    _

// kernel: _lambda_.9
$region0: #{_lambda_.9}
  #allocation0 [shape = 'u32[]', space=smem, size = 0x4, offset = 0x4, fixed_abs, tag = 'smem constant byte address 0x4 - core index']
  #allocation1 [shape = 'u32[144,128]{1,0:T(1,128)}', space=vmem, size = 0x12000, scoped, tag = 'internal scratch']
  %s0 = inlined_call_operand.vmem [shape: f32[2,4,24], index: 0, kind: input, shape index: {}]
  %s1 = inlined_call_operand.vmem [shape: f32[1,24], index: 1, kind: input, shape index: {}]
  %s2 = inlined_call_operand.vmem [shape: f32[1,24], index: 2, kind: input, shape index: {}]
  %s3 = inlined_call_operand.hbm [shape: f32[2,24], index: 3, kind: output, shape index: {}]
  %s4 = sld [smem:[#allocation0]]
  $region22: #{_lambda_.9} parent=0
    _
  %s6 = ssub.s32 1, %s4
  %s7 = scalar_select 0, %s6, %s4
  $region1: #{_lambda_.9} parent=0
    #allocation2 [shape = 'u8[1024]{0}', space=vmem, size = 0x400, scoped, tag = 'output window, operand 0, single buffered']
    #allocation3 [shape = 's32[1]{0}', space=sflag, size = 0x4, scoped, tag = 'scoped memory for _lambda_.9']
    %8 = vsyncpa [#allocation3], 0
    // Predicated region
    $region2: #{_lambda_.9} parent=1 // pred_check
      _
    $region3: #{_lambda_.9} parent=1 // pred_check_branch
      %10 = sbr.rel (0) target = $region5
    $region4: #{_lambda_.9} parent=1 // pred_region
      _
    $region5: #{_lambda_.9} parent=1 // pred_fallthru
      _
    // Predicated region
    $region6: #{_lambda_.9} parent=1 // pred_check
      _
    $region7: #{_lambda_.9} parent=1 // pred_check_branch
      %12 = sbr.rel (0) target = $region9
    $region8: #{_lambda_.9} parent=1 // pred_region
      _
    $region9: #{_lambda_.9} parent=1 // pred_fallthru
      _
    // Predicated region
    $region10: #{_lambda_.9} parent=1 // pred_check
      _
    $region11: #{_lambda_.9} parent=1 // pred_check_branch
      %14 = sbr.rel (0) target = $region13
    $region12: #{_lambda_.9} parent=1 // pred_region
      _
    $region13: #{_lambda_.9} parent=1 // pred_fallthru
      _
    %v15 = vld [vmem:[%s0] sm:$0xf]
    %v16 = vld [vmem:[%s0 + $0x4] sm:$0xf]
    %vm17 = vcmask 191488
    %v18 = vsel %vm17, %v15, 0.0
    %v19 = vrot.slane %v18, 4
    %v20 = vadd.f32 %v18, %v19
    %v21 = vrot.slane %v20, 2
    %v22 = vadd.f32 %v20, %v21
    %v23 = vrot.slane %v22, 1
    %v24 = vadd.f32 %v22, %v23
    %v25 = vsel %vm17, %v16, 0.0
    %v26 = vrot.slane %v25, 4
    %v27 = vadd.f32 %v25, %v26
    %v28 = vrot.slane %v27, 2
    %v29 = vadd.f32 %v27, %v28
    %v30 = vrot.slane %v29, 1
    %v31 = vadd.f32 %v29, %v30
    %v32 = vrcp.pop 4.0
    %v33 = vmul.f32 %v24, %v32
    %v34 = vmul.f32 %v31, %v32
    %v35 = vld [vmem:[%s1] sm:$0x1]
    %v37 = vlaneseq
    %v38 = vshrl.u32 %v37, 7
    %v39 = vsub.s32 0, %v38
    %v40 = vrot.slane %v35, %v39
    %v42 = vmul.f32 %v33, %v40
    %v43 = vmul.f32 %v34, %v40
    %v44 = vld [vmem:[%s2] sm:$0x1]
    %v46 = vlaneseq
    %v47 = vshrl.u32 %v46, 7
    %v48 = vsub.s32 0, %v47
    %v49 = vrot.slane %v44, %v48
    %v51 = vadd.f32 %v42, %v49
    %v52 = vadd.f32 %v43, %v49
    %v55 = vrot.slane %v52, 7
    %vm56 = vcmask 1041409
    %v57 = vsel %vm56, %v55, %v51
    %vm59 = vcmask 189440
    %60 = vst.msk [vmem:[#allocation2] sm:$0x3] %vm59, %v57
    // Predicated region
    $region14: #{_lambda_.9} parent=1 // pred_check
      _
    $region15: #{_lambda_.9} parent=1 // pred_check_branch
      %62 = sbr.rel (0) target = $region17
    $region16: #{_lambda_.9} parent=1 // pred_region
      %s64 = ssub.s32 32, 32
      %65 = vsyncadd [#allocation3], %s64
      %s67 = sshll.u32 [#allocation2], 4
      %s68 = int_to_ptr.vmem [resolvable:$true] %s67
      %70 = dma.vmem_to_hbm [thread:$0]  %s68, 32, %s3, [#allocation3]
    $region17: #{_lambda_.9} parent=1 // pred_fallthru
      _
    // Predicated region
    $region18: #{_lambda_.9} parent=1 // pred_check
      _
    $region19: #{_lambda_.9} parent=1 // pred_check_branch
      %72 = sbr.rel (0) target = $region21
    $region20: #{_lambda_.9} parent=1 // pred_region
      %73 = dma.done [#allocation3], 32
    $region21: #{_lambda_.9} parent=1 // pred_fallthru
      _
    %74 = vsyncpa [#allocation3], 1

// kernel: _lambda_.8
$region0: #{_lambda_.8}
  #allocation0 [shape = 'u32[]', space=smem, size = 0x4, offset = 0x4, fixed_abs, tag = 'smem constant byte address 0x4 - core index']
  #allocation1 [shape = 'u32[144,128]{1,0:T(1,128)}', space=vmem, size = 0x12000, scoped, tag = 'internal scratch']
  #allocation2 [shape = 'f32[36,96]{1,0:T(8,128)}', space=vmem, size = 0x5000, scoped, tag = 'scratch operand']
  #allocation3 [shape = 'f32[4,96]{1,0:T(4,128)}', space=vmem, size = 0x800, scoped, tag = 'scratch operand']
  %s0 = inlined_call_operand.vmem [shape: f32[2,4,24], index: 0, kind: input, shape index: {}]
  %s1 = inlined_call_operand.vmem [shape: bf16[24,96], index: 1, kind: input, shape index: {}]
  %s2 = inlined_call_operand.vmem [shape: f32[1,96], index: 2, kind: input, shape index: {}, may-alias: {2,4,8}]
  %s3 = inlined_call_operand.vmem [shape: f32[25,96], index: 3, kind: input, shape index: {}]
  %s4 = inlined_call_operand.vmem [shape: f32[1,96], index: 4, kind: input, shape index: {}, may-alias: {2,4,8}]
  %s5 = inlined_call_operand.vmem [shape: f32[96,24], index: 5, kind: input, shape index: {}]
  %s6 = inlined_call_operand.vmem [shape: f32[1,24], index: 6, kind: input, shape index: {}, may-alias: {6,10}]
  %s7 = inlined_call_operand.vmem [shape: f32[24,96], index: 7, kind: input, shape index: {}]
  %s8 = inlined_call_operand.vmem [shape: f32[1,96], index: 8, kind: input, shape index: {}, may-alias: {2,4,8}]
  %s9 = inlined_call_operand.vmem [shape: bf16[96,24], index: 9, kind: input, shape index: {}]
  %s10 = inlined_call_operand.vmem [shape: f32[1,24], index: 10, kind: input, shape index: {}, may-alias: {6,10}]
  %s11 = inlined_call_operand.vmem [shape: f32[2,4,24], index: 11, kind: output, shape index: {}]
  %s12 = sld [smem:[#allocation0]]
  $region77: #{_lambda_.8} parent=0
    _
  %s14 = ssub.s32 1, %s12
  %s15 = scalar_select 0, %s14, %s12
  loop: start=0, step=1, limit=4
  $region2: #{_lambda_.8} parent=0 // loop_pre_header
    _
  $region3: #{_lambda_.8} parent=0 // loop_header
    %s17 = sphi 0, %s21
    %p18 = scmp.ge.s32.totalorder %s17, 4
    %s27 = sphi 0, %s29
    %s30 = sphi 0, %s27
    %s31 = sphi 0, %s30
    %s47 = sphi 0, %s31
    %s51 = sphi 0, %s51
    %s53 = sphi 0, %s51
    %s54 = sphi 0, %s53
    %s68 = sphi 0, %s54
    %s72 = sphi 0, %s72
    %s74 = sphi 0, %s72
    %s75 = sphi 0, %s74
    %s89 = sphi 0, %s75
    %s93 = sphi 0, %s93
    %s95 = sphi 0, %s93
    %s96 = sphi 0, %s95
    %s110 = sphi 0, %s96
    %s114 = sphi 0, %s114
    %s116 = sphi 0, %s114
    %s117 = sphi 0, %s116
    %s131 = sphi 0, %s117
    %s135 = sphi 0, %s135
    %s137 = sphi 0, %s135
    %s138 = sphi 0, %s137
    %s152 = sphi 0, %s138
    %s156 = sphi 0, %s156
    %s158 = sphi 0, %s156
    %s159 = sphi 0, %s158
    %s173 = sphi 0, %s159
    %s177 = sphi 0, %s177
    %s179 = sphi 0, %s177
    %s180 = sphi 0, %s179
    %s194 = sphi 0, %s180
    %s198 = sphi 0, %s198
    %s200 = sphi 0, %s198
    %s201 = sphi 0, %s200
    %s215 = sphi 0, %s201
    %s219 = sphi 0, %s219
    %s221 = sphi 0, %s219
    %s222 = sphi 0, %s221
    %s236 = sphi 0, %s222
    %s240 = sphi 0, %s240
    %s242 = sphi 0, %s240
    %s243 = sphi 0, %s242
    %s257 = sphi 0, %s243
    %s263 = sphi 0, %s265
    %s266 = sphi 0, %s263
    %s267 = sphi 0, %s266
    %s283 = sphi 0, %s267
  $region4: #{_lambda_.8} parent=0 // loop_header_branch
    %20 = sbr.rel (%p18) target = $region8
  $region5: #{_lambda_.8} parent=0 // loop_body
    %s22 = ssub.s32 %s17, 1
    %s23 = ssub.s32 %s17, 2
    %s24 = sadd.s32 %s17, 1
    %s25 = ssub.s32 %s17, %s24
    %p26 = scmp.eq.s32.totalorder %s25, 0
    %s28 = sadd.s32 %s27, 1
    %s29 = scalar_select %p26, %s27, %s28
    %p32 = pneg %p26
    %p33 = scmp.eq.s32.totalorder %s17, 1
    %p34 = por %p32, %p33
    %p35 = scmp.ne.s32.totalorder %s27, %s30
    %p36 = scmp.eq.s32.totalorder %s17, 0
    %p37 = por %p35, %p36
    %p38 = scmp.ne.s32.totalorder %s27, %s30
    %p39 = scmp.eq.s32.totalorder %s22, 1
    %p40 = por %p38, %p39
    %p41 = scmp.ne.s32.totalorder %s30, %s31
    %p42 = scmp.eq.s32.totalorder %s22, 0
    %p43 = por %p41, %p42
    %p44 = scmp.ne.s32.totalorder %s30, %s31
    %p45 = scmp.eq.s32.totalorder %s23, 1
    %p46 = por %p44, %p45
    %p48 = scmp.ne.s32.totalorder %s31, %s47
    %p49 = scmp.eq.s32.totalorder %s23, 0
    %p50 = por %p48, %p49
    %s52 = sadd.s32 %s51, 1
    %p55 = scmp.eq.s32.totalorder %s17, 1
    %p56 = scmp.ne.s32.totalorder %s51, %s53
    %p57 = scmp.eq.s32.totalorder %s17, 0
    %p58 = por %p56, %p57
    %p59 = scmp.ne.s32.totalorder %s51, %s53
    %p60 = scmp.eq.s32.totalorder %s22, 1
    %p61 = por %p59, %p60
    %p62 = scmp.ne.s32.totalorder %s53, %s54
    %p63 = scmp.eq.s32.totalorder %s22, 0
    %p64 = por %p62, %p63
    %p65 = scmp.ne.s32.totalorder %s53, %s54
    %p66 = scmp.eq.s32.totalorder %s23, 1
    %p67 = por %p65, %p66
    %p69 = scmp.ne.s32.totalorder %s54, %s68
    %p70 = scmp.eq.s32.totalorder %s23, 0
    %p71 = por %p69, %p70
    %s73 = sadd.s32 %s72, 1
    %p76 = scmp.eq.s32.totalorder %s17, 1
    %p77 = scmp.ne.s32.totalorder %s72, %s74
    %p78 = scmp.eq.s32.totalorder %s17, 0
    %p79 = por %p77, %p78
    %p80 = scmp.ne.s32.totalorder %s72, %s74
    %p81 = scmp.eq.s32.totalorder %s22, 1
    %p82 = por %p80, %p81
    %p83 = scmp.ne.s32.totalorder %s74, %s75
    %p84 = scmp.eq.s32.totalorder %s22, 0
    %p85 = por %p83, %p84
    %p86 = scmp.ne.s32.totalorder %s74, %s75
    %p87 = scmp.eq.s32.totalorder %s23, 1
    %p88 = por %p86, %p87
    %p90 = scmp.ne.s32.totalorder %s75, %s89
    %p91 = scmp.eq.s32.totalorder %s23, 0
    %p92 = por %p90, %p91
    %s94 = sadd.s32 %s93, 1
    %p97 = scmp.eq.s32.totalorder %s17, 1
    %p98 = scmp.ne.s32.totalorder %s93, %s95
    %p99 = scmp.eq.s32.totalorder %s17, 0
    %p100 = por %p98, %p99
    %p101 = scmp.ne.s32.totalorder %s93, %s95
    %p102 = scmp.eq.s32.totalorder %s22, 1
    %p103 = por %p101, %p102
    %p104 = scmp.ne.s32.totalorder %s95, %s96
    %p105 = scmp.eq.s32.totalorder %s22, 0
    %p106 = por %p104, %p105
    %p107 = scmp.ne.s32.totalorder %s95, %s96
    %p108 = scmp.eq.s32.totalorder %s23, 1
    %p109 = por %p107, %p108
    %p111 = scmp.ne.s32.totalorder %s96, %s110
    %p112 = scmp.eq.s32.totalorder %s23, 0
    %p113 = por %p111, %p112
    %s115 = sadd.s32 %s114, 1
    %p118 = scmp.eq.s32.totalorder %s17, 1
    %p119 = scmp.ne.s32.totalorder %s114, %s116
    %p120 = scmp.eq.s32.totalorder %s17, 0
    %p121 = por %p119, %p120
    %p122 = scmp.ne.s32.totalorder %s114, %s116
    %p123 = scmp.eq.s32.totalorder %s22, 1
    %p124 = por %p122, %p123
    %p125 = scmp.ne.s32.totalorder %s116, %s117
    %p126 = scmp.eq.s32.totalorder %s22, 0
    %p127 = por %p125, %p126
    %p128 = scmp.ne.s32.totalorder %s116, %s117
    %p129 = scmp.eq.s32.totalorder %s23, 1
    %p130 = por %p128, %p129
    %p132 = scmp.ne.s32.totalorder %s117, %s131
    %p133 = scmp.eq.s32.totalorder %s23, 0
    %p134 = por %p132, %p133
    %s136 = sadd.s32 %s135, 1
    %p139 = scmp.eq.s32.totalorder %s17, 1
    %p140 = scmp.ne.s32.totalorder %s135, %s137
    %p141 = scmp.eq.s32.totalorder %s17, 0
    %p142 = por %p140, %p141
    %p143 = scmp.ne.s32.totalorder %s135, %s137
    %p144 = scmp.eq.s32.totalorder %s22, 1
    %p145 = por %p143, %p144
    %p146 = scmp.ne.s32.totalorder %s137, %s138
    %p147 = scmp.eq.s32.totalorder %s22, 0
    %p148 = por %p146, %p147
    %p149 = scmp.ne.s32.totalorder %s137, %s138
    %p150 = scmp.eq.s32.totalorder %s23, 1
    %p151 = por %p149, %p150
    %p153 = scmp.ne.s32.totalorder %s138, %s152
    %p154 = scmp.eq.s32.totalorder %s23, 0
    %p155 = por %p153, %p154
    %s157 = sadd.s32 %s156, 1
    %p160 = scmp.eq.s32.totalorder %s17, 1
    %p161 = scmp.ne.s32.totalorder %s156, %s158
    %p162 = scmp.eq.s32.totalorder %s17, 0
    %p163 = por %p161, %p162
    %p164 = scmp.ne.s32.totalorder %s156, %s158
    %p165 = scmp.eq.s32.totalorder %s22, 1
    %p166 = por %p164, %p165
    %p167 = scmp.ne.s32.totalorder %s158, %s159
    %p168 = scmp.eq.s32.totalorder %s22, 0
    %p169 = por %p167, %p168
    %p170 = scmp.ne.s32.totalorder %s158, %s159
    %p171 = scmp.eq.s32.totalorder %s23, 1
    %p172 = por %p170, %p171
    %p174 = scmp.ne.s32.totalorder %s159, %s173
    %p175 = scmp.eq.s32.totalorder %s23, 0
    %p176 = por %p174, %p175
    %s178 = sadd.s32 %s177, 1
    %p181 = scmp.eq.s32.totalorder %s17, 1
    %p182 = scmp.ne.s32.totalorder %s177, %s179
    %p183 = scmp.eq.s32.totalorder %s17, 0
    %p184 = por %p182, %p183
    %p185 = scmp.ne.s32.totalorder %s177, %s179
    %p186 = scmp.eq.s32.totalorder %s22, 1
    %p187 = por %p185, %p186
    %p188 = scmp.ne.s32.totalorder %s179, %s180
    %p189 = scmp.eq.s32.totalorder %s22, 0
    %p190 = por %p188, %p189
    %p191 = scmp.ne.s32.totalorder %s179, %s180
    %p192 = scmp.eq.s32.totalorder %s23, 1
    %p193 = por %p191, %p192
    %p195 = scmp.ne.s32.totalorder %s180, %s194
    %p196 = scmp.eq.s32.totalorder %s23, 0
    %p197 = por %p195, %p196
    %s199 = sadd.s32 %s198, 1
    %p202 = scmp.eq.s32.totalorder %s17, 1
    %p203 = scmp.ne.s32.totalorder %s198, %s200
    %p204 = scmp.eq.s32.totalorder %s17, 0
    %p205 = por %p203, %p204
    %p206 = scmp.ne.s32.totalorder %s198, %s200
    %p207 = scmp.eq.s32.totalorder %s22, 1
    %p208 = por %p206, %p207
    %p209 = scmp.ne.s32.totalorder %s200, %s201
    %p210 = scmp.eq.s32.totalorder %s22, 0
    %p211 = por %p209, %p210
    %p212 = scmp.ne.s32.totalorder %s200, %s201
    %p213 = scmp.eq.s32.totalorder %s23, 1
    %p214 = por %p212, %p213
    %p216 = scmp.ne.s32.totalorder %s201, %s215
    %p217 = scmp.eq.s32.totalorder %s23, 0
    %p218 = por %p216, %p217
    %s220 = sadd.s32 %s219, 1
    %p223 = scmp.eq.s32.totalorder %s17, 1
    %p224 = scmp.ne.s32.totalorder %s219, %s221
    %p225 = scmp.eq.s32.totalorder %s17, 0
    %p226 = por %p224, %p225
    %p227 = scmp.ne.s32.totalorder %s219, %s221
    %p228 = scmp.eq.s32.totalorder %s22, 1
    %p229 = por %p227, %p228
    %p230 = scmp.ne.s32.totalorder %s221, %s222
    %p231 = scmp.eq.s32.totalorder %s22, 0
    %p232 = por %p230, %p231
    %p233 = scmp.ne.s32.totalorder %s221, %s222
    %p234 = scmp.eq.s32.totalorder %s23, 1
    %p235 = por %p233, %p234
    %p237 = scmp.ne.s32.totalorder %s222, %s236
    %p238 = scmp.eq.s32.totalorder %s23, 0
    %p239 = por %p237, %p238
    %s241 = sadd.s32 %s240, 1
    %p244 = scmp.eq.s32.totalorder %s17, 1
    %p245 = scmp.ne.s32.totalorder %s240, %s242
    %p246 = scmp.eq.s32.totalorder %s17, 0
    %p247 = por %p245, %p246
    %p248 = scmp.ne.s32.totalorder %s240, %s242
    %p249 = scmp.eq.s32.totalorder %s22, 1
    %p250 = por %p248, %p249
    %p251 = scmp.ne.s32.totalorder %s242, %s243
    %p252 = scmp.eq.s32.totalorder %s22, 0
    %p253 = por %p251, %p252
    %p254 = scmp.ne.s32.totalorder %s242, %s243
    %p255 = scmp.eq.s32.totalorder %s23, 1
    %p256 = por %p254, %p255
    %p258 = scmp.ne.s32.totalorder %s243, %s257
    %p259 = scmp.eq.s32.totalorder %s23, 0
    %p260 = por %p258, %p259
    %s261 = ssub.s32 %s17, %s24
    %p262 = scmp.eq.s32.totalorder %s261, 0
    %s264 = sadd.s32 %s263, 1
    %s265 = scalar_select %p262, %s263, %s264
    %p268 = pneg %p262
    %p269 = scmp.eq.s32.totalorder %s17, 1
    %p270 = por %p268, %p269
    %p271 = scmp.ne.s32.totalorder %s263, %s266
    %p272 = scmp.eq.s32.totalorder %s17, 0
    %p273 = por %p271, %p272
    %p274 = scmp.ne.s32.totalorder %s263, %s266
    %p275 = scmp.eq.s32.totalorder %s22, 1
    %p276 = por %p274, %p275
    %p277 = scmp.ne.s32.totalorder %s266, %s267
    %p278 = scmp.eq.s32.totalorder %s22, 0
    %p279 = por %p277, %p278
    %p280 = scmp.ne.s32.totalorder %s266, %s267
    %p281 = scmp.eq.s32.totalorder %s23, 1
    %p282 = por %p280, %p281
    %p284 = scmp.ne.s32.totalorder %s267, %s283
    %p285 = scmp.eq.s32.totalorder %s23, 0
    %p286 = por %p284, %p285
    %p287 = scmp.le.s32.totalorder 1, %s17
    %p288 = scmp.lt.s32.totalorder %s17, 3
    %p289 = pnand %p287, %p288
    %p290 = pneg %p289
    // Predicated region
    $region9: #{_lambda_.8} parent=5 // pred_check
      _
    $region10: #{_lambda_.8} parent=5 // pred_check_branch
      %292 = sbr.rel (%p289) target = $region12
    $region11: #{_lambda_.8} parent=5 // pred_region
      %s293 = ssub.s32 %s17, 1
      // Predicated region
      $region13: #{_lambda_.8} parent=11 // pred_check
        %p294 = pneg %p64
      $region14: #{_lambda_.8} parent=11 // pred_check_branch
        %296 = sbr.rel (%p294) target = $region16
      $region15: #{_lambda_.8} parent=11 // pred_region
        _
      $region16: #{_lambda_.8} parent=11 // pred_fallthru
        _
      // Predicated region
      $region17: #{_lambda_.8} parent=11 // pred_check
        %p297 = pneg %p85
      $region18: #{_lambda_.8} parent=11 // pred_check_branch
        %299 = sbr.rel (%p297) target = $region20
      $region19: #{_lambda_.8} parent=11 // pred_region
        _
      $region20: #{_lambda_.8} parent=11 // pred_fallthru
        _
      // Predicated region
      $region21: #{_lambda_.8} parent=11 // pred_check
        %p300 = pneg %p106
      $region22: #{_lambda_.8} parent=11 // pred_check_branch
        %302 = sbr.rel (%p300) target = $region24
      $region23: #{_lambda_.8} parent=11 // pred_region
        _
      $region24: #{_lambda_.8} parent=11 // pred_fallthru
        _
      // Predicated region
      $region25: #{_lambda_.8} parent=11 // pred_check
        %p303 = pneg %p127
      $region26: #{_lambda_.8} parent=11 // pred_check_branch
        %305 = sbr.rel (%p303) target = $region28
      $region27: #{_lambda_.8} parent=11 // pred_region
        _
      $region28: #{_lambda_.8} parent=11 // pred_fallthru
        _
      // Predicated region
      $region29: #{_lambda_.8} parent=11 // pred_check
        %p306 = pneg %p148
      $region30: #{_lambda_.8} parent=11 // pred_check_branch
        %308 = sbr.rel (%p306) target = $region32
      $region31: #{_lambda_.8} parent=11 // pred_region
        _
      $region32: #{_lambda_.8} parent=11 // pred_fallthru
        _
      // Predicated region
      $region33: #{_lambda_.8} parent=11 // pred_check
        %p309 = pneg %p169
      $region34: #{_lambda_.8} parent=11 // pred_check_branch
        %311 = sbr.rel (%p309) target = $region36
      $region35: #{_lambda_.8} parent=11 // pred_region
        _
      $region36: #{_lambda_.8} parent=11 // pred_fallthru
        _
      // Predicated region
      $region37: #{_lambda_.8} parent=11 // pred_check
        %p312 = pneg %p190
      $region38: #{_lambda_.8} parent=11 // pred_check_branch
        %314 = sbr.rel (%p312) target = $region40
      $region39: #{_lambda_.8} parent=11 // pred_region
        _
      $region40: #{_lambda_.8} parent=11 // pred_fallthru
        _
      // Predicated region
      $region41: #{_lambda_.8} parent=11 // pred_check
        %p315 = pneg %p211
      $region42: #{_lambda_.8} parent=11 // pred_check_branch
        %317 = sbr.rel (%p315) target = $region44
      $region43: #{_lambda_.8} parent=11 // pred_region
        _
      $region44: #{_lambda_.8} parent=11 // pred_fallthru
        _
      // Predicated region
      $region45: #{_lambda_.8} parent=11 // pred_check
        %p318 = pneg %p232
      $region46: #{_lambda_.8} parent=11 // pred_check_branch
        %320 = sbr.rel (%p318) target = $region48
      $region47: #{_lambda_.8} parent=11 // pred_region
        _
      $region48: #{_lambda_.8} parent=11 // pred_fallthru
        _
      // Predicated region
      $region49: #{_lambda_.8} parent=11 // pred_check
        %p321 = pneg %p253
      $region50: #{_lambda_.8} parent=11 // pred_check_branch
        %323 = sbr.rel (%p321) target = $region52
      $region51: #{_lambda_.8} parent=11 // pred_region
        _
      $region52: #{_lambda_.8} parent=11 // pred_fallthru
        _
    $region12: #{_lambda_.8} parent=5 // pred_fallthru
      _
    %p324 = scmp.lt.s32.totalorder %s17, 2
    // Predicated region
    $region53: #{_lambda_.8} parent=5 // pred_check
      %p325 = pneg %p324
    $region54: #{_lambda_.8} parent=5 // pred_check_branch
      %327 = sbr.rel (%p325) target = $region56
    $region55: #{_lambda_.8} parent=5 // pred_region
      // Predicated region
      $region57: #{_lambda_.8} parent=55 // pred_check
        %p328 = pneg %p37
      $region58: #{_lambda_.8} parent=55 // pred_check_branch
        %330 = sbr.rel (%p328) target = $region60
      $region59: #{_lambda_.8} parent=55 // pred_region
        %p331 = scmp.lt.s32.totalorder %s17, 1
        %s332 = scalar_select %p331, %s17, 1
        %s333 = smul.addr %s332, 4
        %s334 = scalar_lea.vmem %s0, %s333
      $region60: #{_lambda_.8} parent=55 // pred_fallthru
        _
    $region56: #{_lambda_.8} parent=5 // pred_fallthru
      _
    %p335 = scmp.le.s32.totalorder 1, %s17
    %p336 = scmp.lt.s32.totalorder %s17, 3
    %p337 = pnand %p335, %p336
    %p338 = pneg %p337
    // Predicated region
    $region61: #{_lambda_.8} parent=5 // pred_check
      _
    $region62: #{_lambda_.8} parent=5 // pred_check_branch
      %340 = sbr.rel (%p337) target = $region64
    $region63: #{_lambda_.8} parent=5 // pred_region
      %s341 = ssub.s32 %s17, 1
      %p342 = scmp.lt.s32.totalorder %s22, 1
      %s343 = scalar_select %p342, %s22, 1
      %s344 = smul.addr %s343, 4
      %s345 = scalar_lea.vmem %s0, %s344
      %p346 = pneg %p43
      %p347 = pneg %p40
      %p348 = pneg %p64
      %p349 = pneg %p61
      %p350 = pneg %p85
      %p351 = pneg %p82
      %p352 = pneg %p106
      %p353 = pneg %p103
      %p354 = pneg %p127
      %p355 = pneg %p124
      %p356 = pneg %p148
      %p357 = pneg %p145
      %p358 = pneg %p169
      %p359 = pneg %p166
      %p360 = pneg %p190
      %p361 = pneg %p187
      %p362 = pneg %p211
      %p363 = pneg %p208
      %p364 = pneg %p232
      %p365 = pneg %p229
      %p366 = pneg %p253
      %p367 = pneg %p250
      %p368 = pneg %p279
      %p369 = pneg %p276
      %p370 = scmp.lt.s32.totalorder %s22, 1
      %s371 = scalar_select %p370, %s22, 1
      %s372 = smul.addr %s371, 4
      %s373 = scalar_lea.vmem %s11, %s372
      %p374 = scmp.lt.s32.totalorder %s22, 1
      %s375 = scalar_select %p374, %s22, 1
      %s376 = smul.addr %s375, 4
      %s377 = scalar_lea.vmem %s0, %s376
      %p378 = scmp.lt.s32.totalorder %s22, 1
      %s379 = scalar_select %p378, %s22, 1
      %s380 = smul.addr %s379, 4
      %s381 = scalar_lea.vmem %s11, %s380
      %v383 = vld [vmem:[%s377] sm:$0xf]
      %v384 = vpack.c.bf16 %v383, %v383
      %v385 = vld [vmem:[%s1] sm:$0xf]
      %v386 = vld [vmem:[%s1 + $0x4] sm:$0xf]
      %v387 = vld [vmem:[%s1 + $0x8] sm:$0xf]
      %v388 = vld [vmem:[%s2] sm:$0x1]
      %v390 = vlaneseq
      %v391 = vshrl.u32 %v390, 7
      %v392 = vsub.s32 0, %v391
      %v393 = vrot.slane %v388, %v392
      %v398 = vunpack.c.l.b16 %v385
      %v399 = vunpack.c.l.b16 %v386
      %v400 = vunpack.c.l.b16 %v387
      %v401 = vpack.c.b16 %v399, %v398
      %v402 = vpack.c.b16 %v400, %v400
      %vm404 = vcmask 195584
      %v406 = vsel %vm404, %v384, 0
      %vm408 = vcmask 1043456
      %v410 = vsel %vm408, %v402, 0
      %412 = vmatprep.subr.bf16.mxu0 0
      %413 = vmatpush1.bf16.msra.mxu0 0
      %414 = vmatprep.subr.bf16.mxu0 0
      %415 = vmatpush1.bf16.msra.mxu0 0
      %416 = vmatprep.subr.bf16.mxu0 0
      %417 = vmatpush1.bf16.msra.mxu0 0
      %418 = vmatprep.subr.bf16.mxu0 0
      %419 = vmatpush1.bf16.msra.mxu0 0
      %420 = vmatprep.subr.bf16.mxu0 0
      %421 = vmatpush1.bf16.msra.mxu0 0
      %422 = vmatprep.subr.bf16.mxu0 0
      %423 = vmatpush1.bf16.msra.mxu0 0
      %424 = vmatprep.subr.bf16.mxu0 0
      %425 = vmatpush1.bf16.msra.mxu0 %v410
      %426 = vmatprep.subr.bf16.mxu0 0
      %427 = vmatpush1.bf16.msra.mxu0 %v401
      %428 = vmatprep.subr.bf16.mxu0 0
      %429 = vmatpush2.bf16.msra.mxu0 0
      %430 = vmatprep.subr.bf16.mxu0 0
      %431 = vmatpush2.bf16.msra.mxu0 0
      %432 = vmatprep.subr.bf16.mxu0 0
      %433 = vmatpush2.bf16.msra.mxu0 0
      %434 = vmatprep.subr.bf16.mxu0 0
      %435 = vmatpush2.bf16.msra.mxu0 0
      %436 = vmatprep.subr.bf16.mxu0 0
      %437 = vmatpush2.bf16.msra.mxu0 0
      %438 = vmatprep.subr.bf16.mxu0 0
      %439 = vmatpush2.bf16.msra.mxu0 0
      %440 = vmatprep.subr.bf16.mxu0 0
      %441 = vmatpush2.bf16.msra.mxu0 0
      %442 = vmatprep.subr.bf16.mxu0 0
      %443 = vmatpush2.bf16.msra.mxu0 0
      %444 = vmatprep.mubr.bf16.mxu0 0
      %445 = vmatmul.mubr.bf16.gmra.mxu0 %v406
      %v446 = vpop.f32.mrf.mxu0
      %v447 = vadd.f32 %v393, %v446
      %v448 = vpop.f32.mrf.mxu0
      %v449 = vpop.f32.mrf.mxu0
      %v450 = vpop.f32.mrf.mxu0
      %451 = vdwg.mxu0
      %v452 = vadd.f32 %v447, 3.0
      %v453 = vmax.f32 %v452, 0.0
      %v454 = vmin.f32 %v453, 6.0
      %v455 = vmul.f32 %v454, 0.16666667
      %v456 = vmul.f32 %v447, %v455
      %vm457 = vcmask 785408
      %458 = vst.msk [vmem:[#allocation2] sm:$0xff] %vm457, 0.0
      %459 = vst.msk [vmem:[#allocation2 + $0x8] sm:$0xff] %vm457, 0.0
      %460 = vst.msk [vmem:[#allocation2 + $0x10] sm:$0xff] %vm457, 0.0
      %461 = vst.msk [vmem:[#allocation2 + $0x18] sm:$0xff] %vm457, 0.0
      %vm462 = vcmask 781312
      %463 = vst.msk [vmem:[#allocation2 + $0x20] sm:$0xf] %vm462, 0.0
      %vm464 = vcmask 779264
      %465 = vst.msk [vmem:[#allocation2 + $0xe] sm:$0x3] %vm464, %v456
      %vm466 = vcmask 781314
      %467 = vst.msk [vmem:[#allocation2 + $0x12] sm:$0xc] %vm466, %v456
      %v468 = vld [vmem:[%s3] sm:$0xff]
      %v469 = vld [vmem:[%s3 + $0x8] sm:$0xff]
      %v470 = vld [vmem:[%s3 + $0x10] sm:$0xff]
      %v471 = vld [vmem:[%s3 + $0x18] sm:$0x1]
      %v472 = vld [vmem:[%s4] sm:$0x1]
      %v473 = vld [vmem:[#allocation2] sm:$0x3]
      %v474 = vlaneseq
      %v475 = vshrl.u32 %v474, 7
      %v476 = vsub.s32 0, %v475
      %v477 = vrot.slane %v468, %v476
      %v478 = vmul.f32 %v473, %v477
      %v479 = vld [vmem:[#allocation2 + $0x1] sm:$0x3]
      %v480 = vlaneseq
      %v481 = vshrl.u32 %v480, 7
      %v482 = vsub.s32 1, %v481
      %v483 = vrot.slane %v468, %v482
      %v484 = vmul.f32 %v479, %v483
      %v485 = vadd.f32 %v478, %v484
      %v486 = vld [vmem:[#allocation2 + $0x2] sm:$0x3]
      %v487 = vlaneseq
      %v488 = vshrl.u32 %v487, 7
      %v489 = vsub.s32 2, %v488
      %v490 = vrot.slane %v468, %v489
      %v491 = vmul.f32 %v486, %v490
      %v492 = vadd.f32 %v485, %v491
      %v493 = vld [vmem:[#allocation2 + $0x3] sm:$0x3]
      %v494 = vlaneseq
      %v495 = vshrl.u32 %v494, 7
      %v496 = vsub.s32 3, %v495
      %v497 = vrot.slane %v468, %v496
      %v498 = vmul.f32 %v493, %v497
      %v499 = vadd.f32 %v492, %v498
      %v500 = vld [vmem:[#allocation2 + $0x4] sm:$0x3]
      %v501 = vlaneseq
      %v502 = vshrl.u32 %v501, 7
      %v503 = vsub.s32 4, %v502
      %v504 = vrot.slane %v468, %v503
      %v505 = vmul.f32 %v500, %v504
      %v506 = vadd.f32 %v499, %v505
      %v507 = vld [vmem:[#allocation2 + $0x6] sm:$0x3]
      %v508 = vlaneseq
      %v509 = vshrl.u32 %v508, 7
      %v510 = vsub.s32 5, %v509
      %v511 = vrot.slane %v468, %v510
      %v512 = vmul.f32 %v507, %v511
      %v513 = vadd.f32 %v506, %v512
      %v514 = vld [vmem:[#allocation2 + $0x7] sm:$0x3]
      %v515 = vlaneseq
      %v516 = vshrl.u32 %v515, 7
      %v517 = vsub.s32 6, %v516
      %v518 = vrot.slane %v468, %v517
      %v519 = vmul.f32 %v514, %v518
      %v520 = vadd.f32 %v513, %v519
      %v521 = vld [vmem:[#allocation2 + $0x8] sm:$0x3]
      %v522 = vlaneseq
      %v523 = vshrl.u32 %v522, 7
      %v524 = vsub.s32 7, %v523
      %v525 = vrot.slane %v468, %v524
      %v526 = vmul.f32 %v521, %v525
      %v527 = vadd.f32 %v520, %v526
      %v528 = vld [vmem:[#allocation2 + $0x9] sm:$0x3]
      %v529 = vlaneseq
      %v530 = vshrl.u32 %v529, 7
      %v531 = vsub.s32 0, %v530
      %v532 = vrot.slane %v469, %v531
      %v533 = vmul.f32 %v528, %v532
      %v534 = vadd.f32 %v527, %v533
      %v535 = vld [vmem:[#allocation2 + $0xa] sm:$0x3]
      %v536 = vlaneseq
      %v537 = vshrl.u32 %v536, 7
      %v538 = vsub.s32 1, %v537
      %v539 = vrot.slane %v469, %v538
      %v540 = vmul.f32 %v535, %v539
      %v541 = vadd.f32 %v534, %v540
      %v542 = vld [vmem:[#allocation2 + $0xc] sm:$0x3]
      %v543 = vlaneseq
      %v544 = vshrl.u32 %v543, 7
      %v545 = vsub.s32 2, %v544
      %v546 = vrot.slane %v469, %v545
      %v547 = vmul.f32 %v542, %v546
      %v548 = vadd.f32 %v541, %v547
      %v549 = vld [vmem:[#allocation2 + $0xd] sm:$0x3]
      %v550 = vlaneseq
      %v551 = vshrl.u32 %v550, 7
      %v552 = vsub.s32 3, %v551
      %v553 = vrot.slane %v469, %v552
      %v554 = vmul.f32 %v549, %v553
      %v555 = vadd.f32 %v548, %v554
      %v556 = vld [vmem:[#allocation2 + $0xe] sm:$0x3]
      %v557 = vlaneseq
      %v558 = vshrl.u32 %v557, 7
      %v559 = vsub.s32 4, %v558
      %v560 = vrot.slane %v469, %v559
      %v561 = vmul.f32 %v556, %v560
      %v562 = vadd.f32 %v555, %v561
      %v563 = vld [vmem:[#allocation2 + $0xf] sm:$0x3]
      %v564 = vlaneseq
      %v565 = vshrl.u32 %v564, 7
      %v566 = vsub.s32 5, %v565
      %v567 = vrot.slane %v469, %v566
      %v568 = vmul.f32 %v563, %v567
      %v569 = vadd.f32 %v562, %v568
      %v570 = vld [vmem:[#allocation2 + $0x10] sm:$0x3]
      %v571 = vlaneseq
      %v572 = vshrl.u32 %v571, 7
      %v573 = vsub.s32 6, %v572
      %v574 = vrot.slane %v469, %v573
      %v575 = vmul.f32 %v570, %v574
      %v576 = vadd.f32 %v569, %v575
      %v577 = vld [vmem:[#allocation2 + $0x12] sm:$0x3]
      %v578 = vlaneseq
      %v579 = vshrl.u32 %v578, 7
      %v580 = vsub.s32 7, %v579
      %v581 = vrot.slane %v469, %v580
      %v582 = vmul.f32 %v577, %v581
      %v583 = vadd.f32 %v576, %v582
      %v584 = vld [vmem:[#allocation2 + $0x13] sm:$0x3]
      %v585 = vlaneseq
      %v586 = vshrl.u32 %v585, 7
      %v587 = vsub.s32 0, %v586
      %v588 = vrot.slane %v470, %v587
      %v589 = vmul.f32 %v584, %v588
      %v590 = vadd.f32 %v583, %v589
      %v591 = vld [vmem:[#allocation2 + $0x14] sm:$0x3]
      %v592 = vlaneseq
      %v593 = vshrl.u32 %v592, 7
      %v594 = vsub.s32 1, %v593
      %v595 = vrot.slane %v470, %v594
      %v596 = vmul.f32 %v591, %v595
      %v597 = vadd.f32 %v590, %v596
      %v598 = vld [vmem:[#allocation2 + $0x15] sm:$0x3]
      %v599 = vlaneseq
      %v600 = vshrl.u32 %v599, 7
      %v601 = vsub.s32 2, %v600
      %v602 = vrot.slane %v470, %v601
      %v603 = vmul.f32 %v598, %v602
      %v604 = vadd.f32 %v597, %v603
      %v605 = vld [vmem:[#allocation2 + $0x16] sm:$0x3]
      %v606 = vlaneseq
      %v607 = vshrl.u32 %v606, 7
      %v608 = vsub.s32 3, %v607
      %v609 = vrot.slane %v470, %v608
      %v610 = vmul.f32 %v605, %v609
      %v611 = vadd.f32 %v604, %v610
      %v612 = vld [vmem:[#allocation2 + $0x18] sm:$0x3]
      %v613 = vlaneseq
      %v614 = vshrl.u32 %v613, 7
      %v615 = vsub.s32 4, %v614
      %v616 = vrot.slane %v470, %v615
      %v617 = vmul.f32 %v612, %v616
      %v618 = vadd.f32 %v611, %v617
      %v619 = vld [vmem:[#allocation2 + $0x19] sm:$0x3]
      %v620 = vlaneseq
      %v621 = vshrl.u32 %v620, 7
      %v622 = vsub.s32 5, %v621
      %v623 = vrot.slane %v470, %v622
      %v624 = vmul.f32 %v619, %v623
      %v625 = vadd.f32 %v618, %v624
      %v626 = vld [vmem:[#allocation2 + $0x1a] sm:$0x3]
      %v627 = vlaneseq
      %v628 = vshrl.u32 %v627, 7
      %v629 = vsub.s32 6, %v628
      %v630 = vrot.slane %v470, %v629
      %v631 = vmul.f32 %v626, %v630
      %v632 = vadd.f32 %v625, %v631
      %v633 = vld [vmem:[#allocation2 + $0x1b] sm:$0x3]
      %v634 = vlaneseq
      %v635 = vshrl.u32 %v634, 7
      %v636 = vsub.s32 7, %v635
      %v637 = vrot.slane %v470, %v636
      %v638 = vmul.f32 %v633, %v637
      %v639 = vadd.f32 %v632, %v638
      %v640 = vld [vmem:[#allocation2 + $0x1c] sm:$0x3]
      %v641 = vlaneseq
      %v642 = vshrl.u32 %v641, 7
      %v643 = vsub.s32 0, %v642
      %v644 = vrot.slane %v471, %v643
      %v645 = vmul.f32 %v640, %v644
      %v646 = vadd.f32 %v639, %v645
      %v648 = vlaneseq
      %v649 = vshrl.u32 %v648, 7
      %v650 = vsub.s32 0, %v649
      %v651 = vrot.slane %v472, %v650
      %v653 = vadd.f32 %v646, %v651
      %654 = vst.msk [vmem:[#allocation3] sm:$0x3] %vm464, %v653
      %v655 = vld [vmem:[#allocation2 + $0x6] sm:$0x3]
      %v656 = vmul.f32 %v655, %v477
      %v657 = vld [vmem:[#allocation2 + $0x7] sm:$0x3]
      %v658 = vmul.f32 %v657, %v483
      %v659 = vadd.f32 %v656, %v658
      %v660 = vld [vmem:[#allocation2 + $0x8] sm:$0x3]
      %v661 = vmul.f32 %v660, %v490
      %v662 = vadd.f32 %v659, %v661
      %v663 = vld [vmem:[#allocation2 + $0x9] sm:$0x3]
      %v664 = vmul.f32 %v663, %v497
      %v665 = vadd.f32 %v662, %v664
      %v666 = vld [vmem:[#allocation2 + $0xa] sm:$0x3]
      %v667 = vmul.f32 %v666, %v504
      %v668 = vadd.f32 %v665, %v667
      %v669 = vld [vmem:[#allocation2 + $0xc] sm:$0x3]
      %v670 = vmul.f32 %v669, %v511
      %v671 = vadd.f32 %v668, %v670
      %v672 = vld [vmem:[#allocation2 + $0xd] sm:$0x3]
      %v673 = vmul.f32 %v672, %v518
      %v674 = vadd.f32 %v671, %v673
      %v675 = vld [vmem:[#allocation2 + $0xe] sm:$0x3]
      %v676 = vmul.f32 %v675, %v525
      %v677 = vadd.f32 %v674, %v676
      %v678 = vld [vmem:[#allocation2 + $0xf] sm:$0x3]
      %v679 = vmul.f32 %v678, %v532
      %v680 = vadd.f32 %v677, %v679
      %v681 = vld [vmem:[#allocation2 + $0x10] sm:$0x3]
      %v682 = vmul.f32 %v681, %v539
      %v683 = vadd.f32 %v680, %v682
      %v684 = vld [vmem:[#allocation2 + $0x12] sm:$0x3]
      %v685 = vmul.f32 %v684, %v546
      %v686 = vadd.f32 %v683, %v685
      %v687 = vld [vmem:[#allocation2 + $0x13] sm:$0x3]
      %v688 = vmul.f32 %v687, %v553
      %v689 = vadd.f32 %v686, %v688
      %v690 = vld [vmem:[#allocation2 + $0x14] sm:$0x3]
      %v691 = vmul.f32 %v690, %v560
      %v692 = vadd.f32 %v689, %v691
      %v693 = vld [vmem:[#allocation2 + $0x15] sm:$0x3]
      %v694 = vmul.f32 %v693, %v567
      %v695 = vadd.f32 %v692, %v694
      %v696 = vld [vmem:[#allocation2 + $0x16] sm:$0x3]
      %v697 = vmul.f32 %v696, %v574
      %v698 = vadd.f32 %v695, %v697
      %v699 = vld [vmem:[#allocation2 + $0x18] sm:$0x3]
      %v700 = vmul.f32 %v699, %v581
      %v701 = vadd.f32 %v698, %v700
      %v702 = vld [vmem:[#allocation2 + $0x19] sm:$0x3]
      %v703 = vmul.f32 %v702, %v588
      %v704 = vadd.f32 %v701, %v703
      %v705 = vld [vmem:[#allocation2 + $0x1a] sm:$0x3]
      %v706 = vmul.f32 %v705, %v595
      %v707 = vadd.f32 %v704, %v706
      %v708 = vld [vmem:[#allocation2 + $0x1b] sm:$0x3]
      %v709 = vmul.f32 %v708, %v602
      %v710 = vadd.f32 %v707, %v709
      %v711 = vld [vmem:[#allocation2 + $0x1c] sm:$0x3]
      %v712 = vmul.f32 %v711, %v609
      %v713 = vadd.f32 %v710, %v712
      %v714 = vld [vmem:[#allocation2 + $0x1e] sm:$0x3]
      %v715 = vmul.f32 %v714, %v616
      %v716 = vadd.f32 %v713, %v715
      %v717 = vld [vmem:[#allocation2 + $0x1f] sm:$0x3]
      %v718 = vmul.f32 %v717, %v623
      %v719 = vadd.f32 %v716, %v718
      %v720 = vld [vmem:[#allocation2 + $0x20] sm:$0x3]
      %v721 = vmul.f32 %v720, %v630
      %v722 = vadd.f32 %v719, %v721
      %v723 = vld [vmem:[#allocation2 + $0x21] sm:$0x3]
      %v724 = vmul.f32 %v723, %v637
      %v725 = vadd.f32 %v722, %v724
      %v726 = vld [vmem:[#allocation2 + $0x22] sm:$0x3]
      %v727 = vmul.f32 %v726, %v644
      %v728 = vadd.f32 %v725, %v727
      %v729 = vadd.f32 %v728, %v651
      %730 = vst.msk [vmem:[#allocation3 + $0x2] sm:$0x3] %vm464, %v729
      %v731 = vld [vmem:[#allocation3] sm:$0xf]
      %v732 = vsel %vm462, %v731, 0.0
      %v733 = vrot.slane %v732, 4
      %v734 = vadd.f32 %v732, %v733
      %v735 = vrot.slane %v734, 2
      %v736 = vadd.f32 %v734, %v735
      %v737 = vrot.slane %v736, 1
      %v738 = vadd.f32 %v736, %v737
      %v739 = vrcp.pop 4.0
      %v740 = vmul.f32 %v738, %v739
      %v741 = vld [vmem:[%s5] sm:$0xff]
      %v742 = vld [vmem:[%s5 + $0x8] sm:$0xff]
      %v743 = vld [vmem:[%s5 + $0x10] sm:$0xff]
      %v744 = vld [vmem:[%s5 + $0x18] sm:$0xff]
      %v745 = vld [vmem:[%s5 + $0x20] sm:$0xff]
      %v746 = vld [vmem:[%s5 + $0x28] sm:$0xff]
      %v747 = vld [vmem:[%s5 + $0x30] sm:$0xff]
      %v748 = vld [vmem:[%s5 + $0x38] sm:$0xff]
      %v749 = vld [vmem:[%s5 + $0x40] sm:$0xff]
      %v750 = vld [vmem:[%s5 + $0x48] sm:$0xff]
      %v751 = vld [vmem:[%s5 + $0x50] sm:$0xff]
      %v752 = vld [vmem:[%s5 + $0x58] sm:$0xff]
      %v753 = vld [vmem:[%s6] sm:$0x1]
      %v755 = vsel %vm457, %v740, 0
      %757 = vmatprep.subr.mxu0 0.0
      %758 = vmatpush1.msra.mxu0 0.0
      %759 = vmatprep.subr.mxu0 0.0
      %760 = vmatpush1.msra.mxu0 0.0
      %761 = vmatprep.subr.mxu0 0.0
      %762 = vmatpush1.msra.mxu0 0.0
      %763 = vmatprep.subr.mxu0 0.0
      %764 = vmatpush1.msra.mxu0 0.0
      %765 = vmatprep.subr.mxu0 0.0
      %766 = vmatpush1.msra.mxu0 %v752
      %767 = vmatprep.subr.mxu0 0.0
      %768 = vmatpush1.msra.mxu0 %v751
      %769 = vmatprep.subr.mxu0 0.0
      %770 = vmatpush1.msra.mxu0 %v750
      %771 = vmatprep.subr.mxu0 0.0
      %772 = vmatpush1.msra.mxu0 %v749
      %773 = vmatprep.subr.mxu0 0.0
      %774 = vmatpush1.msra.mxu0 %v748
      %775 = vmatprep.subr.mxu0 0.0
      %776 = vmatpush1.msra.mxu0 %v747
      %777 = vmatprep.subr.mxu0 0.0
      %778 = vmatpush1.msra.mxu0 %v746
      %779 = vmatprep.subr.mxu0 0.0
      %780 = vmatpush1.msra.mxu0 %v745
      %781 = vmatprep.subr.mxu0 0.0
      %782 = vmatpush1.msra.mxu0 %v744
      %783 = vmatprep.subr.mxu0 0.0
      %784 = vmatpush1.msra.mxu0 %v743
      %785 = vmatprep.subr.mxu0 0.0
      %786 = vmatpush1.msra.mxu0 %v742
      %787 = vmatprep.subr.mxu0 0.0
      %788 = vmatpush1.msra.mxu0 %v741
      %789 = vmatprep.subr.mxu0 0.0
      %790 = vmatpush2.msra.mxu0 0.0
      %791 = vmatprep.subr.mxu0 0.0
      %792 = vmatpush2.msra.mxu0 0.0
      %793 = vmatprep.subr.mxu0 0.0
      %794 = vmatpush2.msra.mxu0 0.0
      %795 = vmatprep.subr.mxu0 0.0
      %796 = vmatpush2.msra.mxu0 0.0
      %797 = vmatprep.subr.mxu0 0.0
      %798 = vmatpush2.msra.mxu0 0.0
      %799 = vmatprep.subr.mxu0 0.0
      %800 = vmatpush2.msra.mxu0 0.0
      %801 = vmatprep.subr.mxu0 0.0
      %802 = vmatpush2.msra.mxu0 0.0
      %803 = vmatprep.subr.mxu0 0.0
      %804 = vmatpush2.msra.mxu0 0.0
      %805 = vmatprep.subr.mxu0 0.0
      %806 = vmatpush2.msra.mxu0 0.0
      %807 = vmatprep.subr.mxu0 0.0
      %808 = vmatpush2.msra.mxu0 0.0
      %809 = vmatprep.subr.mxu0 0.0
      %810 = vmatpush2.msra.mxu0 0.0
      %811 = vmatprep.subr.mxu0 0.0
      %812 = vmatpush2.msra.mxu0 0.0
      %813 = vmatprep.subr.mxu0 0.0
      %814 = vmatpush2.msra.mxu0 0.0
      %815 = vmatprep.subr.mxu0 0.0
      %816 = vmatpush2.msra.mxu0 0.0
      %817 = vmatprep.subr.mxu0 0.0
      %818 = vmatpush2.msra.mxu0 0.0
      %819 = vmatprep.subr.mxu0 0.0
      %820 = vmatpush2.msra.mxu0 0.0
      %821 = vmatprep.mubr.f32.mxu0 0.0
      %822 = vmatmul.mubr.f32.gmra.mxu0 %v755
      %v823 = vpop.f32.mrf.mxu0
      %v824 = vadd.f32 %v753, %v823
      %v825 = vpop.f32.mrf.mxu0
      %826 = vdwg.mxu0
      %v827 = vmax.f32 %v824, 0.0
      %v828 = vld [vmem:[%s7] sm:$0xff]
      %v829 = vld [vmem:[%s7 + $0x8] sm:$0xff]
      %v830 = vld [vmem:[%s7 + $0x10] sm:$0xff]
      %v831 = vld [vmem:[%s8] sm:$0x1]
      %v833 = vsel %vm404, %v827, 0
      %835 = vmatprep.subr.mxu0 0.0
      %836 = vmatpush1.msra.mxu0 0.0
      %837 = vmatprep.subr.mxu0 0.0
      %838 = vmatpush1.msra.mxu0 0.0
      %839 = vmatprep.subr.mxu0 0.0
      %840 = vmatpush1.msra.mxu0 0.0
      %841 = vmatprep.subr.mxu0 0.0
      %842 = vmatpush1.msra.mxu0 0.0
      %843 = vmatprep.subr.mxu0 0.0
      %844 = vmatpush1.msra.mxu0 0.0
      %845 = vmatprep.subr.mxu0 0.0
      %846 = vmatpush1.msra.mxu0 0.0
      %847 = vmatprep.subr.mxu0 0.0
      %848 = vmatpush1.msra.mxu0 0.0
      %849 = vmatprep.subr.mxu0 0.0
      %850 = vmatpush1.msra.mxu0 0.0
      %851 = vmatprep.subr.mxu0 0.0
      %852 = vmatpush1.msra.mxu0 0.0
      %853 = vmatprep.subr.mxu0 0.0
      %854 = vmatpush1.msra.mxu0 0.0
      %855 = vmatprep.subr.mxu0 0.0
      %856 = vmatpush1.msra.mxu0 0.0
      %857 = vmatprep.subr.mxu0 0.0
      %858 = vmatpush1.msra.mxu0 0.0
      %859 = vmatprep.subr.mxu0 0.0
      %860 = vmatpush1.msra.mxu0 0.0
      %861 = vmatprep.subr.mxu0 0.0
      %862 = vmatpush1.msra.mxu0 %v830
      %863 = vmatprep.subr.mxu0 0.0
      %864 = vmatpush1.msra.mxu0 %v829
      %865 = vmatprep.subr.mxu0 0.0
      %866 = vmatpush1.msra.mxu0 %v828
      %867 = vmatprep.subr.mxu0 0.0
      %868 = vmatpush2.msra.mxu0 0.0
      %869 = vmatprep.subr.mxu0 0.0
      %870 = vmatpush2.msra.mxu0 0.0
      %871 = vmatprep.subr.mxu0 0.0
      %872 = vmatpush2.msra.mxu0 0.0
      %873 = vmatprep.subr.mxu0 0.0
      %874 = vmatpush2.msra.mxu0 0.0
      %875 = vmatprep.subr.mxu0 0.0
      %876 = vmatpush2.msra.mxu0 0.0
      %877 = vmatprep.subr.mxu0 0.0
      %878 = vmatpush2.msra.mxu0 0.0
      %879 = vmatprep.subr.mxu0 0.0
      %880 = vmatpush2.msra.mxu0 0.0
      %881 = vmatprep.subr.mxu0 0.0
      %882 = vmatpush2.msra.mxu0 0.0
      %883 = vmatprep.subr.mxu0 0.0
      %884 = vmatpush2.msra.mxu0 0.0
      %885 = vmatprep.subr.mxu0 0.0
      %886 = vmatpush2.msra.mxu0 0.0
      %887 = vmatprep.subr.mxu0 0.0
      %888 = vmatpush2.msra.mxu0 0.0
      %889 = vmatprep.subr.mxu0 0.0
      %890 = vmatpush2.msra.mxu0 0.0
      %891 = vmatprep.subr.mxu0 0.0
      %892 = vmatpush2.msra.mxu0 0.0
      %893 = vmatprep.subr.mxu0 0.0
      %894 = vmatpush2.msra.mxu0 0.0
      %895 = vmatprep.subr.mxu0 0.0
      %896 = vmatpush2.msra.mxu0 0.0
      %897 = vmatprep.subr.mxu0 0.0
      %898 = vmatpush2.msra.mxu0 0.0
      %899 = vmatprep.mubr.f32.mxu0 0.0
      %900 = vmatmul.mubr.f32.gmra.mxu0 %v833
      %v901 = vpop.f32.mrf.mxu0
      %v902 = vadd.f32 %v831, %v901
      %v903 = vpop.f32.mrf.mxu0
      %904 = vdwg.mxu0
      %v905 = vadd.f32 %v902, 3.0
      %v906 = vmax.f32 %v905, 0.0
      %v907 = vmin.f32 %v906, 6.0
      %v908 = vmul.f32 %v907, 0.16666667
      %v909 = vlaneseq
      %v910 = vshrl.u32 %v909, 7
      %v911 = vsub.s32 0, %v910
      %v912 = vrot.slane %v908, %v911
      %v913 = vmul.f32 %v731, %v912
      %v914 = vadd.f32 %v913, 3.0
      %v915 = vmax.f32 %v914, 0.0
      %v916 = vmin.f32 %v915, 6.0
      %v917 = vmul.f32 %v916, 0.16666667
      %v918 = vmul.f32 %v913, %v917
      %v919 = vpack.c.bf16 %v918, %v918
      %v920 = vld [vmem:[%s9] sm:$0xf]
      %v921 = vld [vmem:[%s9 + $0x4] sm:$0xf]
      %v922 = vld [vmem:[%s9 + $0x8] sm:$0xf]
      %v923 = vld [vmem:[%s9 + $0xc] sm:$0xf]
      %v924 = vld [vmem:[%s9 + $0x10] sm:$0xf]
      %v925 = vld [vmem:[%s9 + $0x14] sm:$0xf]
      %v926 = vld [vmem:[%s9 + $0x18] sm:$0xf]
      %v927 = vld [vmem:[%s9 + $0x1c] sm:$0xf]
      %v928 = vld [vmem:[%s9 + $0x20] sm:$0xf]
      %v929 = vld [vmem:[%s9 + $0x24] sm:$0xf]
      %v930 = vld [vmem:[%s9 + $0x28] sm:$0xf]
      %v931 = vld [vmem:[%s9 + $0x2c] sm:$0xf]
      %v932 = vld [vmem:[%s10] sm:$0x1]
      %v934 = vlaneseq
      %v935 = vshrl.u32 %v934, 7
      %v936 = vsub.s32 0, %v935
      %v937 = vrot.slane %v932, %v936
      %v951 = vunpack.c.l.b16 %v920
      %v952 = vunpack.c.l.b16 %v921
      %v953 = vunpack.c.l.b16 %v922
      %v954 = vunpack.c.l.b16 %v923
      %v955 = vunpack.c.l.b16 %v924
      %v956 = vunpack.c.l.b16 %v925
      %v957 = vunpack.c.l.b16 %v926
      %v958 = vunpack.c.l.b16 %v927
      %v959 = vunpack.c.l.b16 %v928
      %v960 = vunpack.c.l.b16 %v929
      %v961 = vunpack.c.l.b16 %v930
      %v962 = vunpack.c.l.b16 %v931
      %v963 = vpack.c.b16 %v952, %v951
      %v964 = vpack.c.b16 %v954, %v953
      %v965 = vpack.c.b16 %v956, %v955
      %v966 = vpack.c.b16 %v958, %v957
      %v967 = vpack.c.b16 %v960, %v959
      %v968 = vpack.c.b16 %v962, %v961
      %v976 = vsel %vm457, %v919, 0
      %978 = vmatprep.subr.bf16.mxu0 0
      %979 = vmatpush1.bf16.msra.mxu0 0
      %980 = vmatprep.subr.bf16.mxu0 0
      %981 = vmatpush1.bf16.msra.mxu0 0
      %982 = vmatprep.subr.bf16.mxu0 0
      %983 = vmatpush1.bf16.msra.mxu0 %v968
      %984 = vmatprep.subr.bf16.mxu0 0
      %985 = vmatpush1.bf16.msra.mxu0 %v967
      %986 = vmatprep.subr.bf16.mxu0 0
      %987 = vmatpush1.bf16.msra.mxu0 %v966
      %988 = vmatprep.subr.bf16.mxu0 0
      %989 = vmatpush1.bf16.msra.mxu0 %v965
      %990 = vmatprep.subr.bf16.mxu0 0
      %991 = vmatpush1.bf16.msra.mxu0 %v964
      %992 = vmatprep.subr.bf16.mxu0 0
      %993 = vmatpush1.bf16.msra.mxu0 %v963
      %994 = vmatprep.subr.bf16.mxu0 0
      %995 = vmatpush2.bf16.msra.mxu0 0
      %996 = vmatprep.subr.bf16.mxu0 0
      %997 = vmatpush2.bf16.msra.mxu0 0
      %998 = vmatprep.subr.bf16.mxu0 0
      %999 = vmatpush2.bf16.msra.mxu0 0
      %1000 = vmatprep.subr.bf16.mxu0 0
      %1001 = vmatpush2.bf16.msra.mxu0 0
      %1002 = vmatprep.subr.bf16.mxu0 0
      %1003 = vmatpush2.bf16.msra.mxu0 0
      %1004 = vmatprep.subr.bf16.mxu0 0
      %1005 = vmatpush2.bf16.msra.mxu0 0
      %1006 = vmatprep.subr.bf16.mxu0 0
      %1007 = vmatpush2.bf16.msra.mxu0 0
      %1008 = vmatprep.subr.bf16.mxu0 0
      %1009 = vmatpush2.bf16.msra.mxu0 0
      %1010 = vmatprep.mubr.bf16.mxu0 0
      %1011 = vmatmul.mubr.bf16.gmra.mxu0 %v976
      %v1012 = vpop.f32.mrf.mxu0
      %v1013 = vadd.f32 %v937, %v1012
      %v1014 = vpop.f32.mrf.mxu0
      %v1015 = vpop.f32.mrf.mxu0
      %v1016 = vpop.f32.mrf.mxu0
      %1017 = vdwg.mxu0
      %v1018 = vadd.f32 %v1013, %v383
      %vm1019 = vcmask 191488
      %1020 = vst.msk [vmem:[%s381] sm:$0xf] %vm1019, %v1018
      %p1021 = scmp.lt.s32.totalorder %s22, 1
      %s1022 = scalar_select %p1021, %s22, 1
      %s1023 = smul.addr %s1022, 4
      %s1024 = scalar_lea.vmem %s11, %s1023
      // Predicated region
      $region65: #{_lambda_.8} parent=63 // pred_check
        %p1025 = pneg %p276
      $region66: #{_lambda_.8} parent=63 // pred_check_branch
        %1027 = sbr.rel (%p1025) target = $region68
      $region67: #{_lambda_.8} parent=63 // pred_region
        _
      $region68: #{_lambda_.8} parent=63 // pred_fallthru
        _
    $region64: #{_lambda_.8} parent=5 // pred_fallthru
      _
    %p1028 = scmp.le.s32.totalorder 2, %s17
    // Predicated region
    $region69: #{_lambda_.8} parent=5 // pred_check
      %p1029 = pneg %p1028
    $region70: #{_lambda_.8} parent=5 // pred_check_branch
      %1031 = sbr.rel (%p1029) target = $region72
    $region71: #{_lambda_.8} parent=5 // pred_region
      %s1032 = ssub.s32 %s17, 2
      // Predicated region
      $region73: #{_lambda_.8} parent=71 // pred_check
        %p1033 = pneg %p282
      $region74: #{_lambda_.8} parent=71 // pred_check_branch
        %1035 = sbr.rel (%p1033) target = $region76
      $region75: #{_lambda_.8} parent=71 // pred_region
        %p1036 = scmp.lt.s32.totalorder %s23, 1
        %s1037 = scalar_select %p1036, %s23, 1
        %s1038 = smul.addr %s1037, 4
        %s1039 = scalar_lea.vmem %s11, %s1038
      $region76: #{_lambda_.8} parent=71 // pred_fallthru
        _
    $region72: #{_lambda_.8} parent=5 // pred_fallthru
      _
  $region6: #{_lambda_.8} parent=0 // loop_footer
    %s21 = sadd.s32 1, %s17
  $region7: #{_lambda_.8} parent=0 // loop_footer_branch
    %16 = sbr.rel target = $region3
  $region8: #{_lambda_.8} parent=0 // loop_exit
    _

</llo_original>
